<compile_context>
chip_gen: v5e
topology: v5e:2x2
jax: 0.10.0
libtpu: 0.0.40
codegen_flags: <defaults>
</compile_context>

<pallas_src>
import numpy as np
import jax
import jax.numpy as jnp
from jax import lax
from jax.experimental import pallas as pl
from jax.experimental.pallas import tpu as pltpu

# ---------------------------------------------------------------------------
# Fixed geometry implied by Linear(2592, D_out).
# ---------------------------------------------------------------------------
H_IN = W_IN = 84
C_IN = 3
C1, KH1, ST1 = 16, 8, 4
C2, KH2, ST2 = 32, 4, 2
OH1 = (H_IN - KH1) // ST1 + 1            # 20
OH2 = (OH1 - KH2) // ST2 + 1             # 9
P1_ROWS = OH1 * OH1                      # 400  conv1 output positions
P1_COLS = KH1 * KH1 * C_IN               # 192  conv1 im2col patch length
H2_ROWS = OH2 * OH2                      # 81   conv2 output positions
N_TAPS2 = KH2 * KH2                      # 16   conv2 kernel taps
FLAT = H2_ROWS * C2                      # 2592
T_PAD = 88                               # 81 padded to a multiple of 8
VMEM_LIMIT = 32 * 1024 * 1024


def _round_up(x, m):
    return (x + m - 1) // m * m


def _pick_sample_block(n, cap=8):
    """Samples per kernel-A grid step: ~8, but keep >=2 grid steps if possible."""
    return max(1, min(cap, -(-n // 2)))


def _pick_bm(m, cap=256):
    """Linear M-tile: multiple of 8, >=2 grid steps when it matters."""
    if m <= 8:
        return m
    return min(cap, _round_up(-(-m // 2), 8))


# ---------------------------------------------------------------------------
# Pallas kernel A: fused conv1 + conv2 (+ biases + ReLUs), `blk` samples/step.
# ---------------------------------------------------------------------------
def _fused_conv_kernel(p1_ref, w1_ref, b1_ref, sel_ref, w2c_ref, b2_ref, h2_ref):
    blk = p1_ref.shape[0]

    # conv1: one (blk*400, 192) x (192, 16) MXU matmul for the whole block.
    # Leading-dim collapse only (last two dims untouched, 400 % 8 == 0) -> free.
    p1 = p1_ref[...].reshape(blk * P1_ROWS, P1_COLS)
    h1 = jnp.maximum(
        jnp.dot(p1, w1_ref[...], preferred_element_type=jnp.float32) + b1_ref[...],
        0.0).astype(jnp.bfloat16)                                   # (blk*400, 16)

    sel = sel_ref[...]          # (16*88, 400) constant 0/1 selection matrix
    # conv2 im2col: ONE large-M selection matmul per sample; each tap's block
    # lives at an 8-aligned row offset t*88 (rows 81..87 are all-zero padding).
    gcats = []
    for b in range(blk):
        h1_b = h1[b * P1_ROWS:(b + 1) * P1_ROWS]                    # (400, 16)
        g = jnp.dot(sel, h1_b, preferred_element_type=jnp.float32)  # (1408, 16)
        g = g.astype(jnp.bfloat16)                                  # exact (0/1 select)
        # lane-concat the 16 tap blocks -> (88, 256); XLU work, MXU stays busy.
        gcats.append(jnp.concatenate(
            [g[t * T_PAD:(t + 1) * T_PAD] for t in range(N_TAPS2)], axis=1))
    gcat_all = jnp.concatenate(gcats, axis=0)                       # (blk*88, 256)

    # conv2 contraction: ONE K=256 matmul for the whole block (fills MXU depth).
    h2 = jnp.maximum(
        jnp.dot(gcat_all, w2c_ref[...], preferred_element_type=jnp.float32)
        + b2_ref[...], 0.0)                                         # (blk*88, 32)

    for b in range(blk):
        h2_ref[b] = h2[b * T_PAD: b * T_PAD + H2_ROWS].astype(h2_ref.dtype)


def fused_convs(p1, w1, b1, sel, w2c, b2, *, blk):
    """p1: (N, 400, 192) bf16, N % blk == 0  ->  h2: (N, 81, 32) bf16."""
    n = p1.shape[0]
    return pl.pallas_call(
        _fused_conv_kernel,
        out_shape=jax.ShapeDtypeStruct((n, H2_ROWS, C2), jnp.bfloat16),
        grid=(n // blk,),
        in_specs=[
            pl.BlockSpec((blk, P1_ROWS, P1_COLS), lambda i: (i, 0, 0)),
            pl.BlockSpec((P1_COLS, C1), lambda i: (0, 0)),            # resident
            pl.BlockSpec((1, C1), lambda i: (0, 0)),                  # resident
            pl.BlockSpec((N_TAPS2 * T_PAD, P1_ROWS), lambda i: (0, 0)),
            pl.BlockSpec((N_TAPS2 * C1, C2), lambda i: (0, 0)),
            pl.BlockSpec((1, C2), lambda i: (0, 0)),
        ],
        out_specs=pl.BlockSpec((blk, H2_ROWS, C2), lambda i: (i, 0, 0)),
        compiler_params=pltpu.CompilerParams(
            dimension_semantics=("parallel",),
            vmem_limit_bytes=VMEM_LIMIT),
    )(p1, w1, b1, sel, w2c, b2)


# ---------------------------------------------------------------------------
# Pallas kernel B: M-tiled fused matmul + bias + ReLU (the Linear layer),
# output padded to 128 lanes (unmasked, lane-dense stores).
# ---------------------------------------------------------------------------
def _linear_relu_kernel(x_ref, w_ref, b_ref, o_ref):
    acc = jnp.dot(x_ref[...], w_ref[...], preferred_element_type=jnp.float32)
    o_ref[...] = jnp.maximum(acc + b_ref[...], 0.0).astype(o_ref.dtype)


def linear_relu(x, w, b, *, block_m=256):
    """relu(x @ w + b).  x:(M,K) bf16, w:(K,Npad) bf16, b:(1,Npad) f32."""
    m, k = x.shape
    _, n = w.shape
    bm = _pick_bm(m, block_m)
    return pl.pallas_call(
        _linear_relu_kernel,
        out_shape=jax.ShapeDtypeStruct((m, n), jnp.float32),
        grid=(pl.cdiv(m, bm),),
        in_specs=[
            pl.BlockSpec((bm, k), lambda i: (i, 0)),
            pl.BlockSpec((k, n), lambda i: (0, 0)),     # weight stays resident
            pl.BlockSpec((1, n), lambda i: (0, 0)),
        ],
        out_specs=pl.BlockSpec((bm, n), lambda i: (i, 0)),
        compiler_params=pltpu.CompilerParams(
            dimension_semantics=("parallel",),
            vmem_limit_bytes=VMEM_LIMIT),
    )(x, w, b)


# ---------------------------------------------------------------------------
# Glue: conv1 im2col via 64 static strided slices (no gathers).
# ---------------------------------------------------------------------------
def _im2col_conv1(x_nhwc):
    """(N,84,84,3) bf16 -> (N, 400, 192), patch order (kh, kw, c)."""
    n = x_nhwc.shape[0]
    span = ST1 * (OH1 - 1) + 1
    cols = []
    for i in range(KH1):
        for j in range(KH1):
            cols.append(x_nhwc[:, i:i + span:ST1, j:j + span:ST1, :])  # (N,20,20,3)
    p = jnp.stack(cols, axis=3)                       # (N, 20, 20, 64, 3)
    return p.reshape(n, P1_ROWS, P1_COLS)


def _build_conv2_selector():
    """sel[t*88 + r, m] = 1 iff conv2 tap t=(i,j) at output r=a*9+b reads conv1
    row m=(2a+i)*20 + (2b+j); rows 81..87 of each tap block are zero padding."""
    sel = np.zeros((N_TAPS2 * T_PAD, P1_ROWS), np.float32)
    for i in range(KH2):
        for j in range(KH2):
            t = i * KH2 + j
            for a in range(OH2):
                for b in range(OH2):
                    sel[t * T_PAD + a * OH2 + b,
                        (ST2 * a + i) * OH1 + (ST2 * b + j)] = 1.0
    return jnp.asarray(sel, jnp.bfloat16)


# ---------------------------------------------------------------------------
# Parameters (same shapes as the PyTorch module) + one-time re-layout.
# ---------------------------------------------------------------------------
def init_params(key, d_out):
    k1, k2, k3, k4, k5, k6 = jax.random.split(key, 6)
    return {
        "conv1_w": jax.random.normal(k1, (C1, C_IN, KH1, KH1), jnp.float32) * 0.05,
        "conv1_b": jax.random.normal(k2, (C1,), jnp.float32) * 0.05,
        "conv2_w": jax.random.normal(k3, (C2, C1, KH2, KH2), jnp.float32) * 0.05,
        "conv2_b": jax.random.normal(k4, (C2,), jnp.float32) * 0.05,
        "linear_w": jax.random.normal(k5, (d_out, FLAT), jnp.float32) * 0.02,
        "linear_b": jax.random.normal(k6, (d_out,), jnp.float32) * 0.02,
    }


def prepare_params(params):
    """One-time weight re-layout / permutation / padding / bf16 cast."""
    d_out = params["linear_w"].shape[0]
    n_out_pad = _round_up(d_out, 128)
    # conv1 weight: (OC,IC,KH,KW) -> im2col layout (kh,kw,ic) x oc.
    w1 = jnp.transpose(params["conv1_w"], (2, 3, 1, 0)).reshape(P1_COLS, C1)
    # conv2 weight: taps concatenated along K -> (16*16, 32), row = t*16 + ci.
    w2c = jnp.transpose(params["conv2_w"], (2, 3, 1, 0)).reshape(N_TAPS2 * C1, C2)
    # Fold the PyTorch NCHW flatten permutation into the linear weight and pad
    # the output dim to 128 lanes.
    w3 = params["linear_w"].reshape(d_out, C2, OH2, OH2)
    w3 = jnp.transpose(w3, (2, 3, 1, 0)).reshape(FLAT, d_out)
    w3p = jnp.pad(w3, ((0, 0), (0, n_out_pad - d_out)))
    b3p = jnp.pad(params["linear_b"], (0, n_out_pad - d_out)).reshape(1, n_out_pad)
    return {
        "w1": w1.astype(jnp.bfloat16),
        "b1": params["conv1_b"].reshape(1, C1).astype(jnp.float32),
        "sel": _build_conv2_selector(),
        "w2c": w2c.astype(jnp.bfloat16),
        "b2": params["conv2_b"].reshape(1, C2).astype(jnp.float32),
        "w3p": w3p.astype(jnp.bfloat16),
        "b3p": b3p.astype(jnp.float32),
    }


# ---------------------------------------------------------------------------
# Forward pass (mirrors CNNNetwork.forward, incl. the optional 5-D input).
# ---------------------------------------------------------------------------
def cnn_forward(obs, prep, *, d_out):
    obs_shape = obs.shape
    if_high_dim = len(obs_shape) == 5
    if if_high_dim:
        obs = obs.reshape((-1,) + obs_shape[2:])
    n = obs.shape[0]

    blk = _pick_sample_block(n)
    n_pad = _round_up(n, blk)
    if n_pad != n:                       # pad batch so kernel A's grid is exact
        obs = jnp.pad(obs, ((0, n_pad - n), (0, 0), (0, 0), (0, 0)))

    # NCHW -> NHWC + bf16 cast, then strided-slice im2col for conv1.
    x = jnp.transpose(obs, (0, 2, 3, 1)).astype(jnp.bfloat16)
    p1 = _im2col_conv1(x)                                        # (n_pad, 400, 192)

    # Pallas call 1: fused conv1 + conv2 (+ biases + ReLUs), blk samples/step.
    h2 = fused_convs(p1, prep["w1"], prep["b1"], prep["sel"],
                     prep["w2c"], prep["b2"], blk=blk)           # (n_pad, 81, 32)

    # TODO(synk): the (81,32)->(2592,) flatten stays as an XLA reshape between
    # the two pallas_calls — a minor-dim-changing reshape has no clean Mosaic
    # lowering, so the Linear is not fully fused into kernel A.
    flat = h2.reshape(n_pad, FLAT)

    # Pallas call 2: Linear + ReLU (output padded to 128 lanes, sliced here).
    out = linear_relu(flat, prep["w3p"], prep["b3p"])[:n, :d_out]

    if if_high_dim:
        out = out.reshape(obs_shape[0], obs_shape[1], -1)
    return out


# ---------------------------------------------------------------------------
# Pure-JAX f32 reference (independent path) for correctness checking.
# ---------------------------------------------------------------------------
def cnn_reference(obs, params):
    obs_shape = obs.shape
    if_high_dim = len(obs_shape) == 5
    if if_high_dim:
        obs = obs.reshape((-1,) + obs_shape[2:])
    x = lax.conv_general_dilated(obs, params["conv1_w"], (ST1, ST1), "VALID",
                                 dimension_numbers=("NCHW", "OIHW", "NCHW"))
    x = jax.nn.relu(x + params["conv1_b"][None, :, None, None])
    x = lax.conv_general_dilated(x, params["conv2_w"], (ST2, ST2), "VALID",
                                 dimension_numbers=("NCHW", "OIHW", "NCHW"))
    x = jax.nn.relu(x + params["conv2_b"][None, :, None, None])
    x = x.reshape(x.shape[0], -1)                                # NCHW flatten
    out = jax.nn.relu(x @ params["linear_w"].T + params["linear_b"])
    if if_high_dim:
        out = out.reshape(obs_shape[0], obs_shape[1], -1)
    return out


if __name__ == "__main__":
    D_OUT = 6
    key = jax.random.PRNGKey(0)
    k_params, k_obs4, k_obs5 = jax.random.split(key, 3)

    params = init_params(k_params, D_OUT)
    prep = prepare_params(params)

    fwd = jax.jit(cnn_forward, static_argnames=("d_out",))

    # 4-D input (N, 3, 84, 84).  84x84 is forced by Linear(2592, D_out).
    obs4 = jax.random.normal(k_obs4, (2, C_IN, H_IN, W_IN), jnp.float32)
    out4 = jax.block_until_ready(fwd(obs4, prep, d_out=D_OUT))
    assert out4.shape == (2, D_OUT), out4.shape
    assert bool(jnp.all(out4 >= 0.0))                            # final ReLU
    err4 = float(jnp.max(jnp.abs(out4 - cnn_reference(obs4, params))))
    assert err4 < 5e-2, f"4-D mismatch vs f32 reference: max abs err {err4}"

    # 5-D input (T, B, 3, 84, 84): exercises the high-dim path, a multi-step
    # kernel-A grid (10 samples, block 5) and a ragged Linear M tail (bm=8).
    obs5 = jax.random.normal(k_obs5, (2, 5, C_IN, H_IN, W_IN), jnp.float32)
    out5 = jax.block_until_ready(fwd(obs5, prep, d_out=D_OUT))
    assert out5.shape == (2, 5, D_OUT), out5.shape
    err5 = float(jnp.max(jnp.abs(out5 - cnn_reference(obs5, params))))
    assert err5 < 5e-2, f"5-D mismatch vs f32 reference: max abs err {err5}"

    print("KERNEL_OK")
</pallas_src>

<mosaic_0001>
module attributes {stable_mosaic.version = 11 : i64} {
  func.func @_fused_conv_kernel(%arg0: i32, %arg1: memref<1x400x192xbf16, #tpu.memory_space<vmem>>, %arg2: memref<192x16xbf16, #tpu.memory_space<vmem>>, %arg3: memref<1x16xf32, #tpu.memory_space<vmem>>, %arg4: memref<1408x400xbf16, #tpu.memory_space<vmem>>, %arg5: memref<256x32xbf16, #tpu.memory_space<vmem>>, %arg6: memref<1x32xf32, #tpu.memory_space<vmem>>, %arg7: memref<1x81x32xbf16, #tpu.memory_space<vmem>>) attributes {dimension_semantics = [#tpu.dimension_semantics<parallel>], iteration_bounds = array<i64: 2>, scalar_prefetch = 0 : i64, scratch_operands = 0 : i64, tpu.core_type = #tpu.core_type<tc>, window_params = [{transform_indices = @transform_0, window_bounds = array<i64: 1, 400, 192>}, {pipeline_mode = #tpu.pipeline_mode<synchronous>, transform_indices = @transform_1, window_bounds = array<i64: 192, 16>}, {pipeline_mode = #tpu.pipeline_mode<synchronous>, transform_indices = @transform_2, window_bounds = array<i64: 1, 16>}, {pipeline_mode = #tpu.pipeline_mode<synchronous>, transform_indices = @transform_3, window_bounds = array<i64: 1408, 400>}, {pipeline_mode = #tpu.pipeline_mode<synchronous>, transform_indices = @transform_4, window_bounds = array<i64: 256, 32>}, {pipeline_mode = #tpu.pipeline_mode<synchronous>, transform_indices = @transform_5, window_bounds = array<i64: 1, 32>}, {transform_indices = @transform_6, window_bounds = array<i64: 1, 81, 32>}]} {
    %c0 = arith.constant 0 : index
    %c0_0 = arith.constant 0 : index
    %c0_1 = arith.constant 0 : index
    %0 = vector.load %arg1[%c0, %c0_0, %c0_1] : memref<1x400x192xbf16, #tpu.memory_space<vmem>>, vector<1x400x192xbf16>
    %1 = vector.shape_cast %0 : vector<1x400x192xbf16> to vector<400x192xbf16>
    %c0_2 = arith.constant 0 : index
    %c0_3 = arith.constant 0 : index
    %2 = vector.load %arg2[%c0_2, %c0_3] : memref<192x16xbf16, #tpu.memory_space<vmem>>, vector<192x16xbf16>
    %cst = arith.constant dense<0.000000e+00> : vector<400x16xf32>
    %3 = tpu.matmul %1, %2, %cst {dimension_numbers = #tpu.dot_dimension_numbers<[1], [0], [0], [1], [0, 0, 1, 1], [], []>} : vector<400x192xbf16>, vector<192x16xbf16>, vector<400x16xf32> -> vector<400x16xf32>
    %c0_4 = arith.constant 0 : index
    %c0_5 = arith.constant 0 : index
    %4 = vector.load %arg3[%c0_4, %c0_5] : memref<1x16xf32, #tpu.memory_space<vmem>>, vector<1x16xf32>
    %5 = vector.broadcast %4 : vector<1x16xf32> to vector<400x16xf32>
    %6 = arith.addf %3, %5 : vector<400x16xf32>
    %cst_6 = arith.constant 0.000000e+00 : f32
    %7 = vector.broadcast %cst_6 : f32 to vector<400x16xf32>
    %8 = arith.maximumf %6, %7 : vector<400x16xf32>
    %9 = arith.truncf %8 : vector<400x16xf32> to vector<400x16xbf16>
    %c0_7 = arith.constant 0 : index
    %c0_8 = arith.constant 0 : index
    %10 = vector.load %arg4[%c0_7, %c0_8] : memref<1408x400xbf16, #tpu.memory_space<vmem>>, vector<1408x400xbf16>
    %cst_9 = arith.constant dense<0.000000e+00> : vector<1408x16xf32>
    %11 = tpu.matmul %10, %9, %cst_9 {dimension_numbers = #tpu.dot_dimension_numbers<[1], [0], [0], [1], [0, 0, 1, 1], [], []>} : vector<1408x400xbf16>, vector<400x16xbf16>, vector<1408x16xf32> -> vector<1408x16xf32>
    %12 = arith.truncf %11 : vector<1408x16xf32> to vector<1408x16xbf16>
    %13 = vector.extract_strided_slice %12 {offsets = [0, 0], sizes = [88, 16], strides = [1, 1]} : vector<1408x16xbf16> to vector<88x16xbf16>
    %14 = vector.extract_strided_slice %12 {offsets = [88, 0], sizes = [88, 16], strides = [1, 1]} : vector<1408x16xbf16> to vector<88x16xbf16>
    %15 = vector.extract_strided_slice %12 {offsets = [176, 0], sizes = [88, 16], strides = [1, 1]} : vector<1408x16xbf16> to vector<88x16xbf16>
    %16 = vector.extract_strided_slice %12 {offsets = [264, 0], sizes = [88, 16], strides = [1, 1]} : vector<1408x16xbf16> to vector<88x16xbf16>
    %17 = vector.extract_strided_slice %12 {offsets = [352, 0], sizes = [88, 16], strides = [1, 1]} : vector<1408x16xbf16> to vector<88x16xbf16>
    %18 = vector.extract_strided_slice %12 {offsets = [440, 0], sizes = [88, 16], strides = [1, 1]} : vector<1408x16xbf16> to vector<88x16xbf16>
    %19 = vector.extract_strided_slice %12 {offsets = [528, 0], sizes = [88, 16], strides = [1, 1]} : vector<1408x16xbf16> to vector<88x16xbf16>
    %20 = vector.extract_strided_slice %12 {offsets = [616, 0], sizes = [88, 16], strides = [1, 1]} : vector<1408x16xbf16> to vector<88x16xbf16>
    %21 = vector.extract_strided_slice %12 {offsets = [704, 0], sizes = [88, 16], strides = [1, 1]} : vector<1408x16xbf16> to vector<88x16xbf16>
    %22 = vector.extract_strided_slice %12 {offsets = [792, 0], sizes = [88, 16], strides = [1, 1]} : vector<1408x16xbf16> to vector<88x16xbf16>
    %23 = vector.extract_strided_slice %12 {offsets = [880, 0], sizes = [88, 16], strides = [1, 1]} : vector<1408x16xbf16> to vector<88x16xbf16>
    %24 = vector.extract_strided_slice %12 {offsets = [968, 0], sizes = [88, 16], strides = [1, 1]} : vector<1408x16xbf16> to vector<88x16xbf16>
    %25 = vector.extract_strided_slice %12 {offsets = [1056, 0], sizes = [88, 16], strides = [1, 1]} : vector<1408x16xbf16> to vector<88x16xbf16>
    %26 = vector.extract_strided_slice %12 {offsets = [1144, 0], sizes = [88, 16], strides = [1, 1]} : vector<1408x16xbf16> to vector<88x16xbf16>
    %27 = vector.extract_strided_slice %12 {offsets = [1232, 0], sizes = [88, 16], strides = [1, 1]} : vector<1408x16xbf16> to vector<88x16xbf16>
    %28 = vector.extract_strided_slice %12 {offsets = [1320, 0], sizes = [88, 16], strides = [1, 1]} : vector<1408x16xbf16> to vector<88x16xbf16>
    %29 = tpu.concatenate %13, %14, %15, %16, %17, %18, %19, %20, %21, %22, %23, %24, %25, %26, %27, %28 in 1 : vector<88x16xbf16>, vector<88x16xbf16>, vector<88x16xbf16>, vector<88x16xbf16>, vector<88x16xbf16>, vector<88x16xbf16>, vector<88x16xbf16>, vector<88x16xbf16>, vector<88x16xbf16>, vector<88x16xbf16>, vector<88x16xbf16>, vector<88x16xbf16>, vector<88x16xbf16>, vector<88x16xbf16>, vector<88x16xbf16>, vector<88x16xbf16> -> vector<88x256xbf16>
    %c0_10 = arith.constant 0 : index
    %c0_11 = arith.constant 0 : index
    %30 = vector.load %arg5[%c0_10, %c0_11] : memref<256x32xbf16, #tpu.memory_space<vmem>>, vector<256x32xbf16>
    %cst_12 = arith.constant dense<0.000000e+00> : vector<88x32xf32>
    %31 = tpu.matmul %29, %30, %cst_12 {dimension_numbers = #tpu.dot_dimension_numbers<[1], [0], [0], [1], [0, 0, 1, 1], [], []>} : vector<88x256xbf16>, vector<256x32xbf16>, vector<88x32xf32> -> vector<88x32xf32>
    %c0_13 = arith.constant 0 : index
    %c0_14 = arith.constant 0 : index
    %32 = vector.load %arg6[%c0_13, %c0_14] : memref<1x32xf32, #tpu.memory_space<vmem>>, vector<1x32xf32>
    %33 = vector.broadcast %32 : vector<1x32xf32> to vector<88x32xf32>
    %34 = arith.addf %31, %33 : vector<88x32xf32>
    %cst_15 = arith.constant 0.000000e+00 : f32
    %35 = vector.broadcast %cst_15 : f32 to vector<88x32xf32>
    %36 = arith.maximumf %34, %35 : vector<88x32xf32>
    %37 = vector.extract_strided_slice %36 {offsets = [0, 0], sizes = [81, 32], strides = [1, 1]} : vector<88x32xf32> to vector<81x32xf32>
    %38 = arith.truncf %37 : vector<81x32xf32> to vector<81x32xbf16>
    %c0_16 = arith.constant 0 : index
    %c0_17 = arith.constant 0 : index
    %c0_18 = arith.constant 0 : index
    %39 = vector.load %arg7[%c0_16, %c0_17, %c0_18] : memref<1x81x32xbf16, #tpu.memory_space<vmem>>, vector<1x81x32xbf16>
    %40 = vector.shape_cast %39 : vector<1x81x32xbf16> to vector<81x32xbf16>
    %41 = vector.shape_cast %38 : vector<81x32xbf16> to vector<1x81x32xbf16>
    tpu.vector_store %arg7[%c0_16, %c0_17, %c0_18], %41 {strides = array<i32>} : memref<1x81x32xbf16, #tpu.memory_space<vmem>>, vector<1x81x32xbf16>,
    return
  }
  func.func @transform_0(%arg0: i32) -> (i32, i32, i32) {
    %c0_i32 = arith.constant 0 : i32
    %c0_i32_0 = arith.constant 0 : i32
    %c0_i32_1 = arith.constant 0 : i32
    return %arg0, %c0_i32, %c0_i32_0 : i32, i32, i32
  }
  func.func @transform_1(%arg0: i32) -> (i32, i32) {
    %c0_i32 = arith.constant 0 : i32
    %c0_i32_0 = arith.constant 0 : i32
    %c0_i32_1 = arith.constant 0 : i32
    return %c0_i32, %c0_i32_0 : i32, i32
  }
  func.func @transform_2(%arg0: i32) -> (i32, i32) {
    %c0_i32 = arith.constant 0 : i32
    %c0_i32_0 = arith.constant 0 : i32
    %c0_i32_1 = arith.constant 0 : i32
    return %c0_i32, %c0_i32_0 : i32, i32
  }
  func.func @transform_3(%arg0: i32) -> (i32, i32) {
    %c0_i32 = arith.constant 0 : i32
    %c0_i32_0 = arith.constant 0 : i32
    %c0_i32_1 = arith.constant 0 : i32
    return %c0_i32, %c0_i32_0 : i32, i32
  }
  func.func @transform_4(%arg0: i32) -> (i32, i32) {
    %c0_i32 = arith.constant 0 : i32
    %c0_i32_0 = arith.constant 0 : i32
    %c0_i32_1 = arith.constant 0 : i32
    return %c0_i32, %c0_i32_0 : i32, i32
  }
  func.func @transform_5(%arg0: i32) -> (i32, i32) {
    %c0_i32 = arith.constant 0 : i32
    %c0_i32_0 = arith.constant 0 : i32
    %c0_i32_1 = arith.constant 0 : i32
    return %c0_i32, %c0_i32_0 : i32, i32
  }
  func.func @transform_6(%arg0: i32) -> (i32, i32, i32) {
    %c0_i32 = arith.constant 0 : i32
    %c0_i32_0 = arith.constant 0 : i32
    %c0_i32_1 = arith.constant 0 : i32
    return %arg0, %c0_i32, %c0_i32_0 : i32, i32, i32
  }
}

module attributes {stable_mosaic.version = 11 : i64} {
  func.func @_linear_relu_kernel(%arg0: i32, %arg1: memref<2x2592xbf16, #tpu.memory_space<vmem>>, %arg2: memref<2592x128xbf16, #tpu.memory_space<vmem>>, %arg3: memref<1x128xf32, #tpu.memory_space<vmem>>, %arg4: memref<2x128xf32, #tpu.memory_space<vmem>>) attributes {dimension_semantics = [#tpu.dimension_semantics<parallel>], iteration_bounds = array<i64: 1>, scalar_prefetch = 0 : i64, scratch_operands = 0 : i64, tpu.core_type = #tpu.core_type<tc>, window_params = [{transform_indices = @transform_0, window_bounds = array<i64: 2, 2592>}, {pipeline_mode = #tpu.pipeline_mode<synchronous>, transform_indices = @transform_1, window_bounds = array<i64: 2592, 128>}, {pipeline_mode = #tpu.pipeline_mode<synchronous>, transform_indices = @transform_2, window_bounds = array<i64: 1, 128>}, {transform_indices = @transform_3, window_bounds = array<i64: 2, 128>}]} {
    %c0 = arith.constant 0 : index
    %c0_0 = arith.constant 0 : index
    %0 = vector.load %arg1[%c0, %c0_0] : memref<2x2592xbf16, #tpu.memory_space<vmem>>, vector<2x2592xbf16>
    %c0_1 = arith.constant 0 : index
    %c0_2 = arith.constant 0 : index
    %1 = vector.load %arg2[%c0_1, %c0_2] : memref<2592x128xbf16, #tpu.memory_space<vmem>>, vector<2592x128xbf16>
    %cst = arith.constant dense<0.000000e+00> : vector<2x128xf32>
    %2 = tpu.matmul %0, %1, %cst {dimension_numbers = #tpu.dot_dimension_numbers<[1], [0], [0], [1], [0, 0, 1, 1], [], []>} : vector<2x2592xbf16>, vector<2592x128xbf16>, vector<2x128xf32> -> vector<2x128xf32>
    %c0_3 = arith.constant 0 : index
    %c0_4 = arith.constant 0 : index
    %3 = vector.load %arg3[%c0_3, %c0_4] : memref<1x128xf32, #tpu.memory_space<vmem>>, vector<1x128xf32>
    %4 = vector.broadcast %3 : vector<1x128xf32> to vector<2x128xf32>
    %5 = arith.addf %2, %4 : vector<2x128xf32>
    %cst_5 = arith.constant 0.000000e+00 : f32
    %6 = vector.broadcast %cst_5 : f32 to vector<2x128xf32>
    %7 = arith.maximumf %5, %6 : vector<2x128xf32>
    %c0_6 = arith.constant 0 : index
    %c0_7 = arith.constant 0 : index
    %8 = vector.load %arg4[%c0_6, %c0_7] : memref<2x128xf32, #tpu.memory_space<vmem>>, vector<2x128xf32>
    tpu.vector_store %arg4[%c0_6, %c0_7], %7 {strides = array<i32>} : memref<2x128xf32, #tpu.memory_space<vmem>>, vector<2x128xf32>,
    return
  }
  func.func @transform_0(%arg0: i32) -> (i32, i32) {
    %c0_i32 = arith.constant 0 : i32
    %c0_i32_0 = arith.constant 0 : i32
    return %arg0, %c0_i32 : i32, i32
  }
  func.func @transform_1(%arg0: i32) -> (i32, i32) {
    %c0_i32 = arith.constant 0 : i32
    %c0_i32_0 = arith.constant 0 : i32
    %c0_i32_1 = arith.constant 0 : i32
    return %c0_i32, %c0_i32_0 : i32, i32
  }
  func.func @transform_2(%arg0: i32) -> (i32, i32) {
    %c0_i32 = arith.constant 0 : i32
    %c0_i32_0 = arith.constant 0 : i32
    %c0_i32_1 = arith.constant 0 : i32
    return %c0_i32, %c0_i32_0 : i32, i32
  }
  func.func @transform_3(%arg0: i32) -> (i32, i32) {
    %c0_i32 = arith.constant 0 : i32
    %c0_i32_0 = arith.constant 0 : i32
    return %arg0, %c0_i32 : i32, i32
  }
}

</mosaic_0001>

<llo_original>
// kernel: cnn_forward.3
$region0: #{cnn_forward.3}
  #allocation0 [shape = 'u32[]', space=smem, size = 0x4, offset = 0x4, fixed_abs, tag = 'smem constant byte address 0x4 - core index']
  #allocation1 [shape = 'u32[72,128]{1,0:T(1,128)}', space=vmem, size = 0x9000, scoped, tag = 'internal scratch']
  %s0 = inlined_call_operand.vmem [shape: bf16[2,2592], index: 0, kind: input, shape index: {}]
  %s1 = inlined_call_operand.vmem [shape: bf16[2592,128], index: 1, kind: input, shape index: {}]
  %s2 = inlined_call_operand.vmem [shape: f32[1,128], index: 2, kind: input, shape index: {}]
  %s3 = inlined_call_operand.hbm [shape: f32[2,128], index: 3, kind: output, shape index: {}]
  %s4 = sld [smem:[#allocation0]]
  $region22: #{cnn_forward.3} parent=0
    _
  %s6 = ssub.s32 1, %s4
  %s7 = scalar_select 0, %s6, %s4
  $region1: #{cnn_forward.3} parent=0
    #allocation2 [shape = 'u8[1024]{0}', space=vmem, size = 0x400, scoped, tag = 'output window, operand 0, single buffered']
    #allocation3 [shape = 's32[1]{0}', space=sflag, size = 0x4, scoped, tag = 'scoped memory for cnn_forward.3']
    %8 = vsyncpa [#allocation3], 0
    // Predicated region
    $region2: #{cnn_forward.3} parent=1 // pred_check
      _
    $region3: #{cnn_forward.3} parent=1 // pred_check_branch
      %10 = sbr.rel (0) target = $region5
    $region4: #{cnn_forward.3} parent=1 // pred_region
      _
    $region5: #{cnn_forward.3} parent=1 // pred_fallthru
      _
    // Predicated region
    $region6: #{cnn_forward.3} parent=1 // pred_check
      _
    $region7: #{cnn_forward.3} parent=1 // pred_check_branch
      %12 = sbr.rel (0) target = $region9
    $region8: #{cnn_forward.3} parent=1 // pred_region
      _
    $region9: #{cnn_forward.3} parent=1 // pred_fallthru
      _
    // Predicated region
    $region10: #{cnn_forward.3} parent=1 // pred_check
      _
    $region11: #{cnn_forward.3} parent=1 // pred_check_branch
      %14 = sbr.rel (0) target = $region13
    $region12: #{cnn_forward.3} parent=1 // pred_region
      _
    $region13: #{cnn_forward.3} parent=1 // pred_fallthru
      _
    %v16 = vld [vmem:[%s0] sm:$0xff]
    %v17 = vld [vmem:[%s0 + $0x8] sm:$0xff]
    %v18 = vld [vmem:[%s0 + $0x10] sm:$0x1f]
    %v19 = vld [vmem:[%s1] sm:$0xf]
    %v20 = vld [vmem:[%s1 + $0x4] sm:$0xf]
    %v21 = vld [vmem:[%s1 + $0x8] sm:$0xf]
    %v22 = vld [vmem:[%s1 + $0xc] sm:$0xf]
    %v23 = vld [vmem:[%s1 + $0x10] sm:$0xf]
    %v24 = vld [vmem:[%s1 + $0x14] sm:$0xf]
    %v25 = vld [vmem:[%s1 + $0x18] sm:$0xf]
    %v26 = vld [vmem:[%s1 + $0x1c] sm:$0xf]
    %v27 = vld [vmem:[%s1 + $0x20] sm:$0xf]
    %v28 = vld [vmem:[%s1 + $0x24] sm:$0xf]
    %v29 = vld [vmem:[%s1 + $0x28] sm:$0xf]
    %v30 = vld [vmem:[%s1 + $0x2c] sm:$0xf]
    %v31 = vld [vmem:[%s1 + $0x30] sm:$0xf]
    %v32 = vld [vmem:[%s1 + $0x34] sm:$0xf]
    %v33 = vld [vmem:[%s1 + $0x38] sm:$0xf]
    %v34 = vld [vmem:[%s1 + $0x3c] sm:$0xf]
    %v35 = vld [vmem:[%s1 + $0x40] sm:$0xf]
    %v36 = vld [vmem:[%s1 + $0x44] sm:$0xf]
    %v37 = vld [vmem:[%s1 + $0x48] sm:$0xf]
    %v38 = vld [vmem:[%s1 + $0x4c] sm:$0xf]
    %v39 = vld [vmem:[%s1 + $0x50] sm:$0xf]
    %v40 = vld [vmem:[%s1 + $0x54] sm:$0xf]
    %v41 = vld [vmem:[%s1 + $0x58] sm:$0xf]
    %v42 = vld [vmem:[%s1 + $0x5c] sm:$0xf]
    %v43 = vld [vmem:[%s1 + $0x60] sm:$0xf]
    %v44 = vld [vmem:[%s1 + $0x64] sm:$0xf]
    %v45 = vld [vmem:[%s1 + $0x68] sm:$0xf]
    %v46 = vld [vmem:[%s1 + $0x6c] sm:$0xf]
    %v47 = vld [vmem:[%s1 + $0x70] sm:$0xf]
    %v48 = vld [vmem:[%s1 + $0x74] sm:$0xf]
    %v49 = vld [vmem:[%s1 + $0x78] sm:$0xf]
    %v50 = vld [vmem:[%s1 + $0x7c] sm:$0xf]
    %v51 = vld [vmem:[%s1 + $0x80] sm:$0xf]
    %v52 = vld [vmem:[%s1 + $0x84] sm:$0xf]
    %v53 = vld [vmem:[%s1 + $0x88] sm:$0xf]
    %v54 = vld [vmem:[%s1 + $0x8c] sm:$0xf]
    %v55 = vld [vmem:[%s1 + $0x90] sm:$0xf]
    %v56 = vld [vmem:[%s1 + $0x94] sm:$0xf]
    %v57 = vld [vmem:[%s1 + $0x98] sm:$0xf]
    %v58 = vld [vmem:[%s1 + $0x9c] sm:$0xf]
    %v59 = vld [vmem:[%s1 + $0xa0] sm:$0xf]
    %v60 = vld [vmem:[%s1 + $0xa4] sm:$0xf]
    %v61 = vld [vmem:[%s1 + $0xa8] sm:$0xf]
    %v62 = vld [vmem:[%s1 + $0xac] sm:$0xf]
    %v63 = vld [vmem:[%s1 + $0xb0] sm:$0xf]
    %v64 = vld [vmem:[%s1 + $0xb4] sm:$0xf]
    %v65 = vld [vmem:[%s1 + $0xb8] sm:$0xf]
    %v66 = vld [vmem:[%s1 + $0xbc] sm:$0xf]
    %v67 = vld [vmem:[%s1 + $0xc0] sm:$0xf]
    %v68 = vld [vmem:[%s1 + $0xc4] sm:$0xf]
    %v69 = vld [vmem:[%s1 + $0xc8] sm:$0xf]
    %v70 = vld [vmem:[%s1 + $0xcc] sm:$0xf]
    %v71 = vld [vmem:[%s1 + $0xd0] sm:$0xf]
    %v72 = vld [vmem:[%s1 + $0xd4] sm:$0xf]
    %v73 = vld [vmem:[%s1 + $0xd8] sm:$0xf]
    %v74 = vld [vmem:[%s1 + $0xdc] sm:$0xf]
    %v75 = vld [vmem:[%s1 + $0xe0] sm:$0xf]
    %v76 = vld [vmem:[%s1 + $0xe4] sm:$0xf]
    %v77 = vld [vmem:[%s1 + $0xe8] sm:$0xf]
    %v78 = vld [vmem:[%s1 + $0xec] sm:$0xf]
    %v79 = vld [vmem:[%s1 + $0xf0] sm:$0xf]
    %v80 = vld [vmem:[%s1 + $0xf4] sm:$0xf]
    %v81 = vld [vmem:[%s1 + $0xf8] sm:$0xf]
    %v82 = vld [vmem:[%s1 + $0xfc] sm:$0xf]
    %v83 = vld [vmem:[%s1 + $0x100] sm:$0xf]
    %v84 = vld [vmem:[%s1 + $0x104] sm:$0xf]
    %v85 = vld [vmem:[%s1 + $0x108] sm:$0xf]
    %v86 = vld [vmem:[%s1 + $0x10c] sm:$0xf]
    %v87 = vld [vmem:[%s1 + $0x110] sm:$0xf]
    %v88 = vld [vmem:[%s1 + $0x114] sm:$0xf]
    %v89 = vld [vmem:[%s1 + $0x118] sm:$0xf]
    %v90 = vld [vmem:[%s1 + $0x11c] sm:$0xf]
    %v91 = vld [vmem:[%s1 + $0x120] sm:$0xf]
    %v92 = vld [vmem:[%s1 + $0x124] sm:$0xf]
    %v93 = vld [vmem:[%s1 + $0x128] sm:$0xf]
    %v94 = vld [vmem:[%s1 + $0x12c] sm:$0xf]
    %v95 = vld [vmem:[%s1 + $0x130] sm:$0xf]
    %v96 = vld [vmem:[%s1 + $0x134] sm:$0xf]
    %v97 = vld [vmem:[%s1 + $0x138] sm:$0xf]
    %v98 = vld [vmem:[%s1 + $0x13c] sm:$0xf]
    %v99 = vld [vmem:[%s1 + $0x140] sm:$0xf]
    %v100 = vld [vmem:[%s1 + $0x144] sm:$0xf]
    %v101 = vld [vmem:[%s1 + $0x148] sm:$0xf]
    %v102 = vld [vmem:[%s1 + $0x14c] sm:$0xf]
    %v103 = vld [vmem:[%s1 + $0x150] sm:$0xf]
    %v104 = vld [vmem:[%s1 + $0x154] sm:$0xf]
    %v105 = vld [vmem:[%s1 + $0x158] sm:$0xf]
    %v106 = vld [vmem:[%s1 + $0x15c] sm:$0xf]
    %v107 = vld [vmem:[%s1 + $0x160] sm:$0xf]
    %v108 = vld [vmem:[%s1 + $0x164] sm:$0xf]
    %v109 = vld [vmem:[%s1 + $0x168] sm:$0xf]
    %v110 = vld [vmem:[%s1 + $0x16c] sm:$0xf]
    %v111 = vld [vmem:[%s1 + $0x170] sm:$0xf]
    %v112 = vld [vmem:[%s1 + $0x174] sm:$0xf]
    %v113 = vld [vmem:[%s1 + $0x178] sm:$0xf]
    %v114 = vld [vmem:[%s1 + $0x17c] sm:$0xf]
    %v115 = vld [vmem:[%s1 + $0x180] sm:$0xf]
    %v116 = vld [vmem:[%s1 + $0x184] sm:$0xf]
    %v117 = vld [vmem:[%s1 + $0x188] sm:$0xf]
    %v118 = vld [vmem:[%s1 + $0x18c] sm:$0xf]
    %v119 = vld [vmem:[%s1 + $0x190] sm:$0xf]
    %v120 = vld [vmem:[%s1 + $0x194] sm:$0xf]
    %v121 = vld [vmem:[%s1 + $0x198] sm:$0xf]
    %v122 = vld [vmem:[%s1 + $0x19c] sm:$0xf]
    %v123 = vld [vmem:[%s1 + $0x1a0] sm:$0xf]
    %v124 = vld [vmem:[%s1 + $0x1a4] sm:$0xf]
    %v125 = vld [vmem:[%s1 + $0x1a8] sm:$0xf]
    %v126 = vld [vmem:[%s1 + $0x1ac] sm:$0xf]
    %v127 = vld [vmem:[%s1 + $0x1b0] sm:$0xf]
    %v128 = vld [vmem:[%s1 + $0x1b4] sm:$0xf]
    %v129 = vld [vmem:[%s1 + $0x1b8] sm:$0xf]
    %v130 = vld [vmem:[%s1 + $0x1bc] sm:$0xf]
    %v131 = vld [vmem:[%s1 + $0x1c0] sm:$0xf]
    %v132 = vld [vmem:[%s1 + $0x1c4] sm:$0xf]
    %v133 = vld [vmem:[%s1 + $0x1c8] sm:$0xf]
    %v134 = vld [vmem:[%s1 + $0x1cc] sm:$0xf]
    %v135 = vld [vmem:[%s1 + $0x1d0] sm:$0xf]
    %v136 = vld [vmem:[%s1 + $0x1d4] sm:$0xf]
    %v137 = vld [vmem:[%s1 + $0x1d8] sm:$0xf]
    %v138 = vld [vmem:[%s1 + $0x1dc] sm:$0xf]
    %v139 = vld [vmem:[%s1 + $0x1e0] sm:$0xf]
    %v140 = vld [vmem:[%s1 + $0x1e4] sm:$0xf]
    %v141 = vld [vmem:[%s1 + $0x1e8] sm:$0xf]
    %v142 = vld [vmem:[%s1 + $0x1ec] sm:$0xf]
    %v143 = vld [vmem:[%s1 + $0x1f0] sm:$0xf]
    %v144 = vld [vmem:[%s1 + $0x1f4] sm:$0xf]
    %v145 = vld [vmem:[%s1 + $0x1f8] sm:$0xf]
    %v146 = vld [vmem:[%s1 + $0x1fc] sm:$0xf]
    %v147 = vld [vmem:[%s1 + $0x200] sm:$0xf]
    %v148 = vld [vmem:[%s1 + $0x204] sm:$0xf]
    %v149 = vld [vmem:[%s1 + $0x208] sm:$0xf]
    %v150 = vld [vmem:[%s1 + $0x20c] sm:$0xf]
    %v151 = vld [vmem:[%s1 + $0x210] sm:$0xf]
    %v152 = vld [vmem:[%s1 + $0x214] sm:$0xf]
    %v153 = vld [vmem:[%s1 + $0x218] sm:$0xf]
    %v154 = vld [vmem:[%s1 + $0x21c] sm:$0xf]
    %v155 = vld [vmem:[%s1 + $0x220] sm:$0xf]
    %v156 = vld [vmem:[%s1 + $0x224] sm:$0xf]
    %v157 = vld [vmem:[%s1 + $0x228] sm:$0xf]
    %v158 = vld [vmem:[%s1 + $0x22c] sm:$0xf]
    %v159 = vld [vmem:[%s1 + $0x230] sm:$0xf]
    %v160 = vld [vmem:[%s1 + $0x234] sm:$0xf]
    %v161 = vld [vmem:[%s1 + $0x238] sm:$0xf]
    %v162 = vld [vmem:[%s1 + $0x23c] sm:$0xf]
    %v163 = vld [vmem:[%s1 + $0x240] sm:$0xf]
    %v164 = vld [vmem:[%s1 + $0x244] sm:$0xf]
    %v165 = vld [vmem:[%s1 + $0x248] sm:$0xf]
    %v166 = vld [vmem:[%s1 + $0x24c] sm:$0xf]
    %v167 = vld [vmem:[%s1 + $0x250] sm:$0xf]
    %v168 = vld [vmem:[%s1 + $0x254] sm:$0xf]
    %v169 = vld [vmem:[%s1 + $0x258] sm:$0xf]
    %v170 = vld [vmem:[%s1 + $0x25c] sm:$0xf]
    %v171 = vld [vmem:[%s1 + $0x260] sm:$0xf]
    %v172 = vld [vmem:[%s1 + $0x264] sm:$0xf]
    %v173 = vld [vmem:[%s1 + $0x268] sm:$0xf]
    %v174 = vld [vmem:[%s1 + $0x26c] sm:$0xf]
    %v175 = vld [vmem:[%s1 + $0x270] sm:$0xf]
    %v176 = vld [vmem:[%s1 + $0x274] sm:$0xf]
    %v177 = vld [vmem:[%s1 + $0x278] sm:$0xf]
    %v178 = vld [vmem:[%s1 + $0x27c] sm:$0xf]
    %v179 = vld [vmem:[%s1 + $0x280] sm:$0xf]
    %v180 = vld [vmem:[%s1 + $0x284] sm:$0xf]
    %v181 = vld [vmem:[%s1 + $0x288] sm:$0xf]
    %v182 = vld [vmem:[%s1 + $0x28c] sm:$0xf]
    %v183 = vld [vmem:[%s1 + $0x290] sm:$0xf]
    %v184 = vld [vmem:[%s1 + $0x294] sm:$0xf]
    %v185 = vld [vmem:[%s1 + $0x298] sm:$0xf]
    %v186 = vld [vmem:[%s1 + $0x29c] sm:$0xf]
    %v187 = vld [vmem:[%s1 + $0x2a0] sm:$0xf]
    %v188 = vld [vmem:[%s1 + $0x2a4] sm:$0xf]
    %v189 = vld [vmem:[%s1 + $0x2a8] sm:$0xf]
    %v190 = vld [vmem:[%s1 + $0x2ac] sm:$0xf]
    %v191 = vld [vmem:[%s1 + $0x2b0] sm:$0xf]
    %v192 = vld [vmem:[%s1 + $0x2b4] sm:$0xf]
    %v193 = vld [vmem:[%s1 + $0x2b8] sm:$0xf]
    %v194 = vld [vmem:[%s1 + $0x2bc] sm:$0xf]
    %v195 = vld [vmem:[%s1 + $0x2c0] sm:$0xf]
    %v196 = vld [vmem:[%s1 + $0x2c4] sm:$0xf]
    %v197 = vld [vmem:[%s1 + $0x2c8] sm:$0xf]
    %v198 = vld [vmem:[%s1 + $0x2cc] sm:$0xf]
    %v199 = vld [vmem:[%s1 + $0x2d0] sm:$0xf]
    %v200 = vld [vmem:[%s1 + $0x2d4] sm:$0xf]
    %v201 = vld [vmem:[%s1 + $0x2d8] sm:$0xf]
    %v202 = vld [vmem:[%s1 + $0x2dc] sm:$0xf]
    %v203 = vld [vmem:[%s1 + $0x2e0] sm:$0xf]
    %v204 = vld [vmem:[%s1 + $0x2e4] sm:$0xf]
    %v205 = vld [vmem:[%s1 + $0x2e8] sm:$0xf]
    %v206 = vld [vmem:[%s1 + $0x2ec] sm:$0xf]
    %v207 = vld [vmem:[%s1 + $0x2f0] sm:$0xf]
    %v208 = vld [vmem:[%s1 + $0x2f4] sm:$0xf]
    %v209 = vld [vmem:[%s1 + $0x2f8] sm:$0xf]
    %v210 = vld [vmem:[%s1 + $0x2fc] sm:$0xf]
    %v211 = vld [vmem:[%s1 + $0x300] sm:$0xf]
    %v212 = vld [vmem:[%s1 + $0x304] sm:$0xf]
    %v213 = vld [vmem:[%s1 + $0x308] sm:$0xf]
    %v214 = vld [vmem:[%s1 + $0x30c] sm:$0xf]
    %v215 = vld [vmem:[%s1 + $0x310] sm:$0xf]
    %v216 = vld [vmem:[%s1 + $0x314] sm:$0xf]
    %v217 = vld [vmem:[%s1 + $0x318] sm:$0xf]
    %v218 = vld [vmem:[%s1 + $0x31c] sm:$0xf]
    %v219 = vld [vmem:[%s1 + $0x320] sm:$0xf]
    %v220 = vld [vmem:[%s1 + $0x324] sm:$0xf]
    %v221 = vld [vmem:[%s1 + $0x328] sm:$0xf]
    %v222 = vld [vmem:[%s1 + $0x32c] sm:$0xf]
    %v223 = vld [vmem:[%s1 + $0x330] sm:$0xf]
    %v224 = vld [vmem:[%s1 + $0x334] sm:$0xf]
    %v225 = vld [vmem:[%s1 + $0x338] sm:$0xf]
    %v226 = vld [vmem:[%s1 + $0x33c] sm:$0xf]
    %v227 = vld [vmem:[%s1 + $0x340] sm:$0xf]
    %v228 = vld [vmem:[%s1 + $0x344] sm:$0xf]
    %v229 = vld [vmem:[%s1 + $0x348] sm:$0xf]
    %v230 = vld [vmem:[%s1 + $0x34c] sm:$0xf]
    %v231 = vld [vmem:[%s1 + $0x350] sm:$0xf]
    %v232 = vld [vmem:[%s1 + $0x354] sm:$0xf]
    %v233 = vld [vmem:[%s1 + $0x358] sm:$0xf]
    %v234 = vld [vmem:[%s1 + $0x35c] sm:$0xf]
    %v235 = vld [vmem:[%s1 + $0x360] sm:$0xf]
    %v236 = vld [vmem:[%s1 + $0x364] sm:$0xf]
    %v237 = vld [vmem:[%s1 + $0x368] sm:$0xf]
    %v238 = vld [vmem:[%s1 + $0x36c] sm:$0xf]
    %v239 = vld [vmem:[%s1 + $0x370] sm:$0xf]
    %v240 = vld [vmem:[%s1 + $0x374] sm:$0xf]
    %v241 = vld [vmem:[%s1 + $0x378] sm:$0xf]
    %v242 = vld [vmem:[%s1 + $0x37c] sm:$0xf]
    %v243 = vld [vmem:[%s1 + $0x380] sm:$0xf]
    %v244 = vld [vmem:[%s1 + $0x384] sm:$0xf]
    %v245 = vld [vmem:[%s1 + $0x388] sm:$0xf]
    %v246 = vld [vmem:[%s1 + $0x38c] sm:$0xf]
    %v247 = vld [vmem:[%s1 + $0x390] sm:$0xf]
    %v248 = vld [vmem:[%s1 + $0x394] sm:$0xf]
    %v249 = vld [vmem:[%s1 + $0x398] sm:$0xf]
    %v250 = vld [vmem:[%s1 + $0x39c] sm:$0xf]
    %v251 = vld [vmem:[%s1 + $0x3a0] sm:$0xf]
    %v252 = vld [vmem:[%s1 + $0x3a4] sm:$0xf]
    %v253 = vld [vmem:[%s1 + $0x3a8] sm:$0xf]
    %v254 = vld [vmem:[%s1 + $0x3ac] sm:$0xf]
    %v255 = vld [vmem:[%s1 + $0x3b0] sm:$0xf]
    %v256 = vld [vmem:[%s1 + $0x3b4] sm:$0xf]
    %v257 = vld [vmem:[%s1 + $0x3b8] sm:$0xf]
    %v258 = vld [vmem:[%s1 + $0x3bc] sm:$0xf]
    %v259 = vld [vmem:[%s1 + $0x3c0] sm:$0xf]
    %v260 = vld [vmem:[%s1 + $0x3c4] sm:$0xf]
    %v261 = vld [vmem:[%s1 + $0x3c8] sm:$0xf]
    %v262 = vld [vmem:[%s1 + $0x3cc] sm:$0xf]
    %v263 = vld [vmem:[%s1 + $0x3d0] sm:$0xf]
    %v264 = vld [vmem:[%s1 + $0x3d4] sm:$0xf]
    %v265 = vld [vmem:[%s1 + $0x3d8] sm:$0xf]
    %v266 = vld [vmem:[%s1 + $0x3dc] sm:$0xf]
    %v267 = vld [vmem:[%s1 + $0x3e0] sm:$0xf]
    %v268 = vld [vmem:[%s1 + $0x3e4] sm:$0xf]
    %v269 = vld [vmem:[%s1 + $0x3e8] sm:$0xf]
    %v270 = vld [vmem:[%s1 + $0x3ec] sm:$0xf]
    %v271 = vld [vmem:[%s1 + $0x3f0] sm:$0xf]
    %v272 = vld [vmem:[%s1 + $0x3f4] sm:$0xf]
    %v273 = vld [vmem:[%s1 + $0x3f8] sm:$0xf]
    %v274 = vld [vmem:[%s1 + $0x3fc] sm:$0xf]
    %v275 = vld [vmem:[%s1 + $0x400] sm:$0xf]
    %v276 = vld [vmem:[%s1 + $0x404] sm:$0xf]
    %v277 = vld [vmem:[%s1 + $0x408] sm:$0xf]
    %v278 = vld [vmem:[%s1 + $0x40c] sm:$0xf]
    %v279 = vld [vmem:[%s1 + $0x410] sm:$0xf]
    %v280 = vld [vmem:[%s1 + $0x414] sm:$0xf]
    %v281 = vld [vmem:[%s1 + $0x418] sm:$0xf]
    %v282 = vld [vmem:[%s1 + $0x41c] sm:$0xf]
    %v283 = vld [vmem:[%s1 + $0x420] sm:$0xf]
    %v284 = vld [vmem:[%s1 + $0x424] sm:$0xf]
    %v285 = vld [vmem:[%s1 + $0x428] sm:$0xf]
    %v286 = vld [vmem:[%s1 + $0x42c] sm:$0xf]
    %v287 = vld [vmem:[%s1 + $0x430] sm:$0xf]
    %v288 = vld [vmem:[%s1 + $0x434] sm:$0xf]
    %v289 = vld [vmem:[%s1 + $0x438] sm:$0xf]
    %v290 = vld [vmem:[%s1 + $0x43c] sm:$0xf]
    %v291 = vld [vmem:[%s1 + $0x440] sm:$0xf]
    %v292 = vld [vmem:[%s1 + $0x444] sm:$0xf]
    %v293 = vld [vmem:[%s1 + $0x448] sm:$0xf]
    %v294 = vld [vmem:[%s1 + $0x44c] sm:$0xf]
    %v295 = vld [vmem:[%s1 + $0x450] sm:$0xf]
    %v296 = vld [vmem:[%s1 + $0x454] sm:$0xf]
    %v297 = vld [vmem:[%s1 + $0x458] sm:$0xf]
    %v298 = vld [vmem:[%s1 + $0x45c] sm:$0xf]
    %v299 = vld [vmem:[%s1 + $0x460] sm:$0xf]
    %v300 = vld [vmem:[%s1 + $0x464] sm:$0xf]
    %v301 = vld [vmem:[%s1 + $0x468] sm:$0xf]
    %v302 = vld [vmem:[%s1 + $0x46c] sm:$0xf]
    %v303 = vld [vmem:[%s1 + $0x470] sm:$0xf]
    %v304 = vld [vmem:[%s1 + $0x474] sm:$0xf]
    %v305 = vld [vmem:[%s1 + $0x478] sm:$0xf]
    %v306 = vld [vmem:[%s1 + $0x47c] sm:$0xf]
    %v307 = vld [vmem:[%s1 + $0x480] sm:$0xf]
    %v308 = vld [vmem:[%s1 + $0x484] sm:$0xf]
    %v309 = vld [vmem:[%s1 + $0x488] sm:$0xf]
    %v310 = vld [vmem:[%s1 + $0x48c] sm:$0xf]
    %v311 = vld [vmem:[%s1 + $0x490] sm:$0xf]
    %v312 = vld [vmem:[%s1 + $0x494] sm:$0xf]
    %v313 = vld [vmem:[%s1 + $0x498] sm:$0xf]
    %v314 = vld [vmem:[%s1 + $0x49c] sm:$0xf]
    %v315 = vld [vmem:[%s1 + $0x4a0] sm:$0xf]
    %v316 = vld [vmem:[%s1 + $0x4a4] sm:$0xf]
    %v317 = vld [vmem:[%s1 + $0x4a8] sm:$0xf]
    %v318 = vld [vmem:[%s1 + $0x4ac] sm:$0xf]
    %v319 = vld [vmem:[%s1 + $0x4b0] sm:$0xf]
    %v320 = vld [vmem:[%s1 + $0x4b4] sm:$0xf]
    %v321 = vld [vmem:[%s1 + $0x4b8] sm:$0xf]
    %v322 = vld [vmem:[%s1 + $0x4bc] sm:$0xf]
    %v323 = vld [vmem:[%s1 + $0x4c0] sm:$0xf]
    %v324 = vld [vmem:[%s1 + $0x4c4] sm:$0xf]
    %v325 = vld [vmem:[%s1 + $0x4c8] sm:$0xf]
    %v326 = vld [vmem:[%s1 + $0x4cc] sm:$0xf]
    %v327 = vld [vmem:[%s1 + $0x4d0] sm:$0xf]
    %v328 = vld [vmem:[%s1 + $0x4d4] sm:$0xf]
    %v329 = vld [vmem:[%s1 + $0x4d8] sm:$0xf]
    %v330 = vld [vmem:[%s1 + $0x4dc] sm:$0xf]
    %v331 = vld [vmem:[%s1 + $0x4e0] sm:$0xf]
    %v332 = vld [vmem:[%s1 + $0x4e4] sm:$0xf]
    %v333 = vld [vmem:[%s1 + $0x4e8] sm:$0xf]
    %v334 = vld [vmem:[%s1 + $0x4ec] sm:$0xf]
    %v335 = vld [vmem:[%s1 + $0x4f0] sm:$0xf]
    %v336 = vld [vmem:[%s1 + $0x4f4] sm:$0xf]
    %v337 = vld [vmem:[%s1 + $0x4f8] sm:$0xf]
    %v338 = vld [vmem:[%s1 + $0x4fc] sm:$0xf]
    %v339 = vld [vmem:[%s1 + $0x500] sm:$0xf]
    %v340 = vld [vmem:[%s1 + $0x504] sm:$0xf]
    %v341 = vld [vmem:[%s1 + $0x508] sm:$0xf]
    %v342 = vld [vmem:[%s1 + $0x50c] sm:$0xf]
    %v343 = vld [vmem:[%s2] sm:$0x1]
    %v345 = vperm.slane %v343, 0
    %348 = vst [vmem:[#allocation1] ss:$9 sm:$0xff] %v16
    %v349 = vld [vmem:[#allocation1] sm:$0xff]
    %v350 = vld [vmem:[#allocation1 + $0x9] sm:$0xff]
    %v351 = vld [vmem:[#allocation1 + $0x12] sm:$0xff]
    %v352 = vld [vmem:[#allocation1 + $0x1b] sm:$0xff]
    %v353 = vld [vmem:[#allocation1 + $0x24] sm:$0xff]
    %v354 = vld [vmem:[#allocation1 + $0x2d] sm:$0xff]
    %v355 = vld [vmem:[#allocation1 + $0x36] sm:$0xff]
    %v356 = vld [vmem:[#allocation1 + $0x3f] sm:$0xff]
    %358 = vst [vmem:[#allocation1] ss:$9 sm:$0xff] %v17
    %v359 = vld [vmem:[#allocation1] sm:$0xff]
    %v360 = vld [vmem:[#allocation1 + $0x9] sm:$0xff]
    %v361 = vld [vmem:[#allocation1 + $0x12] sm:$0xff]
    %v362 = vld [vmem:[#allocation1 + $0x1b] sm:$0xff]
    %v363 = vld [vmem:[#allocation1 + $0x24] sm:$0xff]
    %v364 = vld [vmem:[#allocation1 + $0x2d] sm:$0xff]
    %v365 = vld [vmem:[#allocation1 + $0x36] sm:$0xff]
    %v366 = vld [vmem:[#allocation1 + $0x3f] sm:$0xff]
    %368 = vst [vmem:[#allocation1] ss:$9 sm:$0xff] %v18
    %v369 = vld [vmem:[#allocation1] sm:$0xff]
    %v370 = vld [vmem:[#allocation1 + $0x9] sm:$0xff]
    %v371 = vld [vmem:[#allocation1 + $0x12] sm:$0xff]
    %v372 = vld [vmem:[#allocation1 + $0x1b] sm:$0xff]
    %v373 = vld [vmem:[#allocation1 + $0x24] sm:$0xff]
    %v718 = vunpack.c.l.b16 %v19
    %v719 = vunpack.c.l.b16 %v20
    %v720 = vunpack.c.l.b16 %v21
    %v721 = vunpack.c.l.b16 %v22
    %v722 = vunpack.c.l.b16 %v23
    %v723 = vunpack.c.l.b16 %v24
    %v724 = vunpack.c.l.b16 %v25
    %v725 = vunpack.c.l.b16 %v26
    %v726 = vunpack.c.l.b16 %v27
    %v727 = vunpack.c.l.b16 %v28
    %v728 = vunpack.c.l.b16 %v29
    %v729 = vunpack.c.l.b16 %v30
    %v730 = vunpack.c.l.b16 %v31
    %v731 = vunpack.c.l.b16 %v32
    %v732 = vunpack.c.l.b16 %v33
    %v733 = vunpack.c.l.b16 %v34
    %v734 = vunpack.c.l.b16 %v35
    %v735 = vunpack.c.l.b16 %v36
    %v736 = vunpack.c.l.b16 %v37
    %v737 = vunpack.c.l.b16 %v38
    %v738 = vunpack.c.l.b16 %v39
    %v739 = vunpack.c.l.b16 %v40
    %v740 = vunpack.c.l.b16 %v41
    %v741 = vunpack.c.l.b16 %v42
    %v742 = vunpack.c.l.b16 %v43
    %v743 = vunpack.c.l.b16 %v44
    %v744 = vunpack.c.l.b16 %v45
    %v745 = vunpack.c.l.b16 %v46
    %v746 = vunpack.c.l.b16 %v47
    %v747 = vunpack.c.l.b16 %v48
    %v748 = vunpack.c.l.b16 %v49
    %v749 = vunpack.c.l.b16 %v50
    %v750 = vunpack.c.l.b16 %v51
    %v751 = vunpack.c.l.b16 %v52
    %v752 = vunpack.c.l.b16 %v53
    %v753 = vunpack.c.l.b16 %v54
    %v754 = vunpack.c.l.b16 %v55
    %v755 = vunpack.c.l.b16 %v56
    %v756 = vunpack.c.l.b16 %v57
    %v757 = vunpack.c.l.b16 %v58
    %v758 = vunpack.c.l.b16 %v59
    %v759 = vunpack.c.l.b16 %v60
    %v760 = vunpack.c.l.b16 %v61
    %v761 = vunpack.c.l.b16 %v62
    %v762 = vunpack.c.l.b16 %v63
    %v763 = vunpack.c.l.b16 %v64
    %v764 = vunpack.c.l.b16 %v65
    %v765 = vunpack.c.l.b16 %v66
    %v766 = vunpack.c.l.b16 %v67
    %v767 = vunpack.c.l.b16 %v68
    %v768 = vunpack.c.l.b16 %v69
    %v769 = vunpack.c.l.b16 %v70
    %v770 = vunpack.c.l.b16 %v71
    %v771 = vunpack.c.l.b16 %v72
    %v772 = vunpack.c.l.b16 %v73
    %v773 = vunpack.c.l.b16 %v74
    %v774 = vunpack.c.l.b16 %v75
    %v775 = vunpack.c.l.b16 %v76
    %v776 = vunpack.c.l.b16 %v77
    %v777 = vunpack.c.l.b16 %v78
    %v778 = vunpack.c.l.b16 %v79
    %v779 = vunpack.c.l.b16 %v80
    %v780 = vunpack.c.l.b16 %v81
    %v781 = vunpack.c.l.b16 %v82
    %v782 = vunpack.c.l.b16 %v83
    %v783 = vunpack.c.l.b16 %v84
    %v784 = vunpack.c.l.b16 %v85
    %v785 = vunpack.c.l.b16 %v86
    %v786 = vunpack.c.l.b16 %v87
    %v787 = vunpack.c.l.b16 %v88
    %v788 = vunpack.c.l.b16 %v89
    %v789 = vunpack.c.l.b16 %v90
    %v790 = vunpack.c.l.b16 %v91
    %v791 = vunpack.c.l.b16 %v92
    %v792 = vunpack.c.l.b16 %v93
    %v793 = vunpack.c.l.b16 %v94
    %v794 = vunpack.c.l.b16 %v95
    %v795 = vunpack.c.l.b16 %v96
    %v796 = vunpack.c.l.b16 %v97
    %v797 = vunpack.c.l.b16 %v98
    %v798 = vunpack.c.l.b16 %v99
    %v799 = vunpack.c.l.b16 %v100
    %v800 = vunpack.c.l.b16 %v101
    %v801 = vunpack.c.l.b16 %v102
    %v802 = vunpack.c.l.b16 %v103
    %v803 = vunpack.c.l.b16 %v104
    %v804 = vunpack.c.l.b16 %v105
    %v805 = vunpack.c.l.b16 %v106
    %v806 = vunpack.c.l.b16 %v107
    %v807 = vunpack.c.l.b16 %v108
    %v808 = vunpack.c.l.b16 %v109
    %v809 = vunpack.c.l.b16 %v110
    %v810 = vunpack.c.l.b16 %v111
    %v811 = vunpack.c.l.b16 %v112
    %v812 = vunpack.c.l.b16 %v113
    %v813 = vunpack.c.l.b16 %v114
    %v814 = vunpack.c.l.b16 %v115
    %v815 = vunpack.c.l.b16 %v116
    %v816 = vunpack.c.l.b16 %v117
    %v817 = vunpack.c.l.b16 %v118
    %v818 = vunpack.c.l.b16 %v119
    %v819 = vunpack.c.l.b16 %v120
    %v820 = vunpack.c.l.b16 %v121
    %v821 = vunpack.c.l.b16 %v122
    %v822 = vunpack.c.l.b16 %v123
    %v823 = vunpack.c.l.b16 %v124
    %v824 = vunpack.c.l.b16 %v125
    %v825 = vunpack.c.l.b16 %v126
    %v826 = vunpack.c.l.b16 %v127
    %v827 = vunpack.c.l.b16 %v128
    %v828 = vunpack.c.l.b16 %v129
    %v829 = vunpack.c.l.b16 %v130
    %v830 = vunpack.c.l.b16 %v131
    %v831 = vunpack.c.l.b16 %v132
    %v832 = vunpack.c.l.b16 %v133
    %v833 = vunpack.c.l.b16 %v134
    %v834 = vunpack.c.l.b16 %v135
    %v835 = vunpack.c.l.b16 %v136
    %v836 = vunpack.c.l.b16 %v137
    %v837 = vunpack.c.l.b16 %v138
    %v838 = vunpack.c.l.b16 %v139
    %v839 = vunpack.c.l.b16 %v140
    %v840 = vunpack.c.l.b16 %v141
    %v841 = vunpack.c.l.b16 %v142
    %v842 = vunpack.c.l.b16 %v143
    %v843 = vunpack.c.l.b16 %v144
    %v844 = vunpack.c.l.b16 %v145
    %v845 = vunpack.c.l.b16 %v146
    %v846 = vunpack.c.l.b16 %v147
    %v847 = vunpack.c.l.b16 %v148
    %v848 = vunpack.c.l.b16 %v149
    %v849 = vunpack.c.l.b16 %v150
    %v850 = vunpack.c.l.b16 %v151
    %v851 = vunpack.c.l.b16 %v152
    %v852 = vunpack.c.l.b16 %v153
    %v853 = vunpack.c.l.b16 %v154
    %v854 = vunpack.c.l.b16 %v155
    %v855 = vunpack.c.l.b16 %v156
    %v856 = vunpack.c.l.b16 %v157
    %v857 = vunpack.c.l.b16 %v158
    %v858 = vunpack.c.l.b16 %v159
    %v859 = vunpack.c.l.b16 %v160
    %v860 = vunpack.c.l.b16 %v161
    %v861 = vunpack.c.l.b16 %v162
    %v862 = vunpack.c.l.b16 %v163
    %v863 = vunpack.c.l.b16 %v164
    %v864 = vunpack.c.l.b16 %v165
    %v865 = vunpack.c.l.b16 %v166
    %v866 = vunpack.c.l.b16 %v167
    %v867 = vunpack.c.l.b16 %v168
    %v868 = vunpack.c.l.b16 %v169
    %v869 = vunpack.c.l.b16 %v170
    %v870 = vunpack.c.l.b16 %v171
    %v871 = vunpack.c.l.b16 %v172
    %v872 = vunpack.c.l.b16 %v173
    %v873 = vunpack.c.l.b16 %v174
    %v874 = vunpack.c.l.b16 %v175
    %v875 = vunpack.c.l.b16 %v176
    %v876 = vunpack.c.l.b16 %v177
    %v877 = vunpack.c.l.b16 %v178
    %v878 = vunpack.c.l.b16 %v179
    %v879 = vunpack.c.l.b16 %v180
    %v880 = vunpack.c.l.b16 %v181
    %v881 = vunpack.c.l.b16 %v182
    %v882 = vunpack.c.l.b16 %v183
    %v883 = vunpack.c.l.b16 %v184
    %v884 = vunpack.c.l.b16 %v185
    %v885 = vunpack.c.l.b16 %v186
    %v886 = vunpack.c.l.b16 %v187
    %v887 = vunpack.c.l.b16 %v188
    %v888 = vunpack.c.l.b16 %v189
    %v889 = vunpack.c.l.b16 %v190
    %v890 = vunpack.c.l.b16 %v191
    %v891 = vunpack.c.l.b16 %v192
    %v892 = vunpack.c.l.b16 %v193
    %v893 = vunpack.c.l.b16 %v194
    %v894 = vunpack.c.l.b16 %v195
    %v895 = vunpack.c.l.b16 %v196
    %v896 = vunpack.c.l.b16 %v197
    %v897 = vunpack.c.l.b16 %v198
    %v898 = vunpack.c.l.b16 %v199
    %v899 = vunpack.c.l.b16 %v200
    %v900 = vunpack.c.l.b16 %v201
    %v901 = vunpack.c.l.b16 %v202
    %v902 = vunpack.c.l.b16 %v203
    %v903 = vunpack.c.l.b16 %v204
    %v904 = vunpack.c.l.b16 %v205
    %v905 = vunpack.c.l.b16 %v206
    %v906 = vunpack.c.l.b16 %v207
    %v907 = vunpack.c.l.b16 %v208
    %v908 = vunpack.c.l.b16 %v209
    %v909 = vunpack.c.l.b16 %v210
    %v910 = vunpack.c.l.b16 %v211
    %v911 = vunpack.c.l.b16 %v212
    %v912 = vunpack.c.l.b16 %v213
    %v913 = vunpack.c.l.b16 %v214
    %v914 = vunpack.c.l.b16 %v215
    %v915 = vunpack.c.l.b16 %v216
    %v916 = vunpack.c.l.b16 %v217
    %v917 = vunpack.c.l.b16 %v218
    %v918 = vunpack.c.l.b16 %v219
    %v919 = vunpack.c.l.b16 %v220
    %v920 = vunpack.c.l.b16 %v221
    %v921 = vunpack.c.l.b16 %v222
    %v922 = vunpack.c.l.b16 %v223
    %v923 = vunpack.c.l.b16 %v224
    %v924 = vunpack.c.l.b16 %v225
    %v925 = vunpack.c.l.b16 %v226
    %v926 = vunpack.c.l.b16 %v227
    %v927 = vunpack.c.l.b16 %v228
    %v928 = vunpack.c.l.b16 %v229
    %v929 = vunpack.c.l.b16 %v230
    %v930 = vunpack.c.l.b16 %v231
    %v931 = vunpack.c.l.b16 %v232
    %v932 = vunpack.c.l.b16 %v233
    %v933 = vunpack.c.l.b16 %v234
    %v934 = vunpack.c.l.b16 %v235
    %v935 = vunpack.c.l.b16 %v236
    %v936 = vunpack.c.l.b16 %v237
    %v937 = vunpack.c.l.b16 %v238
    %v938 = vunpack.c.l.b16 %v239
    %v939 = vunpack.c.l.b16 %v240
    %v940 = vunpack.c.l.b16 %v241
    %v941 = vunpack.c.l.b16 %v242
    %v942 = vunpack.c.l.b16 %v243
    %v943 = vunpack.c.l.b16 %v244
    %v944 = vunpack.c.l.b16 %v245
    %v945 = vunpack.c.l.b16 %v246
    %v946 = vunpack.c.l.b16 %v247
    %v947 = vunpack.c.l.b16 %v248
    %v948 = vunpack.c.l.b16 %v249
    %v949 = vunpack.c.l.b16 %v250
    %v950 = vunpack.c.l.b16 %v251
    %v951 = vunpack.c.l.b16 %v252
    %v952 = vunpack.c.l.b16 %v253
    %v953 = vunpack.c.l.b16 %v254
    %v954 = vunpack.c.l.b16 %v255
    %v955 = vunpack.c.l.b16 %v256
    %v956 = vunpack.c.l.b16 %v257
    %v957 = vunpack.c.l.b16 %v258
    %v958 = vunpack.c.l.b16 %v259
    %v959 = vunpack.c.l.b16 %v260
    %v960 = vunpack.c.l.b16 %v261
    %v961 = vunpack.c.l.b16 %v262
    %v962 = vunpack.c.l.b16 %v263
    %v963 = vunpack.c.l.b16 %v264
    %v964 = vunpack.c.l.b16 %v265
    %v965 = vunpack.c.l.b16 %v266
    %v966 = vunpack.c.l.b16 %v267
    %v967 = vunpack.c.l.b16 %v268
    %v968 = vunpack.c.l.b16 %v269
    %v969 = vunpack.c.l.b16 %v270
    %v970 = vunpack.c.l.b16 %v271
    %v971 = vunpack.c.l.b16 %v272
    %v972 = vunpack.c.l.b16 %v273
    %v973 = vunpack.c.l.b16 %v274
    %v974 = vunpack.c.l.b16 %v275
    %v975 = vunpack.c.l.b16 %v276
    %v976 = vunpack.c.l.b16 %v277
    %v977 = vunpack.c.l.b16 %v278
    %v978 = vunpack.c.l.b16 %v279
    %v979 = vunpack.c.l.b16 %v280
    %v980 = vunpack.c.l.b16 %v281
    %v981 = vunpack.c.l.b16 %v282
    %v982 = vunpack.c.l.b16 %v283
    %v983 = vunpack.c.l.b16 %v284
    %v984 = vunpack.c.l.b16 %v285
    %v985 = vunpack.c.l.b16 %v286
    %v986 = vunpack.c.l.b16 %v287
    %v987 = vunpack.c.l.b16 %v288
    %v988 = vunpack.c.l.b16 %v289
    %v989 = vunpack.c.l.b16 %v290
    %v990 = vunpack.c.l.b16 %v291
    %v991 = vunpack.c.l.b16 %v292
    %v992 = vunpack.c.l.b16 %v293
    %v993 = vunpack.c.l.b16 %v294
    %v994 = vunpack.c.l.b16 %v295
    %v995 = vunpack.c.l.b16 %v296
    %v996 = vunpack.c.l.b16 %v297
    %v997 = vunpack.c.l.b16 %v298
    %v998 = vunpack.c.l.b16 %v299
    %v999 = vunpack.c.l.b16 %v300
    %v1000 = vunpack.c.l.b16 %v301
    %v1001 = vunpack.c.l.b16 %v302
    %v1002 = vunpack.c.l.b16 %v303
    %v1003 = vunpack.c.l.b16 %v304
    %v1004 = vunpack.c.l.b16 %v305
    %v1005 = vunpack.c.l.b16 %v306
    %v1006 = vunpack.c.l.b16 %v307
    %v1007 = vunpack.c.l.b16 %v308
    %v1008 = vunpack.c.l.b16 %v309
    %v1009 = vunpack.c.l.b16 %v310
    %v1010 = vunpack.c.l.b16 %v311
    %v1011 = vunpack.c.l.b16 %v312
    %v1012 = vunpack.c.l.b16 %v313
    %v1013 = vunpack.c.l.b16 %v314
    %v1014 = vunpack.c.l.b16 %v315
    %v1015 = vunpack.c.l.b16 %v316
    %v1016 = vunpack.c.l.b16 %v317
    %v1017 = vunpack.c.l.b16 %v318
    %v1018 = vunpack.c.l.b16 %v319
    %v1019 = vunpack.c.l.b16 %v320
    %v1020 = vunpack.c.l.b16 %v321
    %v1021 = vunpack.c.l.b16 %v322
    %v1022 = vunpack.c.l.b16 %v323
    %v1023 = vunpack.c.l.b16 %v324
    %v1024 = vunpack.c.l.b16 %v325
    %v1025 = vunpack.c.l.b16 %v326
    %v1026 = vunpack.c.l.b16 %v327
    %v1027 = vunpack.c.l.b16 %v328
    %v1028 = vunpack.c.l.b16 %v329
    %v1029 = vunpack.c.l.b16 %v330
    %v1030 = vunpack.c.l.b16 %v331
    %v1031 = vunpack.c.l.b16 %v332
    %v1032 = vunpack.c.l.b16 %v333
    %v1033 = vunpack.c.l.b16 %v334
    %v1034 = vunpack.c.l.b16 %v335
    %v1035 = vunpack.c.l.b16 %v336
    %v1036 = vunpack.c.l.b16 %v337
    %v1037 = vunpack.c.l.b16 %v338
    %v1038 = vunpack.c.l.b16 %v339
    %v1039 = vunpack.c.l.b16 %v340
    %v1040 = vunpack.c.l.b16 %v341
    %v1041 = vunpack.c.l.b16 %v342
    %v1042 = vpack.c.b16 %v719, %v718
    %v1043 = vpack.c.b16 %v721, %v720
    %v1044 = vpack.c.b16 %v723, %v722
    %v1045 = vpack.c.b16 %v725, %v724
    %v1046 = vpack.c.b16 %v727, %v726
    %v1047 = vpack.c.b16 %v729, %v728
    %v1048 = vpack.c.b16 %v731, %v730
    %v1049 = vpack.c.b16 %v733, %v732
    %v1050 = vpack.c.b16 %v735, %v734
    %v1051 = vpack.c.b16 %v737, %v736
    %v1052 = vpack.c.b16 %v739, %v738
    %v1053 = vpack.c.b16 %v741, %v740
    %v1054 = vpack.c.b16 %v743, %v742
    %v1055 = vpack.c.b16 %v745, %v744
    %v1056 = vpack.c.b16 %v747, %v746
    %v1057 = vpack.c.b16 %v749, %v748
    %v1058 = vpack.c.b16 %v751, %v750
    %v1059 = vpack.c.b16 %v753, %v752
    %v1060 = vpack.c.b16 %v755, %v754
    %v1061 = vpack.c.b16 %v757, %v756
    %v1062 = vpack.c.b16 %v759, %v758
    %v1063 = vpack.c.b16 %v761, %v760
    %v1064 = vpack.c.b16 %v763, %v762
    %v1065 = vpack.c.b16 %v765, %v764
    %v1066 = vpack.c.b16 %v767, %v766
    %v1067 = vpack.c.b16 %v769, %v768
    %v1068 = vpack.c.b16 %v771, %v770
    %v1069 = vpack.c.b16 %v773, %v772
    %v1070 = vpack.c.b16 %v775, %v774
    %v1071 = vpack.c.b16 %v777, %v776
    %v1072 = vpack.c.b16 %v779, %v778
    %v1073 = vpack.c.b16 %v781, %v780
    %v1074 = vpack.c.b16 %v783, %v782
    %v1075 = vpack.c.b16 %v785, %v784
    %v1076 = vpack.c.b16 %v787, %v786
    %v1077 = vpack.c.b16 %v789, %v788
    %v1078 = vpack.c.b16 %v791, %v790
    %v1079 = vpack.c.b16 %v793, %v792
    %v1080 = vpack.c.b16 %v795, %v794
    %v1081 = vpack.c.b16 %v797, %v796
    %v1082 = vpack.c.b16 %v799, %v798
    %v1083 = vpack.c.b16 %v801, %v800
    %v1084 = vpack.c.b16 %v803, %v802
    %v1085 = vpack.c.b16 %v805, %v804
    %v1086 = vpack.c.b16 %v807, %v806
    %v1087 = vpack.c.b16 %v809, %v808
    %v1088 = vpack.c.b16 %v811, %v810
    %v1089 = vpack.c.b16 %v813, %v812
    %v1090 = vpack.c.b16 %v815, %v814
    %v1091 = vpack.c.b16 %v817, %v816
    %v1092 = vpack.c.b16 %v819, %v818
    %v1093 = vpack.c.b16 %v821, %v820
    %v1094 = vpack.c.b16 %v823, %v822
    %v1095 = vpack.c.b16 %v825, %v824
    %v1096 = vpack.c.b16 %v827, %v826
    %v1097 = vpack.c.b16 %v829, %v828
    %v1098 = vpack.c.b16 %v831, %v830
    %v1099 = vpack.c.b16 %v833, %v832
    %v1100 = vpack.c.b16 %v835, %v834
    %v1101 = vpack.c.b16 %v837, %v836
    %v1102 = vpack.c.b16 %v839, %v838
    %v1103 = vpack.c.b16 %v841, %v840
    %v1104 = vpack.c.b16 %v843, %v842
    %v1105 = vpack.c.b16 %v845, %v844
    %v1106 = vpack.c.b16 %v847, %v846
    %v1107 = vpack.c.b16 %v849, %v848
    %v1108 = vpack.c.b16 %v851, %v850
    %v1109 = vpack.c.b16 %v853, %v852
    %v1110 = vpack.c.b16 %v855, %v854
    %v1111 = vpack.c.b16 %v857, %v856
    %v1112 = vpack.c.b16 %v859, %v858
    %v1113 = vpack.c.b16 %v861, %v860
    %v1114 = vpack.c.b16 %v863, %v862
    %v1115 = vpack.c.b16 %v865, %v864
    %v1116 = vpack.c.b16 %v867, %v866
    %v1117 = vpack.c.b16 %v869, %v868
    %v1118 = vpack.c.b16 %v871, %v870
    %v1119 = vpack.c.b16 %v873, %v872
    %v1120 = vpack.c.b16 %v875, %v874
    %v1121 = vpack.c.b16 %v877, %v876
    %v1122 = vpack.c.b16 %v879, %v878
    %v1123 = vpack.c.b16 %v881, %v880
    %v1124 = vpack.c.b16 %v883, %v882
    %v1125 = vpack.c.b16 %v885, %v884
    %v1126 = vpack.c.b16 %v887, %v886
    %v1127 = vpack.c.b16 %v889, %v888
    %v1128 = vpack.c.b16 %v891, %v890
    %v1129 = vpack.c.b16 %v893, %v892
    %v1130 = vpack.c.b16 %v895, %v894
    %v1131 = vpack.c.b16 %v897, %v896
    %v1132 = vpack.c.b16 %v899, %v898
    %v1133 = vpack.c.b16 %v901, %v900
    %v1134 = vpack.c.b16 %v903, %v902
    %v1135 = vpack.c.b16 %v905, %v904
    %v1136 = vpack.c.b16 %v907, %v906
    %v1137 = vpack.c.b16 %v909, %v908
    %v1138 = vpack.c.b16 %v911, %v910
    %v1139 = vpack.c.b16 %v913, %v912
    %v1140 = vpack.c.b16 %v915, %v914
    %v1141 = vpack.c.b16 %v917, %v916
    %v1142 = vpack.c.b16 %v919, %v918
    %v1143 = vpack.c.b16 %v921, %v920
    %v1144 = vpack.c.b16 %v923, %v922
    %v1145 = vpack.c.b16 %v925, %v924
    %v1146 = vpack.c.b16 %v927, %v926
    %v1147 = vpack.c.b16 %v929, %v928
    %v1148 = vpack.c.b16 %v931, %v930
    %v1149 = vpack.c.b16 %v933, %v932
    %v1150 = vpack.c.b16 %v935, %v934
    %v1151 = vpack.c.b16 %v937, %v936
    %v1152 = vpack.c.b16 %v939, %v938
    %v1153 = vpack.c.b16 %v941, %v940
    %v1154 = vpack.c.b16 %v943, %v942
    %v1155 = vpack.c.b16 %v945, %v944
    %v1156 = vpack.c.b16 %v947, %v946
    %v1157 = vpack.c.b16 %v949, %v948
    %v1158 = vpack.c.b16 %v951, %v950
    %v1159 = vpack.c.b16 %v953, %v952
    %v1160 = vpack.c.b16 %v955, %v954
    %v1161 = vpack.c.b16 %v957, %v956
    %v1162 = vpack.c.b16 %v959, %v958
    %v1163 = vpack.c.b16 %v961, %v960
    %v1164 = vpack.c.b16 %v963, %v962
    %v1165 = vpack.c.b16 %v965, %v964
    %v1166 = vpack.c.b16 %v967, %v966
    %v1167 = vpack.c.b16 %v969, %v968
    %v1168 = vpack.c.b16 %v971, %v970
    %v1169 = vpack.c.b16 %v973, %v972
    %v1170 = vpack.c.b16 %v975, %v974
    %v1171 = vpack.c.b16 %v977, %v976
    %v1172 = vpack.c.b16 %v979, %v978
    %v1173 = vpack.c.b16 %v981, %v980
    %v1174 = vpack.c.b16 %v983, %v982
    %v1175 = vpack.c.b16 %v985, %v984
    %v1176 = vpack.c.b16 %v987, %v986
    %v1177 = vpack.c.b16 %v989, %v988
    %v1178 = vpack.c.b16 %v991, %v990
    %v1179 = vpack.c.b16 %v993, %v992
    %v1180 = vpack.c.b16 %v995, %v994
    %v1181 = vpack.c.b16 %v997, %v996
    %v1182 = vpack.c.b16 %v999, %v998
    %v1183 = vpack.c.b16 %v1001, %v1000
    %v1184 = vpack.c.b16 %v1003, %v1002
    %v1185 = vpack.c.b16 %v1005, %v1004
    %v1186 = vpack.c.b16 %v1007, %v1006
    %v1187 = vpack.c.b16 %v1009, %v1008
    %v1188 = vpack.c.b16 %v1011, %v1010
    %v1189 = vpack.c.b16 %v1013, %v1012
    %v1190 = vpack.c.b16 %v1015, %v1014
    %v1191 = vpack.c.b16 %v1017, %v1016
    %v1192 = vpack.c.b16 %v1019, %v1018
    %v1193 = vpack.c.b16 %v1021, %v1020
    %v1194 = vpack.c.b16 %v1023, %v1022
    %v1195 = vpack.c.b16 %v1025, %v1024
    %v1196 = vpack.c.b16 %v1027, %v1026
    %v1197 = vpack.c.b16 %v1029, %v1028
    %v1198 = vpack.c.b16 %v1031, %v1030
    %v1199 = vpack.c.b16 %v1033, %v1032
    %v1200 = vpack.c.b16 %v1035, %v1034
    %v1201 = vpack.c.b16 %v1037, %v1036
    %v1202 = vpack.c.b16 %v1039, %v1038
    %v1203 = vpack.c.b16 %v1041, %v1040
    %vm1366 = vcmask 261120
    %v1367 = vsel %vm1366, %v373, 0
    %1369 = vmatpush.bf16.msra.mxu0 %v1049
    %1370 = vmatpush.bf16.msra.mxu0 %v1048
    %1371 = vmatpush.bf16.msra.mxu0 %v1047
    %1372 = vmatpush.bf16.msra.mxu0 %v1046
    %1373 = vmatpush.bf16.msra.mxu0 %v1045
    %1374 = vmatpush.bf16.msra.mxu0 %v1044
    %1375 = vmatpush.bf16.msra.mxu0 %v1043
    %1376 = vmatpush.bf16.msra.mxu0 %v1042
    %1377 = vmatmul.bf16.gmra.mxu0 %v349
    %v1378 = vpop.f32.mrf.mxu0
    %v1379 = vadd.f32 %v345, %v1378
    %v1380 = vpop.f32.mrf.mxu0
    %1381 = vdwg.mxu0
    %1382 = vmatpush.bf16.msra.mxu0 %v1057
    %1383 = vmatpush.bf16.msra.mxu0 %v1056
    %1384 = vmatpush.bf16.msra.mxu0 %v1055
    %1385 = vmatpush.bf16.msra.mxu0 %v1054
    %1386 = vmatpush.bf16.msra.mxu0 %v1053
    %1387 = vmatpush.bf16.msra.mxu0 %v1052
    %1388 = vmatpush.bf16.msra.mxu0 %v1051
    %1389 = vmatpush.bf16.msra.mxu0 %v1050
    %1390 = vmatmul.bf16.gmra.mxu0 %v350
    %v1391 = vpop.f32.mrf.mxu0
    %v1392 = vadd.f32 %v1379, %v1391
    %v1393 = vpop.f32.mrf.mxu0
    %1394 = vdwg.mxu0
    %1395 = vmatpush.bf16.msra.mxu0 %v1065
    %1396 = vmatpush.bf16.msra.mxu0 %v1064
    %1397 = vmatpush.bf16.msra.mxu0 %v1063
    %1398 = vmatpush.bf16.msra.mxu0 %v1062
    %1399 = vmatpush.bf16.msra.mxu0 %v1061
    %1400 = vmatpush.bf16.msra.mxu0 %v1060
    %1401 = vmatpush.bf16.msra.mxu0 %v1059
    %1402 = vmatpush.bf16.msra.mxu0 %v1058
    %1403 = vmatmul.bf16.gmra.mxu0 %v351
    %v1404 = vpop.f32.mrf.mxu0
    %v1405 = vadd.f32 %v1392, %v1404
    %v1406 = vpop.f32.mrf.mxu0
    %1407 = vdwg.mxu0
    %1408 = vmatpush.bf16.msra.mxu0 %v1073
    %1409 = vmatpush.bf16.msra.mxu0 %v1072
    %1410 = vmatpush.bf16.msra.mxu0 %v1071
    %1411 = vmatpush.bf16.msra.mxu0 %v1070
    %1412 = vmatpush.bf16.msra.mxu0 %v1069
    %1413 = vmatpush.bf16.msra.mxu0 %v1068
    %1414 = vmatpush.bf16.msra.mxu0 %v1067
    %1415 = vmatpush.bf16.msra.mxu0 %v1066
    %1416 = vmatmul.bf16.gmra.mxu0 %v352
    %v1417 = vpop.f32.mrf.mxu0
    %v1418 = vadd.f32 %v1405, %v1417
    %v1419 = vpop.f32.mrf.mxu0
    %1420 = vdwg.mxu0
    %1421 = vmatpush.bf16.msra.mxu0 %v1081
    %1422 = vmatpush.bf16.msra.mxu0 %v1080
    %1423 = vmatpush.bf16.msra.mxu0 %v1079
    %1424 = vmatpush.bf16.msra.mxu0 %v1078
    %1425 = vmatpush.bf16.msra.mxu0 %v1077
    %1426 = vmatpush.bf16.msra.mxu0 %v1076
    %1427 = vmatpush.bf16.msra.mxu0 %v1075
    %1428 = vmatpush.bf16.msra.mxu0 %v1074
    %1429 = vmatmul.bf16.gmra.mxu0 %v353
    %v1430 = vpop.f32.mrf.mxu0
    %v1431 = vadd.f32 %v1418, %v1430
    %v1432 = vpop.f32.mrf.mxu0
    %1433 = vdwg.mxu0
    %1434 = vmatpush.bf16.msra.mxu0 %v1089
    %1435 = vmatpush.bf16.msra.mxu0 %v1088
    %1436 = vmatpush.bf16.msra.mxu0 %v1087
    %1437 = vmatpush.bf16.msra.mxu0 %v1086
    %1438 = vmatpush.bf16.msra.mxu0 %v1085
    %1439 = vmatpush.bf16.msra.mxu0 %v1084
    %1440 = vmatpush.bf16.msra.mxu0 %v1083
    %1441 = vmatpush.bf16.msra.mxu0 %v1082
    %1442 = vmatmul.bf16.gmra.mxu0 %v354
    %v1443 = vpop.f32.mrf.mxu0
    %v1444 = vadd.f32 %v1431, %v1443
    %v1445 = vpop.f32.mrf.mxu0
    %1446 = vdwg.mxu0
    %1447 = vmatpush.bf16.msra.mxu0 %v1097
    %1448 = vmatpush.bf16.msra.mxu0 %v1096
    %1449 = vmatpush.bf16.msra.mxu0 %v1095
    %1450 = vmatpush.bf16.msra.mxu0 %v1094
    %1451 = vmatpush.bf16.msra.mxu0 %v1093
    %1452 = vmatpush.bf16.msra.mxu0 %v1092
    %1453 = vmatpush.bf16.msra.mxu0 %v1091
    %1454 = vmatpush.bf16.msra.mxu0 %v1090
    %1455 = vmatmul.bf16.gmra.mxu0 %v355
    %v1456 = vpop.f32.mrf.mxu0
    %v1457 = vadd.f32 %v1444, %v1456
    %v1458 = vpop.f32.mrf.mxu0
    %1459 = vdwg.mxu0
    %1460 = vmatpush.bf16.msra.mxu0 %v1105
    %1461 = vmatpush.bf16.msra.mxu0 %v1104
    %1462 = vmatpush.bf16.msra.mxu0 %v1103
    %1463 = vmatpush.bf16.msra.mxu0 %v1102
    %1464 = vmatpush.bf16.msra.mxu0 %v1101
    %1465 = vmatpush.bf16.msra.mxu0 %v1100
    %1466 = vmatpush.bf16.msra.mxu0 %v1099
    %1467 = vmatpush.bf16.msra.mxu0 %v1098
    %1468 = vmatmul.bf16.gmra.mxu0 %v356
    %v1469 = vpop.f32.mrf.mxu0
    %v1470 = vadd.f32 %v1457, %v1469
    %v1471 = vpop.f32.mrf.mxu0
    %1472 = vdwg.mxu0
    %1473 = vmatpush.bf16.msra.mxu0 %v1113
    %1474 = vmatpush.bf16.msra.mxu0 %v1112
    %1475 = vmatpush.bf16.msra.mxu0 %v1111
    %1476 = vmatpush.bf16.msra.mxu0 %v1110
    %1477 = vmatpush.bf16.msra.mxu0 %v1109
    %1478 = vmatpush.bf16.msra.mxu0 %v1108
    %1479 = vmatpush.bf16.msra.mxu0 %v1107
    %1480 = vmatpush.bf16.msra.mxu0 %v1106
    %1481 = vmatmul.bf16.gmra.mxu0 %v359
    %v1482 = vpop.f32.mrf.mxu0
    %v1483 = vadd.f32 %v1470, %v1482
    %v1484 = vpop.f32.mrf.mxu0
    %1485 = vdwg.mxu0
    %1486 = vmatpush.bf16.msra.mxu0 %v1121
    %1487 = vmatpush.bf16.msra.mxu0 %v1120
    %1488 = vmatpush.bf16.msra.mxu0 %v1119
    %1489 = vmatpush.bf16.msra.mxu0 %v1118
    %1490 = vmatpush.bf16.msra.mxu0 %v1117
    %1491 = vmatpush.bf16.msra.mxu0 %v1116
    %1492 = vmatpush.bf16.msra.mxu0 %v1115
    %1493 = vmatpush.bf16.msra.mxu0 %v1114
    %1494 = vmatmul.bf16.gmra.mxu0 %v360
    %v1495 = vpop.f32.mrf.mxu0
    %v1496 = vadd.f32 %v1483, %v1495
    %v1497 = vpop.f32.mrf.mxu0
    %1498 = vdwg.mxu0
    %1499 = vmatpush.bf16.msra.mxu0 %v1129
    %1500 = vmatpush.bf16.msra.mxu0 %v1128
    %1501 = vmatpush.bf16.msra.mxu0 %v1127
    %1502 = vmatpush.bf16.msra.mxu0 %v1126
    %1503 = vmatpush.bf16.msra.mxu0 %v1125
    %1504 = vmatpush.bf16.msra.mxu0 %v1124
    %1505 = vmatpush.bf16.msra.mxu0 %v1123
    %1506 = vmatpush.bf16.msra.mxu0 %v1122
    %1507 = vmatmul.bf16.gmra.mxu0 %v361
    %v1508 = vpop.f32.mrf.mxu0
    %v1509 = vadd.f32 %v1496, %v1508
    %v1510 = vpop.f32.mrf.mxu0
    %1511 = vdwg.mxu0
    %1512 = vmatpush.bf16.msra.mxu0 %v1137
    %1513 = vmatpush.bf16.msra.mxu0 %v1136
    %1514 = vmatpush.bf16.msra.mxu0 %v1135
    %1515 = vmatpush.bf16.msra.mxu0 %v1134
    %1516 = vmatpush.bf16.msra.mxu0 %v1133
    %1517 = vmatpush.bf16.msra.mxu0 %v1132
    %1518 = vmatpush.bf16.msra.mxu0 %v1131
    %1519 = vmatpush.bf16.msra.mxu0 %v1130
    %1520 = vmatmul.bf16.gmra.mxu0 %v362
    %v1521 = vpop.f32.mrf.mxu0
    %v1522 = vadd.f32 %v1509, %v1521
    %v1523 = vpop.f32.mrf.mxu0
    %1524 = vdwg.mxu0
    %1525 = vmatpush.bf16.msra.mxu0 %v1145
    %1526 = vmatpush.bf16.msra.mxu0 %v1144
    %1527 = vmatpush.bf16.msra.mxu0 %v1143
    %1528 = vmatpush.bf16.msra.mxu0 %v1142
    %1529 = vmatpush.bf16.msra.mxu0 %v1141
    %1530 = vmatpush.bf16.msra.mxu0 %v1140
    %1531 = vmatpush.bf16.msra.mxu0 %v1139
    %1532 = vmatpush.bf16.msra.mxu0 %v1138
    %1533 = vmatmul.bf16.gmra.mxu0 %v363
    %v1534 = vpop.f32.mrf.mxu0
    %v1535 = vadd.f32 %v1522, %v1534
    %v1536 = vpop.f32.mrf.mxu0
    %1537 = vdwg.mxu0
    %1538 = vmatpush.bf16.msra.mxu0 %v1153
    %1539 = vmatpush.bf16.msra.mxu0 %v1152
    %1540 = vmatpush.bf16.msra.mxu0 %v1151
    %1541 = vmatpush.bf16.msra.mxu0 %v1150
    %1542 = vmatpush.bf16.msra.mxu0 %v1149
    %1543 = vmatpush.bf16.msra.mxu0 %v1148
    %1544 = vmatpush.bf16.msra.mxu0 %v1147
    %1545 = vmatpush.bf16.msra.mxu0 %v1146
    %1546 = vmatmul.bf16.gmra.mxu0 %v364
    %v1547 = vpop.f32.mrf.mxu0
    %v1548 = vadd.f32 %v1535, %v1547
    %v1549 = vpop.f32.mrf.mxu0
    %1550 = vdwg.mxu0
    %1551 = vmatpush.bf16.msra.mxu0 %v1161
    %1552 = vmatpush.bf16.msra.mxu0 %v1160
    %1553 = vmatpush.bf16.msra.mxu0 %v1159
    %1554 = vmatpush.bf16.msra.mxu0 %v1158
    %1555 = vmatpush.bf16.msra.mxu0 %v1157
    %1556 = vmatpush.bf16.msra.mxu0 %v1156
    %1557 = vmatpush.bf16.msra.mxu0 %v1155
    %1558 = vmatpush.bf16.msra.mxu0 %v1154
    %1559 = vmatmul.bf16.gmra.mxu0 %v365
    %v1560 = vpop.f32.mrf.mxu0
    %v1561 = vadd.f32 %v1548, %v1560
    %v1562 = vpop.f32.mrf.mxu0
    %1563 = vdwg.mxu0
    %1564 = vmatpush.bf16.msra.mxu0 %v1169
    %1565 = vmatpush.bf16.msra.mxu0 %v1168
    %1566 = vmatpush.bf16.msra.mxu0 %v1167
    %1567 = vmatpush.bf16.msra.mxu0 %v1166
    %1568 = vmatpush.bf16.msra.mxu0 %v1165
    %1569 = vmatpush.bf16.msra.mxu0 %v1164
    %1570 = vmatpush.bf16.msra.mxu0 %v1163
    %1571 = vmatpush.bf16.msra.mxu0 %v1162
    %1572 = vmatmul.bf16.gmra.mxu0 %v366
    %v1573 = vpop.f32.mrf.mxu0
    %v1574 = vadd.f32 %v1561, %v1573
    %v1575 = vpop.f32.mrf.mxu0
    %1576 = vdwg.mxu0
    %1577 = vmatpush.bf16.msra.mxu0 %v1177
    %1578 = vmatpush.bf16.msra.mxu0 %v1176
    %1579 = vmatpush.bf16.msra.mxu0 %v1175
    %1580 = vmatpush.bf16.msra.mxu0 %v1174
    %1581 = vmatpush.bf16.msra.mxu0 %v1173
    %1582 = vmatpush.bf16.msra.mxu0 %v1172
    %1583 = vmatpush.bf16.msra.mxu0 %v1171
    %1584 = vmatpush.bf16.msra.mxu0 %v1170
    %1585 = vmatmul.bf16.gmra.mxu0 %v369
    %v1586 = vpop.f32.mrf.mxu0
    %v1587 = vadd.f32 %v1574, %v1586
    %v1588 = vpop.f32.mrf.mxu0
    %1589 = vdwg.mxu0
    %1590 = vmatpush.bf16.msra.mxu0 %v1185
    %1591 = vmatpush.bf16.msra.mxu0 %v1184
    %1592 = vmatpush.bf16.msra.mxu0 %v1183
    %1593 = vmatpush.bf16.msra.mxu0 %v1182
    %1594 = vmatpush.bf16.msra.mxu0 %v1181
    %1595 = vmatpush.bf16.msra.mxu0 %v1180
    %1596 = vmatpush.bf16.msra.mxu0 %v1179
    %1597 = vmatpush.bf16.msra.mxu0 %v1178
    %1598 = vmatmul.bf16.gmra.mxu0 %v370
    %v1599 = vpop.f32.mrf.mxu0
    %v1600 = vadd.f32 %v1587, %v1599
    %v1601 = vpop.f32.mrf.mxu0
    %1602 = vdwg.mxu0
    %1603 = vmatpush.bf16.msra.mxu0 %v1193
    %1604 = vmatpush.bf16.msra.mxu0 %v1192
    %1605 = vmatpush.bf16.msra.mxu0 %v1191
    %1606 = vmatpush.bf16.msra.mxu0 %v1190
    %1607 = vmatpush.bf16.msra.mxu0 %v1189
    %1608 = vmatpush.bf16.msra.mxu0 %v1188
    %1609 = vmatpush.bf16.msra.mxu0 %v1187
    %1610 = vmatpush.bf16.msra.mxu0 %v1186
    %1611 = vmatmul.bf16.gmra.mxu0 %v371
    %v1612 = vpop.f32.mrf.mxu0
    %v1613 = vadd.f32 %v1600, %v1612
    %v1614 = vpop.f32.mrf.mxu0
    %1615 = vdwg.mxu0
    %1616 = vmatpush.bf16.msra.mxu0 %v1201
    %1617 = vmatpush.bf16.msra.mxu0 %v1200
    %1618 = vmatpush.bf16.msra.mxu0 %v1199
    %1619 = vmatpush.bf16.msra.mxu0 %v1198
    %1620 = vmatpush.bf16.msra.mxu0 %v1197
    %1621 = vmatpush.bf16.msra.mxu0 %v1196
    %1622 = vmatpush.bf16.msra.mxu0 %v1195
    %1623 = vmatpush.bf16.msra.mxu0 %v1194
    %1624 = vmatmul.bf16.gmra.mxu0 %v372
    %v1625 = vpop.f32.mrf.mxu0
    %v1626 = vadd.f32 %v1613, %v1625
    %v1627 = vpop.f32.mrf.mxu0
    %1628 = vdwg.mxu0
    %1629 = vmatpush.bf16.msra.mxu0 0
    %1630 = vmatpush.bf16.msra.mxu0 0
    %1631 = vmatpush.bf16.msra.mxu0 0
    %1632 = vmatpush.bf16.msra.mxu0 0
    %1633 = vmatpush.bf16.msra.mxu0 0
    %1634 = vmatpush.bf16.msra.mxu0 0
    %1635 = vmatpush.bf16.msra.mxu0 %v1203
    %1636 = vmatpush.bf16.msra.mxu0 %v1202
    %1637 = vmatmul.bf16.gmra.mxu0 %v1367
    %v1638 = vpop.f32.mrf.mxu0
    %v1639 = vadd.f32 %v1626, %v1638
    %v1640 = vpop.f32.mrf.mxu0
    %1641 = vdwg.mxu0
    %v1642 = vmax.f32 %v1639, 0.0
    %1643 = vst [vmem:[#allocation2] sm:$0x3] %v1642
    // Predicated region
    $region14: #{cnn_forward.3} parent=1 // pred_check
      _
    $region15: #{cnn_forward.3} parent=1 // pred_check_branch
      %1645 = sbr.rel (0) target = $region17
    $region16: #{cnn_forward.3} parent=1 // pred_region
      %1647 = vsyncadd [#allocation3], 0
      %s1649 = sshll.u32 [#allocation2], 4
      %s1650 = int_to_ptr.vmem [resolvable:$true] %s1649
      %s1651 = sshll.u32 %s3, 4
      %s1652 = int_to_ptr.hbm [resolvable:$true] %s1651
      %1654 = dma.vmem_to_hbm [thread:$0]  %s1650, 32, %s1652, [#allocation3]
    $region17: #{cnn_forward.3} parent=1 // pred_fallthru
      _
    // Predicated region
    $region18: #{cnn_forward.3} parent=1 // pred_check
      _
    $region19: #{cnn_forward.3} parent=1 // pred_check_branch
      %1656 = sbr.rel (0) target = $region21
    $region20: #{cnn_forward.3} parent=1 // pred_region
      %1658 = dma.done [#allocation3], 32
    $region21: #{cnn_forward.3} parent=1 // pred_fallthru
      _
    %1659 = vsyncpa [#allocation3], 1

// kernel: cnn_forward.2
$region0: #{cnn_forward.2}
  #allocation0 [shape = 'u32[]', space=smem, size = 0x4, offset = 0x4, fixed_abs, tag = 'smem constant byte address 0x4 - core index']
  #allocation1 [shape = 'u32[72,128]{1,0:T(1,128)}', space=vmem, size = 0x9000, scoped, tag = 'internal scratch']
  %s0 = inlined_call_operand.vmem [shape: bf16[2,400,192], index: 0, kind: input, shape index: {}]
  %s1 = inlined_call_operand.vmem [shape: bf16[192,16], index: 1, kind: input, shape index: {}]
  %s2 = inlined_call_operand.vmem [shape: f32[1,16], index: 2, kind: input, shape index: {}]
  %s3 = inlined_call_operand.vmem [shape: bf16[1408,400], index: 3, kind: input, shape index: {}]
  %s4 = inlined_call_operand.vmem [shape: bf16[256,32], index: 4, kind: input, shape index: {}]
  %s5 = inlined_call_operand.vmem [shape: f32[1,32], index: 5, kind: input, shape index: {}]
  %s6 = inlined_call_operand.vmem [shape: bf16[2,81,32], index: 6, kind: output, shape index: {}]
  %s7 = sld [smem:[#allocation0]]
  $region57: #{cnn_forward.2} parent=0
    _
  %s9 = ssub.s32 1, %s7
  %s10 = scalar_select 0, %s9, %s7
  loop: start=0, step=1, limit=4
  $region2: #{cnn_forward.2} parent=0 // loop_pre_header
    _
  $region3: #{cnn_forward.2} parent=0 // loop_header
    %s12 = sphi 0, %s16
    %p13 = scmp.ge.s32.totalorder %s12, 4
    %s22 = sphi 0, %s24
    %s25 = sphi 0, %s22
    %s26 = sphi 0, %s25
    %s42 = sphi 0, %s26
    %s46 = sphi 0, %s46
    %s48 = sphi 0, %s46
    %s49 = sphi 0, %s48
    %s63 = sphi 0, %s49
    %s67 = sphi 0, %s67
    %s69 = sphi 0, %s67
    %s70 = sphi 0, %s69
    %s84 = sphi 0, %s70
    %s88 = sphi 0, %s88
    %s90 = sphi 0, %s88
    %s91 = sphi 0, %s90
    %s105 = sphi 0, %s91
    %s109 = sphi 0, %s109
    %s111 = sphi 0, %s109
    %s112 = sphi 0, %s111
    %s126 = sphi 0, %s112
    %s130 = sphi 0, %s130
    %s132 = sphi 0, %s130
    %s133 = sphi 0, %s132
    %s147 = sphi 0, %s133
    %s153 = sphi 0, %s155
    %s156 = sphi 0, %s153
    %s157 = sphi 0, %s156
    %s173 = sphi 0, %s157
  $region4: #{cnn_forward.2} parent=0 // loop_header_branch
    %15 = sbr.rel (%p13) target = $region8
  $region5: #{cnn_forward.2} parent=0 // loop_body
    %s17 = ssub.s32 %s12, 1
    %s18 = ssub.s32 %s12, 2
    %s19 = sadd.s32 %s12, 1
    %s20 = ssub.s32 %s12, %s19
    %p21 = scmp.eq.s32.totalorder %s20, 0
    %s23 = sadd.s32 %s22, 1
    %s24 = scalar_select %p21, %s22, %s23
    %p27 = pneg %p21
    %p28 = scmp.eq.s32.totalorder %s12, 1
    %p29 = por %p27, %p28
    %p30 = scmp.ne.s32.totalorder %s22, %s25
    %p31 = scmp.eq.s32.totalorder %s12, 0
    %p32 = por %p30, %p31
    %p33 = scmp.ne.s32.totalorder %s22, %s25
    %p34 = scmp.eq.s32.totalorder %s17, 1
    %p35 = por %p33, %p34
    %p36 = scmp.ne.s32.totalorder %s25, %s26
    %p37 = scmp.eq.s32.totalorder %s17, 0
    %p38 = por %p36, %p37
    %p39 = scmp.ne.s32.totalorder %s25, %s26
    %p40 = scmp.eq.s32.totalorder %s18, 1
    %p41 = por %p39, %p40
    %p43 = scmp.ne.s32.totalorder %s26, %s42
    %p44 = scmp.eq.s32.totalorder %s18, 0
    %p45 = por %p43, %p44
    %s47 = sadd.s32 %s46, 1
    %p50 = scmp.eq.s32.totalorder %s12, 1
    %p51 = scmp.ne.s32.totalorder %s46, %s48
    %p52 = scmp.eq.s32.totalorder %s12, 0
    %p53 = por %p51, %p52
    %p54 = scmp.ne.s32.totalorder %s46, %s48
    %p55 = scmp.eq.s32.totalorder %s17, 1
    %p56 = por %p54, %p55
    %p57 = scmp.ne.s32.totalorder %s48, %s49
    %p58 = scmp.eq.s32.totalorder %s17, 0
    %p59 = por %p57, %p58
    %p60 = scmp.ne.s32.totalorder %s48, %s49
    %p61 = scmp.eq.s32.totalorder %s18, 1
    %p62 = por %p60, %p61
    %p64 = scmp.ne.s32.totalorder %s49, %s63
    %p65 = scmp.eq.s32.totalorder %s18, 0
    %p66 = por %p64, %p65
    %s68 = sadd.s32 %s67, 1
    %p71 = scmp.eq.s32.totalorder %s12, 1
    %p72 = scmp.ne.s32.totalorder %s67, %s69
    %p73 = scmp.eq.s32.totalorder %s12, 0
    %p74 = por %p72, %p73
    %p75 = scmp.ne.s32.totalorder %s67, %s69
    %p76 = scmp.eq.s32.totalorder %s17, 1
    %p77 = por %p75, %p76
    %p78 = scmp.ne.s32.totalorder %s69, %s70
    %p79 = scmp.eq.s32.totalorder %s17, 0
    %p80 = por %p78, %p79
    %p81 = scmp.ne.s32.totalorder %s69, %s70
    %p82 = scmp.eq.s32.totalorder %s18, 1
    %p83 = por %p81, %p82
    %p85 = scmp.ne.s32.totalorder %s70, %s84
    %p86 = scmp.eq.s32.totalorder %s18, 0
    %p87 = por %p85, %p86
    %s89 = sadd.s32 %s88, 1
    %p92 = scmp.eq.s32.totalorder %s12, 1
    %p93 = scmp.ne.s32.totalorder %s88, %s90
    %p94 = scmp.eq.s32.totalorder %s12, 0
    %p95 = por %p93, %p94
    %p96 = scmp.ne.s32.totalorder %s88, %s90
    %p97 = scmp.eq.s32.totalorder %s17, 1
    %p98 = por %p96, %p97
    %p99 = scmp.ne.s32.totalorder %s90, %s91
    %p100 = scmp.eq.s32.totalorder %s17, 0
    %p101 = por %p99, %p100
    %p102 = scmp.ne.s32.totalorder %s90, %s91
    %p103 = scmp.eq.s32.totalorder %s18, 1
    %p104 = por %p102, %p103
    %p106 = scmp.ne.s32.totalorder %s91, %s105
    %p107 = scmp.eq.s32.totalorder %s18, 0
    %p108 = por %p106, %p107
    %s110 = sadd.s32 %s109, 1
    %p113 = scmp.eq.s32.totalorder %s12, 1
    %p114 = scmp.ne.s32.totalorder %s109, %s111
    %p115 = scmp.eq.s32.totalorder %s12, 0
    %p116 = por %p114, %p115
    %p117 = scmp.ne.s32.totalorder %s109, %s111
    %p118 = scmp.eq.s32.totalorder %s17, 1
    %p119 = por %p117, %p118
    %p120 = scmp.ne.s32.totalorder %s111, %s112
    %p121 = scmp.eq.s32.totalorder %s17, 0
    %p122 = por %p120, %p121
    %p123 = scmp.ne.s32.totalorder %s111, %s112
    %p124 = scmp.eq.s32.totalorder %s18, 1
    %p125 = por %p123, %p124
    %p127 = scmp.ne.s32.totalorder %s112, %s126
    %p128 = scmp.eq.s32.totalorder %s18, 0
    %p129 = por %p127, %p128
    %s131 = sadd.s32 %s130, 1
    %p134 = scmp.eq.s32.totalorder %s12, 1
    %p135 = scmp.ne.s32.totalorder %s130, %s132
    %p136 = scmp.eq.s32.totalorder %s12, 0
    %p137 = por %p135, %p136
    %p138 = scmp.ne.s32.totalorder %s130, %s132
    %p139 = scmp.eq.s32.totalorder %s17, 1
    %p140 = por %p138, %p139
    %p141 = scmp.ne.s32.totalorder %s132, %s133
    %p142 = scmp.eq.s32.totalorder %s17, 0
    %p143 = por %p141, %p142
    %p144 = scmp.ne.s32.totalorder %s132, %s133
    %p145 = scmp.eq.s32.totalorder %s18, 1
    %p146 = por %p144, %p145
    %p148 = scmp.ne.s32.totalorder %s133, %s147
    %p149 = scmp.eq.s32.totalorder %s18, 0
    %p150 = por %p148, %p149
    %s151 = ssub.s32 %s12, %s19
    %p152 = scmp.eq.s32.totalorder %s151, 0
    %s154 = sadd.s32 %s153, 1
    %s155 = scalar_select %p152, %s153, %s154
    %p158 = pneg %p152
    %p159 = scmp.eq.s32.totalorder %s12, 1
    %p160 = por %p158, %p159
    %p161 = scmp.ne.s32.totalorder %s153, %s156
    %p162 = scmp.eq.s32.totalorder %s12, 0
    %p163 = por %p161, %p162
    %p164 = scmp.ne.s32.totalorder %s153, %s156
    %p165 = scmp.eq.s32.totalorder %s17, 1
    %p166 = por %p164, %p165
    %p167 = scmp.ne.s32.totalorder %s156, %s157
    %p168 = scmp.eq.s32.totalorder %s17, 0
    %p169 = por %p167, %p168
    %p170 = scmp.ne.s32.totalorder %s156, %s157
    %p171 = scmp.eq.s32.totalorder %s18, 1
    %p172 = por %p170, %p171
    %p174 = scmp.ne.s32.totalorder %s157, %s173
    %p175 = scmp.eq.s32.totalorder %s18, 0
    %p176 = por %p174, %p175
    %p177 = scmp.le.s32.totalorder 1, %s12
    %p178 = scmp.lt.s32.totalorder %s12, 3
    %p179 = pnand %p177, %p178
    %p180 = pneg %p179
    // Predicated region
    $region9: #{cnn_forward.2} parent=5 // pred_check
      _
    $region10: #{cnn_forward.2} parent=5 // pred_check_branch
      %182 = sbr.rel (%p179) target = $region12
    $region11: #{cnn_forward.2} parent=5 // pred_region
      %s183 = ssub.s32 %s12, 1
      // Predicated region
      $region13: #{cnn_forward.2} parent=11 // pred_check
        %p184 = pneg %p59
      $region14: #{cnn_forward.2} parent=11 // pred_check_branch
        %186 = sbr.rel (%p184) target = $region16
      $region15: #{cnn_forward.2} parent=11 // pred_region
        _
      $region16: #{cnn_forward.2} parent=11 // pred_fallthru
        _
      // Predicated region
      $region17: #{cnn_forward.2} parent=11 // pred_check
        %p187 = pneg %p80
      $region18: #{cnn_forward.2} parent=11 // pred_check_branch
        %189 = sbr.rel (%p187) target = $region20
      $region19: #{cnn_forward.2} parent=11 // pred_region
        _
      $region20: #{cnn_forward.2} parent=11 // pred_fallthru
        _
      // Predicated region
      $region21: #{cnn_forward.2} parent=11 // pred_check
        %p190 = pneg %p101
      $region22: #{cnn_forward.2} parent=11 // pred_check_branch
        %192 = sbr.rel (%p190) target = $region24
      $region23: #{cnn_forward.2} parent=11 // pred_region
        _
      $region24: #{cnn_forward.2} parent=11 // pred_fallthru
        _
      // Predicated region
      $region25: #{cnn_forward.2} parent=11 // pred_check
        %p193 = pneg %p122
      $region26: #{cnn_forward.2} parent=11 // pred_check_branch
        %195 = sbr.rel (%p193) target = $region28
      $region27: #{cnn_forward.2} parent=11 // pred_region
        _
      $region28: #{cnn_forward.2} parent=11 // pred_fallthru
        _
      // Predicated region
      $region29: #{cnn_forward.2} parent=11 // pred_check
        %p196 = pneg %p143
      $region30: #{cnn_forward.2} parent=11 // pred_check_branch
        %198 = sbr.rel (%p196) target = $region32
      $region31: #{cnn_forward.2} parent=11 // pred_region
        _
      $region32: #{cnn_forward.2} parent=11 // pred_fallthru
        _
    $region12: #{cnn_forward.2} parent=5 // pred_fallthru
      _
    %p199 = scmp.lt.s32.totalorder %s12, 2
    // Predicated region
    $region33: #{cnn_forward.2} parent=5 // pred_check
      %p200 = pneg %p199
    $region34: #{cnn_forward.2} parent=5 // pred_check_branch
      %202 = sbr.rel (%p200) target = $region36
    $region35: #{cnn_forward.2} parent=5 // pred_region
      // Predicated region
      $region37: #{cnn_forward.2} parent=35 // pred_check
        %p203 = pneg %p32
      $region38: #{cnn_forward.2} parent=35 // pred_check_branch
        %205 = sbr.rel (%p203) target = $region40
      $region39: #{cnn_forward.2} parent=35 // pred_region
        %p206 = scmp.lt.s32.totalorder %s12, 1
        %s207 = scalar_select %p206, %s12, 1
        %s208 = smul.addr %s207, 100
        %s209 = smul.addr %s208, 4
        %s210 = scalar_lea.vmem %s0, %s209
      $region40: #{cnn_forward.2} parent=35 // pred_fallthru
        _
    $region36: #{cnn_forward.2} parent=5 // pred_fallthru
      _
    %p211 = scmp.le.s32.totalorder 1, %s12
    %p212 = scmp.lt.s32.totalorder %s12, 3
    %p213 = pnand %p211, %p212
    %p214 = pneg %p213
    // Predicated region
    $region41: #{cnn_forward.2} parent=5 // pred_check
      _
    $region42: #{cnn_forward.2} parent=5 // pred_check_branch
      %216 = sbr.rel (%p213) target = $region44
    $region43: #{cnn_forward.2} parent=5 // pred_region
      %s217 = ssub.s32 %s12, 1
      %p218 = scmp.lt.s32.totalorder %s17, 1
      %s219 = scalar_select %p218, %s17, 1
      %s220 = smul.addr %s219, 100
      %s221 = smul.addr %s220, 4
      %s222 = scalar_lea.vmem %s0, %s221
      %p223 = pneg %p38
      %p224 = pneg %p35
      %p225 = pneg %p59
      %p226 = pneg %p56
      %p227 = pneg %p80
      %p228 = pneg %p77
      %p229 = pneg %p101
      %p230 = pneg %p98
      %p231 = pneg %p122
      %p232 = pneg %p119
      %p233 = pneg %p143
      %p234 = pneg %p140
      %p235 = pneg %p169
      %p236 = pneg %p166
      %p237 = scmp.lt.s32.totalorder %s17, 1
      %s238 = scalar_select %p237, %s17, 1
      %s239 = smul.addr %s238, 11
      %s240 = smul.addr %s239, 4
      %s241 = scalar_lea.vmem %s6, %s240
      %p242 = scmp.lt.s32.totalorder %s17, 1
      %s243 = scalar_select %p242, %s17, 1
      %s244 = smul.addr %s243, 100
      %s245 = smul.addr %s244, 4
      %s246 = scalar_lea.vmem %s0, %s245
      %p247 = scmp.lt.s32.totalorder %s17, 1
      %s248 = scalar_select %p247, %s17, 1
      %s249 = smul.addr %s248, 11
      %s250 = smul.addr %s249, 4
      %s251 = scalar_lea.vmem %s6, %s250
      %v253 = vld [vmem:[%s246] sm:$0xff]
      %v254 = vld [vmem:[%s246 + $0x8] sm:$0xff]
      %v255 = vld [vmem:[%s246 + $0x10] sm:$0xff]
      %v256 = vld [vmem:[%s246 + $0x18] sm:$0xff]
      %v257 = vld [vmem:[%s246 + $0x20] sm:$0xff]
      %v258 = vld [vmem:[%s246 + $0x28] sm:$0xff]
      %v259 = vld [vmem:[%s246 + $0x30] sm:$0xff]
      %v260 = vld [vmem:[%s246 + $0x38] sm:$0xff]
      %v261 = vld [vmem:[%s246 + $0x40] sm:$0xff]
      %v262 = vld [vmem:[%s246 + $0x48] sm:$0xff]
      %v263 = vld [vmem:[%s246 + $0x50] sm:$0xff]
      %v264 = vld [vmem:[%s246 + $0x58] sm:$0xff]
      %v265 = vld [vmem:[%s246 + $0x60] sm:$0xff]
      %v266 = vld [vmem:[%s246 + $0x68] sm:$0xff]
      %v267 = vld [vmem:[%s246 + $0x70] sm:$0xff]
      %v268 = vld [vmem:[%s246 + $0x78] sm:$0xff]
      %v269 = vld [vmem:[%s246 + $0x80] sm:$0xff]
      %v270 = vld [vmem:[%s246 + $0x88] sm:$0xff]
      %v271 = vld [vmem:[%s246 + $0x90] sm:$0xff]
      %v272 = vld [vmem:[%s246 + $0x98] sm:$0xff]
      %v273 = vld [vmem:[%s246 + $0xa0] sm:$0xff]
      %v274 = vld [vmem:[%s246 + $0xa8] sm:$0xff]
      %v275 = vld [vmem:[%s246 + $0xb0] sm:$0xff]
      %v276 = vld [vmem:[%s246 + $0xb8] sm:$0xff]
      %v277 = vld [vmem:[%s246 + $0xc0] sm:$0xff]
      %v278 = vld [vmem:[%s246 + $0xc8] sm:$0xff]
      %v279 = vld [vmem:[%s246 + $0xd0] sm:$0xff]
      %v280 = vld [vmem:[%s246 + $0xd8] sm:$0xff]
      %v281 = vld [vmem:[%s246 + $0xe0] sm:$0xff]
      %v282 = vld [vmem:[%s246 + $0xe8] sm:$0xff]
      %v283 = vld [vmem:[%s246 + $0xf0] sm:$0xff]
      %v284 = vld [vmem:[%s246 + $0xf8] sm:$0xff]
      %v285 = vld [vmem:[%s246 + $0x100] sm:$0xff]
      %v286 = vld [vmem:[%s246 + $0x108] sm:$0xff]
      %v287 = vld [vmem:[%s246 + $0x110] sm:$0xff]
      %v288 = vld [vmem:[%s246 + $0x118] sm:$0xff]
      %v289 = vld [vmem:[%s246 + $0x120] sm:$0xff]
      %v290 = vld [vmem:[%s246 + $0x128] sm:$0xff]
      %v291 = vld [vmem:[%s246 + $0x130] sm:$0xff]
      %v292 = vld [vmem:[%s246 + $0x138] sm:$0xff]
      %v293 = vld [vmem:[%s246 + $0x140] sm:$0xff]
      %v294 = vld [vmem:[%s246 + $0x148] sm:$0xff]
      %v295 = vld [vmem:[%s246 + $0x150] sm:$0xff]
      %v296 = vld [vmem:[%s246 + $0x158] sm:$0xff]
      %v297 = vld [vmem:[%s246 + $0x160] sm:$0xff]
      %v298 = vld [vmem:[%s246 + $0x168] sm:$0xff]
      %v299 = vld [vmem:[%s246 + $0x170] sm:$0xff]
      %v300 = vld [vmem:[%s246 + $0x178] sm:$0xff]
      %v301 = vld [vmem:[%s246 + $0x180] sm:$0xff]
      %v302 = vld [vmem:[%s246 + $0x188] sm:$0xff]
      %v303 = vld [vmem:[%s1] sm:$0xf]
      %v304 = vld [vmem:[%s1 + $0x4] sm:$0xf]
      %v305 = vld [vmem:[%s1 + $0x8] sm:$0xf]
      %v306 = vld [vmem:[%s1 + $0xc] sm:$0xf]
      %v307 = vld [vmem:[%s1 + $0x10] sm:$0xf]
      %v308 = vld [vmem:[%s1 + $0x14] sm:$0xf]
      %v309 = vld [vmem:[%s1 + $0x18] sm:$0xf]
      %v310 = vld [vmem:[%s1 + $0x1c] sm:$0xf]
      %v311 = vld [vmem:[%s1 + $0x20] sm:$0xf]
      %v312 = vld [vmem:[%s1 + $0x24] sm:$0xf]
      %v313 = vld [vmem:[%s1 + $0x28] sm:$0xf]
      %v314 = vld [vmem:[%s1 + $0x2c] sm:$0xf]
      %v315 = vld [vmem:[%s1 + $0x30] sm:$0xf]
      %v316 = vld [vmem:[%s1 + $0x34] sm:$0xf]
      %v317 = vld [vmem:[%s1 + $0x38] sm:$0xf]
      %v318 = vld [vmem:[%s1 + $0x3c] sm:$0xf]
      %v319 = vld [vmem:[%s1 + $0x40] sm:$0xf]
      %v320 = vld [vmem:[%s1 + $0x44] sm:$0xf]
      %v321 = vld [vmem:[%s1 + $0x48] sm:$0xf]
      %v322 = vld [vmem:[%s1 + $0x4c] sm:$0xf]
      %v323 = vld [vmem:[%s1 + $0x50] sm:$0xf]
      %v324 = vld [vmem:[%s1 + $0x54] sm:$0xf]
      %v325 = vld [vmem:[%s1 + $0x58] sm:$0xf]
      %v326 = vld [vmem:[%s1 + $0x5c] sm:$0xf]
      %v327 = vld [vmem:[%s2] sm:$0x1]
      %v329 = vperm.slane %v327, 0
      %v381 = vunpack.c.l.b16 %v253
      %v382 = vunpack.c.h.b16 %v253
      %v383 = vunpack.c.l.b16 %v254
      %v384 = vunpack.c.h.b16 %v254
      %v385 = vunpack.c.l.b16 %v255
      %v386 = vunpack.c.h.b16 %v255
      %v387 = vunpack.c.l.b16 %v256
      %v388 = vunpack.c.h.b16 %v256
      %v389 = vunpack.c.l.b16 %v257
      %v390 = vunpack.c.h.b16 %v257
      %v391 = vunpack.c.l.b16 %v258
      %v392 = vunpack.c.h.b16 %v258
      %v393 = vunpack.c.l.b16 %v259
      %v394 = vunpack.c.h.b16 %v259
      %v395 = vunpack.c.l.b16 %v260
      %v396 = vunpack.c.h.b16 %v260
      %v397 = vunpack.c.l.b16 %v261
      %v398 = vunpack.c.h.b16 %v261
      %v399 = vunpack.c.l.b16 %v262
      %v400 = vunpack.c.h.b16 %v262
      %v401 = vunpack.c.l.b16 %v263
      %v402 = vunpack.c.h.b16 %v263
      %v403 = vunpack.c.l.b16 %v264
      %v404 = vunpack.c.h.b16 %v264
      %v405 = vunpack.c.l.b16 %v265
      %v406 = vunpack.c.h.b16 %v265
      %v407 = vunpack.c.l.b16 %v266
      %v408 = vunpack.c.h.b16 %v266
      %v409 = vunpack.c.l.b16 %v267
      %v410 = vunpack.c.h.b16 %v267
      %v411 = vunpack.c.l.b16 %v268
      %v412 = vunpack.c.h.b16 %v268
      %v413 = vunpack.c.l.b16 %v269
      %v414 = vunpack.c.h.b16 %v269
      %v415 = vunpack.c.l.b16 %v270
      %v416 = vunpack.c.h.b16 %v270
      %v417 = vunpack.c.l.b16 %v271
      %v418 = vunpack.c.h.b16 %v271
      %v419 = vunpack.c.l.b16 %v272
      %v420 = vunpack.c.h.b16 %v272
      %v421 = vunpack.c.l.b16 %v273
      %v422 = vunpack.c.h.b16 %v273
      %v423 = vunpack.c.l.b16 %v274
      %v424 = vunpack.c.h.b16 %v274
      %v425 = vunpack.c.l.b16 %v275
      %v426 = vunpack.c.h.b16 %v275
      %v427 = vunpack.c.l.b16 %v276
      %v428 = vunpack.c.h.b16 %v276
      %v429 = vunpack.c.l.b16 %v277
      %v430 = vunpack.c.h.b16 %v277
      %v431 = vunpack.c.l.b16 %v278
      %v432 = vunpack.c.h.b16 %v278
      %v433 = vunpack.c.l.b16 %v279
      %v434 = vunpack.c.h.b16 %v279
      %v435 = vunpack.c.l.b16 %v280
      %v436 = vunpack.c.h.b16 %v280
      %v437 = vunpack.c.l.b16 %v281
      %v438 = vunpack.c.h.b16 %v281
      %v439 = vunpack.c.l.b16 %v282
      %v440 = vunpack.c.h.b16 %v282
      %v441 = vunpack.c.l.b16 %v283
      %v442 = vunpack.c.h.b16 %v283
      %v443 = vunpack.c.l.b16 %v284
      %v444 = vunpack.c.h.b16 %v284
      %v445 = vunpack.c.l.b16 %v285
      %v446 = vunpack.c.h.b16 %v285
      %v447 = vunpack.c.l.b16 %v286
      %v448 = vunpack.c.h.b16 %v286
      %v449 = vunpack.c.l.b16 %v287
      %v450 = vunpack.c.h.b16 %v287
      %v451 = vunpack.c.l.b16 %v288
      %v452 = vunpack.c.h.b16 %v288
      %v453 = vunpack.c.l.b16 %v289
      %v454 = vunpack.c.h.b16 %v289
      %v455 = vunpack.c.l.b16 %v290
      %v456 = vunpack.c.h.b16 %v290
      %v457 = vunpack.c.l.b16 %v291
      %v458 = vunpack.c.h.b16 %v291
      %v459 = vunpack.c.l.b16 %v292
      %v460 = vunpack.c.h.b16 %v292
      %v461 = vunpack.c.l.b16 %v293
      %v462 = vunpack.c.h.b16 %v293
      %v463 = vunpack.c.l.b16 %v294
      %v464 = vunpack.c.h.b16 %v294
      %v465 = vunpack.c.l.b16 %v295
      %v466 = vunpack.c.h.b16 %v295
      %v467 = vunpack.c.l.b16 %v296
      %v468 = vunpack.c.h.b16 %v296
      %v469 = vunpack.c.l.b16 %v297
      %v470 = vunpack.c.h.b16 %v297
      %v471 = vunpack.c.l.b16 %v298
      %v472 = vunpack.c.h.b16 %v298
      %v473 = vunpack.c.l.b16 %v299
      %v474 = vunpack.c.h.b16 %v299
      %v475 = vunpack.c.l.b16 %v300
      %v476 = vunpack.c.h.b16 %v300
      %v477 = vunpack.c.l.b16 %v301
      %v478 = vunpack.c.h.b16 %v301
      %v479 = vunpack.c.l.b16 %v302
      %v480 = vunpack.c.h.b16 %v302
      %v481 = vpack.c.b16 %v383, %v381
      %v482 = vpack.c.b16 %v384, %v382
      %v483 = vpack.c.b16 %v387, %v385
      %v484 = vpack.c.b16 %v388, %v386
      %v485 = vpack.c.b16 %v391, %v389
      %v486 = vpack.c.b16 %v392, %v390
      %v487 = vpack.c.b16 %v395, %v393
      %v488 = vpack.c.b16 %v396, %v394
      %v489 = vpack.c.b16 %v399, %v397
      %v490 = vpack.c.b16 %v400, %v398
      %v491 = vpack.c.b16 %v403, %v401
      %v492 = vpack.c.b16 %v404, %v402
      %v493 = vpack.c.b16 %v407, %v405
      %v494 = vpack.c.b16 %v408, %v406
      %v495 = vpack.c.b16 %v411, %v409
      %v496 = vpack.c.b16 %v412, %v410
      %v497 = vpack.c.b16 %v415, %v413
      %v498 = vpack.c.b16 %v416, %v414
      %v499 = vpack.c.b16 %v419, %v417
      %v500 = vpack.c.b16 %v420, %v418
      %v501 = vpack.c.b16 %v423, %v421
      %v502 = vpack.c.b16 %v424, %v422
      %v503 = vpack.c.b16 %v427, %v425
      %v504 = vpack.c.b16 %v428, %v426
      %v505 = vpack.c.b16 %v431, %v429
      %v506 = vpack.c.b16 %v432, %v430
      %v507 = vpack.c.b16 %v435, %v433
      %v508 = vpack.c.b16 %v436, %v434
      %v509 = vpack.c.b16 %v439, %v437
      %v510 = vpack.c.b16 %v440, %v438
      %v511 = vpack.c.b16 %v443, %v441
      %v512 = vpack.c.b16 %v444, %v442
      %v513 = vpack.c.b16 %v447, %v445
      %v514 = vpack.c.b16 %v448, %v446
      %v515 = vpack.c.b16 %v451, %v449
      %v516 = vpack.c.b16 %v452, %v450
      %v517 = vpack.c.b16 %v455, %v453
      %v518 = vpack.c.b16 %v456, %v454
      %v519 = vpack.c.b16 %v459, %v457
      %v520 = vpack.c.b16 %v460, %v458
      %v521 = vpack.c.b16 %v463, %v461
      %v522 = vpack.c.b16 %v464, %v462
      %v523 = vpack.c.b16 %v467, %v465
      %v524 = vpack.c.b16 %v468, %v466
      %v525 = vpack.c.b16 %v471, %v469
      %v526 = vpack.c.b16 %v472, %v470
      %v527 = vpack.c.b16 %v475, %v473
      %v528 = vpack.c.b16 %v476, %v474
      %v529 = vpack.c.b16 %v479, %v477
      %v530 = vpack.c.b16 %v480, %v478
      %v580 = vunpack.c.l.b16 %v303
      %v581 = vunpack.c.l.b16 %v304
      %v582 = vunpack.c.l.b16 %v305
      %v583 = vunpack.c.l.b16 %v306
      %v584 = vunpack.c.l.b16 %v307
      %v585 = vunpack.c.l.b16 %v308
      %v586 = vunpack.c.l.b16 %v309
      %v587 = vunpack.c.l.b16 %v310
      %v588 = vunpack.c.l.b16 %v311
      %v589 = vunpack.c.l.b16 %v312
      %v590 = vunpack.c.l.b16 %v313
      %v591 = vunpack.c.l.b16 %v314
      %v592 = vunpack.c.l.b16 %v315
      %v593 = vunpack.c.l.b16 %v316
      %v594 = vunpack.c.l.b16 %v317
      %v595 = vunpack.c.l.b16 %v318
      %v596 = vunpack.c.l.b16 %v319
      %v597 = vunpack.c.l.b16 %v320
      %v598 = vunpack.c.l.b16 %v321
      %v599 = vunpack.c.l.b16 %v322
      %v600 = vunpack.c.l.b16 %v323
      %v601 = vunpack.c.l.b16 %v324
      %v602 = vunpack.c.l.b16 %v325
      %v603 = vunpack.c.l.b16 %v326
      %v604 = vpack.c.b16 %v581, %v580
      %v605 = vpack.c.b16 %v583, %v582
      %v606 = vpack.c.b16 %v585, %v584
      %v607 = vpack.c.b16 %v587, %v586
      %v608 = vpack.c.b16 %v589, %v588
      %v609 = vpack.c.b16 %v591, %v590
      %v610 = vpack.c.b16 %v593, %v592
      %v611 = vpack.c.b16 %v595, %v594
      %v612 = vpack.c.b16 %v597, %v596
      %v613 = vpack.c.b16 %v599, %v598
      %v614 = vpack.c.b16 %v601, %v600
      %v615 = vpack.c.b16 %v603, %v602
      %vm628 = vcmask 523264
      %v630 = vsel %vm628, %v482, 0
      %v633 = vsel %vm628, %v484, 0
      %v636 = vsel %vm628, %v486, 0
      %v639 = vsel %vm628, %v488, 0
      %v642 = vsel %vm628, %v490, 0
      %v645 = vsel %vm628, %v492, 0
      %v648 = vsel %vm628, %v494, 0
      %v651 = vsel %vm628, %v496, 0
      %v654 = vsel %vm628, %v498, 0
      %v657 = vsel %vm628, %v500, 0
      %v660 = vsel %vm628, %v502, 0
      %v663 = vsel %vm628, %v504, 0
      %v666 = vsel %vm628, %v506, 0
      %v669 = vsel %vm628, %v508, 0
      %v672 = vsel %vm628, %v510, 0
      %v675 = vsel %vm628, %v512, 0
      %v678 = vsel %vm628, %v514, 0
      %v681 = vsel %vm628, %v516, 0
      %v684 = vsel %vm628, %v518, 0
      %v687 = vsel %vm628, %v520, 0
      %v690 = vsel %vm628, %v522, 0
      %v693 = vsel %vm628, %v524, 0
      %v696 = vsel %vm628, %v526, 0
      %v699 = vsel %vm628, %v528, 0
      %v702 = vsel %vm628, %v530, 0
      %704 = vmatpush.bf16.msra.mxu0 %v611
      %705 = vmatpush.bf16.msra.mxu0 %v610
      %706 = vmatpush.bf16.msra.mxu0 %v609
      %707 = vmatpush.bf16.msra.mxu0 %v608
      %708 = vmatpush.bf16.msra.mxu0 %v607
      %709 = vmatpush.bf16.msra.mxu0 %v606
      %710 = vmatpush.bf16.msra.mxu0 %v605
      %711 = vmatpush.bf16.msra.mxu0 %v604
      %712 = vmatmul.bf16.gmra.mxu0 %v481
      %v713 = vpop.f32.mrf.mxu0
      %v714 = vadd.f32 %v329, %v713
      %v715 = vpop.f32.mrf.mxu0
      %v716 = vadd.f32 %v329, %v715
      %717 = vmatmul.bf16.gmra.mxu0 %v483
      %v718 = vpop.f32.mrf.mxu0
      %v719 = vadd.f32 %v329, %v718
      %v720 = vpop.f32.mrf.mxu0
      %v721 = vadd.f32 %v329, %v720
      %722 = vmatmul.bf16.gmra.mxu0 %v485
      %v723 = vpop.f32.mrf.mxu0
      %v724 = vadd.f32 %v329, %v723
      %v725 = vpop.f32.mrf.mxu0
      %v726 = vadd.f32 %v329, %v725
      %727 = vmatmul.bf16.gmra.mxu0 %v487
      %v728 = vpop.f32.mrf.mxu0
      %v729 = vadd.f32 %v329, %v728
      %v730 = vpop.f32.mrf.mxu0
      %v731 = vadd.f32 %v329, %v730
      %732 = vmatmul.bf16.gmra.mxu0 %v489
      %v733 = vpop.f32.mrf.mxu0
      %v734 = vadd.f32 %v329, %v733
      %v735 = vpop.f32.mrf.mxu0
      %v736 = vadd.f32 %v329, %v735
      %737 = vmatmul.bf16.gmra.mxu0 %v491
      %v738 = vpop.f32.mrf.mxu0
      %v739 = vadd.f32 %v329, %v738
      %v740 = vpop.f32.mrf.mxu0
      %v741 = vadd.f32 %v329, %v740
      %742 = vmatmul.bf16.gmra.mxu0 %v493
      %v743 = vpop.f32.mrf.mxu0
      %v744 = vadd.f32 %v329, %v743
      %v745 = vpop.f32.mrf.mxu0
      %v746 = vadd.f32 %v329, %v745
      %747 = vmatmul.bf16.gmra.mxu0 %v495
      %v748 = vpop.f32.mrf.mxu0
      %v749 = vadd.f32 %v329, %v748
      %v750 = vpop.f32.mrf.mxu0
      %v751 = vadd.f32 %v329, %v750
      %752 = vmatmul.bf16.gmra.mxu0 %v497
      %v753 = vpop.f32.mrf.mxu0
      %v754 = vadd.f32 %v329, %v753
      %v755 = vpop.f32.mrf.mxu0
      %v756 = vadd.f32 %v329, %v755
      %757 = vmatmul.bf16.gmra.mxu0 %v499
      %v758 = vpop.f32.mrf.mxu0
      %v759 = vadd.f32 %v329, %v758
      %v760 = vpop.f32.mrf.mxu0
      %v761 = vadd.f32 %v329, %v760
      %762 = vmatmul.bf16.gmra.mxu0 %v501
      %v763 = vpop.f32.mrf.mxu0
      %v764 = vadd.f32 %v329, %v763
      %v765 = vpop.f32.mrf.mxu0
      %v766 = vadd.f32 %v329, %v765
      %767 = vmatmul.bf16.gmra.mxu0 %v503
      %v768 = vpop.f32.mrf.mxu0
      %v769 = vadd.f32 %v329, %v768
      %v770 = vpop.f32.mrf.mxu0
      %v771 = vadd.f32 %v329, %v770
      %772 = vmatmul.bf16.gmra.mxu0 %v505
      %v773 = vpop.f32.mrf.mxu0
      %v774 = vadd.f32 %v329, %v773
      %v775 = vpop.f32.mrf.mxu0
      %v776 = vadd.f32 %v329, %v775
      %777 = vmatmul.bf16.gmra.mxu0 %v507
      %v778 = vpop.f32.mrf.mxu0
      %v779 = vadd.f32 %v329, %v778
      %v780 = vpop.f32.mrf.mxu0
      %v781 = vadd.f32 %v329, %v780
      %782 = vmatmul.bf16.gmra.mxu0 %v509
      %v783 = vpop.f32.mrf.mxu0
      %v784 = vadd.f32 %v329, %v783
      %v785 = vpop.f32.mrf.mxu0
      %v786 = vadd.f32 %v329, %v785
      %787 = vmatmul.bf16.gmra.mxu0 %v511
      %v788 = vpop.f32.mrf.mxu0
      %v789 = vadd.f32 %v329, %v788
      %v790 = vpop.f32.mrf.mxu0
      %v791 = vadd.f32 %v329, %v790
      %792 = vmatmul.bf16.gmra.mxu0 %v513
      %v793 = vpop.f32.mrf.mxu0
      %v794 = vadd.f32 %v329, %v793
      %v795 = vpop.f32.mrf.mxu0
      %v796 = vadd.f32 %v329, %v795
      %797 = vmatmul.bf16.gmra.mxu0 %v515
      %v798 = vpop.f32.mrf.mxu0
      %v799 = vadd.f32 %v329, %v798
      %v800 = vpop.f32.mrf.mxu0
      %v801 = vadd.f32 %v329, %v800
      %802 = vmatmul.bf16.gmra.mxu0 %v517
      %v803 = vpop.f32.mrf.mxu0
      %v804 = vadd.f32 %v329, %v803
      %v805 = vpop.f32.mrf.mxu0
      %v806 = vadd.f32 %v329, %v805
      %807 = vmatmul.bf16.gmra.mxu0 %v519
      %v808 = vpop.f32.mrf.mxu0
      %v809 = vadd.f32 %v329, %v808
      %v810 = vpop.f32.mrf.mxu0
      %v811 = vadd.f32 %v329, %v810
      %812 = vmatmul.bf16.gmra.mxu0 %v521
      %v813 = vpop.f32.mrf.mxu0
      %v814 = vadd.f32 %v329, %v813
      %v815 = vpop.f32.mrf.mxu0
      %v816 = vadd.f32 %v329, %v815
      %817 = vmatmul.bf16.gmra.mxu0 %v523
      %v818 = vpop.f32.mrf.mxu0
      %v819 = vadd.f32 %v329, %v818
      %v820 = vpop.f32.mrf.mxu0
      %v821 = vadd.f32 %v329, %v820
      %822 = vmatmul.bf16.gmra.mxu0 %v525
      %v823 = vpop.f32.mrf.mxu0
      %v824 = vadd.f32 %v329, %v823
      %v825 = vpop.f32.mrf.mxu0
      %v826 = vadd.f32 %v329, %v825
      %827 = vmatmul.bf16.gmra.mxu0 %v527
      %v828 = vpop.f32.mrf.mxu0
      %v829 = vadd.f32 %v329, %v828
      %v830 = vpop.f32.mrf.mxu0
      %v831 = vadd.f32 %v329, %v830
      %832 = vmatmul.bf16.gmra.mxu0 %v529
      %v833 = vpop.f32.mrf.mxu0
      %v834 = vadd.f32 %v329, %v833
      %v835 = vpop.f32.mrf.mxu0
      %v836 = vadd.f32 %v329, %v835
      %837 = vdwg.mxu0
      %838 = vmatpush.bf16.msra.mxu0 0
      %839 = vmatpush.bf16.msra.mxu0 0
      %840 = vmatpush.bf16.msra.mxu0 0
      %841 = vmatpush.bf16.msra.mxu0 0
      %842 = vmatpush.bf16.msra.mxu0 %v615
      %843 = vmatpush.bf16.msra.mxu0 %v614
      %844 = vmatpush.bf16.msra.mxu0 %v613
      %845 = vmatpush.bf16.msra.mxu0 %v612
      %846 = vmatmul.bf16.gmra.mxu0 %v630
      %v847 = vpop.f32.mrf.mxu0
      %v848 = vadd.f32 %v714, %v847
      %v849 = vpop.f32.mrf.mxu0
      %v850 = vadd.f32 %v716, %v849
      %851 = vmatmul.bf16.gmra.mxu0 %v633
      %v852 = vpop.f32.mrf.mxu0
      %v853 = vadd.f32 %v719, %v852
      %v854 = vpop.f32.mrf.mxu0
      %v855 = vadd.f32 %v721, %v854
      %856 = vmatmul.bf16.gmra.mxu0 %v636
      %v857 = vpop.f32.mrf.mxu0
      %v858 = vadd.f32 %v724, %v857
      %v859 = vpop.f32.mrf.mxu0
      %v860 = vadd.f32 %v726, %v859
      %861 = vmatmul.bf16.gmra.mxu0 %v639
      %v862 = vpop.f32.mrf.mxu0
      %v863 = vadd.f32 %v729, %v862
      %v864 = vpop.f32.mrf.mxu0
      %v865 = vadd.f32 %v731, %v864
      %866 = vmatmul.bf16.gmra.mxu0 %v642
      %v867 = vpop.f32.mrf.mxu0
      %v868 = vadd.f32 %v734, %v867
      %v869 = vpop.f32.mrf.mxu0
      %v870 = vadd.f32 %v736, %v869
      %871 = vmatmul.bf16.gmra.mxu0 %v645
      %v872 = vpop.f32.mrf.mxu0
      %v873 = vadd.f32 %v739, %v872
      %v874 = vpop.f32.mrf.mxu0
      %v875 = vadd.f32 %v741, %v874
      %876 = vmatmul.bf16.gmra.mxu0 %v648
      %v877 = vpop.f32.mrf.mxu0
      %v878 = vadd.f32 %v744, %v877
      %v879 = vpop.f32.mrf.mxu0
      %v880 = vadd.f32 %v746, %v879
      %881 = vmatmul.bf16.gmra.mxu0 %v651
      %v882 = vpop.f32.mrf.mxu0
      %v883 = vadd.f32 %v749, %v882
      %v884 = vpop.f32.mrf.mxu0
      %v885 = vadd.f32 %v751, %v884
      %886 = vmatmul.bf16.gmra.mxu0 %v654
      %v887 = vpop.f32.mrf.mxu0
      %v888 = vadd.f32 %v754, %v887
      %v889 = vpop.f32.mrf.mxu0
      %v890 = vadd.f32 %v756, %v889
      %891 = vmatmul.bf16.gmra.mxu0 %v657
      %v892 = vpop.f32.mrf.mxu0
      %v893 = vadd.f32 %v759, %v892
      %v894 = vpop.f32.mrf.mxu0
      %v895 = vadd.f32 %v761, %v894
      %896 = vmatmul.bf16.gmra.mxu0 %v660
      %v897 = vpop.f32.mrf.mxu0
      %v898 = vadd.f32 %v764, %v897
      %v899 = vpop.f32.mrf.mxu0
      %v900 = vadd.f32 %v766, %v899
      %901 = vmatmul.bf16.gmra.mxu0 %v663
      %v902 = vpop.f32.mrf.mxu0
      %v903 = vadd.f32 %v769, %v902
      %v904 = vpop.f32.mrf.mxu0
      %v905 = vadd.f32 %v771, %v904
      %906 = vmatmul.bf16.gmra.mxu0 %v666
      %v907 = vpop.f32.mrf.mxu0
      %v908 = vadd.f32 %v774, %v907
      %v909 = vpop.f32.mrf.mxu0
      %v910 = vadd.f32 %v776, %v909
      %911 = vmatmul.bf16.gmra.mxu0 %v669
      %v912 = vpop.f32.mrf.mxu0
      %v913 = vadd.f32 %v779, %v912
      %v914 = vpop.f32.mrf.mxu0
      %v915 = vadd.f32 %v781, %v914
      %916 = vmatmul.bf16.gmra.mxu0 %v672
      %v917 = vpop.f32.mrf.mxu0
      %v918 = vadd.f32 %v784, %v917
      %v919 = vpop.f32.mrf.mxu0
      %v920 = vadd.f32 %v786, %v919
      %921 = vmatmul.bf16.gmra.mxu0 %v675
      %v922 = vpop.f32.mrf.mxu0
      %v923 = vadd.f32 %v789, %v922
      %v924 = vpop.f32.mrf.mxu0
      %v925 = vadd.f32 %v791, %v924
      %926 = vmatmul.bf16.gmra.mxu0 %v678
      %v927 = vpop.f32.mrf.mxu0
      %v928 = vadd.f32 %v794, %v927
      %v929 = vpop.f32.mrf.mxu0
      %v930 = vadd.f32 %v796, %v929
      %931 = vmatmul.bf16.gmra.mxu0 %v681
      %v932 = vpop.f32.mrf.mxu0
      %v933 = vadd.f32 %v799, %v932
      %v934 = vpop.f32.mrf.mxu0
      %v935 = vadd.f32 %v801, %v934
      %936 = vmatmul.bf16.gmra.mxu0 %v684
      %v937 = vpop.f32.mrf.mxu0
      %v938 = vadd.f32 %v804, %v937
      %v939 = vpop.f32.mrf.mxu0
      %v940 = vadd.f32 %v806, %v939
      %941 = vmatmul.bf16.gmra.mxu0 %v687
      %v942 = vpop.f32.mrf.mxu0
      %v943 = vadd.f32 %v809, %v942
      %v944 = vpop.f32.mrf.mxu0
      %v945 = vadd.f32 %v811, %v944
      %946 = vmatmul.bf16.gmra.mxu0 %v690
      %v947 = vpop.f32.mrf.mxu0
      %v948 = vadd.f32 %v814, %v947
      %v949 = vpop.f32.mrf.mxu0
      %v950 = vadd.f32 %v816, %v949
      %951 = vmatmul.bf16.gmra.mxu0 %v693
      %v952 = vpop.f32.mrf.mxu0
      %v953 = vadd.f32 %v819, %v952
      %v954 = vpop.f32.mrf.mxu0
      %v955 = vadd.f32 %v821, %v954
      %956 = vmatmul.bf16.gmra.mxu0 %v696
      %v957 = vpop.f32.mrf.mxu0
      %v958 = vadd.f32 %v824, %v957
      %v959 = vpop.f32.mrf.mxu0
      %v960 = vadd.f32 %v826, %v959
      %961 = vmatmul.bf16.gmra.mxu0 %v699
      %v962 = vpop.f32.mrf.mxu0
      %v963 = vadd.f32 %v829, %v962
      %v964 = vpop.f32.mrf.mxu0
      %v965 = vadd.f32 %v831, %v964
      %966 = vmatmul.bf16.gmra.mxu0 %v702
      %v967 = vpop.f32.mrf.mxu0
      %v968 = vadd.f32 %v834, %v967
      %v969 = vpop.f32.mrf.mxu0
      %v970 = vadd.f32 %v836, %v969
      %971 = vdwg.mxu0
      %v972 = vmax.f32 %v848, 0.0
      %v973 = vmax.f32 %v850, 0.0
      %v974 = vmax.f32 %v853, 0.0
      %v975 = vmax.f32 %v855, 0.0
      %v976 = vmax.f32 %v858, 0.0
      %v977 = vmax.f32 %v860, 0.0
      %v978 = vmax.f32 %v863, 0.0
      %v979 = vmax.f32 %v865, 0.0
      %v980 = vmax.f32 %v868, 0.0
      %v981 = vmax.f32 %v870, 0.0
      %v982 = vmax.f32 %v873, 0.0
      %v983 = vmax.f32 %v875, 0.0
      %v984 = vmax.f32 %v878, 0.0
      %v985 = vmax.f32 %v880, 0.0
      %v986 = vmax.f32 %v883, 0.0
      %v987 = vmax.f32 %v885, 0.0
      %v988 = vmax.f32 %v888, 0.0
      %v989 = vmax.f32 %v890, 0.0
      %v990 = vmax.f32 %v893, 0.0
      %v991 = vmax.f32 %v895, 0.0
      %v992 = vmax.f32 %v898, 0.0
      %v993 = vmax.f32 %v900, 0.0
      %v994 = vmax.f32 %v903, 0.0
      %v995 = vmax.f32 %v905, 0.0
      %v996 = vmax.f32 %v908, 0.0
      %v997 = vmax.f32 %v910, 0.0
      %v998 = vmax.f32 %v913, 0.0
      %v999 = vmax.f32 %v915, 0.0
      %v1000 = vmax.f32 %v918, 0.0
      %v1001 = vmax.f32 %v920, 0.0
      %v1002 = vmax.f32 %v923, 0.0
      %v1003 = vmax.f32 %v925, 0.0
      %v1004 = vmax.f32 %v928, 0.0
      %v1005 = vmax.f32 %v930, 0.0
      %v1006 = vmax.f32 %v933, 0.0
      %v1007 = vmax.f32 %v935, 0.0
      %v1008 = vmax.f32 %v938, 0.0
      %v1009 = vmax.f32 %v940, 0.0
      %v1010 = vmax.f32 %v943, 0.0
      %v1011 = vmax.f32 %v945, 0.0
      %v1012 = vmax.f32 %v948, 0.0
      %v1013 = vmax.f32 %v950, 0.0
      %v1014 = vmax.f32 %v953, 0.0
      %v1015 = vmax.f32 %v955, 0.0
      %v1016 = vmax.f32 %v958, 0.0
      %v1017 = vmax.f32 %v960, 0.0
      %v1018 = vmax.f32 %v963, 0.0
      %v1019 = vmax.f32 %v965, 0.0
      %v1020 = vmax.f32 %v968, 0.0
      %v1021 = vmax.f32 %v970, 0.0
      %v1022 = vpack.c.bf16 %v973, %v972
      %v1023 = vpack.c.bf16 %v975, %v974
      %v1024 = vpack.c.bf16 %v977, %v976
      %v1025 = vpack.c.bf16 %v979, %v978
      %v1026 = vpack.c.bf16 %v981, %v980
      %v1027 = vpack.c.bf16 %v983, %v982
      %v1028 = vpack.c.bf16 %v985, %v984
      %v1029 = vpack.c.bf16 %v987, %v986
      %v1030 = vpack.c.bf16 %v989, %v988
      %v1031 = vpack.c.bf16 %v991, %v990
      %v1032 = vpack.c.bf16 %v993, %v992
      %v1033 = vpack.c.bf16 %v995, %v994
      %v1034 = vpack.c.bf16 %v997, %v996
      %v1035 = vpack.c.bf16 %v999, %v998
      %v1036 = vpack.c.bf16 %v1001, %v1000
      %v1037 = vpack.c.bf16 %v1003, %v1002
      %v1038 = vpack.c.bf16 %v1005, %v1004
      %v1039 = vpack.c.bf16 %v1007, %v1006
      %v1040 = vpack.c.bf16 %v1009, %v1008
      %v1041 = vpack.c.bf16 %v1011, %v1010
      %v1042 = vpack.c.bf16 %v1013, %v1012
      %v1043 = vpack.c.bf16 %v1015, %v1014
      %v1044 = vpack.c.bf16 %v1017, %v1016
      %v1045 = vpack.c.bf16 %v1019, %v1018
      %v1046 = vpack.c.bf16 %v1021, %v1020
      %v1047 = vld [vmem:[%s3] sm:$0xff]
      %v1048 = vld [vmem:[%s3 + $0x8] sm:$0xff]
      %v1049 = vld [vmem:[%s3 + $0x10] sm:$0xff]
      %v1050 = vld [vmem:[%s3 + $0x18] sm:$0xff]
      %v1051 = vld [vmem:[%s3 + $0x20] sm:$0xff]
      %v1052 = vld [vmem:[%s3 + $0x28] sm:$0xff]
      %v1053 = vld [vmem:[%s3 + $0x30] sm:$0xff]
      %v1054 = vld [vmem:[%s3 + $0x38] sm:$0xff]
      %v1055 = vld [vmem:[%s3 + $0x40] sm:$0xff]
      %v1056 = vld [vmem:[%s3 + $0x48] sm:$0xff]
      %v1057 = vld [vmem:[%s3 + $0x50] sm:$0xff]
      %v1058 = vld [vmem:[%s3 + $0x58] sm:$0xff]
      %v1059 = vld [vmem:[%s3 + $0x60] sm:$0xff]
      %v1060 = vld [vmem:[%s3 + $0x68] sm:$0xff]
      %v1061 = vld [vmem:[%s3 + $0x70] sm:$0xff]
      %v1062 = vld [vmem:[%s3 + $0x78] sm:$0xff]
      %v1063 = vld [vmem:[%s3 + $0x80] sm:$0xff]
      %v1064 = vld [vmem:[%s3 + $0x88] sm:$0xff]
      %v1065 = vld [vmem:[%s3 + $0x90] sm:$0xff]
      %v1066 = vld [vmem:[%s3 + $0x98] sm:$0xff]
      %v1067 = vld [vmem:[%s3 + $0xa0] sm:$0xff]
      %v1068 = vld [vmem:[%s3 + $0xa8] sm:$0xff]
      %v1069 = vld [vmem:[%s3 + $0xb0] sm:$0xff]
      %v1070 = vld [vmem:[%s3 + $0xb8] sm:$0xff]
      %v1071 = vld [vmem:[%s3 + $0xc0] sm:$0xff]
      %v1072 = vld [vmem:[%s3 + $0xc8] sm:$0xff]
      %v1073 = vld [vmem:[%s3 + $0xd0] sm:$0xff]
      %v1074 = vld [vmem:[%s3 + $0xd8] sm:$0xff]
      %v1075 = vld [vmem:[%s3 + $0xe0] sm:$0xff]
      %v1076 = vld [vmem:[%s3 + $0xe8] sm:$0xff]
      %v1077 = vld [vmem:[%s3 + $0xf0] sm:$0xff]
      %v1078 = vld [vmem:[%s3 + $0xf8] sm:$0xff]
      %v1079 = vld [vmem:[%s3 + $0x100] sm:$0xff]
      %v1080 = vld [vmem:[%s3 + $0x108] sm:$0xff]
      %v1081 = vld [vmem:[%s3 + $0x110] sm:$0xff]
      %v1082 = vld [vmem:[%s3 + $0x118] sm:$0xff]
      %v1083 = vld [vmem:[%s3 + $0x120] sm:$0xff]
      %v1084 = vld [vmem:[%s3 + $0x128] sm:$0xff]
      %v1085 = vld [vmem:[%s3 + $0x130] sm:$0xff]
      %v1086 = vld [vmem:[%s3 + $0x138] sm:$0xff]
      %v1087 = vld [vmem:[%s3 + $0x140] sm:$0xff]
      %v1088 = vld [vmem:[%s3 + $0x148] sm:$0xff]
      %v1089 = vld [vmem:[%s3 + $0x150] sm:$0xff]
      %v1090 = vld [vmem:[%s3 + $0x158] sm:$0xff]
      %v1091 = vld [vmem:[%s3 + $0x160] sm:$0xff]
      %v1092 = vld [vmem:[%s3 + $0x168] sm:$0xff]
      %v1093 = vld [vmem:[%s3 + $0x170] sm:$0xff]
      %v1094 = vld [vmem:[%s3 + $0x178] sm:$0xff]
      %v1095 = vld [vmem:[%s3 + $0x180] sm:$0xff]
      %v1096 = vld [vmem:[%s3 + $0x188] sm:$0xff]
      %v1097 = vld [vmem:[%s3 + $0x190] sm:$0xff]
      %v1098 = vld [vmem:[%s3 + $0x198] sm:$0xff]
      %v1099 = vld [vmem:[%s3 + $0x1a0] sm:$0xff]
      %v1100 = vld [vmem:[%s3 + $0x1a8] sm:$0xff]
      %v1101 = vld [vmem:[%s3 + $0x1b0] sm:$0xff]
      %v1102 = vld [vmem:[%s3 + $0x1b8] sm:$0xff]
      %v1103 = vld [vmem:[%s3 + $0x1c0] sm:$0xff]
      %v1104 = vld [vmem:[%s3 + $0x1c8] sm:$0xff]
      %v1105 = vld [vmem:[%s3 + $0x1d0] sm:$0xff]
      %v1106 = vld [vmem:[%s3 + $0x1d8] sm:$0xff]
      %v1107 = vld [vmem:[%s3 + $0x1e0] sm:$0xff]
      %v1108 = vld [vmem:[%s3 + $0x1e8] sm:$0xff]
      %v1109 = vld [vmem:[%s3 + $0x1f0] sm:$0xff]
      %v1110 = vld [vmem:[%s3 + $0x1f8] sm:$0xff]
      %v1111 = vld [vmem:[%s3 + $0x200] sm:$0xff]
      %v1112 = vld [vmem:[%s3 + $0x208] sm:$0xff]
      %v1113 = vld [vmem:[%s3 + $0x210] sm:$0xff]
      %v1114 = vld [vmem:[%s3 + $0x218] sm:$0xff]
      %v1115 = vld [vmem:[%s3 + $0x220] sm:$0xff]
      %v1116 = vld [vmem:[%s3 + $0x228] sm:$0xff]
      %v1117 = vld [vmem:[%s3 + $0x230] sm:$0xff]
      %v1118 = vld [vmem:[%s3 + $0x238] sm:$0xff]
      %v1119 = vld [vmem:[%s3 + $0x240] sm:$0xff]
      %v1120 = vld [vmem:[%s3 + $0x248] sm:$0xff]
      %v1121 = vld [vmem:[%s3 + $0x250] sm:$0xff]
      %v1122 = vld [vmem:[%s3 + $0x258] sm:$0xff]
      %v1123 = vld [vmem:[%s3 + $0x260] sm:$0xff]
      %v1124 = vld [vmem:[%s3 + $0x268] sm:$0xff]
      %v1125 = vld [vmem:[%s3 + $0x270] sm:$0xff]
      %v1126 = vld [vmem:[%s3 + $0x278] sm:$0xff]
      %v1127 = vld [vmem:[%s3 + $0x280] sm:$0xff]
      %v1128 = vld [vmem:[%s3 + $0x288] sm:$0xff]
      %v1129 = vld [vmem:[%s3 + $0x290] sm:$0xff]
      %v1130 = vld [vmem:[%s3 + $0x298] sm:$0xff]
      %v1131 = vld [vmem:[%s3 + $0x2a0] sm:$0xff]
      %v1132 = vld [vmem:[%s3 + $0x2a8] sm:$0xff]
      %v1133 = vld [vmem:[%s3 + $0x2b0] sm:$0xff]
      %v1134 = vld [vmem:[%s3 + $0x2b8] sm:$0xff]
      %v1135 = vld [vmem:[%s3 + $0x2c0] sm:$0xff]
      %v1136 = vld [vmem:[%s3 + $0x2c8] sm:$0xff]
      %v1137 = vld [vmem:[%s3 + $0x2d0] sm:$0xff]
      %v1138 = vld [vmem:[%s3 + $0x2d8] sm:$0xff]
      %v1139 = vld [vmem:[%s3 + $0x2e0] sm:$0xff]
      %v1140 = vld [vmem:[%s3 + $0x2e8] sm:$0xff]
      %v1141 = vld [vmem:[%s3 + $0x2f0] sm:$0xff]
      %v1142 = vld [vmem:[%s3 + $0x2f8] sm:$0xff]
      %v1143 = vld [vmem:[%s3 + $0x300] sm:$0xff]
      %v1144 = vld [vmem:[%s3 + $0x308] sm:$0xff]
      %v1145 = vld [vmem:[%s3 + $0x310] sm:$0xff]
      %v1146 = vld [vmem:[%s3 + $0x318] sm:$0xff]
      %v1147 = vld [vmem:[%s3 + $0x320] sm:$0xff]
      %v1148 = vld [vmem:[%s3 + $0x328] sm:$0xff]
      %v1149 = vld [vmem:[%s3 + $0x330] sm:$0xff]
      %v1150 = vld [vmem:[%s3 + $0x338] sm:$0xff]
      %v1151 = vld [vmem:[%s3 + $0x340] sm:$0xff]
      %v1152 = vld [vmem:[%s3 + $0x348] sm:$0xff]
      %v1153 = vld [vmem:[%s3 + $0x350] sm:$0xff]
      %v1154 = vld [vmem:[%s3 + $0x358] sm:$0xff]
      %v1155 = vld [vmem:[%s3 + $0x360] sm:$0xff]
      %v1156 = vld [vmem:[%s3 + $0x368] sm:$0xff]
      %v1157 = vld [vmem:[%s3 + $0x370] sm:$0xff]
      %v1158 = vld [vmem:[%s3 + $0x378] sm:$0xff]
      %v1159 = vld [vmem:[%s3 + $0x380] sm:$0xff]
      %v1160 = vld [vmem:[%s3 + $0x388] sm:$0xff]
      %v1161 = vld [vmem:[%s3 + $0x390] sm:$0xff]
      %v1162 = vld [vmem:[%s3 + $0x398] sm:$0xff]
      %v1163 = vld [vmem:[%s3 + $0x3a0] sm:$0xff]
      %v1164 = vld [vmem:[%s3 + $0x3a8] sm:$0xff]
      %v1165 = vld [vmem:[%s3 + $0x3b0] sm:$0xff]
      %v1166 = vld [vmem:[%s3 + $0x3b8] sm:$0xff]
      %v1167 = vld [vmem:[%s3 + $0x3c0] sm:$0xff]
      %v1168 = vld [vmem:[%s3 + $0x3c8] sm:$0xff]
      %v1169 = vld [vmem:[%s3 + $0x3d0] sm:$0xff]
      %v1170 = vld [vmem:[%s3 + $0x3d8] sm:$0xff]
      %v1171 = vld [vmem:[%s3 + $0x3e0] sm:$0xff]
      %v1172 = vld [vmem:[%s3 + $0x3e8] sm:$0xff]
      %v1173 = vld [vmem:[%s3 + $0x3f0] sm:$0xff]
      %v1174 = vld [vmem:[%s3 + $0x3f8] sm:$0xff]
      %v1175 = vld [vmem:[%s3 + $0x400] sm:$0xff]
      %v1176 = vld [vmem:[%s3 + $0x408] sm:$0xff]
      %v1177 = vld [vmem:[%s3 + $0x410] sm:$0xff]
      %v1178 = vld [vmem:[%s3 + $0x418] sm:$0xff]
      %v1179 = vld [vmem:[%s3 + $0x420] sm:$0xff]
      %v1180 = vld [vmem:[%s3 + $0x428] sm:$0xff]
      %v1181 = vld [vmem:[%s3 + $0x430] sm:$0xff]
      %v1182 = vld [vmem:[%s3 + $0x438] sm:$0xff]
      %v1183 = vld [vmem:[%s3 + $0x440] sm:$0xff]
      %v1184 = vld [vmem:[%s3 + $0x448] sm:$0xff]
      %v1185 = vld [vmem:[%s3 + $0x450] sm:$0xff]
      %v1186 = vld [vmem:[%s3 + $0x458] sm:$0xff]
      %v1187 = vld [vmem:[%s3 + $0x460] sm:$0xff]
      %v1188 = vld [vmem:[%s3 + $0x468] sm:$0xff]
      %v1189 = vld [vmem:[%s3 + $0x470] sm:$0xff]
      %v1190 = vld [vmem:[%s3 + $0x478] sm:$0xff]
      %v1191 = vld [vmem:[%s3 + $0x480] sm:$0xff]
      %v1192 = vld [vmem:[%s3 + $0x488] sm:$0xff]
      %v1193 = vld [vmem:[%s3 + $0x490] sm:$0xff]
      %v1194 = vld [vmem:[%s3 + $0x498] sm:$0xff]
      %v1195 = vld [vmem:[%s3 + $0x4a0] sm:$0xff]
      %v1196 = vld [vmem:[%s3 + $0x4a8] sm:$0xff]
      %v1197 = vld [vmem:[%s3 + $0x4b0] sm:$0xff]
      %v1198 = vld [vmem:[%s3 + $0x4b8] sm:$0xff]
      %v1199 = vld [vmem:[%s3 + $0x4c0] sm:$0xff]
      %v1200 = vld [vmem:[%s3 + $0x4c8] sm:$0xff]
      %v1201 = vld [vmem:[%s3 + $0x4d0] sm:$0xff]
      %v1202 = vld [vmem:[%s3 + $0x4d8] sm:$0xff]
      %v1203 = vld [vmem:[%s3 + $0x4e0] sm:$0xff]
      %v1204 = vld [vmem:[%s3 + $0x4e8] sm:$0xff]
      %v1205 = vld [vmem:[%s3 + $0x4f0] sm:$0xff]
      %v1206 = vld [vmem:[%s3 + $0x4f8] sm:$0xff]
      %v1207 = vld [vmem:[%s3 + $0x500] sm:$0xff]
      %v1208 = vld [vmem:[%s3 + $0x508] sm:$0xff]
      %v1209 = vld [vmem:[%s3 + $0x510] sm:$0xff]
      %v1210 = vld [vmem:[%s3 + $0x518] sm:$0xff]
      %v1211 = vld [vmem:[%s3 + $0x520] sm:$0xff]
      %v1212 = vld [vmem:[%s3 + $0x528] sm:$0xff]
      %v1213 = vld [vmem:[%s3 + $0x530] sm:$0xff]
      %v1214 = vld [vmem:[%s3 + $0x538] sm:$0xff]
      %v1215 = vld [vmem:[%s3 + $0x540] sm:$0xff]
      %v1216 = vld [vmem:[%s3 + $0x548] sm:$0xff]
      %v1217 = vld [vmem:[%s3 + $0x550] sm:$0xff]
      %v1218 = vld [vmem:[%s3 + $0x558] sm:$0xff]
      %v1219 = vld [vmem:[%s3 + $0x560] sm:$0xff]
      %v1220 = vld [vmem:[%s3 + $0x568] sm:$0xff]
      %v1221 = vld [vmem:[%s3 + $0x570] sm:$0xff]
      %v1222 = vld [vmem:[%s3 + $0x578] sm:$0xff]
      %v1223 = vld [vmem:[%s3 + $0x580] sm:$0xff]
      %v1224 = vld [vmem:[%s3 + $0x588] sm:$0xff]
      %v1225 = vld [vmem:[%s3 + $0x590] sm:$0xff]
      %v1226 = vld [vmem:[%s3 + $0x598] sm:$0xff]
      %v1227 = vld [vmem:[%s3 + $0x5a0] sm:$0xff]
      %v1228 = vld [vmem:[%s3 + $0x5a8] sm:$0xff]
      %v1229 = vld [vmem:[%s3 + $0x5b0] sm:$0xff]
      %v1230 = vld [vmem:[%s3 + $0x5b8] sm:$0xff]
      %v1231 = vld [vmem:[%s3 + $0x5c0] sm:$0xff]
      %v1232 = vld [vmem:[%s3 + $0x5c8] sm:$0xff]
      %v1233 = vld [vmem:[%s3 + $0x5d0] sm:$0xff]
      %v1234 = vld [vmem:[%s3 + $0x5d8] sm:$0xff]
      %v1235 = vld [vmem:[%s3 + $0x5e0] sm:$0xff]
      %v1236 = vld [vmem:[%s3 + $0x5e8] sm:$0xff]
      %v1237 = vld [vmem:[%s3 + $0x5f0] sm:$0xff]
      %v1238 = vld [vmem:[%s3 + $0x5f8] sm:$0xff]
      %v1239 = vld [vmem:[%s3 + $0x600] sm:$0xff]
      %v1240 = vld [vmem:[%s3 + $0x608] sm:$0xff]
      %v1241 = vld [vmem:[%s3 + $0x610] sm:$0xff]
      %v1242 = vld [vmem:[%s3 + $0x618] sm:$0xff]
      %v1243 = vld [vmem:[%s3 + $0x620] sm:$0xff]
      %v1244 = vld [vmem:[%s3 + $0x628] sm:$0xff]
      %v1245 = vld [vmem:[%s3 + $0x630] sm:$0xff]
      %v1246 = vld [vmem:[%s3 + $0x638] sm:$0xff]
      %v1247 = vld [vmem:[%s3 + $0x640] sm:$0xff]
      %v1248 = vld [vmem:[%s3 + $0x648] sm:$0xff]
      %v1249 = vld [vmem:[%s3 + $0x650] sm:$0xff]
      %v1250 = vld [vmem:[%s3 + $0x658] sm:$0xff]
      %v1251 = vld [vmem:[%s3 + $0x660] sm:$0xff]
      %v1252 = vld [vmem:[%s3 + $0x668] sm:$0xff]
      %v1253 = vld [vmem:[%s3 + $0x670] sm:$0xff]
      %v1254 = vld [vmem:[%s3 + $0x678] sm:$0xff]
      %v1255 = vld [vmem:[%s3 + $0x680] sm:$0xff]
      %v1256 = vld [vmem:[%s3 + $0x688] sm:$0xff]
      %v1257 = vld [vmem:[%s3 + $0x690] sm:$0xff]
      %v1258 = vld [vmem:[%s3 + $0x698] sm:$0xff]
      %v1259 = vld [vmem:[%s3 + $0x6a0] sm:$0xff]
      %v1260 = vld [vmem:[%s3 + $0x6a8] sm:$0xff]
      %v1261 = vld [vmem:[%s3 + $0x6b0] sm:$0xff]
      %v1262 = vld [vmem:[%s3 + $0x6b8] sm:$0xff]
      %v1263 = vld [vmem:[%s3 + $0x6c0] sm:$0xff]
      %v1264 = vld [vmem:[%s3 + $0x6c8] sm:$0xff]
      %v1265 = vld [vmem:[%s3 + $0x6d0] sm:$0xff]
      %v1266 = vld [vmem:[%s3 + $0x6d8] sm:$0xff]
      %v1267 = vld [vmem:[%s3 + $0x6e0] sm:$0xff]
      %v1268 = vld [vmem:[%s3 + $0x6e8] sm:$0xff]
      %v1269 = vld [vmem:[%s3 + $0x6f0] sm:$0xff]
      %v1270 = vld [vmem:[%s3 + $0x6f8] sm:$0xff]
      %v1271 = vld [vmem:[%s3 + $0x700] sm:$0xff]
      %v1272 = vld [vmem:[%s3 + $0x708] sm:$0xff]
      %v1273 = vld [vmem:[%s3 + $0x710] sm:$0xff]
      %v1274 = vld [vmem:[%s3 + $0x718] sm:$0xff]
      %v1275 = vld [vmem:[%s3 + $0x720] sm:$0xff]
      %v1276 = vld [vmem:[%s3 + $0x728] sm:$0xff]
      %v1277 = vld [vmem:[%s3 + $0x730] sm:$0xff]
      %v1278 = vld [vmem:[%s3 + $0x738] sm:$0xff]
      %v1279 = vld [vmem:[%s3 + $0x740] sm:$0xff]
      %v1280 = vld [vmem:[%s3 + $0x748] sm:$0xff]
      %v1281 = vld [vmem:[%s3 + $0x750] sm:$0xff]
      %v1282 = vld [vmem:[%s3 + $0x758] sm:$0xff]
      %v1283 = vld [vmem:[%s3 + $0x760] sm:$0xff]
      %v1284 = vld [vmem:[%s3 + $0x768] sm:$0xff]
      %v1285 = vld [vmem:[%s3 + $0x770] sm:$0xff]
      %v1286 = vld [vmem:[%s3 + $0x778] sm:$0xff]
      %v1287 = vld [vmem:[%s3 + $0x780] sm:$0xff]
      %v1288 = vld [vmem:[%s3 + $0x788] sm:$0xff]
      %v1289 = vld [vmem:[%s3 + $0x790] sm:$0xff]
      %v1290 = vld [vmem:[%s3 + $0x798] sm:$0xff]
      %v1291 = vld [vmem:[%s3 + $0x7a0] sm:$0xff]
      %v1292 = vld [vmem:[%s3 + $0x7a8] sm:$0xff]
      %v1293 = vld [vmem:[%s3 + $0x7b0] sm:$0xff]
      %v1294 = vld [vmem:[%s3 + $0x7b8] sm:$0xff]
      %v1295 = vld [vmem:[%s3 + $0x7c0] sm:$0xff]
      %v1296 = vld [vmem:[%s3 + $0x7c8] sm:$0xff]
      %v1297 = vld [vmem:[%s3 + $0x7d0] sm:$0xff]
      %v1298 = vld [vmem:[%s3 + $0x7d8] sm:$0xff]
      %v1299 = vld [vmem:[%s3 + $0x7e0] sm:$0xff]
      %v1300 = vld [vmem:[%s3 + $0x7e8] sm:$0xff]
      %v1301 = vld [vmem:[%s3 + $0x7f0] sm:$0xff]
      %v1302 = vld [vmem:[%s3 + $0x7f8] sm:$0xff]
      %v1303 = vld [vmem:[%s3 + $0x800] sm:$0xff]
      %v1304 = vld [vmem:[%s3 + $0x808] sm:$0xff]
      %v1305 = vld [vmem:[%s3 + $0x810] sm:$0xff]
      %v1306 = vld [vmem:[%s3 + $0x818] sm:$0xff]
      %v1307 = vld [vmem:[%s3 + $0x820] sm:$0xff]
      %v1308 = vld [vmem:[%s3 + $0x828] sm:$0xff]
      %v1309 = vld [vmem:[%s3 + $0x830] sm:$0xff]
      %v1310 = vld [vmem:[%s3 + $0x838] sm:$0xff]
      %v1311 = vld [vmem:[%s3 + $0x840] sm:$0xff]
      %v1312 = vld [vmem:[%s3 + $0x848] sm:$0xff]
      %v1313 = vld [vmem:[%s3 + $0x850] sm:$0xff]
      %v1314 = vld [vmem:[%s3 + $0x858] sm:$0xff]
      %v1315 = vld [vmem:[%s3 + $0x860] sm:$0xff]
      %v1316 = vld [vmem:[%s3 + $0x868] sm:$0xff]
      %v1317 = vld [vmem:[%s3 + $0x870] sm:$0xff]
      %v1318 = vld [vmem:[%s3 + $0x878] sm:$0xff]
      %v1319 = vld [vmem:[%s3 + $0x880] sm:$0xff]
      %v1320 = vld [vmem:[%s3 + $0x888] sm:$0xff]
      %v1321 = vld [vmem:[%s3 + $0x890] sm:$0xff]
      %v1322 = vld [vmem:[%s3 + $0x898] sm:$0xff]
      %v1323 = vld [vmem:[%s3 + $0x8a0] sm:$0xff]
      %v1324 = vld [vmem:[%s3 + $0x8a8] sm:$0xff]
      %v1325 = vld [vmem:[%s3 + $0x8b0] sm:$0xff]
      %v1326 = vld [vmem:[%s3 + $0x8b8] sm:$0xff]
      %v1327 = vld [vmem:[%s3 + $0x8c0] sm:$0xff]
      %v1328 = vld [vmem:[%s3 + $0x8c8] sm:$0xff]
      %v1329 = vld [vmem:[%s3 + $0x8d0] sm:$0xff]
      %v1330 = vld [vmem:[%s3 + $0x8d8] sm:$0xff]
      %v1331 = vld [vmem:[%s3 + $0x8e0] sm:$0xff]
      %v1332 = vld [vmem:[%s3 + $0x8e8] sm:$0xff]
      %v1333 = vld [vmem:[%s3 + $0x8f0] sm:$0xff]
      %v1334 = vld [vmem:[%s3 + $0x8f8] sm:$0xff]
      %v1335 = vld [vmem:[%s3 + $0x900] sm:$0xff]
      %v1336 = vld [vmem:[%s3 + $0x908] sm:$0xff]
      %v1337 = vld [vmem:[%s3 + $0x910] sm:$0xff]
      %v1338 = vld [vmem:[%s3 + $0x918] sm:$0xff]
      %v1339 = vld [vmem:[%s3 + $0x920] sm:$0xff]
      %v1340 = vld [vmem:[%s3 + $0x928] sm:$0xff]
      %v1341 = vld [vmem:[%s3 + $0x930] sm:$0xff]
      %v1342 = vld [vmem:[%s3 + $0x938] sm:$0xff]
      %v1343 = vld [vmem:[%s3 + $0x940] sm:$0xff]
      %v1344 = vld [vmem:[%s3 + $0x948] sm:$0xff]
      %v1345 = vld [vmem:[%s3 + $0x950] sm:$0xff]
      %v1346 = vld [vmem:[%s3 + $0x958] sm:$0xff]
      %v1347 = vld [vmem:[%s3 + $0x960] sm:$0xff]
      %v1348 = vld [vmem:[%s3 + $0x968] sm:$0xff]
      %v1349 = vld [vmem:[%s3 + $0x970] sm:$0xff]
      %v1350 = vld [vmem:[%s3 + $0x978] sm:$0xff]
      %v1351 = vld [vmem:[%s3 + $0x980] sm:$0xff]
      %v1352 = vld [vmem:[%s3 + $0x988] sm:$0xff]
      %v1353 = vld [vmem:[%s3 + $0x990] sm:$0xff]
      %v1354 = vld [vmem:[%s3 + $0x998] sm:$0xff]
      %v1355 = vld [vmem:[%s3 + $0x9a0] sm:$0xff]
      %v1356 = vld [vmem:[%s3 + $0x9a8] sm:$0xff]
      %v1357 = vld [vmem:[%s3 + $0x9b0] sm:$0xff]
      %v1358 = vld [vmem:[%s3 + $0x9b8] sm:$0xff]
      %v1359 = vld [vmem:[%s3 + $0x9c0] sm:$0xff]
      %v1360 = vld [vmem:[%s3 + $0x9c8] sm:$0xff]
      %v1361 = vld [vmem:[%s3 + $0x9d0] sm:$0xff]
      %v1362 = vld [vmem:[%s3 + $0x9d8] sm:$0xff]
      %v1363 = vld [vmem:[%s3 + $0x9e0] sm:$0xff]
      %v1364 = vld [vmem:[%s3 + $0x9e8] sm:$0xff]
      %v1365 = vld [vmem:[%s3 + $0x9f0] sm:$0xff]
      %v1366 = vld [vmem:[%s3 + $0x9f8] sm:$0xff]
      %v1367 = vld [vmem:[%s3 + $0xa00] sm:$0xff]
      %v1368 = vld [vmem:[%s3 + $0xa08] sm:$0xff]
      %v1369 = vld [vmem:[%s3 + $0xa10] sm:$0xff]
      %v1370 = vld [vmem:[%s3 + $0xa18] sm:$0xff]
      %v1371 = vld [vmem:[%s3 + $0xa20] sm:$0xff]
      %v1372 = vld [vmem:[%s3 + $0xa28] sm:$0xff]
      %v1373 = vld [vmem:[%s3 + $0xa30] sm:$0xff]
      %v1374 = vld [vmem:[%s3 + $0xa38] sm:$0xff]
      %v1375 = vld [vmem:[%s3 + $0xa40] sm:$0xff]
      %v1376 = vld [vmem:[%s3 + $0xa48] sm:$0xff]
      %v1377 = vld [vmem:[%s3 + $0xa50] sm:$0xff]
      %v1378 = vld [vmem:[%s3 + $0xa58] sm:$0xff]
      %v1379 = vld [vmem:[%s3 + $0xa60] sm:$0xff]
      %v1380 = vld [vmem:[%s3 + $0xa68] sm:$0xff]
      %v1381 = vld [vmem:[%s3 + $0xa70] sm:$0xff]
      %v1382 = vld [vmem:[%s3 + $0xa78] sm:$0xff]
      %v1383 = vld [vmem:[%s3 + $0xa80] sm:$0xff]
      %v1384 = vld [vmem:[%s3 + $0xa88] sm:$0xff]
      %v1385 = vld [vmem:[%s3 + $0xa90] sm:$0xff]
      %v1386 = vld [vmem:[%s3 + $0xa98] sm:$0xff]
      %v1387 = vld [vmem:[%s3 + $0xaa0] sm:$0xff]
      %v1388 = vld [vmem:[%s3 + $0xaa8] sm:$0xff]
      %v1389 = vld [vmem:[%s3 + $0xab0] sm:$0xff]
      %v1390 = vld [vmem:[%s3 + $0xab8] sm:$0xff]
      %v1391 = vld [vmem:[%s3 + $0xac0] sm:$0xff]
      %v1392 = vld [vmem:[%s3 + $0xac8] sm:$0xff]
      %v1393 = vld [vmem:[%s3 + $0xad0] sm:$0xff]
      %v1394 = vld [vmem:[%s3 + $0xad8] sm:$0xff]
      %v1395 = vld [vmem:[%s3 + $0xae0] sm:$0xff]
      %v1396 = vld [vmem:[%s3 + $0xae8] sm:$0xff]
      %v1397 = vld [vmem:[%s3 + $0xaf0] sm:$0xff]
      %v1398 = vld [vmem:[%s3 + $0xaf8] sm:$0xff]
      %v1751 = vunpack.c.l.b16 %v1047
      %v1752 = vunpack.c.h.b16 %v1047
      %v1753 = vunpack.c.l.b16 %v1048
      %v1754 = vunpack.c.h.b16 %v1048
      %v1755 = vunpack.c.l.b16 %v1049
      %v1756 = vunpack.c.h.b16 %v1049
      %v1757 = vunpack.c.l.b16 %v1050
      %v1758 = vunpack.c.h.b16 %v1050
      %v1759 = vunpack.c.l.b16 %v1051
      %v1760 = vunpack.c.h.b16 %v1051
      %v1761 = vunpack.c.l.b16 %v1052
      %v1762 = vunpack.c.h.b16 %v1052
      %v1763 = vunpack.c.l.b16 %v1053
      %v1764 = vunpack.c.h.b16 %v1053
      %v1765 = vunpack.c.l.b16 %v1054
      %v1766 = vunpack.c.h.b16 %v1054
      %v1767 = vunpack.c.l.b16 %v1055
      %v1768 = vunpack.c.h.b16 %v1055
      %v1769 = vunpack.c.l.b16 %v1056
      %v1770 = vunpack.c.h.b16 %v1056
      %v1771 = vunpack.c.l.b16 %v1057
      %v1772 = vunpack.c.h.b16 %v1057
      %v1773 = vunpack.c.l.b16 %v1058
      %v1774 = vunpack.c.h.b16 %v1058
      %v1775 = vunpack.c.l.b16 %v1059
      %v1776 = vunpack.c.h.b16 %v1059
      %v1777 = vunpack.c.l.b16 %v1060
      %v1778 = vunpack.c.h.b16 %v1060
      %v1779 = vunpack.c.l.b16 %v1061
      %v1780 = vunpack.c.h.b16 %v1061
      %v1781 = vunpack.c.l.b16 %v1062
      %v1782 = vunpack.c.h.b16 %v1062
      %v1783 = vunpack.c.l.b16 %v1063
      %v1784 = vunpack.c.h.b16 %v1063
      %v1785 = vunpack.c.l.b16 %v1064
      %v1786 = vunpack.c.h.b16 %v1064
      %v1787 = vunpack.c.l.b16 %v1065
      %v1788 = vunpack.c.h.b16 %v1065
      %v1789 = vunpack.c.l.b16 %v1066
      %v1790 = vunpack.c.h.b16 %v1066
      %v1791 = vunpack.c.l.b16 %v1067
      %v1792 = vunpack.c.h.b16 %v1067
      %v1793 = vunpack.c.l.b16 %v1068
      %v1794 = vunpack.c.h.b16 %v1068
      %v1795 = vunpack.c.l.b16 %v1069
      %v1796 = vunpack.c.h.b16 %v1069
      %v1797 = vunpack.c.l.b16 %v1070
      %v1798 = vunpack.c.h.b16 %v1070
      %v1799 = vunpack.c.l.b16 %v1071
      %v1800 = vunpack.c.h.b16 %v1071
      %v1801 = vunpack.c.l.b16 %v1072
      %v1802 = vunpack.c.h.b16 %v1072
      %v1803 = vunpack.c.l.b16 %v1073
      %v1804 = vunpack.c.h.b16 %v1073
      %v1805 = vunpack.c.l.b16 %v1074
      %v1806 = vunpack.c.h.b16 %v1074
      %v1807 = vunpack.c.l.b16 %v1075
      %v1808 = vunpack.c.h.b16 %v1075
      %v1809 = vunpack.c.l.b16 %v1076
      %v1810 = vunpack.c.h.b16 %v1076
      %v1811 = vunpack.c.l.b16 %v1077
      %v1812 = vunpack.c.h.b16 %v1077
      %v1813 = vunpack.c.l.b16 %v1078
      %v1814 = vunpack.c.h.b16 %v1078
      %v1815 = vunpack.c.l.b16 %v1079
      %v1816 = vunpack.c.h.b16 %v1079
      %v1817 = vunpack.c.l.b16 %v1080
      %v1818 = vunpack.c.h.b16 %v1080
      %v1819 = vunpack.c.l.b16 %v1081
      %v1820 = vunpack.c.h.b16 %v1081
      %v1821 = vunpack.c.l.b16 %v1082
      %v1822 = vunpack.c.h.b16 %v1082
      %v1823 = vunpack.c.l.b16 %v1083
      %v1824 = vunpack.c.h.b16 %v1083
      %v1825 = vunpack.c.l.b16 %v1084
      %v1826 = vunpack.c.h.b16 %v1084
      %v1827 = vunpack.c.l.b16 %v1085
      %v1828 = vunpack.c.h.b16 %v1085
      %v1829 = vunpack.c.l.b16 %v1086
      %v1830 = vunpack.c.h.b16 %v1086
      %v1831 = vunpack.c.l.b16 %v1087
      %v1832 = vunpack.c.h.b16 %v1087
      %v1833 = vunpack.c.l.b16 %v1088
      %v1834 = vunpack.c.h.b16 %v1088
      %v1835 = vunpack.c.l.b16 %v1089
      %v1836 = vunpack.c.h.b16 %v1089
      %v1837 = vunpack.c.l.b16 %v1090
      %v1838 = vunpack.c.h.b16 %v1090
      %v1839 = vunpack.c.l.b16 %v1091
      %v1840 = vunpack.c.h.b16 %v1091
      %v1841 = vunpack.c.l.b16 %v1092
      %v1842 = vunpack.c.h.b16 %v1092
      %v1843 = vunpack.c.l.b16 %v1093
      %v1844 = vunpack.c.h.b16 %v1093
      %v1845 = vunpack.c.l.b16 %v1094
      %v1846 = vunpack.c.h.b16 %v1094
      %v1847 = vunpack.c.l.b16 %v1095
      %v1848 = vunpack.c.h.b16 %v1095
      %v1849 = vunpack.c.l.b16 %v1096
      %v1850 = vunpack.c.h.b16 %v1096
      %v1851 = vunpack.c.l.b16 %v1097
      %v1852 = vunpack.c.h.b16 %v1097
      %v1853 = vunpack.c.l.b16 %v1098
      %v1854 = vunpack.c.h.b16 %v1098
      %v1855 = vunpack.c.l.b16 %v1099
      %v1856 = vunpack.c.h.b16 %v1099
      %v1857 = vunpack.c.l.b16 %v1100
      %v1858 = vunpack.c.h.b16 %v1100
      %v1859 = vunpack.c.l.b16 %v1101
      %v1860 = vunpack.c.h.b16 %v1101
      %v1861 = vunpack.c.l.b16 %v1102
      %v1862 = vunpack.c.h.b16 %v1102
      %v1863 = vunpack.c.l.b16 %v1103
      %v1864 = vunpack.c.h.b16 %v1103
      %v1865 = vunpack.c.l.b16 %v1104
      %v1866 = vunpack.c.h.b16 %v1104
      %v1867 = vunpack.c.l.b16 %v1105
      %v1868 = vunpack.c.h.b16 %v1105
      %v1869 = vunpack.c.l.b16 %v1106
      %v1870 = vunpack.c.h.b16 %v1106
      %v1871 = vunpack.c.l.b16 %v1107
      %v1872 = vunpack.c.h.b16 %v1107
      %v1873 = vunpack.c.l.b16 %v1108
      %v1874 = vunpack.c.h.b16 %v1108
      %v1875 = vunpack.c.l.b16 %v1109
      %v1876 = vunpack.c.h.b16 %v1109
      %v1877 = vunpack.c.l.b16 %v1110
      %v1878 = vunpack.c.h.b16 %v1110
      %v1879 = vunpack.c.l.b16 %v1111
      %v1880 = vunpack.c.h.b16 %v1111
      %v1881 = vunpack.c.l.b16 %v1112
      %v1882 = vunpack.c.h.b16 %v1112
      %v1883 = vunpack.c.l.b16 %v1113
      %v1884 = vunpack.c.h.b16 %v1113
      %v1885 = vunpack.c.l.b16 %v1114
      %v1886 = vunpack.c.h.b16 %v1114
      %v1887 = vunpack.c.l.b16 %v1115
      %v1888 = vunpack.c.h.b16 %v1115
      %v1889 = vunpack.c.l.b16 %v1116
      %v1890 = vunpack.c.h.b16 %v1116
      %v1891 = vunpack.c.l.b16 %v1117
      %v1892 = vunpack.c.h.b16 %v1117
      %v1893 = vunpack.c.l.b16 %v1118
      %v1894 = vunpack.c.h.b16 %v1118
      %v1895 = vunpack.c.l.b16 %v1119
      %v1896 = vunpack.c.h.b16 %v1119
      %v1897 = vunpack.c.l.b16 %v1120
      %v1898 = vunpack.c.h.b16 %v1120
      %v1899 = vunpack.c.l.b16 %v1121
      %v1900 = vunpack.c.h.b16 %v1121
      %v1901 = vunpack.c.l.b16 %v1122
      %v1902 = vunpack.c.h.b16 %v1122
      %v1903 = vunpack.c.l.b16 %v1123
      %v1904 = vunpack.c.h.b16 %v1123
      %v1905 = vunpack.c.l.b16 %v1124
      %v1906 = vunpack.c.h.b16 %v1124
      %v1907 = vunpack.c.l.b16 %v1125
      %v1908 = vunpack.c.h.b16 %v1125
      %v1909 = vunpack.c.l.b16 %v1126
      %v1910 = vunpack.c.h.b16 %v1126
      %v1911 = vunpack.c.l.b16 %v1127
      %v1912 = vunpack.c.h.b16 %v1127
      %v1913 = vunpack.c.l.b16 %v1128
      %v1914 = vunpack.c.h.b16 %v1128
      %v1915 = vunpack.c.l.b16 %v1129
      %v1916 = vunpack.c.h.b16 %v1129
      %v1917 = vunpack.c.l.b16 %v1130
      %v1918 = vunpack.c.h.b16 %v1130
      %v1919 = vunpack.c.l.b16 %v1131
      %v1920 = vunpack.c.h.b16 %v1131
      %v1921 = vunpack.c.l.b16 %v1132
      %v1922 = vunpack.c.h.b16 %v1132
      %v1923 = vunpack.c.l.b16 %v1133
      %v1924 = vunpack.c.h.b16 %v1133
      %v1925 = vunpack.c.l.b16 %v1134
      %v1926 = vunpack.c.h.b16 %v1134
      %v1927 = vunpack.c.l.b16 %v1135
      %v1928 = vunpack.c.h.b16 %v1135
      %v1929 = vunpack.c.l.b16 %v1136
      %v1930 = vunpack.c.h.b16 %v1136
      %v1931 = vunpack.c.l.b16 %v1137
      %v1932 = vunpack.c.h.b16 %v1137
      %v1933 = vunpack.c.l.b16 %v1138
      %v1934 = vunpack.c.h.b16 %v1138
      %v1935 = vunpack.c.l.b16 %v1139
      %v1936 = vunpack.c.h.b16 %v1139
      %v1937 = vunpack.c.l.b16 %v1140
      %v1938 = vunpack.c.h.b16 %v1140
      %v1939 = vunpack.c.l.b16 %v1141
      %v1940 = vunpack.c.h.b16 %v1141
      %v1941 = vunpack.c.l.b16 %v1142
      %v1942 = vunpack.c.h.b16 %v1142
      %v1943 = vunpack.c.l.b16 %v1143
      %v1944 = vunpack.c.h.b16 %v1143
      %v1945 = vunpack.c.l.b16 %v1144
      %v1946 = vunpack.c.h.b16 %v1144
      %v1947 = vunpack.c.l.b16 %v1145
      %v1948 = vunpack.c.h.b16 %v1145
      %v1949 = vunpack.c.l.b16 %v1146
      %v1950 = vunpack.c.h.b16 %v1146
      %v1951 = vunpack.c.l.b16 %v1147
      %v1952 = vunpack.c.h.b16 %v1147
      %v1953 = vunpack.c.l.b16 %v1148
      %v1954 = vunpack.c.h.b16 %v1148
      %v1955 = vunpack.c.l.b16 %v1149
      %v1956 = vunpack.c.h.b16 %v1149
      %v1957 = vunpack.c.l.b16 %v1150
      %v1958 = vunpack.c.h.b16 %v1150
      %v1959 = vunpack.c.l.b16 %v1151
      %v1960 = vunpack.c.h.b16 %v1151
      %v1961 = vunpack.c.l.b16 %v1152
      %v1962 = vunpack.c.h.b16 %v1152
      %v1963 = vunpack.c.l.b16 %v1153
      %v1964 = vunpack.c.h.b16 %v1153
      %v1965 = vunpack.c.l.b16 %v1154
      %v1966 = vunpack.c.h.b16 %v1154
      %v1967 = vunpack.c.l.b16 %v1155
      %v1968 = vunpack.c.h.b16 %v1155
      %v1969 = vunpack.c.l.b16 %v1156
      %v1970 = vunpack.c.h.b16 %v1156
      %v1971 = vunpack.c.l.b16 %v1157
      %v1972 = vunpack.c.h.b16 %v1157
      %v1973 = vunpack.c.l.b16 %v1158
      %v1974 = vunpack.c.h.b16 %v1158
      %v1975 = vunpack.c.l.b16 %v1159
      %v1976 = vunpack.c.h.b16 %v1159
      %v1977 = vunpack.c.l.b16 %v1160
      %v1978 = vunpack.c.h.b16 %v1160
      %v1979 = vunpack.c.l.b16 %v1161
      %v1980 = vunpack.c.h.b16 %v1161
      %v1981 = vunpack.c.l.b16 %v1162
      %v1982 = vunpack.c.h.b16 %v1162
      %v1983 = vunpack.c.l.b16 %v1163
      %v1984 = vunpack.c.h.b16 %v1163
      %v1985 = vunpack.c.l.b16 %v1164
      %v1986 = vunpack.c.h.b16 %v1164
      %v1987 = vunpack.c.l.b16 %v1165
      %v1988 = vunpack.c.h.b16 %v1165
      %v1989 = vunpack.c.l.b16 %v1166
      %v1990 = vunpack.c.h.b16 %v1166
      %v1991 = vunpack.c.l.b16 %v1167
      %v1992 = vunpack.c.h.b16 %v1167
      %v1993 = vunpack.c.l.b16 %v1168
      %v1994 = vunpack.c.h.b16 %v1168
      %v1995 = vunpack.c.l.b16 %v1169
      %v1996 = vunpack.c.h.b16 %v1169
      %v1997 = vunpack.c.l.b16 %v1170
      %v1998 = vunpack.c.h.b16 %v1170
      %v1999 = vunpack.c.l.b16 %v1171
      %v2000 = vunpack.c.h.b16 %v1171
      %v2001 = vunpack.c.l.b16 %v1172
      %v2002 = vunpack.c.h.b16 %v1172
      %v2003 = vunpack.c.l.b16 %v1173
      %v2004 = vunpack.c.h.b16 %v1173
      %v2005 = vunpack.c.l.b16 %v1174
      %v2006 = vunpack.c.h.b16 %v1174
      %v2007 = vunpack.c.l.b16 %v1175
      %v2008 = vunpack.c.h.b16 %v1175
      %v2009 = vunpack.c.l.b16 %v1176
      %v2010 = vunpack.c.h.b16 %v1176
      %v2011 = vunpack.c.l.b16 %v1177
      %v2012 = vunpack.c.h.b16 %v1177
      %v2013 = vunpack.c.l.b16 %v1178
      %v2014 = vunpack.c.h.b16 %v1178
      %v2015 = vunpack.c.l.b16 %v1179
      %v2016 = vunpack.c.h.b16 %v1179
      %v2017 = vunpack.c.l.b16 %v1180
      %v2018 = vunpack.c.h.b16 %v1180
      %v2019 = vunpack.c.l.b16 %v1181
      %v2020 = vunpack.c.h.b16 %v1181
      %v2021 = vunpack.c.l.b16 %v1182
      %v2022 = vunpack.c.h.b16 %v1182
      %v2023 = vunpack.c.l.b16 %v1183
      %v2024 = vunpack.c.h.b16 %v1183
      %v2025 = vunpack.c.l.b16 %v1184
      %v2026 = vunpack.c.h.b16 %v1184
      %v2027 = vunpack.c.l.b16 %v1185
      %v2028 = vunpack.c.h.b16 %v1185
      %v2029 = vunpack.c.l.b16 %v1186
      %v2030 = vunpack.c.h.b16 %v1186
      %v2031 = vunpack.c.l.b16 %v1187
      %v2032 = vunpack.c.h.b16 %v1187
      %v2033 = vunpack.c.l.b16 %v1188
      %v2034 = vunpack.c.h.b16 %v1188
      %v2035 = vunpack.c.l.b16 %v1189
      %v2036 = vunpack.c.h.b16 %v1189
      %v2037 = vunpack.c.l.b16 %v1190
      %v2038 = vunpack.c.h.b16 %v1190
      %v2039 = vunpack.c.l.b16 %v1191
      %v2040 = vunpack.c.h.b16 %v1191
      %v2041 = vunpack.c.l.b16 %v1192
      %v2042 = vunpack.c.h.b16 %v1192
      %v2043 = vunpack.c.l.b16 %v1193
      %v2044 = vunpack.c.h.b16 %v1193
      %v2045 = vunpack.c.l.b16 %v1194
      %v2046 = vunpack.c.h.b16 %v1194
      %v2047 = vunpack.c.l.b16 %v1195
      %v2048 = vunpack.c.h.b16 %v1195
      %v2049 = vunpack.c.l.b16 %v1196
      %v2050 = vunpack.c.h.b16 %v1196
      %v2051 = vunpack.c.l.b16 %v1197
      %v2052 = vunpack.c.h.b16 %v1197
      %v2053 = vunpack.c.l.b16 %v1198
      %v2054 = vunpack.c.h.b16 %v1198
      %v2055 = vunpack.c.l.b16 %v1199
      %v2056 = vunpack.c.h.b16 %v1199
      %v2057 = vunpack.c.l.b16 %v1200
      %v2058 = vunpack.c.h.b16 %v1200
      %v2059 = vunpack.c.l.b16 %v1201
      %v2060 = vunpack.c.h.b16 %v1201
      %v2061 = vunpack.c.l.b16 %v1202
      %v2062 = vunpack.c.h.b16 %v1202
      %v2063 = vunpack.c.l.b16 %v1203
      %v2064 = vunpack.c.h.b16 %v1203
      %v2065 = vunpack.c.l.b16 %v1204
      %v2066 = vunpack.c.h.b16 %v1204
      %v2067 = vunpack.c.l.b16 %v1205
      %v2068 = vunpack.c.h.b16 %v1205
      %v2069 = vunpack.c.l.b16 %v1206
      %v2070 = vunpack.c.h.b16 %v1206
      %v2071 = vunpack.c.l.b16 %v1207
      %v2072 = vunpack.c.h.b16 %v1207
      %v2073 = vunpack.c.l.b16 %v1208
      %v2074 = vunpack.c.h.b16 %v1208
      %v2075 = vunpack.c.l.b16 %v1209
      %v2076 = vunpack.c.h.b16 %v1209
      %v2077 = vunpack.c.l.b16 %v1210
      %v2078 = vunpack.c.h.b16 %v1210
      %v2079 = vunpack.c.l.b16 %v1211
      %v2080 = vunpack.c.h.b16 %v1211
      %v2081 = vunpack.c.l.b16 %v1212
      %v2082 = vunpack.c.h.b16 %v1212
      %v2083 = vunpack.c.l.b16 %v1213
      %v2084 = vunpack.c.h.b16 %v1213
      %v2085 = vunpack.c.l.b16 %v1214
      %v2086 = vunpack.c.h.b16 %v1214
      %v2087 = vunpack.c.l.b16 %v1215
      %v2088 = vunpack.c.h.b16 %v1215
      %v2089 = vunpack.c.l.b16 %v1216
      %v2090 = vunpack.c.h.b16 %v1216
      %v2091 = vunpack.c.l.b16 %v1217
      %v2092 = vunpack.c.h.b16 %v1217
      %v2093 = vunpack.c.l.b16 %v1218
      %v2094 = vunpack.c.h.b16 %v1218
      %v2095 = vunpack.c.l.b16 %v1219
      %v2096 = vunpack.c.h.b16 %v1219
      %v2097 = vunpack.c.l.b16 %v1220
      %v2098 = vunpack.c.h.b16 %v1220
      %v2099 = vunpack.c.l.b16 %v1221
      %v2100 = vunpack.c.h.b16 %v1221
      %v2101 = vunpack.c.l.b16 %v1222
      %v2102 = vunpack.c.h.b16 %v1222
      %v2103 = vunpack.c.l.b16 %v1223
      %v2104 = vunpack.c.h.b16 %v1223
      %v2105 = vunpack.c.l.b16 %v1224
      %v2106 = vunpack.c.h.b16 %v1224
      %v2107 = vunpack.c.l.b16 %v1225
      %v2108 = vunpack.c.h.b16 %v1225
      %v2109 = vunpack.c.l.b16 %v1226
      %v2110 = vunpack.c.h.b16 %v1226
      %v2111 = vunpack.c.l.b16 %v1227
      %v2112 = vunpack.c.h.b16 %v1227
      %v2113 = vunpack.c.l.b16 %v1228
      %v2114 = vunpack.c.h.b16 %v1228
      %v2115 = vunpack.c.l.b16 %v1229
      %v2116 = vunpack.c.h.b16 %v1229
      %v2117 = vunpack.c.l.b16 %v1230
      %v2118 = vunpack.c.h.b16 %v1230
      %v2119 = vunpack.c.l.b16 %v1231
      %v2120 = vunpack.c.h.b16 %v1231
      %v2121 = vunpack.c.l.b16 %v1232
      %v2122 = vunpack.c.h.b16 %v1232
      %v2123 = vunpack.c.l.b16 %v1233
      %v2124 = vunpack.c.h.b16 %v1233
      %v2125 = vunpack.c.l.b16 %v1234
      %v2126 = vunpack.c.h.b16 %v1234
      %v2127 = vunpack.c.l.b16 %v1235
      %v2128 = vunpack.c.h.b16 %v1235
      %v2129 = vunpack.c.l.b16 %v1236
      %v2130 = vunpack.c.h.b16 %v1236
      %v2131 = vunpack.c.l.b16 %v1237
      %v2132 = vunpack.c.h.b16 %v1237
      %v2133 = vunpack.c.l.b16 %v1238
      %v2134 = vunpack.c.h.b16 %v1238
      %v2135 = vunpack.c.l.b16 %v1239
      %v2136 = vunpack.c.h.b16 %v1239
      %v2137 = vunpack.c.l.b16 %v1240
      %v2138 = vunpack.c.h.b16 %v1240
      %v2139 = vunpack.c.l.b16 %v1241
      %v2140 = vunpack.c.h.b16 %v1241
      %v2141 = vunpack.c.l.b16 %v1242
      %v2142 = vunpack.c.h.b16 %v1242
      %v2143 = vunpack.c.l.b16 %v1243
      %v2144 = vunpack.c.h.b16 %v1243
      %v2145 = vunpack.c.l.b16 %v1244
      %v2146 = vunpack.c.h.b16 %v1244
      %v2147 = vunpack.c.l.b16 %v1245
      %v2148 = vunpack.c.h.b16 %v1245
      %v2149 = vunpack.c.l.b16 %v1246
      %v2150 = vunpack.c.h.b16 %v1246
      %v2151 = vunpack.c.l.b16 %v1247
      %v2152 = vunpack.c.h.b16 %v1247
      %v2153 = vunpack.c.l.b16 %v1248
      %v2154 = vunpack.c.h.b16 %v1248
      %v2155 = vunpack.c.l.b16 %v1249
      %v2156 = vunpack.c.h.b16 %v1249
      %v2157 = vunpack.c.l.b16 %v1250
      %v2158 = vunpack.c.h.b16 %v1250
      %v2159 = vunpack.c.l.b16 %v1251
      %v2160 = vunpack.c.h.b16 %v1251
      %v2161 = vunpack.c.l.b16 %v1252
      %v2162 = vunpack.c.h.b16 %v1252
      %v2163 = vunpack.c.l.b16 %v1253
      %v2164 = vunpack.c.h.b16 %v1253
      %v2165 = vunpack.c.l.b16 %v1254
      %v2166 = vunpack.c.h.b16 %v1254
      %v2167 = vunpack.c.l.b16 %v1255
      %v2168 = vunpack.c.h.b16 %v1255
      %v2169 = vunpack.c.l.b16 %v1256
      %v2170 = vunpack.c.h.b16 %v1256
      %v2171 = vunpack.c.l.b16 %v1257
      %v2172 = vunpack.c.h.b16 %v1257
      %v2173 = vunpack.c.l.b16 %v1258
      %v2174 = vunpack.c.h.b16 %v1258
      %v2175 = vunpack.c.l.b16 %v1259
      %v2176 = vunpack.c.h.b16 %v1259
      %v2177 = vunpack.c.l.b16 %v1260
      %v2178 = vunpack.c.h.b16 %v1260
      %v2179 = vunpack.c.l.b16 %v1261
      %v2180 = vunpack.c.h.b16 %v1261
      %v2181 = vunpack.c.l.b16 %v1262
      %v2182 = vunpack.c.h.b16 %v1262
      %v2183 = vunpack.c.l.b16 %v1263
      %v2184 = vunpack.c.h.b16 %v1263
      %v2185 = vunpack.c.l.b16 %v1264
      %v2186 = vunpack.c.h.b16 %v1264
      %v2187 = vunpack.c.l.b16 %v1265
      %v2188 = vunpack.c.h.b16 %v1265
      %v2189 = vunpack.c.l.b16 %v1266
      %v2190 = vunpack.c.h.b16 %v1266
      %v2191 = vunpack.c.l.b16 %v1267
      %v2192 = vunpack.c.h.b16 %v1267
      %v2193 = vunpack.c.l.b16 %v1268
      %v2194 = vunpack.c.h.b16 %v1268
      %v2195 = vunpack.c.l.b16 %v1269
      %v2196 = vunpack.c.h.b16 %v1269
      %v2197 = vunpack.c.l.b16 %v1270
      %v2198 = vunpack.c.h.b16 %v1270
      %v2199 = vunpack.c.l.b16 %v1271
      %v2200 = vunpack.c.h.b16 %v1271
      %v2201 = vunpack.c.l.b16 %v1272
      %v2202 = vunpack.c.h.b16 %v1272
      %v2203 = vunpack.c.l.b16 %v1273
      %v2204 = vunpack.c.h.b16 %v1273
      %v2205 = vunpack.c.l.b16 %v1274
      %v2206 = vunpack.c.h.b16 %v1274
      %v2207 = vunpack.c.l.b16 %v1275
      %v2208 = vunpack.c.h.b16 %v1275
      %v2209 = vunpack.c.l.b16 %v1276
      %v2210 = vunpack.c.h.b16 %v1276
      %v2211 = vunpack.c.l.b16 %v1277
      %v2212 = vunpack.c.h.b16 %v1277
      %v2213 = vunpack.c.l.b16 %v1278
      %v2214 = vunpack.c.h.b16 %v1278
      %v2215 = vunpack.c.l.b16 %v1279
      %v2216 = vunpack.c.h.b16 %v1279
      %v2217 = vunpack.c.l.b16 %v1280
      %v2218 = vunpack.c.h.b16 %v1280
      %v2219 = vunpack.c.l.b16 %v1281
      %v2220 = vunpack.c.h.b16 %v1281
      %v2221 = vunpack.c.l.b16 %v1282
      %v2222 = vunpack.c.h.b16 %v1282
      %v2223 = vunpack.c.l.b16 %v1283
      %v2224 = vunpack.c.h.b16 %v1283
      %v2225 = vunpack.c.l.b16 %v1284
      %v2226 = vunpack.c.h.b16 %v1284
      %v2227 = vunpack.c.l.b16 %v1285
      %v2228 = vunpack.c.h.b16 %v1285
      %v2229 = vunpack.c.l.b16 %v1286
      %v2230 = vunpack.c.h.b16 %v1286
      %v2231 = vunpack.c.l.b16 %v1287
      %v2232 = vunpack.c.h.b16 %v1287
      %v2233 = vunpack.c.l.b16 %v1288
      %v2234 = vunpack.c.h.b16 %v1288
      %v2235 = vunpack.c.l.b16 %v1289
      %v2236 = vunpack.c.h.b16 %v1289
      %v2237 = vunpack.c.l.b16 %v1290
      %v2238 = vunpack.c.h.b16 %v1290
      %v2239 = vunpack.c.l.b16 %v1291
      %v2240 = vunpack.c.h.b16 %v1291
      %v2241 = vunpack.c.l.b16 %v1292
      %v2242 = vunpack.c.h.b16 %v1292
      %v2243 = vunpack.c.l.b16 %v1293
      %v2244 = vunpack.c.h.b16 %v1293
      %v2245 = vunpack.c.l.b16 %v1294
      %v2246 = vunpack.c.h.b16 %v1294
      %v2247 = vunpack.c.l.b16 %v1295
      %v2248 = vunpack.c.h.b16 %v1295
      %v2249 = vunpack.c.l.b16 %v1296
      %v2250 = vunpack.c.h.b16 %v1296
      %v2251 = vunpack.c.l.b16 %v1297
      %v2252 = vunpack.c.h.b16 %v1297
      %v2253 = vunpack.c.l.b16 %v1298
      %v2254 = vunpack.c.h.b16 %v1298
      %v2255 = vunpack.c.l.b16 %v1299
      %v2256 = vunpack.c.h.b16 %v1299
      %v2257 = vunpack.c.l.b16 %v1300
      %v2258 = vunpack.c.h.b16 %v1300
      %v2259 = vunpack.c.l.b16 %v1301
      %v2260 = vunpack.c.h.b16 %v1301
      %v2261 = vunpack.c.l.b16 %v1302
      %v2262 = vunpack.c.h.b16 %v1302
      %v2263 = vunpack.c.l.b16 %v1303
      %v2264 = vunpack.c.h.b16 %v1303
      %v2265 = vunpack.c.l.b16 %v1304
      %v2266 = vunpack.c.h.b16 %v1304
      %v2267 = vunpack.c.l.b16 %v1305
      %v2268 = vunpack.c.h.b16 %v1305
      %v2269 = vunpack.c.l.b16 %v1306
      %v2270 = vunpack.c.h.b16 %v1306
      %v2271 = vunpack.c.l.b16 %v1307
      %v2272 = vunpack.c.h.b16 %v1307
      %v2273 = vunpack.c.l.b16 %v1308
      %v2274 = vunpack.c.h.b16 %v1308
      %v2275 = vunpack.c.l.b16 %v1309
      %v2276 = vunpack.c.h.b16 %v1309
      %v2277 = vunpack.c.l.b16 %v1310
      %v2278 = vunpack.c.h.b16 %v1310
      %v2279 = vunpack.c.l.b16 %v1311
      %v2280 = vunpack.c.h.b16 %v1311
      %v2281 = vunpack.c.l.b16 %v1312
      %v2282 = vunpack.c.h.b16 %v1312
      %v2283 = vunpack.c.l.b16 %v1313
      %v2284 = vunpack.c.h.b16 %v1313
      %v2285 = vunpack.c.l.b16 %v1314
      %v2286 = vunpack.c.h.b16 %v1314
      %v2287 = vunpack.c.l.b16 %v1315
      %v2288 = vunpack.c.h.b16 %v1315
      %v2289 = vunpack.c.l.b16 %v1316
      %v2290 = vunpack.c.h.b16 %v1316
      %v2291 = vunpack.c.l.b16 %v1317
      %v2292 = vunpack.c.h.b16 %v1317
      %v2293 = vunpack.c.l.b16 %v1318
      %v2294 = vunpack.c.h.b16 %v1318
      %v2295 = vunpack.c.l.b16 %v1319
      %v2296 = vunpack.c.h.b16 %v1319
      %v2297 = vunpack.c.l.b16 %v1320
      %v2298 = vunpack.c.h.b16 %v1320
      %v2299 = vunpack.c.l.b16 %v1321
      %v2300 = vunpack.c.h.b16 %v1321
      %v2301 = vunpack.c.l.b16 %v1322
      %v2302 = vunpack.c.h.b16 %v1322
      %v2303 = vunpack.c.l.b16 %v1323
      %v2304 = vunpack.c.h.b16 %v1323
      %v2305 = vunpack.c.l.b16 %v1324
      %v2306 = vunpack.c.h.b16 %v1324
      %v2307 = vunpack.c.l.b16 %v1325
      %v2308 = vunpack.c.h.b16 %v1325
      %v2309 = vunpack.c.l.b16 %v1326
      %v2310 = vunpack.c.h.b16 %v1326
      %v2311 = vunpack.c.l.b16 %v1327
      %v2312 = vunpack.c.h.b16 %v1327
      %v2313 = vunpack.c.l.b16 %v1328
      %v2314 = vunpack.c.h.b16 %v1328
      %v2315 = vunpack.c.l.b16 %v1329
      %v2316 = vunpack.c.h.b16 %v1329
      %v2317 = vunpack.c.l.b16 %v1330
      %v2318 = vunpack.c.h.b16 %v1330
      %v2319 = vunpack.c.l.b16 %v1331
      %v2320 = vunpack.c.h.b16 %v1331
      %v2321 = vunpack.c.l.b16 %v1332
      %v2322 = vunpack.c.h.b16 %v1332
      %v2323 = vunpack.c.l.b16 %v1333
      %v2324 = vunpack.c.h.b16 %v1333
      %v2325 = vunpack.c.l.b16 %v1334
      %v2326 = vunpack.c.h.b16 %v1334
      %v2327 = vunpack.c.l.b16 %v1335
      %v2328 = vunpack.c.h.b16 %v1335
      %v2329 = vunpack.c.l.b16 %v1336
      %v2330 = vunpack.c.h.b16 %v1336
      %v2331 = vunpack.c.l.b16 %v1337
      %v2332 = vunpack.c.h.b16 %v1337
      %v2333 = vunpack.c.l.b16 %v1338
      %v2334 = vunpack.c.h.b16 %v1338
      %v2335 = vunpack.c.l.b16 %v1339
      %v2336 = vunpack.c.h.b16 %v1339
      %v2337 = vunpack.c.l.b16 %v1340
      %v2338 = vunpack.c.h.b16 %v1340
      %v2339 = vunpack.c.l.b16 %v1341
      %v2340 = vunpack.c.h.b16 %v1341
      %v2341 = vunpack.c.l.b16 %v1342
      %v2342 = vunpack.c.h.b16 %v1342
      %v2343 = vunpack.c.l.b16 %v1343
      %v2344 = vunpack.c.h.b16 %v1343
      %v2345 = vunpack.c.l.b16 %v1344
      %v2346 = vunpack.c.h.b16 %v1344
      %v2347 = vunpack.c.l.b16 %v1345
      %v2348 = vunpack.c.h.b16 %v1345
      %v2349 = vunpack.c.l.b16 %v1346
      %v2350 = vunpack.c.h.b16 %v1346
      %v2351 = vunpack.c.l.b16 %v1347
      %v2352 = vunpack.c.h.b16 %v1347
      %v2353 = vunpack.c.l.b16 %v1348
      %v2354 = vunpack.c.h.b16 %v1348
      %v2355 = vunpack.c.l.b16 %v1349
      %v2356 = vunpack.c.h.b16 %v1349
      %v2357 = vunpack.c.l.b16 %v1350
      %v2358 = vunpack.c.h.b16 %v1350
      %v2359 = vunpack.c.l.b16 %v1351
      %v2360 = vunpack.c.h.b16 %v1351
      %v2361 = vunpack.c.l.b16 %v1352
      %v2362 = vunpack.c.h.b16 %v1352
      %v2363 = vunpack.c.l.b16 %v1353
      %v2364 = vunpack.c.h.b16 %v1353
      %v2365 = vunpack.c.l.b16 %v1354
      %v2366 = vunpack.c.h.b16 %v1354
      %v2367 = vunpack.c.l.b16 %v1355
      %v2368 = vunpack.c.h.b16 %v1355
      %v2369 = vunpack.c.l.b16 %v1356
      %v2370 = vunpack.c.h.b16 %v1356
      %v2371 = vunpack.c.l.b16 %v1357
      %v2372 = vunpack.c.h.b16 %v1357
      %v2373 = vunpack.c.l.b16 %v1358
      %v2374 = vunpack.c.h.b16 %v1358
      %v2375 = vunpack.c.l.b16 %v1359
      %v2376 = vunpack.c.h.b16 %v1359
      %v2377 = vunpack.c.l.b16 %v1360
      %v2378 = vunpack.c.h.b16 %v1360
      %v2379 = vunpack.c.l.b16 %v1361
      %v2380 = vunpack.c.h.b16 %v1361
      %v2381 = vunpack.c.l.b16 %v1362
      %v2382 = vunpack.c.h.b16 %v1362
      %v2383 = vunpack.c.l.b16 %v1363
      %v2384 = vunpack.c.h.b16 %v1363
      %v2385 = vunpack.c.l.b16 %v1364
      %v2386 = vunpack.c.h.b16 %v1364
      %v2387 = vunpack.c.l.b16 %v1365
      %v2388 = vunpack.c.h.b16 %v1365
      %v2389 = vunpack.c.l.b16 %v1366
      %v2390 = vunpack.c.h.b16 %v1366
      %v2391 = vunpack.c.l.b16 %v1367
      %v2392 = vunpack.c.h.b16 %v1367
      %v2393 = vunpack.c.l.b16 %v1368
      %v2394 = vunpack.c.h.b16 %v1368
      %v2395 = vunpack.c.l.b16 %v1369
      %v2396 = vunpack.c.h.b16 %v1369
      %v2397 = vunpack.c.l.b16 %v1370
      %v2398 = vunpack.c.h.b16 %v1370
      %v2399 = vunpack.c.l.b16 %v1371
      %v2400 = vunpack.c.h.b16 %v1371
      %v2401 = vunpack.c.l.b16 %v1372
      %v2402 = vunpack.c.h.b16 %v1372
      %v2403 = vunpack.c.l.b16 %v1373
      %v2404 = vunpack.c.h.b16 %v1373
      %v2405 = vunpack.c.l.b16 %v1374
      %v2406 = vunpack.c.h.b16 %v1374
      %v2407 = vunpack.c.l.b16 %v1375
      %v2408 = vunpack.c.h.b16 %v1375
      %v2409 = vunpack.c.l.b16 %v1376
      %v2410 = vunpack.c.h.b16 %v1376
      %v2411 = vunpack.c.l.b16 %v1377
      %v2412 = vunpack.c.h.b16 %v1377
      %v2413 = vunpack.c.l.b16 %v1378
      %v2414 = vunpack.c.h.b16 %v1378
      %v2415 = vunpack.c.l.b16 %v1379
      %v2416 = vunpack.c.h.b16 %v1379
      %v2417 = vunpack.c.l.b16 %v1380
      %v2418 = vunpack.c.h.b16 %v1380
      %v2419 = vunpack.c.l.b16 %v1381
      %v2420 = vunpack.c.h.b16 %v1381
      %v2421 = vunpack.c.l.b16 %v1382
      %v2422 = vunpack.c.h.b16 %v1382
      %v2423 = vunpack.c.l.b16 %v1383
      %v2424 = vunpack.c.h.b16 %v1383
      %v2425 = vunpack.c.l.b16 %v1384
      %v2426 = vunpack.c.h.b16 %v1384
      %v2427 = vunpack.c.l.b16 %v1385
      %v2428 = vunpack.c.h.b16 %v1385
      %v2429 = vunpack.c.l.b16 %v1386
      %v2430 = vunpack.c.h.b16 %v1386
      %v2431 = vunpack.c.l.b16 %v1387
      %v2432 = vunpack.c.h.b16 %v1387
      %v2433 = vunpack.c.l.b16 %v1388
      %v2434 = vunpack.c.h.b16 %v1388
      %v2435 = vunpack.c.l.b16 %v1389
      %v2436 = vunpack.c.h.b16 %v1389
      %v2437 = vunpack.c.l.b16 %v1390
      %v2438 = vunpack.c.h.b16 %v1390
      %v2439 = vunpack.c.l.b16 %v1391
      %v2440 = vunpack.c.h.b16 %v1391
      %v2441 = vunpack.c.l.b16 %v1392
      %v2442 = vunpack.c.h.b16 %v1392
      %v2443 = vunpack.c.l.b16 %v1393
      %v2444 = vunpack.c.h.b16 %v1393
      %v2445 = vunpack.c.l.b16 %v1394
      %v2446 = vunpack.c.h.b16 %v1394
      %v2447 = vunpack.c.l.b16 %v1395
      %v2448 = vunpack.c.h.b16 %v1395
      %v2449 = vunpack.c.l.b16 %v1396
      %v2450 = vunpack.c.h.b16 %v1396
      %v2451 = vunpack.c.l.b16 %v1397
      %v2452 = vunpack.c.h.b16 %v1397
      %v2453 = vunpack.c.l.b16 %v1398
      %v2454 = vunpack.c.h.b16 %v1398
      %v2455 = vpack.c.b16 %v1755, %v1751
      %v2456 = vpack.c.b16 %v1756, %v1752
      %v2457 = vpack.c.b16 %v1757, %v1753
      %v2458 = vpack.c.b16 %v1758, %v1754
      %v2459 = vpack.c.b16 %v1763, %v1759
      %v2460 = vpack.c.b16 %v1764, %v1760
      %v2461 = vpack.c.b16 %v1765, %v1761
      %v2462 = vpack.c.b16 %v1766, %v1762
      %v2463 = vpack.c.b16 %v1771, %v1767
      %v2464 = vpack.c.b16 %v1772, %v1768
      %v2465 = vpack.c.b16 %v1773, %v1769
      %v2466 = vpack.c.b16 %v1774, %v1770
      %v2467 = vpack.c.b16 %v1779, %v1775
      %v2468 = vpack.c.b16 %v1780, %v1776
      %v2469 = vpack.c.b16 %v1781, %v1777
      %v2470 = vpack.c.b16 %v1782, %v1778
      %v2471 = vpack.c.b16 %v1787, %v1783
      %v2472 = vpack.c.b16 %v1788, %v1784
      %v2473 = vpack.c.b16 %v1789, %v1785
      %v2474 = vpack.c.b16 %v1790, %v1786
      %v2475 = vpack.c.b16 %v1795, %v1791
      %v2476 = vpack.c.b16 %v1796, %v1792
      %v2477 = vpack.c.b16 %v1797, %v1793
      %v2478 = vpack.c.b16 %v1798, %v1794
      %v2479 = vpack.c.b16 %v1803, %v1799
      %v2480 = vpack.c.b16 %v1804, %v1800
      %v2481 = vpack.c.b16 %v1805, %v1801
      %v2482 = vpack.c.b16 %v1806, %v1802
      %v2483 = vpack.c.b16 %v1811, %v1807
      %v2484 = vpack.c.b16 %v1812, %v1808
      %v2485 = vpack.c.b16 %v1813, %v1809
      %v2486 = vpack.c.b16 %v1814, %v1810
      %v2487 = vpack.c.b16 %v1819, %v1815
      %v2488 = vpack.c.b16 %v1820, %v1816
      %v2489 = vpack.c.b16 %v1821, %v1817
      %v2490 = vpack.c.b16 %v1822, %v1818
      %v2491 = vpack.c.b16 %v1827, %v1823
      %v2492 = vpack.c.b16 %v1828, %v1824
      %v2493 = vpack.c.b16 %v1829, %v1825
      %v2494 = vpack.c.b16 %v1830, %v1826
      %v2495 = vpack.c.b16 %v1835, %v1831
      %v2496 = vpack.c.b16 %v1836, %v1832
      %v2497 = vpack.c.b16 %v1837, %v1833
      %v2498 = vpack.c.b16 %v1838, %v1834
      %v2499 = vpack.c.b16 %v1843, %v1839
      %v2500 = vpack.c.b16 %v1844, %v1840
      %v2501 = vpack.c.b16 %v1845, %v1841
      %v2502 = vpack.c.b16 %v1846, %v1842
      %v2503 = vpack.c.b16 %v1851, %v1847
      %v2504 = vpack.c.b16 %v1852, %v1848
      %v2505 = vpack.c.b16 %v1853, %v1849
      %v2506 = vpack.c.b16 %v1854, %v1850
      %v2507 = vpack.c.b16 %v1859, %v1855
      %v2508 = vpack.c.b16 %v1860, %v1856
      %v2509 = vpack.c.b16 %v1861, %v1857
      %v2510 = vpack.c.b16 %v1862, %v1858
      %v2511 = vpack.c.b16 %v1867, %v1863
      %v2512 = vpack.c.b16 %v1868, %v1864
      %v2513 = vpack.c.b16 %v1869, %v1865
      %v2514 = vpack.c.b16 %v1870, %v1866
      %v2515 = vpack.c.b16 %v1875, %v1871
      %v2516 = vpack.c.b16 %v1876, %v1872
      %v2517 = vpack.c.b16 %v1877, %v1873
      %v2518 = vpack.c.b16 %v1878, %v1874
      %v2519 = vpack.c.b16 %v1883, %v1879
      %v2520 = vpack.c.b16 %v1884, %v1880
      %v2521 = vpack.c.b16 %v1885, %v1881
      %v2522 = vpack.c.b16 %v1886, %v1882
      %v2523 = vpack.c.b16 %v1891, %v1887
      %v2524 = vpack.c.b16 %v1892, %v1888
      %v2525 = vpack.c.b16 %v1893, %v1889
      %v2526 = vpack.c.b16 %v1894, %v1890
      %v2527 = vpack.c.b16 %v1899, %v1895
      %v2528 = vpack.c.b16 %v1900, %v1896
      %v2529 = vpack.c.b16 %v1901, %v1897
      %v2530 = vpack.c.b16 %v1902, %v1898
      %v2531 = vpack.c.b16 %v1907, %v1903
      %v2532 = vpack.c.b16 %v1908, %v1904
      %v2533 = vpack.c.b16 %v1909, %v1905
      %v2534 = vpack.c.b16 %v1910, %v1906
      %v2535 = vpack.c.b16 %v1915, %v1911
      %v2536 = vpack.c.b16 %v1916, %v1912
      %v2537 = vpack.c.b16 %v1917, %v1913
      %v2538 = vpack.c.b16 %v1918, %v1914
      %v2539 = vpack.c.b16 %v1923, %v1919
      %v2540 = vpack.c.b16 %v1924, %v1920
      %v2541 = vpack.c.b16 %v1925, %v1921
      %v2542 = vpack.c.b16 %v1926, %v1922
      %v2543 = vpack.c.b16 %v1931, %v1927
      %v2544 = vpack.c.b16 %v1932, %v1928
      %v2545 = vpack.c.b16 %v1933, %v1929
      %v2546 = vpack.c.b16 %v1934, %v1930
      %v2547 = vpack.c.b16 %v1939, %v1935
      %v2548 = vpack.c.b16 %v1940, %v1936
      %v2549 = vpack.c.b16 %v1941, %v1937
      %v2550 = vpack.c.b16 %v1942, %v1938
      %v2551 = vpack.c.b16 %v1947, %v1943
      %v2552 = vpack.c.b16 %v1948, %v1944
      %v2553 = vpack.c.b16 %v1949, %v1945
      %v2554 = vpack.c.b16 %v1950, %v1946
      %v2555 = vpack.c.b16 %v1955, %v1951
      %v2556 = vpack.c.b16 %v1956, %v1952
      %v2557 = vpack.c.b16 %v1957, %v1953
      %v2558 = vpack.c.b16 %v1958, %v1954
      %v2559 = vpack.c.b16 %v1963, %v1959
      %v2560 = vpack.c.b16 %v1964, %v1960
      %v2561 = vpack.c.b16 %v1965, %v1961
      %v2562 = vpack.c.b16 %v1966, %v1962
      %v2563 = vpack.c.b16 %v1971, %v1967
      %v2564 = vpack.c.b16 %v1972, %v1968
      %v2565 = vpack.c.b16 %v1973, %v1969
      %v2566 = vpack.c.b16 %v1974, %v1970
      %v2567 = vpack.c.b16 %v1979, %v1975
      %v2568 = vpack.c.b16 %v1980, %v1976
      %v2569 = vpack.c.b16 %v1981, %v1977
      %v2570 = vpack.c.b16 %v1982, %v1978
      %v2571 = vpack.c.b16 %v1987, %v1983
      %v2572 = vpack.c.b16 %v1988, %v1984
      %v2573 = vpack.c.b16 %v1989, %v1985
      %v2574 = vpack.c.b16 %v1990, %v1986
      %v2575 = vpack.c.b16 %v1995, %v1991
      %v2576 = vpack.c.b16 %v1996, %v1992
      %v2577 = vpack.c.b16 %v1997, %v1993
      %v2578 = vpack.c.b16 %v1998, %v1994
      %v2579 = vpack.c.b16 %v2003, %v1999
      %v2580 = vpack.c.b16 %v2004, %v2000
      %v2581 = vpack.c.b16 %v2005, %v2001
      %v2582 = vpack.c.b16 %v2006, %v2002
      %v2583 = vpack.c.b16 %v2011, %v2007
      %v2584 = vpack.c.b16 %v2012, %v2008
      %v2585 = vpack.c.b16 %v2013, %v2009
      %v2586 = vpack.c.b16 %v2014, %v2010
      %v2587 = vpack.c.b16 %v2019, %v2015
      %v2588 = vpack.c.b16 %v2020, %v2016
      %v2589 = vpack.c.b16 %v2021, %v2017
      %v2590 = vpack.c.b16 %v2022, %v2018
      %v2591 = vpack.c.b16 %v2027, %v2023
      %v2592 = vpack.c.b16 %v2028, %v2024
      %v2593 = vpack.c.b16 %v2029, %v2025
      %v2594 = vpack.c.b16 %v2030, %v2026
      %v2595 = vpack.c.b16 %v2035, %v2031
      %v2596 = vpack.c.b16 %v2036, %v2032
      %v2597 = vpack.c.b16 %v2037, %v2033
      %v2598 = vpack.c.b16 %v2038, %v2034
      %v2599 = vpack.c.b16 %v2043, %v2039
      %v2600 = vpack.c.b16 %v2044, %v2040
      %v2601 = vpack.c.b16 %v2045, %v2041
      %v2602 = vpack.c.b16 %v2046, %v2042
      %v2603 = vpack.c.b16 %v2051, %v2047
      %v2604 = vpack.c.b16 %v2052, %v2048
      %v2605 = vpack.c.b16 %v2053, %v2049
      %v2606 = vpack.c.b16 %v2054, %v2050
      %v2607 = vpack.c.b16 %v2059, %v2055
      %v2608 = vpack.c.b16 %v2060, %v2056
      %v2609 = vpack.c.b16 %v2061, %v2057
      %v2610 = vpack.c.b16 %v2062, %v2058
      %v2611 = vpack.c.b16 %v2067, %v2063
      %v2612 = vpack.c.b16 %v2068, %v2064
      %v2613 = vpack.c.b16 %v2069, %v2065
      %v2614 = vpack.c.b16 %v2070, %v2066
      %v2615 = vpack.c.b16 %v2075, %v2071
      %v2616 = vpack.c.b16 %v2076, %v2072
      %v2617 = vpack.c.b16 %v2077, %v2073
      %v2618 = vpack.c.b16 %v2078, %v2074
      %v2619 = vpack.c.b16 %v2083, %v2079
      %v2620 = vpack.c.b16 %v2084, %v2080
      %v2621 = vpack.c.b16 %v2085, %v2081
      %v2622 = vpack.c.b16 %v2086, %v2082
      %v2623 = vpack.c.b16 %v2091, %v2087
      %v2624 = vpack.c.b16 %v2092, %v2088
      %v2625 = vpack.c.b16 %v2093, %v2089
      %v2626 = vpack.c.b16 %v2094, %v2090
      %v2627 = vpack.c.b16 %v2099, %v2095
      %v2628 = vpack.c.b16 %v2100, %v2096
      %v2629 = vpack.c.b16 %v2101, %v2097
      %v2630 = vpack.c.b16 %v2102, %v2098
      %v2631 = vpack.c.b16 %v2107, %v2103
      %v2632 = vpack.c.b16 %v2108, %v2104
      %v2633 = vpack.c.b16 %v2109, %v2105
      %v2634 = vpack.c.b16 %v2110, %v2106
      %v2635 = vpack.c.b16 %v2115, %v2111
      %v2636 = vpack.c.b16 %v2116, %v2112
      %v2637 = vpack.c.b16 %v2117, %v2113
      %v2638 = vpack.c.b16 %v2118, %v2114
      %v2639 = vpack.c.b16 %v2123, %v2119
      %v2640 = vpack.c.b16 %v2124, %v2120
      %v2641 = vpack.c.b16 %v2125, %v2121
      %v2642 = vpack.c.b16 %v2126, %v2122
      %v2643 = vpack.c.b16 %v2131, %v2127
      %v2644 = vpack.c.b16 %v2132, %v2128
      %v2645 = vpack.c.b16 %v2133, %v2129
      %v2646 = vpack.c.b16 %v2134, %v2130
      %v2647 = vpack.c.b16 %v2139, %v2135
      %v2648 = vpack.c.b16 %v2140, %v2136
      %v2649 = vpack.c.b16 %v2141, %v2137
      %v2650 = vpack.c.b16 %v2142, %v2138
      %v2651 = vpack.c.b16 %v2147, %v2143
      %v2652 = vpack.c.b16 %v2148, %v2144
      %v2653 = vpack.c.b16 %v2149, %v2145
      %v2654 = vpack.c.b16 %v2150, %v2146
      %v2655 = vpack.c.b16 %v2155, %v2151
      %v2656 = vpack.c.b16 %v2156, %v2152
      %v2657 = vpack.c.b16 %v2157, %v2153
      %v2658 = vpack.c.b16 %v2158, %v2154
      %v2659 = vpack.c.b16 %v2163, %v2159
      %v2660 = vpack.c.b16 %v2164, %v2160
      %v2661 = vpack.c.b16 %v2165, %v2161
      %v2662 = vpack.c.b16 %v2166, %v2162
      %v2663 = vpack.c.b16 %v2171, %v2167
      %v2664 = vpack.c.b16 %v2172, %v2168
      %v2665 = vpack.c.b16 %v2173, %v2169
      %v2666 = vpack.c.b16 %v2174, %v2170
      %v2667 = vpack.c.b16 %v2179, %v2175
      %v2668 = vpack.c.b16 %v2180, %v2176
      %v2669 = vpack.c.b16 %v2181, %v2177
      %v2670 = vpack.c.b16 %v2182, %v2178
      %v2671 = vpack.c.b16 %v2187, %v2183
      %v2672 = vpack.c.b16 %v2188, %v2184
      %v2673 = vpack.c.b16 %v2189, %v2185
      %v2674 = vpack.c.b16 %v2190, %v2186
      %v2675 = vpack.c.b16 %v2195, %v2191
      %v2676 = vpack.c.b16 %v2196, %v2192
      %v2677 = vpack.c.b16 %v2197, %v2193
      %v2678 = vpack.c.b16 %v2198, %v2194
      %v2679 = vpack.c.b16 %v2203, %v2199
      %v2680 = vpack.c.b16 %v2204, %v2200
      %v2681 = vpack.c.b16 %v2205, %v2201
      %v2682 = vpack.c.b16 %v2206, %v2202
      %v2683 = vpack.c.b16 %v2211, %v2207
      %v2684 = vpack.c.b16 %v2212, %v2208
      %v2685 = vpack.c.b16 %v2213, %v2209
      %v2686 = vpack.c.b16 %v2214, %v2210
      %v2687 = vpack.c.b16 %v2219, %v2215
      %v2688 = vpack.c.b16 %v2220, %v2216
      %v2689 = vpack.c.b16 %v2221, %v2217
      %v2690 = vpack.c.b16 %v2222, %v2218
      %v2691 = vpack.c.b16 %v2227, %v2223
      %v2692 = vpack.c.b16 %v2228, %v2224
      %v2693 = vpack.c.b16 %v2229, %v2225
      %v2694 = vpack.c.b16 %v2230, %v2226
      %v2695 = vpack.c.b16 %v2235, %v2231
      %v2696 = vpack.c.b16 %v2236, %v2232
      %v2697 = vpack.c.b16 %v2237, %v2233
      %v2698 = vpack.c.b16 %v2238, %v2234
      %v2699 = vpack.c.b16 %v2243, %v2239
      %v2700 = vpack.c.b16 %v2244, %v2240
      %v2701 = vpack.c.b16 %v2245, %v2241
      %v2702 = vpack.c.b16 %v2246, %v2242
      %v2703 = vpack.c.b16 %v2251, %v2247
      %v2704 = vpack.c.b16 %v2252, %v2248
      %v2705 = vpack.c.b16 %v2253, %v2249
      %v2706 = vpack.c.b16 %v2254, %v2250
      %v2707 = vpack.c.b16 %v2259, %v2255
      %v2708 = vpack.c.b16 %v2260, %v2256
      %v2709 = vpack.c.b16 %v2261, %v2257
      %v2710 = vpack.c.b16 %v2262, %v2258
      %v2711 = vpack.c.b16 %v2267, %v2263
      %v2712 = vpack.c.b16 %v2268, %v2264
      %v2713 = vpack.c.b16 %v2269, %v2265
      %v2714 = vpack.c.b16 %v2270, %v2266
      %v2715 = vpack.c.b16 %v2275, %v2271
      %v2716 = vpack.c.b16 %v2276, %v2272
      %v2717 = vpack.c.b16 %v2277, %v2273
      %v2718 = vpack.c.b16 %v2278, %v2274
      %v2719 = vpack.c.b16 %v2283, %v2279
      %v2720 = vpack.c.b16 %v2284, %v2280
      %v2721 = vpack.c.b16 %v2285, %v2281
      %v2722 = vpack.c.b16 %v2286, %v2282
      %v2723 = vpack.c.b16 %v2291, %v2287
      %v2724 = vpack.c.b16 %v2292, %v2288
      %v2725 = vpack.c.b16 %v2293, %v2289
      %v2726 = vpack.c.b16 %v2294, %v2290
      %v2727 = vpack.c.b16 %v2299, %v2295
      %v2728 = vpack.c.b16 %v2300, %v2296
      %v2729 = vpack.c.b16 %v2301, %v2297
      %v2730 = vpack.c.b16 %v2302, %v2298
      %v2731 = vpack.c.b16 %v2307, %v2303
      %v2732 = vpack.c.b16 %v2308, %v2304
      %v2733 = vpack.c.b16 %v2309, %v2305
      %v2734 = vpack.c.b16 %v2310, %v2306
      %v2735 = vpack.c.b16 %v2315, %v2311
      %v2736 = vpack.c.b16 %v2316, %v2312
      %v2737 = vpack.c.b16 %v2317, %v2313
      %v2738 = vpack.c.b16 %v2318, %v2314
      %v2739 = vpack.c.b16 %v2323, %v2319
      %v2740 = vpack.c.b16 %v2324, %v2320
      %v2741 = vpack.c.b16 %v2325, %v2321
      %v2742 = vpack.c.b16 %v2326, %v2322
      %v2743 = vpack.c.b16 %v2331, %v2327
      %v2744 = vpack.c.b16 %v2332, %v2328
      %v2745 = vpack.c.b16 %v2333, %v2329
      %v2746 = vpack.c.b16 %v2334, %v2330
      %v2747 = vpack.c.b16 %v2339, %v2335
      %v2748 = vpack.c.b16 %v2340, %v2336
      %v2749 = vpack.c.b16 %v2341, %v2337
      %v2750 = vpack.c.b16 %v2342, %v2338
      %v2751 = vpack.c.b16 %v2347, %v2343
      %v2752 = vpack.c.b16 %v2348, %v2344
      %v2753 = vpack.c.b16 %v2349, %v2345
      %v2754 = vpack.c.b16 %v2350, %v2346
      %v2755 = vpack.c.b16 %v2355, %v2351
      %v2756 = vpack.c.b16 %v2356, %v2352
      %v2757 = vpack.c.b16 %v2357, %v2353
      %v2758 = vpack.c.b16 %v2358, %v2354
      %v2759 = vpack.c.b16 %v2363, %v2359
      %v2760 = vpack.c.b16 %v2364, %v2360
      %v2761 = vpack.c.b16 %v2365, %v2361
      %v2762 = vpack.c.b16 %v2366, %v2362
      %v2763 = vpack.c.b16 %v2371, %v2367
      %v2764 = vpack.c.b16 %v2372, %v2368
      %v2765 = vpack.c.b16 %v2373, %v2369
      %v2766 = vpack.c.b16 %v2374, %v2370
      %v2767 = vpack.c.b16 %v2379, %v2375
      %v2768 = vpack.c.b16 %v2380, %v2376
      %v2769 = vpack.c.b16 %v2381, %v2377
      %v2770 = vpack.c.b16 %v2382, %v2378
      %v2771 = vpack.c.b16 %v2387, %v2383
      %v2772 = vpack.c.b16 %v2388, %v2384
      %v2773 = vpack.c.b16 %v2389, %v2385
      %v2774 = vpack.c.b16 %v2390, %v2386
      %v2775 = vpack.c.b16 %v2395, %v2391
      %v2776 = vpack.c.b16 %v2396, %v2392
      %v2777 = vpack.c.b16 %v2397, %v2393
      %v2778 = vpack.c.b16 %v2398, %v2394
      %v2779 = vpack.c.b16 %v2403, %v2399
      %v2780 = vpack.c.b16 %v2404, %v2400
      %v2781 = vpack.c.b16 %v2405, %v2401
      %v2782 = vpack.c.b16 %v2406, %v2402
      %v2783 = vpack.c.b16 %v2411, %v2407
      %v2784 = vpack.c.b16 %v2412, %v2408
      %v2785 = vpack.c.b16 %v2413, %v2409
      %v2786 = vpack.c.b16 %v2414, %v2410
      %v2787 = vpack.c.b16 %v2419, %v2415
      %v2788 = vpack.c.b16 %v2420, %v2416
      %v2789 = vpack.c.b16 %v2421, %v2417
      %v2790 = vpack.c.b16 %v2422, %v2418
      %v2791 = vpack.c.b16 %v2427, %v2423
      %v2792 = vpack.c.b16 %v2428, %v2424
      %v2793 = vpack.c.b16 %v2429, %v2425
      %v2794 = vpack.c.b16 %v2430, %v2426
      %v2795 = vpack.c.b16 %v2435, %v2431
      %v2796 = vpack.c.b16 %v2436, %v2432
      %v2797 = vpack.c.b16 %v2437, %v2433
      %v2798 = vpack.c.b16 %v2438, %v2434
      %v2799 = vpack.c.b16 %v2443, %v2439
      %v2800 = vpack.c.b16 %v2444, %v2440
      %v2801 = vpack.c.b16 %v2445, %v2441
      %v2802 = vpack.c.b16 %v2446, %v2442
      %v2803 = vpack.c.b16 %v2451, %v2447
      %v2804 = vpack.c.b16 %v2452, %v2448
      %v2805 = vpack.c.b16 %v2453, %v2449
      %v2806 = vpack.c.b16 %v2454, %v2450
      %vm3071 = vcmask 130048
      %v3073 = vsel %vm3071, %v2458, 0
      %v3076 = vsel %vm3071, %v2462, 0
      %v3079 = vsel %vm3071, %v2466, 0
      %v3082 = vsel %vm3071, %v2470, 0
      %v3085 = vsel %vm3071, %v2474, 0
      %v3088 = vsel %vm3071, %v2478, 0
      %v3091 = vsel %vm3071, %v2482, 0
      %v3094 = vsel %vm3071, %v2486, 0
      %v3097 = vsel %vm3071, %v2490, 0
      %v3100 = vsel %vm3071, %v2494, 0
      %v3103 = vsel %vm3071, %v2498, 0
      %v3106 = vsel %vm3071, %v2502, 0
      %v3109 = vsel %vm3071, %v2506, 0
      %v3112 = vsel %vm3071, %v2510, 0
      %v3115 = vsel %vm3071, %v2514, 0
      %v3118 = vsel %vm3071, %v2518, 0
      %v3121 = vsel %vm3071, %v2522, 0
      %v3124 = vsel %vm3071, %v2526, 0
      %v3127 = vsel %vm3071, %v2530, 0
      %v3130 = vsel %vm3071, %v2534, 0
      %v3133 = vsel %vm3071, %v2538, 0
      %v3136 = vsel %vm3071, %v2542, 0
      %v3139 = vsel %vm3071, %v2546, 0
      %v3142 = vsel %vm3071, %v2550, 0
      %v3145 = vsel %vm3071, %v2554, 0
      %v3148 = vsel %vm3071, %v2558, 0
      %v3151 = vsel %vm3071, %v2562, 0
      %v3154 = vsel %vm3071, %v2566, 0
      %v3157 = vsel %vm3071, %v2570, 0
      %v3160 = vsel %vm3071, %v2574, 0
      %v3163 = vsel %vm3071, %v2578, 0
      %v3166 = vsel %vm3071, %v2582, 0
      %v3169 = vsel %vm3071, %v2586, 0
      %v3172 = vsel %vm3071, %v2590, 0
      %v3175 = vsel %vm3071, %v2594, 0
      %v3178 = vsel %vm3071, %v2598, 0
      %v3181 = vsel %vm3071, %v2602, 0
      %v3184 = vsel %vm3071, %v2606, 0
      %v3187 = vsel %vm3071, %v2610, 0
      %v3190 = vsel %vm3071, %v2614, 0
      %v3193 = vsel %vm3071, %v2618, 0
      %v3196 = vsel %vm3071, %v2622, 0
      %v3199 = vsel %vm3071, %v2626, 0
      %v3202 = vsel %vm3071, %v2630, 0
      %v3205 = vsel %vm3071, %v2634, 0
      %v3208 = vsel %vm3071, %v2638, 0
      %v3211 = vsel %vm3071, %v2642, 0
      %v3214 = vsel %vm3071, %v2646, 0
      %v3217 = vsel %vm3071, %v2650, 0
      %v3220 = vsel %vm3071, %v2654, 0
      %v3223 = vsel %vm3071, %v2658, 0
      %v3226 = vsel %vm3071, %v2662, 0
      %v3229 = vsel %vm3071, %v2666, 0
      %v3232 = vsel %vm3071, %v2670, 0
      %v3235 = vsel %vm3071, %v2674, 0
      %v3238 = vsel %vm3071, %v2678, 0
      %v3241 = vsel %vm3071, %v2682, 0
      %v3244 = vsel %vm3071, %v2686, 0
      %v3247 = vsel %vm3071, %v2690, 0
      %v3250 = vsel %vm3071, %v2694, 0
      %v3253 = vsel %vm3071, %v2698, 0
      %v3256 = vsel %vm3071, %v2702, 0
      %v3259 = vsel %vm3071, %v2706, 0
      %v3262 = vsel %vm3071, %v2710, 0
      %v3265 = vsel %vm3071, %v2714, 0
      %v3268 = vsel %vm3071, %v2718, 0
      %v3271 = vsel %vm3071, %v2722, 0
      %v3274 = vsel %vm3071, %v2726, 0
      %v3277 = vsel %vm3071, %v2730, 0
      %v3280 = vsel %vm3071, %v2734, 0
      %v3283 = vsel %vm3071, %v2738, 0
      %v3286 = vsel %vm3071, %v2742, 0
      %v3289 = vsel %vm3071, %v2746, 0
      %v3292 = vsel %vm3071, %v2750, 0
      %v3295 = vsel %vm3071, %v2754, 0
      %v3298 = vsel %vm3071, %v2758, 0
      %v3301 = vsel %vm3071, %v2762, 0
      %v3304 = vsel %vm3071, %v2766, 0
      %v3307 = vsel %vm3071, %v2770, 0
      %v3310 = vsel %vm3071, %v2774, 0
      %v3313 = vsel %vm3071, %v2778, 0
      %v3316 = vsel %vm3071, %v2782, 0
      %v3319 = vsel %vm3071, %v2786, 0
      %v3322 = vsel %vm3071, %v2790, 0
      %v3325 = vsel %vm3071, %v2794, 0
      %v3328 = vsel %vm3071, %v2798, 0
      %v3331 = vsel %vm3071, %v2802, 0
      %v3334 = vsel %vm3071, %v2806, 0
      %3336 = vmatpush.bf16.msra.mxu0 %v1029
      %3337 = vmatpush.bf16.msra.mxu0 %v1028
      %3338 = vmatpush.bf16.msra.mxu0 %v1027
      %3339 = vmatpush.bf16.msra.mxu0 %v1026
      %3340 = vmatpush.bf16.msra.mxu0 %v1025
      %3341 = vmatpush.bf16.msra.mxu0 %v1024
      %3342 = vmatpush.bf16.msra.mxu0 %v1023
      %3343 = vmatpush.bf16.msra.mxu0 %v1022
      %3344 = vmatmul.bf16.gmra.mxu0 %v2455
      %v3345 = vpop.f32.mrf.mxu0
      %v3346 = vadd.f32 0.0, %v3345
      %v3347 = vpop.f32.mrf.mxu0
      %v3348 = vadd.f32 0.0, %v3347
      %3349 = vmatmul.bf16.gmra.mxu0 %v2459
      %v3350 = vpop.f32.mrf.mxu0
      %v3351 = vadd.f32 0.0, %v3350
      %v3352 = vpop.f32.mrf.mxu0
      %v3353 = vadd.f32 0.0, %v3352
      %3354 = vmatmul.bf16.gmra.mxu0 %v2463
      %v3355 = vpop.f32.mrf.mxu0
      %v3356 = vadd.f32 0.0, %v3355
      %v3357 = vpop.f32.mrf.mxu0
      %v3358 = vadd.f32 0.0, %v3357
      %3359 = vmatmul.bf16.gmra.mxu0 %v2467
      %v3360 = vpop.f32.mrf.mxu0
      %v3361 = vadd.f32 0.0, %v3360
      %v3362 = vpop.f32.mrf.mxu0
      %v3363 = vadd.f32 0.0, %v3362
      %3364 = vmatmul.bf16.gmra.mxu0 %v2471
      %v3365 = vpop.f32.mrf.mxu0
      %v3366 = vadd.f32 0.0, %v3365
      %v3367 = vpop.f32.mrf.mxu0
      %v3368 = vadd.f32 0.0, %v3367
      %3369 = vmatmul.bf16.gmra.mxu0 %v2475
      %v3370 = vpop.f32.mrf.mxu0
      %v3371 = vadd.f32 0.0, %v3370
      %v3372 = vpop.f32.mrf.mxu0
      %v3373 = vadd.f32 0.0, %v3372
      %3374 = vmatmul.bf16.gmra.mxu0 %v2479
      %v3375 = vpop.f32.mrf.mxu0
      %v3376 = vadd.f32 0.0, %v3375
      %v3377 = vpop.f32.mrf.mxu0
      %v3378 = vadd.f32 0.0, %v3377
      %3379 = vmatmul.bf16.gmra.mxu0 %v2483
      %v3380 = vpop.f32.mrf.mxu0
      %v3381 = vadd.f32 0.0, %v3380
      %v3382 = vpop.f32.mrf.mxu0
      %v3383 = vadd.f32 0.0, %v3382
      %3384 = vmatmul.bf16.gmra.mxu0 %v2487
      %v3385 = vpop.f32.mrf.mxu0
      %v3386 = vadd.f32 0.0, %v3385
      %v3387 = vpop.f32.mrf.mxu0
      %v3388 = vadd.f32 0.0, %v3387
      %3389 = vmatmul.bf16.gmra.mxu0 %v2491
      %v3390 = vpop.f32.mrf.mxu0
      %v3391 = vadd.f32 0.0, %v3390
      %v3392 = vpop.f32.mrf.mxu0
      %v3393 = vadd.f32 0.0, %v3392
      %3394 = vmatmul.bf16.gmra.mxu0 %v2495
      %v3395 = vpop.f32.mrf.mxu0
      %v3396 = vadd.f32 0.0, %v3395
      %v3397 = vpop.f32.mrf.mxu0
      %v3398 = vadd.f32 0.0, %v3397
      %3399 = vmatmul.bf16.gmra.mxu0 %v2499
      %v3400 = vpop.f32.mrf.mxu0
      %v3401 = vadd.f32 0.0, %v3400
      %v3402 = vpop.f32.mrf.mxu0
      %v3403 = vadd.f32 0.0, %v3402
      %3404 = vmatmul.bf16.gmra.mxu0 %v2503
      %v3405 = vpop.f32.mrf.mxu0
      %v3406 = vadd.f32 0.0, %v3405
      %v3407 = vpop.f32.mrf.mxu0
      %v3408 = vadd.f32 0.0, %v3407
      %3409 = vmatmul.bf16.gmra.mxu0 %v2507
      %v3410 = vpop.f32.mrf.mxu0
      %v3411 = vadd.f32 0.0, %v3410
      %v3412 = vpop.f32.mrf.mxu0
      %v3413 = vadd.f32 0.0, %v3412
      %3414 = vmatmul.bf16.gmra.mxu0 %v2511
      %v3415 = vpop.f32.mrf.mxu0
      %v3416 = vadd.f32 0.0, %v3415
      %v3417 = vpop.f32.mrf.mxu0
      %v3418 = vadd.f32 0.0, %v3417
      %3419 = vmatmul.bf16.gmra.mxu0 %v2515
      %v3420 = vpop.f32.mrf.mxu0
      %v3421 = vadd.f32 0.0, %v3420
      %v3422 = vpop.f32.mrf.mxu0
      %v3423 = vadd.f32 0.0, %v3422
      %3424 = vmatmul.bf16.gmra.mxu0 %v2519
      %v3425 = vpop.f32.mrf.mxu0
      %v3426 = vadd.f32 0.0, %v3425
      %v3427 = vpop.f32.mrf.mxu0
      %v3428 = vadd.f32 0.0, %v3427
      %3429 = vmatmul.bf16.gmra.mxu0 %v2523
      %v3430 = vpop.f32.mrf.mxu0
      %v3431 = vadd.f32 0.0, %v3430
      %v3432 = vpop.f32.mrf.mxu0
      %v3433 = vadd.f32 0.0, %v3432
      %3434 = vmatmul.bf16.gmra.mxu0 %v2527
      %v3435 = vpop.f32.mrf.mxu0
      %v3436 = vadd.f32 0.0, %v3435
      %v3437 = vpop.f32.mrf.mxu0
      %v3438 = vadd.f32 0.0, %v3437
      %3439 = vmatmul.bf16.gmra.mxu0 %v2531
      %v3440 = vpop.f32.mrf.mxu0
      %v3441 = vadd.f32 0.0, %v3440
      %v3442 = vpop.f32.mrf.mxu0
      %v3443 = vadd.f32 0.0, %v3442
      %3444 = vmatmul.bf16.gmra.mxu0 %v2535
      %v3445 = vpop.f32.mrf.mxu0
      %v3446 = vadd.f32 0.0, %v3445
      %v3447 = vpop.f32.mrf.mxu0
      %v3448 = vadd.f32 0.0, %v3447
      %3449 = vmatmul.bf16.gmra.mxu0 %v2539
      %v3450 = vpop.f32.mrf.mxu0
      %v3451 = vadd.f32 0.0, %v3450
      %v3452 = vpop.f32.mrf.mxu0
      %v3453 = vadd.f32 0.0, %v3452
      %3454 = vmatmul.bf16.gmra.mxu0 %v2543
      %v3455 = vpop.f32.mrf.mxu0
      %v3456 = vadd.f32 0.0, %v3455
      %v3457 = vpop.f32.mrf.mxu0
      %v3458 = vadd.f32 0.0, %v3457
      %3459 = vmatmul.bf16.gmra.mxu0 %v2547
      %v3460 = vpop.f32.mrf.mxu0
      %v3461 = vadd.f32 0.0, %v3460
      %v3462 = vpop.f32.mrf.mxu0
      %v3463 = vadd.f32 0.0, %v3462
      %3464 = vmatmul.bf16.gmra.mxu0 %v2551
      %v3465 = vpop.f32.mrf.mxu0
      %v3466 = vadd.f32 0.0, %v3465
      %v3467 = vpop.f32.mrf.mxu0
      %v3468 = vadd.f32 0.0, %v3467
      %3469 = vmatmul.bf16.gmra.mxu0 %v2555
      %v3470 = vpop.f32.mrf.mxu0
      %v3471 = vadd.f32 0.0, %v3470
      %v3472 = vpop.f32.mrf.mxu0
      %v3473 = vadd.f32 0.0, %v3472
      %3474 = vmatmul.bf16.gmra.mxu0 %v2559
      %v3475 = vpop.f32.mrf.mxu0
      %v3476 = vadd.f32 0.0, %v3475
      %v3477 = vpop.f32.mrf.mxu0
      %v3478 = vadd.f32 0.0, %v3477
      %3479 = vmatmul.bf16.gmra.mxu0 %v2563
      %v3480 = vpop.f32.mrf.mxu0
      %v3481 = vadd.f32 0.0, %v3480
      %v3482 = vpop.f32.mrf.mxu0
      %v3483 = vadd.f32 0.0, %v3482
      %3484 = vmatmul.bf16.gmra.mxu0 %v2567
      %v3485 = vpop.f32.mrf.mxu0
      %v3486 = vadd.f32 0.0, %v3485
      %v3487 = vpop.f32.mrf.mxu0
      %v3488 = vadd.f32 0.0, %v3487
      %3489 = vmatmul.bf16.gmra.mxu0 %v2571
      %v3490 = vpop.f32.mrf.mxu0
      %v3491 = vadd.f32 0.0, %v3490
      %v3492 = vpop.f32.mrf.mxu0
      %v3493 = vadd.f32 0.0, %v3492
      %3494 = vmatmul.bf16.gmra.mxu0 %v2575
      %v3495 = vpop.f32.mrf.mxu0
      %v3496 = vadd.f32 0.0, %v3495
      %v3497 = vpop.f32.mrf.mxu0
      %v3498 = vadd.f32 0.0, %v3497
      %3499 = vmatmul.bf16.gmra.mxu0 %v2579
      %v3500 = vpop.f32.mrf.mxu0
      %v3501 = vadd.f32 0.0, %v3500
      %v3502 = vpop.f32.mrf.mxu0
      %v3503 = vadd.f32 0.0, %v3502
      %3504 = vmatmul.bf16.gmra.mxu0 %v2583
      %v3505 = vpop.f32.mrf.mxu0
      %v3506 = vadd.f32 0.0, %v3505
      %v3507 = vpop.f32.mrf.mxu0
      %v3508 = vadd.f32 0.0, %v3507
      %3509 = vmatmul.bf16.gmra.mxu0 %v2587
      %v3510 = vpop.f32.mrf.mxu0
      %v3511 = vadd.f32 0.0, %v3510
      %v3512 = vpop.f32.mrf.mxu0
      %v3513 = vadd.f32 0.0, %v3512
      %3514 = vmatmul.bf16.gmra.mxu0 %v2591
      %v3515 = vpop.f32.mrf.mxu0
      %v3516 = vadd.f32 0.0, %v3515
      %v3517 = vpop.f32.mrf.mxu0
      %v3518 = vadd.f32 0.0, %v3517
      %3519 = vmatmul.bf16.gmra.mxu0 %v2595
      %v3520 = vpop.f32.mrf.mxu0
      %v3521 = vadd.f32 0.0, %v3520
      %v3522 = vpop.f32.mrf.mxu0
      %v3523 = vadd.f32 0.0, %v3522
      %3524 = vmatmul.bf16.gmra.mxu0 %v2599
      %v3525 = vpop.f32.mrf.mxu0
      %v3526 = vadd.f32 0.0, %v3525
      %v3527 = vpop.f32.mrf.mxu0
      %v3528 = vadd.f32 0.0, %v3527
      %3529 = vmatmul.bf16.gmra.mxu0 %v2603
      %v3530 = vpop.f32.mrf.mxu0
      %v3531 = vadd.f32 0.0, %v3530
      %v3532 = vpop.f32.mrf.mxu0
      %v3533 = vadd.f32 0.0, %v3532
      %3534 = vmatmul.bf16.gmra.mxu0 %v2607
      %v3535 = vpop.f32.mrf.mxu0
      %v3536 = vadd.f32 0.0, %v3535
      %v3537 = vpop.f32.mrf.mxu0
      %v3538 = vadd.f32 0.0, %v3537
      %3539 = vmatmul.bf16.gmra.mxu0 %v2611
      %v3540 = vpop.f32.mrf.mxu0
      %v3541 = vadd.f32 0.0, %v3540
      %v3542 = vpop.f32.mrf.mxu0
      %v3543 = vadd.f32 0.0, %v3542
      %3544 = vmatmul.bf16.gmra.mxu0 %v2615
      %v3545 = vpop.f32.mrf.mxu0
      %v3546 = vadd.f32 0.0, %v3545
      %v3547 = vpop.f32.mrf.mxu0
      %v3548 = vadd.f32 0.0, %v3547
      %3549 = vmatmul.bf16.gmra.mxu0 %v2619
      %v3550 = vpop.f32.mrf.mxu0
      %v3551 = vadd.f32 0.0, %v3550
      %v3552 = vpop.f32.mrf.mxu0
      %v3553 = vadd.f32 0.0, %v3552
      %3554 = vmatmul.bf16.gmra.mxu0 %v2623
      %v3555 = vpop.f32.mrf.mxu0
      %v3556 = vadd.f32 0.0, %v3555
      %v3557 = vpop.f32.mrf.mxu0
      %v3558 = vadd.f32 0.0, %v3557
      %3559 = vmatmul.bf16.gmra.mxu0 %v2627
      %v3560 = vpop.f32.mrf.mxu0
      %v3561 = vadd.f32 0.0, %v3560
      %v3562 = vpop.f32.mrf.mxu0
      %v3563 = vadd.f32 0.0, %v3562
      %3564 = vmatmul.bf16.gmra.mxu0 %v2631
      %v3565 = vpop.f32.mrf.mxu0
      %v3566 = vadd.f32 0.0, %v3565
      %v3567 = vpop.f32.mrf.mxu0
      %v3568 = vadd.f32 0.0, %v3567
      %3569 = vmatmul.bf16.gmra.mxu0 %v2635
      %v3570 = vpop.f32.mrf.mxu0
      %v3571 = vadd.f32 0.0, %v3570
      %v3572 = vpop.f32.mrf.mxu0
      %v3573 = vadd.f32 0.0, %v3572
      %3574 = vmatmul.bf16.gmra.mxu0 %v2639
      %v3575 = vpop.f32.mrf.mxu0
      %v3576 = vadd.f32 0.0, %v3575
      %v3577 = vpop.f32.mrf.mxu0
      %v3578 = vadd.f32 0.0, %v3577
      %3579 = vmatmul.bf16.gmra.mxu0 %v2643
      %v3580 = vpop.f32.mrf.mxu0
      %v3581 = vadd.f32 0.0, %v3580
      %v3582 = vpop.f32.mrf.mxu0
      %v3583 = vadd.f32 0.0, %v3582
      %3584 = vmatmul.bf16.gmra.mxu0 %v2647
      %v3585 = vpop.f32.mrf.mxu0
      %v3586 = vadd.f32 0.0, %v3585
      %v3587 = vpop.f32.mrf.mxu0
      %v3588 = vadd.f32 0.0, %v3587
      %3589 = vmatmul.bf16.gmra.mxu0 %v2651
      %v3590 = vpop.f32.mrf.mxu0
      %v3591 = vadd.f32 0.0, %v3590
      %v3592 = vpop.f32.mrf.mxu0
      %v3593 = vadd.f32 0.0, %v3592
      %3594 = vmatmul.bf16.gmra.mxu0 %v2655
      %v3595 = vpop.f32.mrf.mxu0
      %v3596 = vadd.f32 0.0, %v3595
      %v3597 = vpop.f32.mrf.mxu0
      %v3598 = vadd.f32 0.0, %v3597
      %3599 = vmatmul.bf16.gmra.mxu0 %v2659
      %v3600 = vpop.f32.mrf.mxu0
      %v3601 = vadd.f32 0.0, %v3600
      %v3602 = vpop.f32.mrf.mxu0
      %v3603 = vadd.f32 0.0, %v3602
      %3604 = vmatmul.bf16.gmra.mxu0 %v2663
      %v3605 = vpop.f32.mrf.mxu0
      %v3606 = vadd.f32 0.0, %v3605
      %v3607 = vpop.f32.mrf.mxu0
      %v3608 = vadd.f32 0.0, %v3607
      %3609 = vmatmul.bf16.gmra.mxu0 %v2667
      %v3610 = vpop.f32.mrf.mxu0
      %v3611 = vadd.f32 0.0, %v3610
      %v3612 = vpop.f32.mrf.mxu0
      %v3613 = vadd.f32 0.0, %v3612
      %3614 = vmatmul.bf16.gmra.mxu0 %v2671
      %v3615 = vpop.f32.mrf.mxu0
      %v3616 = vadd.f32 0.0, %v3615
      %v3617 = vpop.f32.mrf.mxu0
      %v3618 = vadd.f32 0.0, %v3617
      %3619 = vmatmul.bf16.gmra.mxu0 %v2675
      %v3620 = vpop.f32.mrf.mxu0
      %v3621 = vadd.f32 0.0, %v3620
      %v3622 = vpop.f32.mrf.mxu0
      %v3623 = vadd.f32 0.0, %v3622
      %3624 = vmatmul.bf16.gmra.mxu0 %v2679
      %v3625 = vpop.f32.mrf.mxu0
      %v3626 = vadd.f32 0.0, %v3625
      %v3627 = vpop.f32.mrf.mxu0
      %v3628 = vadd.f32 0.0, %v3627
      %3629 = vmatmul.bf16.gmra.mxu0 %v2683
      %v3630 = vpop.f32.mrf.mxu0
      %v3631 = vadd.f32 0.0, %v3630
      %v3632 = vpop.f32.mrf.mxu0
      %v3633 = vadd.f32 0.0, %v3632
      %3634 = vmatmul.bf16.gmra.mxu0 %v2687
      %v3635 = vpop.f32.mrf.mxu0
      %v3636 = vadd.f32 0.0, %v3635
      %v3637 = vpop.f32.mrf.mxu0
      %v3638 = vadd.f32 0.0, %v3637
      %3639 = vmatmul.bf16.gmra.mxu0 %v2691
      %v3640 = vpop.f32.mrf.mxu0
      %v3641 = vadd.f32 0.0, %v3640
      %v3642 = vpop.f32.mrf.mxu0
      %v3643 = vadd.f32 0.0, %v3642
      %3644 = vmatmul.bf16.gmra.mxu0 %v2695
      %v3645 = vpop.f32.mrf.mxu0
      %v3646 = vadd.f32 0.0, %v3645
      %v3647 = vpop.f32.mrf.mxu0
      %v3648 = vadd.f32 0.0, %v3647
      %3649 = vmatmul.bf16.gmra.mxu0 %v2699
      %v3650 = vpop.f32.mrf.mxu0
      %v3651 = vadd.f32 0.0, %v3650
      %v3652 = vpop.f32.mrf.mxu0
      %v3653 = vadd.f32 0.0, %v3652
      %3654 = vmatmul.bf16.gmra.mxu0 %v2703
      %v3655 = vpop.f32.mrf.mxu0
      %v3656 = vadd.f32 0.0, %v3655
      %v3657 = vpop.f32.mrf.mxu0
      %v3658 = vadd.f32 0.0, %v3657
      %3659 = vmatmul.bf16.gmra.mxu0 %v2707
      %v3660 = vpop.f32.mrf.mxu0
      %v3661 = vadd.f32 0.0, %v3660
      %v3662 = vpop.f32.mrf.mxu0
      %v3663 = vadd.f32 0.0, %v3662
      %3664 = vmatmul.bf16.gmra.mxu0 %v2711
      %v3665 = vpop.f32.mrf.mxu0
      %v3666 = vadd.f32 0.0, %v3665
      %v3667 = vpop.f32.mrf.mxu0
      %v3668 = vadd.f32 0.0, %v3667
      %3669 = vmatmul.bf16.gmra.mxu0 %v2715
      %v3670 = vpop.f32.mrf.mxu0
      %v3671 = vadd.f32 0.0, %v3670
      %v3672 = vpop.f32.mrf.mxu0
      %v3673 = vadd.f32 0.0, %v3672
      %3674 = vmatmul.bf16.gmra.mxu0 %v2719
      %v3675 = vpop.f32.mrf.mxu0
      %v3676 = vadd.f32 0.0, %v3675
      %v3677 = vpop.f32.mrf.mxu0
      %v3678 = vadd.f32 0.0, %v3677
      %3679 = vmatmul.bf16.gmra.mxu0 %v2723
      %v3680 = vpop.f32.mrf.mxu0
      %v3681 = vadd.f32 0.0, %v3680
      %v3682 = vpop.f32.mrf.mxu0
      %v3683 = vadd.f32 0.0, %v3682
      %3684 = vmatmul.bf16.gmra.mxu0 %v2727
      %v3685 = vpop.f32.mrf.mxu0
      %v3686 = vadd.f32 0.0, %v3685
      %v3687 = vpop.f32.mrf.mxu0
      %v3688 = vadd.f32 0.0, %v3687
      %3689 = vmatmul.bf16.gmra.mxu0 %v2731
      %v3690 = vpop.f32.mrf.mxu0
      %v3691 = vadd.f32 0.0, %v3690
      %v3692 = vpop.f32.mrf.mxu0
      %v3693 = vadd.f32 0.0, %v3692
      %3694 = vmatmul.bf16.gmra.mxu0 %v2735
      %v3695 = vpop.f32.mrf.mxu0
      %v3696 = vadd.f32 0.0, %v3695
      %v3697 = vpop.f32.mrf.mxu0
      %v3698 = vadd.f32 0.0, %v3697
      %3699 = vmatmul.bf16.gmra.mxu0 %v2739
      %v3700 = vpop.f32.mrf.mxu0
      %v3701 = vadd.f32 0.0, %v3700
      %v3702 = vpop.f32.mrf.mxu0
      %v3703 = vadd.f32 0.0, %v3702
      %3704 = vmatmul.bf16.gmra.mxu0 %v2743
      %v3705 = vpop.f32.mrf.mxu0
      %v3706 = vadd.f32 0.0, %v3705
      %v3707 = vpop.f32.mrf.mxu0
      %v3708 = vadd.f32 0.0, %v3707
      %3709 = vmatmul.bf16.gmra.mxu0 %v2747
      %v3710 = vpop.f32.mrf.mxu0
      %v3711 = vadd.f32 0.0, %v3710
      %v3712 = vpop.f32.mrf.mxu0
      %v3713 = vadd.f32 0.0, %v3712
      %3714 = vmatmul.bf16.gmra.mxu0 %v2751
      %v3715 = vpop.f32.mrf.mxu0
      %v3716 = vadd.f32 0.0, %v3715
      %v3717 = vpop.f32.mrf.mxu0
      %v3718 = vadd.f32 0.0, %v3717
      %3719 = vmatmul.bf16.gmra.mxu0 %v2755
      %v3720 = vpop.f32.mrf.mxu0
      %v3721 = vadd.f32 0.0, %v3720
      %v3722 = vpop.f32.mrf.mxu0
      %v3723 = vadd.f32 0.0, %v3722
      %3724 = vmatmul.bf16.gmra.mxu0 %v2759
      %v3725 = vpop.f32.mrf.mxu0
      %v3726 = vadd.f32 0.0, %v3725
      %v3727 = vpop.f32.mrf.mxu0
      %v3728 = vadd.f32 0.0, %v3727
      %3729 = vmatmul.bf16.gmra.mxu0 %v2763
      %v3730 = vpop.f32.mrf.mxu0
      %v3731 = vadd.f32 0.0, %v3730
      %v3732 = vpop.f32.mrf.mxu0
      %v3733 = vadd.f32 0.0, %v3732
      %3734 = vmatmul.bf16.gmra.mxu0 %v2767
      %v3735 = vpop.f32.mrf.mxu0
      %v3736 = vadd.f32 0.0, %v3735
      %v3737 = vpop.f32.mrf.mxu0
      %v3738 = vadd.f32 0.0, %v3737
      %3739 = vmatmul.bf16.gmra.mxu0 %v2771
      %v3740 = vpop.f32.mrf.mxu0
      %v3741 = vadd.f32 0.0, %v3740
      %v3742 = vpop.f32.mrf.mxu0
      %v3743 = vadd.f32 0.0, %v3742
      %3744 = vmatmul.bf16.gmra.mxu0 %v2775
      %v3745 = vpop.f32.mrf.mxu0
      %v3746 = vadd.f32 0.0, %v3745
      %v3747 = vpop.f32.mrf.mxu0
      %v3748 = vadd.f32 0.0, %v3747
      %3749 = vmatmul.bf16.gmra.mxu0 %v2779
      %v3750 = vpop.f32.mrf.mxu0
      %v3751 = vadd.f32 0.0, %v3750
      %v3752 = vpop.f32.mrf.mxu0
      %v3753 = vadd.f32 0.0, %v3752
      %3754 = vmatmul.bf16.gmra.mxu0 %v2783
      %v3755 = vpop.f32.mrf.mxu0
      %v3756 = vadd.f32 0.0, %v3755
      %v3757 = vpop.f32.mrf.mxu0
      %v3758 = vadd.f32 0.0, %v3757
      %3759 = vmatmul.bf16.gmra.mxu0 %v2787
      %v3760 = vpop.f32.mrf.mxu0
      %v3761 = vadd.f32 0.0, %v3760
      %v3762 = vpop.f32.mrf.mxu0
      %v3763 = vadd.f32 0.0, %v3762
      %3764 = vmatmul.bf16.gmra.mxu0 %v2791
      %v3765 = vpop.f32.mrf.mxu0
      %v3766 = vadd.f32 0.0, %v3765
      %v3767 = vpop.f32.mrf.mxu0
      %v3768 = vadd.f32 0.0, %v3767
      %3769 = vmatmul.bf16.gmra.mxu0 %v2795
      %v3770 = vpop.f32.mrf.mxu0
      %v3771 = vadd.f32 0.0, %v3770
      %v3772 = vpop.f32.mrf.mxu0
      %v3773 = vadd.f32 0.0, %v3772
      %3774 = vmatmul.bf16.gmra.mxu0 %v2799
      %v3775 = vpop.f32.mrf.mxu0
      %v3776 = vadd.f32 0.0, %v3775
      %v3777 = vpop.f32.mrf.mxu0
      %v3778 = vadd.f32 0.0, %v3777
      %3779 = vmatmul.bf16.gmra.mxu0 %v2803
      %v3780 = vpop.f32.mrf.mxu0
      %v3781 = vadd.f32 0.0, %v3780
      %v3782 = vpop.f32.mrf.mxu0
      %v3783 = vadd.f32 0.0, %v3782
      %3784 = vdwg.mxu0
      %3785 = vmatpush.bf16.msra.mxu0 %v1037
      %3786 = vmatpush.bf16.msra.mxu0 %v1036
      %3787 = vmatpush.bf16.msra.mxu0 %v1035
      %3788 = vmatpush.bf16.msra.mxu0 %v1034
      %3789 = vmatpush.bf16.msra.mxu0 %v1033
      %3790 = vmatpush.bf16.msra.mxu0 %v1032
      %3791 = vmatpush.bf16.msra.mxu0 %v1031
      %3792 = vmatpush.bf16.msra.mxu0 %v1030
      %3793 = vmatmul.bf16.gmra.mxu0 %v2456
      %v3794 = vpop.f32.mrf.mxu0
      %v3795 = vadd.f32 %v3346, %v3794
      %v3796 = vpop.f32.mrf.mxu0
      %v3797 = vadd.f32 %v3348, %v3796
      %3798 = vmatmul.bf16.gmra.mxu0 %v2460
      %v3799 = vpop.f32.mrf.mxu0
      %v3800 = vadd.f32 %v3351, %v3799
      %v3801 = vpop.f32.mrf.mxu0
      %v3802 = vadd.f32 %v3353, %v3801
      %3803 = vmatmul.bf16.gmra.mxu0 %v2464
      %v3804 = vpop.f32.mrf.mxu0
      %v3805 = vadd.f32 %v3356, %v3804
      %v3806 = vpop.f32.mrf.mxu0
      %v3807 = vadd.f32 %v3358, %v3806
      %3808 = vmatmul.bf16.gmra.mxu0 %v2468
      %v3809 = vpop.f32.mrf.mxu0
      %v3810 = vadd.f32 %v3361, %v3809
      %v3811 = vpop.f32.mrf.mxu0
      %v3812 = vadd.f32 %v3363, %v3811
      %3813 = vmatmul.bf16.gmra.mxu0 %v2472
      %v3814 = vpop.f32.mrf.mxu0
      %v3815 = vadd.f32 %v3366, %v3814
      %v3816 = vpop.f32.mrf.mxu0
      %v3817 = vadd.f32 %v3368, %v3816
      %3818 = vmatmul.bf16.gmra.mxu0 %v2476
      %v3819 = vpop.f32.mrf.mxu0
      %v3820 = vadd.f32 %v3371, %v3819
      %v3821 = vpop.f32.mrf.mxu0
      %v3822 = vadd.f32 %v3373, %v3821
      %3823 = vmatmul.bf16.gmra.mxu0 %v2480
      %v3824 = vpop.f32.mrf.mxu0
      %v3825 = vadd.f32 %v3376, %v3824
      %v3826 = vpop.f32.mrf.mxu0
      %v3827 = vadd.f32 %v3378, %v3826
      %3828 = vmatmul.bf16.gmra.mxu0 %v2484
      %v3829 = vpop.f32.mrf.mxu0
      %v3830 = vadd.f32 %v3381, %v3829
      %v3831 = vpop.f32.mrf.mxu0
      %v3832 = vadd.f32 %v3383, %v3831
      %3833 = vmatmul.bf16.gmra.mxu0 %v2488
      %v3834 = vpop.f32.mrf.mxu0
      %v3835 = vadd.f32 %v3386, %v3834
      %v3836 = vpop.f32.mrf.mxu0
      %v3837 = vadd.f32 %v3388, %v3836
      %3838 = vmatmul.bf16.gmra.mxu0 %v2492
      %v3839 = vpop.f32.mrf.mxu0
      %v3840 = vadd.f32 %v3391, %v3839
      %v3841 = vpop.f32.mrf.mxu0
      %v3842 = vadd.f32 %v3393, %v3841
      %3843 = vmatmul.bf16.gmra.mxu0 %v2496
      %v3844 = vpop.f32.mrf.mxu0
      %v3845 = vadd.f32 %v3396, %v3844
      %v3846 = vpop.f32.mrf.mxu0
      %v3847 = vadd.f32 %v3398, %v3846
      %3848 = vmatmul.bf16.gmra.mxu0 %v2500
      %v3849 = vpop.f32.mrf.mxu0
      %v3850 = vadd.f32 %v3401, %v3849
      %v3851 = vpop.f32.mrf.mxu0
      %v3852 = vadd.f32 %v3403, %v3851
      %3853 = vmatmul.bf16.gmra.mxu0 %v2504
      %v3854 = vpop.f32.mrf.mxu0
      %v3855 = vadd.f32 %v3406, %v3854
      %v3856 = vpop.f32.mrf.mxu0
      %v3857 = vadd.f32 %v3408, %v3856
      %3858 = vmatmul.bf16.gmra.mxu0 %v2508
      %v3859 = vpop.f32.mrf.mxu0
      %v3860 = vadd.f32 %v3411, %v3859
      %v3861 = vpop.f32.mrf.mxu0
      %v3862 = vadd.f32 %v3413, %v3861
      %3863 = vmatmul.bf16.gmra.mxu0 %v2512
      %v3864 = vpop.f32.mrf.mxu0
      %v3865 = vadd.f32 %v3416, %v3864
      %v3866 = vpop.f32.mrf.mxu0
      %v3867 = vadd.f32 %v3418, %v3866
      %3868 = vmatmul.bf16.gmra.mxu0 %v2516
      %v3869 = vpop.f32.mrf.mxu0
      %v3870 = vadd.f32 %v3421, %v3869
      %v3871 = vpop.f32.mrf.mxu0
      %v3872 = vadd.f32 %v3423, %v3871
      %3873 = vmatmul.bf16.gmra.mxu0 %v2520
      %v3874 = vpop.f32.mrf.mxu0
      %v3875 = vadd.f32 %v3426, %v3874
      %v3876 = vpop.f32.mrf.mxu0
      %v3877 = vadd.f32 %v3428, %v3876
      %3878 = vmatmul.bf16.gmra.mxu0 %v2524
      %v3879 = vpop.f32.mrf.mxu0
      %v3880 = vadd.f32 %v3431, %v3879
      %v3881 = vpop.f32.mrf.mxu0
      %v3882 = vadd.f32 %v3433, %v3881
      %3883 = vmatmul.bf16.gmra.mxu0 %v2528
      %v3884 = vpop.f32.mrf.mxu0
      %v3885 = vadd.f32 %v3436, %v3884
      %v3886 = vpop.f32.mrf.mxu0
      %v3887 = vadd.f32 %v3438, %v3886
      %3888 = vmatmul.bf16.gmra.mxu0 %v2532
      %v3889 = vpop.f32.mrf.mxu0
      %v3890 = vadd.f32 %v3441, %v3889
      %v3891 = vpop.f32.mrf.mxu0
      %v3892 = vadd.f32 %v3443, %v3891
      %3893 = vmatmul.bf16.gmra.mxu0 %v2536
      %v3894 = vpop.f32.mrf.mxu0
      %v3895 = vadd.f32 %v3446, %v3894
      %v3896 = vpop.f32.mrf.mxu0
      %v3897 = vadd.f32 %v3448, %v3896
      %3898 = vmatmul.bf16.gmra.mxu0 %v2540
      %v3899 = vpop.f32.mrf.mxu0
      %v3900 = vadd.f32 %v3451, %v3899
      %v3901 = vpop.f32.mrf.mxu0
      %v3902 = vadd.f32 %v3453, %v3901
      %3903 = vmatmul.bf16.gmra.mxu0 %v2544
      %v3904 = vpop.f32.mrf.mxu0
      %v3905 = vadd.f32 %v3456, %v3904
      %v3906 = vpop.f32.mrf.mxu0
      %v3907 = vadd.f32 %v3458, %v3906
      %3908 = vmatmul.bf16.gmra.mxu0 %v2548
      %v3909 = vpop.f32.mrf.mxu0
      %v3910 = vadd.f32 %v3461, %v3909
      %v3911 = vpop.f32.mrf.mxu0
      %v3912 = vadd.f32 %v3463, %v3911
      %3913 = vmatmul.bf16.gmra.mxu0 %v2552
      %v3914 = vpop.f32.mrf.mxu0
      %v3915 = vadd.f32 %v3466, %v3914
      %v3916 = vpop.f32.mrf.mxu0
      %v3917 = vadd.f32 %v3468, %v3916
      %3918 = vmatmul.bf16.gmra.mxu0 %v2556
      %v3919 = vpop.f32.mrf.mxu0
      %v3920 = vadd.f32 %v3471, %v3919
      %v3921 = vpop.f32.mrf.mxu0
      %v3922 = vadd.f32 %v3473, %v3921
      %3923 = vmatmul.bf16.gmra.mxu0 %v2560
      %v3924 = vpop.f32.mrf.mxu0
      %v3925 = vadd.f32 %v3476, %v3924
      %v3926 = vpop.f32.mrf.mxu0
      %v3927 = vadd.f32 %v3478, %v3926
      %3928 = vmatmul.bf16.gmra.mxu0 %v2564
      %v3929 = vpop.f32.mrf.mxu0
      %v3930 = vadd.f32 %v3481, %v3929
      %v3931 = vpop.f32.mrf.mxu0
      %v3932 = vadd.f32 %v3483, %v3931
      %3933 = vmatmul.bf16.gmra.mxu0 %v2568
      %v3934 = vpop.f32.mrf.mxu0
      %v3935 = vadd.f32 %v3486, %v3934
      %v3936 = vpop.f32.mrf.mxu0
      %v3937 = vadd.f32 %v3488, %v3936
      %3938 = vmatmul.bf16.gmra.mxu0 %v2572
      %v3939 = vpop.f32.mrf.mxu0
      %v3940 = vadd.f32 %v3491, %v3939
      %v3941 = vpop.f32.mrf.mxu0
      %v3942 = vadd.f32 %v3493, %v3941
      %3943 = vmatmul.bf16.gmra.mxu0 %v2576
      %v3944 = vpop.f32.mrf.mxu0
      %v3945 = vadd.f32 %v3496, %v3944
      %v3946 = vpop.f32.mrf.mxu0
      %v3947 = vadd.f32 %v3498, %v3946
      %3948 = vmatmul.bf16.gmra.mxu0 %v2580
      %v3949 = vpop.f32.mrf.mxu0
      %v3950 = vadd.f32 %v3501, %v3949
      %v3951 = vpop.f32.mrf.mxu0
      %v3952 = vadd.f32 %v3503, %v3951
      %3953 = vmatmul.bf16.gmra.mxu0 %v2584
      %v3954 = vpop.f32.mrf.mxu0
      %v3955 = vadd.f32 %v3506, %v3954
      %v3956 = vpop.f32.mrf.mxu0
      %v3957 = vadd.f32 %v3508, %v3956
      %3958 = vmatmul.bf16.gmra.mxu0 %v2588
      %v3959 = vpop.f32.mrf.mxu0
      %v3960 = vadd.f32 %v3511, %v3959
      %v3961 = vpop.f32.mrf.mxu0
      %v3962 = vadd.f32 %v3513, %v3961
      %3963 = vmatmul.bf16.gmra.mxu0 %v2592
      %v3964 = vpop.f32.mrf.mxu0
      %v3965 = vadd.f32 %v3516, %v3964
      %v3966 = vpop.f32.mrf.mxu0
      %v3967 = vadd.f32 %v3518, %v3966
      %3968 = vmatmul.bf16.gmra.mxu0 %v2596
      %v3969 = vpop.f32.mrf.mxu0
      %v3970 = vadd.f32 %v3521, %v3969
      %v3971 = vpop.f32.mrf.mxu0
      %v3972 = vadd.f32 %v3523, %v3971
      %3973 = vmatmul.bf16.gmra.mxu0 %v2600
      %v3974 = vpop.f32.mrf.mxu0
      %v3975 = vadd.f32 %v3526, %v3974
      %v3976 = vpop.f32.mrf.mxu0
      %v3977 = vadd.f32 %v3528, %v3976
      %3978 = vmatmul.bf16.gmra.mxu0 %v2604
      %v3979 = vpop.f32.mrf.mxu0
      %v3980 = vadd.f32 %v3531, %v3979
      %v3981 = vpop.f32.mrf.mxu0
      %v3982 = vadd.f32 %v3533, %v3981
      %3983 = vmatmul.bf16.gmra.mxu0 %v2608
      %v3984 = vpop.f32.mrf.mxu0
      %v3985 = vadd.f32 %v3536, %v3984
      %v3986 = vpop.f32.mrf.mxu0
      %v3987 = vadd.f32 %v3538, %v3986
      %3988 = vmatmul.bf16.gmra.mxu0 %v2612
      %v3989 = vpop.f32.mrf.mxu0
      %v3990 = vadd.f32 %v3541, %v3989
      %v3991 = vpop.f32.mrf.mxu0
      %v3992 = vadd.f32 %v3543, %v3991
      %3993 = vmatmul.bf16.gmra.mxu0 %v2616
      %v3994 = vpop.f32.mrf.mxu0
      %v3995 = vadd.f32 %v3546, %v3994
      %v3996 = vpop.f32.mrf.mxu0
      %v3997 = vadd.f32 %v3548, %v3996
      %3998 = vmatmul.bf16.gmra.mxu0 %v2620
      %v3999 = vpop.f32.mrf.mxu0
      %v4000 = vadd.f32 %v3551, %v3999
      %v4001 = vpop.f32.mrf.mxu0
      %v4002 = vadd.f32 %v3553, %v4001
      %4003 = vmatmul.bf16.gmra.mxu0 %v2624
      %v4004 = vpop.f32.mrf.mxu0
      %v4005 = vadd.f32 %v3556, %v4004
      %v4006 = vpop.f32.mrf.mxu0
      %v4007 = vadd.f32 %v3558, %v4006
      %4008 = vmatmul.bf16.gmra.mxu0 %v2628
      %v4009 = vpop.f32.mrf.mxu0
      %v4010 = vadd.f32 %v3561, %v4009
      %v4011 = vpop.f32.mrf.mxu0
      %v4012 = vadd.f32 %v3563, %v4011
      %4013 = vmatmul.bf16.gmra.mxu0 %v2632
      %v4014 = vpop.f32.mrf.mxu0
      %v4015 = vadd.f32 %v3566, %v4014
      %v4016 = vpop.f32.mrf.mxu0
      %v4017 = vadd.f32 %v3568, %v4016
      %4018 = vmatmul.bf16.gmra.mxu0 %v2636
      %v4019 = vpop.f32.mrf.mxu0
      %v4020 = vadd.f32 %v3571, %v4019
      %v4021 = vpop.f32.mrf.mxu0
      %v4022 = vadd.f32 %v3573, %v4021
      %4023 = vmatmul.bf16.gmra.mxu0 %v2640
      %v4024 = vpop.f32.mrf.mxu0
      %v4025 = vadd.f32 %v3576, %v4024
      %v4026 = vpop.f32.mrf.mxu0
      %v4027 = vadd.f32 %v3578, %v4026
      %4028 = vmatmul.bf16.gmra.mxu0 %v2644
      %v4029 = vpop.f32.mrf.mxu0
      %v4030 = vadd.f32 %v3581, %v4029
      %v4031 = vpop.f32.mrf.mxu0
      %v4032 = vadd.f32 %v3583, %v4031
      %4033 = vmatmul.bf16.gmra.mxu0 %v2648
      %v4034 = vpop.f32.mrf.mxu0
      %v4035 = vadd.f32 %v3586, %v4034
      %v4036 = vpop.f32.mrf.mxu0
      %v4037 = vadd.f32 %v3588, %v4036
      %4038 = vmatmul.bf16.gmra.mxu0 %v2652
      %v4039 = vpop.f32.mrf.mxu0
      %v4040 = vadd.f32 %v3591, %v4039
      %v4041 = vpop.f32.mrf.mxu0
      %v4042 = vadd.f32 %v3593, %v4041
      %4043 = vmatmul.bf16.gmra.mxu0 %v2656
      %v4044 = vpop.f32.mrf.mxu0
      %v4045 = vadd.f32 %v3596, %v4044
      %v4046 = vpop.f32.mrf.mxu0
      %v4047 = vadd.f32 %v3598, %v4046
      %4048 = vmatmul.bf16.gmra.mxu0 %v2660
      %v4049 = vpop.f32.mrf.mxu0
      %v4050 = vadd.f32 %v3601, %v4049
      %v4051 = vpop.f32.mrf.mxu0
      %v4052 = vadd.f32 %v3603, %v4051
      %4053 = vmatmul.bf16.gmra.mxu0 %v2664
      %v4054 = vpop.f32.mrf.mxu0
      %v4055 = vadd.f32 %v3606, %v4054
      %v4056 = vpop.f32.mrf.mxu0
      %v4057 = vadd.f32 %v3608, %v4056
      %4058 = vmatmul.bf16.gmra.mxu0 %v2668
      %v4059 = vpop.f32.mrf.mxu0
      %v4060 = vadd.f32 %v3611, %v4059
      %v4061 = vpop.f32.mrf.mxu0
      %v4062 = vadd.f32 %v3613, %v4061
      %4063 = vmatmul.bf16.gmra.mxu0 %v2672
      %v4064 = vpop.f32.mrf.mxu0
      %v4065 = vadd.f32 %v3616, %v4064
      %v4066 = vpop.f32.mrf.mxu0
      %v4067 = vadd.f32 %v3618, %v4066
      %4068 = vmatmul.bf16.gmra.mxu0 %v2676
      %v4069 = vpop.f32.mrf.mxu0
      %v4070 = vadd.f32 %v3621, %v4069
      %v4071 = vpop.f32.mrf.mxu0
      %v4072 = vadd.f32 %v3623, %v4071
      %4073 = vmatmul.bf16.gmra.mxu0 %v2680
      %v4074 = vpop.f32.mrf.mxu0
      %v4075 = vadd.f32 %v3626, %v4074
      %v4076 = vpop.f32.mrf.mxu0
      %v4077 = vadd.f32 %v3628, %v4076
      %4078 = vmatmul.bf16.gmra.mxu0 %v2684
      %v4079 = vpop.f32.mrf.mxu0
      %v4080 = vadd.f32 %v3631, %v4079
      %v4081 = vpop.f32.mrf.mxu0
      %v4082 = vadd.f32 %v3633, %v4081
      %4083 = vmatmul.bf16.gmra.mxu0 %v2688
      %v4084 = vpop.f32.mrf.mxu0
      %v4085 = vadd.f32 %v3636, %v4084
      %v4086 = vpop.f32.mrf.mxu0
      %v4087 = vadd.f32 %v3638, %v4086
      %4088 = vmatmul.bf16.gmra.mxu0 %v2692
      %v4089 = vpop.f32.mrf.mxu0
      %v4090 = vadd.f32 %v3641, %v4089
      %v4091 = vpop.f32.mrf.mxu0
      %v4092 = vadd.f32 %v3643, %v4091
      %4093 = vmatmul.bf16.gmra.mxu0 %v2696
      %v4094 = vpop.f32.mrf.mxu0
      %v4095 = vadd.f32 %v3646, %v4094
      %v4096 = vpop.f32.mrf.mxu0
      %v4097 = vadd.f32 %v3648, %v4096
      %4098 = vmatmul.bf16.gmra.mxu0 %v2700
      %v4099 = vpop.f32.mrf.mxu0
      %v4100 = vadd.f32 %v3651, %v4099
      %v4101 = vpop.f32.mrf.mxu0
      %v4102 = vadd.f32 %v3653, %v4101
      %4103 = vmatmul.bf16.gmra.mxu0 %v2704
      %v4104 = vpop.f32.mrf.mxu0
      %v4105 = vadd.f32 %v3656, %v4104
      %v4106 = vpop.f32.mrf.mxu0
      %v4107 = vadd.f32 %v3658, %v4106
      %4108 = vmatmul.bf16.gmra.mxu0 %v2708
      %v4109 = vpop.f32.mrf.mxu0
      %v4110 = vadd.f32 %v3661, %v4109
      %v4111 = vpop.f32.mrf.mxu0
      %v4112 = vadd.f32 %v3663, %v4111
      %4113 = vmatmul.bf16.gmra.mxu0 %v2712
      %v4114 = vpop.f32.mrf.mxu0
      %v4115 = vadd.f32 %v3666, %v4114
      %v4116 = vpop.f32.mrf.mxu0
      %v4117 = vadd.f32 %v3668, %v4116
      %4118 = vmatmul.bf16.gmra.mxu0 %v2716
      %v4119 = vpop.f32.mrf.mxu0
      %v4120 = vadd.f32 %v3671, %v4119
      %v4121 = vpop.f32.mrf.mxu0
      %v4122 = vadd.f32 %v3673, %v4121
      %4123 = vmatmul.bf16.gmra.mxu0 %v2720
      %v4124 = vpop.f32.mrf.mxu0
      %v4125 = vadd.f32 %v3676, %v4124
      %v4126 = vpop.f32.mrf.mxu0
      %v4127 = vadd.f32 %v3678, %v4126
      %4128 = vmatmul.bf16.gmra.mxu0 %v2724
      %v4129 = vpop.f32.mrf.mxu0
      %v4130 = vadd.f32 %v3681, %v4129
      %v4131 = vpop.f32.mrf.mxu0
      %v4132 = vadd.f32 %v3683, %v4131
      %4133 = vmatmul.bf16.gmra.mxu0 %v2728
      %v4134 = vpop.f32.mrf.mxu0
      %v4135 = vadd.f32 %v3686, %v4134
      %v4136 = vpop.f32.mrf.mxu0
      %v4137 = vadd.f32 %v3688, %v4136
      %4138 = vmatmul.bf16.gmra.mxu0 %v2732
      %v4139 = vpop.f32.mrf.mxu0
      %v4140 = vadd.f32 %v3691, %v4139
      %v4141 = vpop.f32.mrf.mxu0
      %v4142 = vadd.f32 %v3693, %v4141
      %4143 = vmatmul.bf16.gmra.mxu0 %v2736
      %v4144 = vpop.f32.mrf.mxu0
      %v4145 = vadd.f32 %v3696, %v4144
      %v4146 = vpop.f32.mrf.mxu0
      %v4147 = vadd.f32 %v3698, %v4146
      %4148 = vmatmul.bf16.gmra.mxu0 %v2740
      %v4149 = vpop.f32.mrf.mxu0
      %v4150 = vadd.f32 %v3701, %v4149
      %v4151 = vpop.f32.mrf.mxu0
      %v4152 = vadd.f32 %v3703, %v4151
      %4153 = vmatmul.bf16.gmra.mxu0 %v2744
      %v4154 = vpop.f32.mrf.mxu0
      %v4155 = vadd.f32 %v3706, %v4154
      %v4156 = vpop.f32.mrf.mxu0
      %v4157 = vadd.f32 %v3708, %v4156
      %4158 = vmatmul.bf16.gmra.mxu0 %v2748
      %v4159 = vpop.f32.mrf.mxu0
      %v4160 = vadd.f32 %v3711, %v4159
      %v4161 = vpop.f32.mrf.mxu0
      %v4162 = vadd.f32 %v3713, %v4161
      %4163 = vmatmul.bf16.gmra.mxu0 %v2752
      %v4164 = vpop.f32.mrf.mxu0
      %v4165 = vadd.f32 %v3716, %v4164
      %v4166 = vpop.f32.mrf.mxu0
      %v4167 = vadd.f32 %v3718, %v4166
      %4168 = vmatmul.bf16.gmra.mxu0 %v2756
      %v4169 = vpop.f32.mrf.mxu0
      %v4170 = vadd.f32 %v3721, %v4169
      %v4171 = vpop.f32.mrf.mxu0
      %v4172 = vadd.f32 %v3723, %v4171
      %4173 = vmatmul.bf16.gmra.mxu0 %v2760
      %v4174 = vpop.f32.mrf.mxu0
      %v4175 = vadd.f32 %v3726, %v4174
      %v4176 = vpop.f32.mrf.mxu0
      %v4177 = vadd.f32 %v3728, %v4176
      %4178 = vmatmul.bf16.gmra.mxu0 %v2764
      %v4179 = vpop.f32.mrf.mxu0
      %v4180 = vadd.f32 %v3731, %v4179
      %v4181 = vpop.f32.mrf.mxu0
      %v4182 = vadd.f32 %v3733, %v4181
      %4183 = vmatmul.bf16.gmra.mxu0 %v2768
      %v4184 = vpop.f32.mrf.mxu0
      %v4185 = vadd.f32 %v3736, %v4184
      %v4186 = vpop.f32.mrf.mxu0
      %v4187 = vadd.f32 %v3738, %v4186
      %4188 = vmatmul.bf16.gmra.mxu0 %v2772
      %v4189 = vpop.f32.mrf.mxu0
      %v4190 = vadd.f32 %v3741, %v4189
      %v4191 = vpop.f32.mrf.mxu0
      %v4192 = vadd.f32 %v3743, %v4191
      %4193 = vmatmul.bf16.gmra.mxu0 %v2776
      %v4194 = vpop.f32.mrf.mxu0
      %v4195 = vadd.f32 %v3746, %v4194
      %v4196 = vpop.f32.mrf.mxu0
      %v4197 = vadd.f32 %v3748, %v4196
      %4198 = vmatmul.bf16.gmra.mxu0 %v2780
      %v4199 = vpop.f32.mrf.mxu0
      %v4200 = vadd.f32 %v3751, %v4199
      %v4201 = vpop.f32.mrf.mxu0
      %v4202 = vadd.f32 %v3753, %v4201
      %4203 = vmatmul.bf16.gmra.mxu0 %v2784
      %v4204 = vpop.f32.mrf.mxu0
      %v4205 = vadd.f32 %v3756, %v4204
      %v4206 = vpop.f32.mrf.mxu0
      %v4207 = vadd.f32 %v3758, %v4206
      %4208 = vmatmul.bf16.gmra.mxu0 %v2788
      %v4209 = vpop.f32.mrf.mxu0
      %v4210 = vadd.f32 %v3761, %v4209
      %v4211 = vpop.f32.mrf.mxu0
      %v4212 = vadd.f32 %v3763, %v4211
      %4213 = vmatmul.bf16.gmra.mxu0 %v2792
      %v4214 = vpop.f32.mrf.mxu0
      %v4215 = vadd.f32 %v3766, %v4214
      %v4216 = vpop.f32.mrf.mxu0
      %v4217 = vadd.f32 %v3768, %v4216
      %4218 = vmatmul.bf16.gmra.mxu0 %v2796
      %v4219 = vpop.f32.mrf.mxu0
      %v4220 = vadd.f32 %v3771, %v4219
      %v4221 = vpop.f32.mrf.mxu0
      %v4222 = vadd.f32 %v3773, %v4221
      %4223 = vmatmul.bf16.gmra.mxu0 %v2800
      %v4224 = vpop.f32.mrf.mxu0
      %v4225 = vadd.f32 %v3776, %v4224
      %v4226 = vpop.f32.mrf.mxu0
      %v4227 = vadd.f32 %v3778, %v4226
      %4228 = vmatmul.bf16.gmra.mxu0 %v2804
      %v4229 = vpop.f32.mrf.mxu0
      %v4230 = vadd.f32 %v3781, %v4229
      %v4231 = vpop.f32.mrf.mxu0
      %v4232 = vadd.f32 %v3783, %v4231
      %4233 = vdwg.mxu0
      %4234 = vmatpush.bf16.msra.mxu0 %v1045
      %4235 = vmatpush.bf16.msra.mxu0 %v1044
      %4236 = vmatpush.bf16.msra.mxu0 %v1043
      %4237 = vmatpush.bf16.msra.mxu0 %v1042
      %4238 = vmatpush.bf16.msra.mxu0 %v1041
      %4239 = vmatpush.bf16.msra.mxu0 %v1040
      %4240 = vmatpush.bf16.msra.mxu0 %v1039
      %4241 = vmatpush.bf16.msra.mxu0 %v1038
      %4242 = vmatmul.bf16.gmra.mxu0 %v2457
      %v4243 = vpop.f32.mrf.mxu0
      %v4244 = vadd.f32 %v3795, %v4243
      %v4245 = vpop.f32.mrf.mxu0
      %v4246 = vadd.f32 %v3797, %v4245
      %4247 = vmatmul.bf16.gmra.mxu0 %v2461
      %v4248 = vpop.f32.mrf.mxu0
      %v4249 = vadd.f32 %v3800, %v4248
      %v4250 = vpop.f32.mrf.mxu0
      %v4251 = vadd.f32 %v3802, %v4250
      %4252 = vmatmul.bf16.gmra.mxu0 %v2465
      %v4253 = vpop.f32.mrf.mxu0
      %v4254 = vadd.f32 %v3805, %v4253
      %v4255 = vpop.f32.mrf.mxu0
      %v4256 = vadd.f32 %v3807, %v4255
      %4257 = vmatmul.bf16.gmra.mxu0 %v2469
      %v4258 = vpop.f32.mrf.mxu0
      %v4259 = vadd.f32 %v3810, %v4258
      %v4260 = vpop.f32.mrf.mxu0
      %v4261 = vadd.f32 %v3812, %v4260
      %4262 = vmatmul.bf16.gmra.mxu0 %v2473
      %v4263 = vpop.f32.mrf.mxu0
      %v4264 = vadd.f32 %v3815, %v4263
      %v4265 = vpop.f32.mrf.mxu0
      %v4266 = vadd.f32 %v3817, %v4265
      %4267 = vmatmul.bf16.gmra.mxu0 %v2477
      %v4268 = vpop.f32.mrf.mxu0
      %v4269 = vadd.f32 %v3820, %v4268
      %v4270 = vpop.f32.mrf.mxu0
      %v4271 = vadd.f32 %v3822, %v4270
      %4272 = vmatmul.bf16.gmra.mxu0 %v2481
      %v4273 = vpop.f32.mrf.mxu0
      %v4274 = vadd.f32 %v3825, %v4273
      %v4275 = vpop.f32.mrf.mxu0
      %v4276 = vadd.f32 %v3827, %v4275
      %4277 = vmatmul.bf16.gmra.mxu0 %v2485
      %v4278 = vpop.f32.mrf.mxu0
      %v4279 = vadd.f32 %v3830, %v4278
      %v4280 = vpop.f32.mrf.mxu0
      %v4281 = vadd.f32 %v3832, %v4280
      %4282 = vmatmul.bf16.gmra.mxu0 %v2489
      %v4283 = vpop.f32.mrf.mxu0
      %v4284 = vadd.f32 %v3835, %v4283
      %v4285 = vpop.f32.mrf.mxu0
      %v4286 = vadd.f32 %v3837, %v4285
      %4287 = vmatmul.bf16.gmra.mxu0 %v2493
      %v4288 = vpop.f32.mrf.mxu0
      %v4289 = vadd.f32 %v3840, %v4288
      %v4290 = vpop.f32.mrf.mxu0
      %v4291 = vadd.f32 %v3842, %v4290
      %4292 = vmatmul.bf16.gmra.mxu0 %v2497
      %v4293 = vpop.f32.mrf.mxu0
      %v4294 = vadd.f32 %v3845, %v4293
      %v4295 = vpop.f32.mrf.mxu0
      %v4296 = vadd.f32 %v3847, %v4295
      %4297 = vmatmul.bf16.gmra.mxu0 %v2501
      %v4298 = vpop.f32.mrf.mxu0
      %v4299 = vadd.f32 %v3850, %v4298
      %v4300 = vpop.f32.mrf.mxu0
      %v4301 = vadd.f32 %v3852, %v4300
      %4302 = vmatmul.bf16.gmra.mxu0 %v2505
      %v4303 = vpop.f32.mrf.mxu0
      %v4304 = vadd.f32 %v3855, %v4303
      %v4305 = vpop.f32.mrf.mxu0
      %v4306 = vadd.f32 %v3857, %v4305
      %4307 = vmatmul.bf16.gmra.mxu0 %v2509
      %v4308 = vpop.f32.mrf.mxu0
      %v4309 = vadd.f32 %v3860, %v4308
      %v4310 = vpop.f32.mrf.mxu0
      %v4311 = vadd.f32 %v3862, %v4310
      %4312 = vmatmul.bf16.gmra.mxu0 %v2513
      %v4313 = vpop.f32.mrf.mxu0
      %v4314 = vadd.f32 %v3865, %v4313
      %v4315 = vpop.f32.mrf.mxu0
      %v4316 = vadd.f32 %v3867, %v4315
      %4317 = vmatmul.bf16.gmra.mxu0 %v2517
      %v4318 = vpop.f32.mrf.mxu0
      %v4319 = vadd.f32 %v3870, %v4318
      %v4320 = vpop.f32.mrf.mxu0
      %v4321 = vadd.f32 %v3872, %v4320
      %4322 = vmatmul.bf16.gmra.mxu0 %v2521
      %v4323 = vpop.f32.mrf.mxu0
      %v4324 = vadd.f32 %v3875, %v4323
      %v4325 = vpop.f32.mrf.mxu0
      %v4326 = vadd.f32 %v3877, %v4325
      %4327 = vmatmul.bf16.gmra.mxu0 %v2525
      %v4328 = vpop.f32.mrf.mxu0
      %v4329 = vadd.f32 %v3880, %v4328
      %v4330 = vpop.f32.mrf.mxu0
      %v4331 = vadd.f32 %v3882, %v4330
      %4332 = vmatmul.bf16.gmra.mxu0 %v2529
      %v4333 = vpop.f32.mrf.mxu0
      %v4334 = vadd.f32 %v3885, %v4333
      %v4335 = vpop.f32.mrf.mxu0
      %v4336 = vadd.f32 %v3887, %v4335
      %4337 = vmatmul.bf16.gmra.mxu0 %v2533
      %v4338 = vpop.f32.mrf.mxu0
      %v4339 = vadd.f32 %v3890, %v4338
      %v4340 = vpop.f32.mrf.mxu0
      %v4341 = vadd.f32 %v3892, %v4340
      %4342 = vmatmul.bf16.gmra.mxu0 %v2537
      %v4343 = vpop.f32.mrf.mxu0
      %v4344 = vadd.f32 %v3895, %v4343
      %v4345 = vpop.f32.mrf.mxu0
      %v4346 = vadd.f32 %v3897, %v4345
      %4347 = vmatmul.bf16.gmra.mxu0 %v2541
      %v4348 = vpop.f32.mrf.mxu0
      %v4349 = vadd.f32 %v3900, %v4348
      %v4350 = vpop.f32.mrf.mxu0
      %v4351 = vadd.f32 %v3902, %v4350
      %4352 = vmatmul.bf16.gmra.mxu0 %v2545
      %v4353 = vpop.f32.mrf.mxu0
      %v4354 = vadd.f32 %v3905, %v4353
      %v4355 = vpop.f32.mrf.mxu0
      %v4356 = vadd.f32 %v3907, %v4355
      %4357 = vmatmul.bf16.gmra.mxu0 %v2549
      %v4358 = vpop.f32.mrf.mxu0
      %v4359 = vadd.f32 %v3910, %v4358
      %v4360 = vpop.f32.mrf.mxu0
      %v4361 = vadd.f32 %v3912, %v4360
      %4362 = vmatmul.bf16.gmra.mxu0 %v2553
      %v4363 = vpop.f32.mrf.mxu0
      %v4364 = vadd.f32 %v3915, %v4363
      %v4365 = vpop.f32.mrf.mxu0
      %v4366 = vadd.f32 %v3917, %v4365
      %4367 = vmatmul.bf16.gmra.mxu0 %v2557
      %v4368 = vpop.f32.mrf.mxu0
      %v4369 = vadd.f32 %v3920, %v4368
      %v4370 = vpop.f32.mrf.mxu0
      %v4371 = vadd.f32 %v3922, %v4370
      %4372 = vmatmul.bf16.gmra.mxu0 %v2561
      %v4373 = vpop.f32.mrf.mxu0
      %v4374 = vadd.f32 %v3925, %v4373
      %v4375 = vpop.f32.mrf.mxu0
      %v4376 = vadd.f32 %v3927, %v4375
      %4377 = vmatmul.bf16.gmra.mxu0 %v2565
      %v4378 = vpop.f32.mrf.mxu0
      %v4379 = vadd.f32 %v3930, %v4378
      %v4380 = vpop.f32.mrf.mxu0
      %v4381 = vadd.f32 %v3932, %v4380
      %4382 = vmatmul.bf16.gmra.mxu0 %v2569
      %v4383 = vpop.f32.mrf.mxu0
      %v4384 = vadd.f32 %v3935, %v4383
      %v4385 = vpop.f32.mrf.mxu0
      %v4386 = vadd.f32 %v3937, %v4385
      %4387 = vmatmul.bf16.gmra.mxu0 %v2573
      %v4388 = vpop.f32.mrf.mxu0
      %v4389 = vadd.f32 %v3940, %v4388
      %v4390 = vpop.f32.mrf.mxu0
      %v4391 = vadd.f32 %v3942, %v4390
      %4392 = vmatmul.bf16.gmra.mxu0 %v2577
      %v4393 = vpop.f32.mrf.mxu0
      %v4394 = vadd.f32 %v3945, %v4393
      %v4395 = vpop.f32.mrf.mxu0
      %v4396 = vadd.f32 %v3947, %v4395
      %4397 = vmatmul.bf16.gmra.mxu0 %v2581
      %v4398 = vpop.f32.mrf.mxu0
      %v4399 = vadd.f32 %v3950, %v4398
      %v4400 = vpop.f32.mrf.mxu0
      %v4401 = vadd.f32 %v3952, %v4400
      %4402 = vmatmul.bf16.gmra.mxu0 %v2585
      %v4403 = vpop.f32.mrf.mxu0
      %v4404 = vadd.f32 %v3955, %v4403
      %v4405 = vpop.f32.mrf.mxu0
      %v4406 = vadd.f32 %v3957, %v4405
      %4407 = vmatmul.bf16.gmra.mxu0 %v2589
      %v4408 = vpop.f32.mrf.mxu0
      %v4409 = vadd.f32 %v3960, %v4408
      %v4410 = vpop.f32.mrf.mxu0
      %v4411 = vadd.f32 %v3962, %v4410
      %4412 = vmatmul.bf16.gmra.mxu0 %v2593
      %v4413 = vpop.f32.mrf.mxu0
      %v4414 = vadd.f32 %v3965, %v4413
      %v4415 = vpop.f32.mrf.mxu0
      %v4416 = vadd.f32 %v3967, %v4415
      %4417 = vmatmul.bf16.gmra.mxu0 %v2597
      %v4418 = vpop.f32.mrf.mxu0
      %v4419 = vadd.f32 %v3970, %v4418
      %v4420 = vpop.f32.mrf.mxu0
      %v4421 = vadd.f32 %v3972, %v4420
      %4422 = vmatmul.bf16.gmra.mxu0 %v2601
      %v4423 = vpop.f32.mrf.mxu0
      %v4424 = vadd.f32 %v3975, %v4423
      %v4425 = vpop.f32.mrf.mxu0
      %v4426 = vadd.f32 %v3977, %v4425
      %4427 = vmatmul.bf16.gmra.mxu0 %v2605
      %v4428 = vpop.f32.mrf.mxu0
      %v4429 = vadd.f32 %v3980, %v4428
      %v4430 = vpop.f32.mrf.mxu0
      %v4431 = vadd.f32 %v3982, %v4430
      %4432 = vmatmul.bf16.gmra.mxu0 %v2609
      %v4433 = vpop.f32.mrf.mxu0
      %v4434 = vadd.f32 %v3985, %v4433
      %v4435 = vpop.f32.mrf.mxu0
      %v4436 = vadd.f32 %v3987, %v4435
      %4437 = vmatmul.bf16.gmra.mxu0 %v2613
      %v4438 = vpop.f32.mrf.mxu0
      %v4439 = vadd.f32 %v3990, %v4438
      %v4440 = vpop.f32.mrf.mxu0
      %v4441 = vadd.f32 %v3992, %v4440
      %4442 = vmatmul.bf16.gmra.mxu0 %v2617
      %v4443 = vpop.f32.mrf.mxu0
      %v4444 = vadd.f32 %v3995, %v4443
      %v4445 = vpop.f32.mrf.mxu0
      %v4446 = vadd.f32 %v3997, %v4445
      %4447 = vmatmul.bf16.gmra.mxu0 %v2621
      %v4448 = vpop.f32.mrf.mxu0
      %v4449 = vadd.f32 %v4000, %v4448
      %v4450 = vpop.f32.mrf.mxu0
      %v4451 = vadd.f32 %v4002, %v4450
      %4452 = vmatmul.bf16.gmra.mxu0 %v2625
      %v4453 = vpop.f32.mrf.mxu0
      %v4454 = vadd.f32 %v4005, %v4453
      %v4455 = vpop.f32.mrf.mxu0
      %v4456 = vadd.f32 %v4007, %v4455
      %4457 = vmatmul.bf16.gmra.mxu0 %v2629
      %v4458 = vpop.f32.mrf.mxu0
      %v4459 = vadd.f32 %v4010, %v4458
      %v4460 = vpop.f32.mrf.mxu0
      %v4461 = vadd.f32 %v4012, %v4460
      %4462 = vmatmul.bf16.gmra.mxu0 %v2633
      %v4463 = vpop.f32.mrf.mxu0
      %v4464 = vadd.f32 %v4015, %v4463
      %v4465 = vpop.f32.mrf.mxu0
      %v4466 = vadd.f32 %v4017, %v4465
      %4467 = vmatmul.bf16.gmra.mxu0 %v2637
      %v4468 = vpop.f32.mrf.mxu0
      %v4469 = vadd.f32 %v4020, %v4468
      %v4470 = vpop.f32.mrf.mxu0
      %v4471 = vadd.f32 %v4022, %v4470
      %4472 = vmatmul.bf16.gmra.mxu0 %v2641
      %v4473 = vpop.f32.mrf.mxu0
      %v4474 = vadd.f32 %v4025, %v4473
      %v4475 = vpop.f32.mrf.mxu0
      %v4476 = vadd.f32 %v4027, %v4475
      %4477 = vmatmul.bf16.gmra.mxu0 %v2645
      %v4478 = vpop.f32.mrf.mxu0
      %v4479 = vadd.f32 %v4030, %v4478
      %v4480 = vpop.f32.mrf.mxu0
      %v4481 = vadd.f32 %v4032, %v4480
      %4482 = vmatmul.bf16.gmra.mxu0 %v2649
      %v4483 = vpop.f32.mrf.mxu0
      %v4484 = vadd.f32 %v4035, %v4483
      %v4485 = vpop.f32.mrf.mxu0
      %v4486 = vadd.f32 %v4037, %v4485
      %4487 = vmatmul.bf16.gmra.mxu0 %v2653
      %v4488 = vpop.f32.mrf.mxu0
      %v4489 = vadd.f32 %v4040, %v4488
      %v4490 = vpop.f32.mrf.mxu0
      %v4491 = vadd.f32 %v4042, %v4490
      %4492 = vmatmul.bf16.gmra.mxu0 %v2657
      %v4493 = vpop.f32.mrf.mxu0
      %v4494 = vadd.f32 %v4045, %v4493
      %v4495 = vpop.f32.mrf.mxu0
      %v4496 = vadd.f32 %v4047, %v4495
      %4497 = vmatmul.bf16.gmra.mxu0 %v2661
      %v4498 = vpop.f32.mrf.mxu0
      %v4499 = vadd.f32 %v4050, %v4498
      %v4500 = vpop.f32.mrf.mxu0
      %v4501 = vadd.f32 %v4052, %v4500
      %4502 = vmatmul.bf16.gmra.mxu0 %v2665
      %v4503 = vpop.f32.mrf.mxu0
      %v4504 = vadd.f32 %v4055, %v4503
      %v4505 = vpop.f32.mrf.mxu0
      %v4506 = vadd.f32 %v4057, %v4505
      %4507 = vmatmul.bf16.gmra.mxu0 %v2669
      %v4508 = vpop.f32.mrf.mxu0
      %v4509 = vadd.f32 %v4060, %v4508
      %v4510 = vpop.f32.mrf.mxu0
      %v4511 = vadd.f32 %v4062, %v4510
      %4512 = vmatmul.bf16.gmra.mxu0 %v2673
      %v4513 = vpop.f32.mrf.mxu0
      %v4514 = vadd.f32 %v4065, %v4513
      %v4515 = vpop.f32.mrf.mxu0
      %v4516 = vadd.f32 %v4067, %v4515
      %4517 = vmatmul.bf16.gmra.mxu0 %v2677
      %v4518 = vpop.f32.mrf.mxu0
      %v4519 = vadd.f32 %v4070, %v4518
      %v4520 = vpop.f32.mrf.mxu0
      %v4521 = vadd.f32 %v4072, %v4520
      %4522 = vmatmul.bf16.gmra.mxu0 %v2681
      %v4523 = vpop.f32.mrf.mxu0
      %v4524 = vadd.f32 %v4075, %v4523
      %v4525 = vpop.f32.mrf.mxu0
      %v4526 = vadd.f32 %v4077, %v4525
      %4527 = vmatmul.bf16.gmra.mxu0 %v2685
      %v4528 = vpop.f32.mrf.mxu0
      %v4529 = vadd.f32 %v4080, %v4528
      %v4530 = vpop.f32.mrf.mxu0
      %v4531 = vadd.f32 %v4082, %v4530
      %4532 = vmatmul.bf16.gmra.mxu0 %v2689
      %v4533 = vpop.f32.mrf.mxu0
      %v4534 = vadd.f32 %v4085, %v4533
      %v4535 = vpop.f32.mrf.mxu0
      %v4536 = vadd.f32 %v4087, %v4535
      %4537 = vmatmul.bf16.gmra.mxu0 %v2693
      %v4538 = vpop.f32.mrf.mxu0
      %v4539 = vadd.f32 %v4090, %v4538
      %v4540 = vpop.f32.mrf.mxu0
      %v4541 = vadd.f32 %v4092, %v4540
      %4542 = vmatmul.bf16.gmra.mxu0 %v2697
      %v4543 = vpop.f32.mrf.mxu0
      %v4544 = vadd.f32 %v4095, %v4543
      %v4545 = vpop.f32.mrf.mxu0
      %v4546 = vadd.f32 %v4097, %v4545
      %4547 = vmatmul.bf16.gmra.mxu0 %v2701
      %v4548 = vpop.f32.mrf.mxu0
      %v4549 = vadd.f32 %v4100, %v4548
      %v4550 = vpop.f32.mrf.mxu0
      %v4551 = vadd.f32 %v4102, %v4550
      %4552 = vmatmul.bf16.gmra.mxu0 %v2705
      %v4553 = vpop.f32.mrf.mxu0
      %v4554 = vadd.f32 %v4105, %v4553
      %v4555 = vpop.f32.mrf.mxu0
      %v4556 = vadd.f32 %v4107, %v4555
      %4557 = vmatmul.bf16.gmra.mxu0 %v2709
      %v4558 = vpop.f32.mrf.mxu0
      %v4559 = vadd.f32 %v4110, %v4558
      %v4560 = vpop.f32.mrf.mxu0
      %v4561 = vadd.f32 %v4112, %v4560
      %4562 = vmatmul.bf16.gmra.mxu0 %v2713
      %v4563 = vpop.f32.mrf.mxu0
      %v4564 = vadd.f32 %v4115, %v4563
      %v4565 = vpop.f32.mrf.mxu0
      %v4566 = vadd.f32 %v4117, %v4565
      %4567 = vmatmul.bf16.gmra.mxu0 %v2717
      %v4568 = vpop.f32.mrf.mxu0
      %v4569 = vadd.f32 %v4120, %v4568
      %v4570 = vpop.f32.mrf.mxu0
      %v4571 = vadd.f32 %v4122, %v4570
      %4572 = vmatmul.bf16.gmra.mxu0 %v2721
      %v4573 = vpop.f32.mrf.mxu0
      %v4574 = vadd.f32 %v4125, %v4573
      %v4575 = vpop.f32.mrf.mxu0
      %v4576 = vadd.f32 %v4127, %v4575
      %4577 = vmatmul.bf16.gmra.mxu0 %v2725
      %v4578 = vpop.f32.mrf.mxu0
      %v4579 = vadd.f32 %v4130, %v4578
      %v4580 = vpop.f32.mrf.mxu0
      %v4581 = vadd.f32 %v4132, %v4580
      %4582 = vmatmul.bf16.gmra.mxu0 %v2729
      %v4583 = vpop.f32.mrf.mxu0
      %v4584 = vadd.f32 %v4135, %v4583
      %v4585 = vpop.f32.mrf.mxu0
      %v4586 = vadd.f32 %v4137, %v4585
      %4587 = vmatmul.bf16.gmra.mxu0 %v2733
      %v4588 = vpop.f32.mrf.mxu0
      %v4589 = vadd.f32 %v4140, %v4588
      %v4590 = vpop.f32.mrf.mxu0
      %v4591 = vadd.f32 %v4142, %v4590
      %4592 = vmatmul.bf16.gmra.mxu0 %v2737
      %v4593 = vpop.f32.mrf.mxu0
      %v4594 = vadd.f32 %v4145, %v4593
      %v4595 = vpop.f32.mrf.mxu0
      %v4596 = vadd.f32 %v4147, %v4595
      %4597 = vmatmul.bf16.gmra.mxu0 %v2741
      %v4598 = vpop.f32.mrf.mxu0
      %v4599 = vadd.f32 %v4150, %v4598
      %v4600 = vpop.f32.mrf.mxu0
      %v4601 = vadd.f32 %v4152, %v4600
      %4602 = vmatmul.bf16.gmra.mxu0 %v2745
      %v4603 = vpop.f32.mrf.mxu0
      %v4604 = vadd.f32 %v4155, %v4603
      %v4605 = vpop.f32.mrf.mxu0
      %v4606 = vadd.f32 %v4157, %v4605
      %4607 = vmatmul.bf16.gmra.mxu0 %v2749
      %v4608 = vpop.f32.mrf.mxu0
      %v4609 = vadd.f32 %v4160, %v4608
      %v4610 = vpop.f32.mrf.mxu0
      %v4611 = vadd.f32 %v4162, %v4610
      %4612 = vmatmul.bf16.gmra.mxu0 %v2753
      %v4613 = vpop.f32.mrf.mxu0
      %v4614 = vadd.f32 %v4165, %v4613
      %v4615 = vpop.f32.mrf.mxu0
      %v4616 = vadd.f32 %v4167, %v4615
      %4617 = vmatmul.bf16.gmra.mxu0 %v2757
      %v4618 = vpop.f32.mrf.mxu0
      %v4619 = vadd.f32 %v4170, %v4618
      %v4620 = vpop.f32.mrf.mxu0
      %v4621 = vadd.f32 %v4172, %v4620
      %4622 = vmatmul.bf16.gmra.mxu0 %v2761
      %v4623 = vpop.f32.mrf.mxu0
      %v4624 = vadd.f32 %v4175, %v4623
      %v4625 = vpop.f32.mrf.mxu0
      %v4626 = vadd.f32 %v4177, %v4625
      %4627 = vmatmul.bf16.gmra.mxu0 %v2765
      %v4628 = vpop.f32.mrf.mxu0
      %v4629 = vadd.f32 %v4180, %v4628
      %v4630 = vpop.f32.mrf.mxu0
      %v4631 = vadd.f32 %v4182, %v4630
      %4632 = vmatmul.bf16.gmra.mxu0 %v2769
      %v4633 = vpop.f32.mrf.mxu0
      %v4634 = vadd.f32 %v4185, %v4633
      %v4635 = vpop.f32.mrf.mxu0
      %v4636 = vadd.f32 %v4187, %v4635
      %4637 = vmatmul.bf16.gmra.mxu0 %v2773
      %v4638 = vpop.f32.mrf.mxu0
      %v4639 = vadd.f32 %v4190, %v4638
      %v4640 = vpop.f32.mrf.mxu0
      %v4641 = vadd.f32 %v4192, %v4640
      %4642 = vmatmul.bf16.gmra.mxu0 %v2777
      %v4643 = vpop.f32.mrf.mxu0
      %v4644 = vadd.f32 %v4195, %v4643
      %v4645 = vpop.f32.mrf.mxu0
      %v4646 = vadd.f32 %v4197, %v4645
      %4647 = vmatmul.bf16.gmra.mxu0 %v2781
      %v4648 = vpop.f32.mrf.mxu0
      %v4649 = vadd.f32 %v4200, %v4648
      %v4650 = vpop.f32.mrf.mxu0
      %v4651 = vadd.f32 %v4202, %v4650
      %4652 = vmatmul.bf16.gmra.mxu0 %v2785
      %v4653 = vpop.f32.mrf.mxu0
      %v4654 = vadd.f32 %v4205, %v4653
      %v4655 = vpop.f32.mrf.mxu0
      %v4656 = vadd.f32 %v4207, %v4655
      %4657 = vmatmul.bf16.gmra.mxu0 %v2789
      %v4658 = vpop.f32.mrf.mxu0
      %v4659 = vadd.f32 %v4210, %v4658
      %v4660 = vpop.f32.mrf.mxu0
      %v4661 = vadd.f32 %v4212, %v4660
      %4662 = vmatmul.bf16.gmra.mxu0 %v2793
      %v4663 = vpop.f32.mrf.mxu0
      %v4664 = vadd.f32 %v4215, %v4663
      %v4665 = vpop.f32.mrf.mxu0
      %v4666 = vadd.f32 %v4217, %v4665
      %4667 = vmatmul.bf16.gmra.mxu0 %v2797
      %v4668 = vpop.f32.mrf.mxu0
      %v4669 = vadd.f32 %v4220, %v4668
      %v4670 = vpop.f32.mrf.mxu0
      %v4671 = vadd.f32 %v4222, %v4670
      %4672 = vmatmul.bf16.gmra.mxu0 %v2801
      %v4673 = vpop.f32.mrf.mxu0
      %v4674 = vadd.f32 %v4225, %v4673
      %v4675 = vpop.f32.mrf.mxu0
      %v4676 = vadd.f32 %v4227, %v4675
      %4677 = vmatmul.bf16.gmra.mxu0 %v2805
      %v4678 = vpop.f32.mrf.mxu0
      %v4679 = vadd.f32 %v4230, %v4678
      %v4680 = vpop.f32.mrf.mxu0
      %v4681 = vadd.f32 %v4232, %v4680
      %4682 = vdwg.mxu0
      %4683 = vmatpush.bf16.msra.mxu0 0
      %4684 = vmatpush.bf16.msra.mxu0 0
      %4685 = vmatpush.bf16.msra.mxu0 0
      %4686 = vmatpush.bf16.msra.mxu0 0
      %4687 = vmatpush.bf16.msra.mxu0 0
      %4688 = vmatpush.bf16.msra.mxu0 0
      %4689 = vmatpush.bf16.msra.mxu0 0
      %4690 = vmatpush.bf16.msra.mxu0 %v1046
      %4691 = vmatmul.bf16.gmra.mxu0 %v3073
      %v4692 = vpop.f32.mrf.mxu0
      %v4693 = vadd.f32 %v4244, %v4692
      %v4694 = vpop.f32.mrf.mxu0
      %v4695 = vadd.f32 %v4246, %v4694
      %4696 = vmatmul.bf16.gmra.mxu0 %v3076
      %v4697 = vpop.f32.mrf.mxu0
      %v4698 = vadd.f32 %v4249, %v4697
      %v4699 = vpop.f32.mrf.mxu0
      %v4700 = vadd.f32 %v4251, %v4699
      %4701 = vmatmul.bf16.gmra.mxu0 %v3079
      %v4702 = vpop.f32.mrf.mxu0
      %v4703 = vadd.f32 %v4254, %v4702
      %v4704 = vpop.f32.mrf.mxu0
      %v4705 = vadd.f32 %v4256, %v4704
      %4706 = vmatmul.bf16.gmra.mxu0 %v3082
      %v4707 = vpop.f32.mrf.mxu0
      %v4708 = vadd.f32 %v4259, %v4707
      %v4709 = vpop.f32.mrf.mxu0
      %v4710 = vadd.f32 %v4261, %v4709
      %4711 = vmatmul.bf16.gmra.mxu0 %v3085
      %v4712 = vpop.f32.mrf.mxu0
      %v4713 = vadd.f32 %v4264, %v4712
      %v4714 = vpop.f32.mrf.mxu0
      %v4715 = vadd.f32 %v4266, %v4714
      %4716 = vmatmul.bf16.gmra.mxu0 %v3088
      %v4717 = vpop.f32.mrf.mxu0
      %v4718 = vadd.f32 %v4269, %v4717
      %v4719 = vpop.f32.mrf.mxu0
      %v4720 = vadd.f32 %v4271, %v4719
      %4721 = vmatmul.bf16.gmra.mxu0 %v3091
      %v4722 = vpop.f32.mrf.mxu0
      %v4723 = vadd.f32 %v4274, %v4722
      %v4724 = vpop.f32.mrf.mxu0
      %v4725 = vadd.f32 %v4276, %v4724
      %4726 = vmatmul.bf16.gmra.mxu0 %v3094
      %v4727 = vpop.f32.mrf.mxu0
      %v4728 = vadd.f32 %v4279, %v4727
      %v4729 = vpop.f32.mrf.mxu0
      %v4730 = vadd.f32 %v4281, %v4729
      %4731 = vmatmul.bf16.gmra.mxu0 %v3097
      %v4732 = vpop.f32.mrf.mxu0
      %v4733 = vadd.f32 %v4284, %v4732
      %v4734 = vpop.f32.mrf.mxu0
      %v4735 = vadd.f32 %v4286, %v4734
      %4736 = vmatmul.bf16.gmra.mxu0 %v3100
      %v4737 = vpop.f32.mrf.mxu0
      %v4738 = vadd.f32 %v4289, %v4737
      %v4739 = vpop.f32.mrf.mxu0
      %v4740 = vadd.f32 %v4291, %v4739
      %4741 = vmatmul.bf16.gmra.mxu0 %v3103
      %v4742 = vpop.f32.mrf.mxu0
      %v4743 = vadd.f32 %v4294, %v4742
      %v4744 = vpop.f32.mrf.mxu0
      %v4745 = vadd.f32 %v4296, %v4744
      %4746 = vmatmul.bf16.gmra.mxu0 %v3106
      %v4747 = vpop.f32.mrf.mxu0
      %v4748 = vadd.f32 %v4299, %v4747
      %v4749 = vpop.f32.mrf.mxu0
      %v4750 = vadd.f32 %v4301, %v4749
      %4751 = vmatmul.bf16.gmra.mxu0 %v3109
      %v4752 = vpop.f32.mrf.mxu0
      %v4753 = vadd.f32 %v4304, %v4752
      %v4754 = vpop.f32.mrf.mxu0
      %v4755 = vadd.f32 %v4306, %v4754
      %4756 = vmatmul.bf16.gmra.mxu0 %v3112
      %v4757 = vpop.f32.mrf.mxu0
      %v4758 = vadd.f32 %v4309, %v4757
      %v4759 = vpop.f32.mrf.mxu0
      %v4760 = vadd.f32 %v4311, %v4759
      %4761 = vmatmul.bf16.gmra.mxu0 %v3115
      %v4762 = vpop.f32.mrf.mxu0
      %v4763 = vadd.f32 %v4314, %v4762
      %v4764 = vpop.f32.mrf.mxu0
      %v4765 = vadd.f32 %v4316, %v4764
      %4766 = vmatmul.bf16.gmra.mxu0 %v3118
      %v4767 = vpop.f32.mrf.mxu0
      %v4768 = vadd.f32 %v4319, %v4767
      %v4769 = vpop.f32.mrf.mxu0
      %v4770 = vadd.f32 %v4321, %v4769
      %4771 = vmatmul.bf16.gmra.mxu0 %v3121
      %v4772 = vpop.f32.mrf.mxu0
      %v4773 = vadd.f32 %v4324, %v4772
      %v4774 = vpop.f32.mrf.mxu0
      %v4775 = vadd.f32 %v4326, %v4774
      %4776 = vmatmul.bf16.gmra.mxu0 %v3124
      %v4777 = vpop.f32.mrf.mxu0
      %v4778 = vadd.f32 %v4329, %v4777
      %v4779 = vpop.f32.mrf.mxu0
      %v4780 = vadd.f32 %v4331, %v4779
      %4781 = vmatmul.bf16.gmra.mxu0 %v3127
      %v4782 = vpop.f32.mrf.mxu0
      %v4783 = vadd.f32 %v4334, %v4782
      %v4784 = vpop.f32.mrf.mxu0
      %v4785 = vadd.f32 %v4336, %v4784
      %4786 = vmatmul.bf16.gmra.mxu0 %v3130
      %v4787 = vpop.f32.mrf.mxu0
      %v4788 = vadd.f32 %v4339, %v4787
      %v4789 = vpop.f32.mrf.mxu0
      %v4790 = vadd.f32 %v4341, %v4789
      %4791 = vmatmul.bf16.gmra.mxu0 %v3133
      %v4792 = vpop.f32.mrf.mxu0
      %v4793 = vadd.f32 %v4344, %v4792
      %v4794 = vpop.f32.mrf.mxu0
      %v4795 = vadd.f32 %v4346, %v4794
      %4796 = vmatmul.bf16.gmra.mxu0 %v3136
      %v4797 = vpop.f32.mrf.mxu0
      %v4798 = vadd.f32 %v4349, %v4797
      %v4799 = vpop.f32.mrf.mxu0
      %v4800 = vadd.f32 %v4351, %v4799
      %4801 = vmatmul.bf16.gmra.mxu0 %v3139
      %v4802 = vpop.f32.mrf.mxu0
      %v4803 = vadd.f32 %v4354, %v4802
      %v4804 = vpop.f32.mrf.mxu0
      %v4805 = vadd.f32 %v4356, %v4804
      %4806 = vmatmul.bf16.gmra.mxu0 %v3142
      %v4807 = vpop.f32.mrf.mxu0
      %v4808 = vadd.f32 %v4359, %v4807
      %v4809 = vpop.f32.mrf.mxu0
      %v4810 = vadd.f32 %v4361, %v4809
      %4811 = vmatmul.bf16.gmra.mxu0 %v3145
      %v4812 = vpop.f32.mrf.mxu0
      %v4813 = vadd.f32 %v4364, %v4812
      %v4814 = vpop.f32.mrf.mxu0
      %v4815 = vadd.f32 %v4366, %v4814
      %4816 = vmatmul.bf16.gmra.mxu0 %v3148
      %v4817 = vpop.f32.mrf.mxu0
      %v4818 = vadd.f32 %v4369, %v4817
      %v4819 = vpop.f32.mrf.mxu0
      %v4820 = vadd.f32 %v4371, %v4819
      %4821 = vmatmul.bf16.gmra.mxu0 %v3151
      %v4822 = vpop.f32.mrf.mxu0
      %v4823 = vadd.f32 %v4374, %v4822
      %v4824 = vpop.f32.mrf.mxu0
      %v4825 = vadd.f32 %v4376, %v4824
      %4826 = vmatmul.bf16.gmra.mxu0 %v3154
      %v4827 = vpop.f32.mrf.mxu0
      %v4828 = vadd.f32 %v4379, %v4827
      %v4829 = vpop.f32.mrf.mxu0
      %v4830 = vadd.f32 %v4381, %v4829
      %4831 = vmatmul.bf16.gmra.mxu0 %v3157
      %v4832 = vpop.f32.mrf.mxu0
      %v4833 = vadd.f32 %v4384, %v4832
      %v4834 = vpop.f32.mrf.mxu0
      %v4835 = vadd.f32 %v4386, %v4834
      %4836 = vmatmul.bf16.gmra.mxu0 %v3160
      %v4837 = vpop.f32.mrf.mxu0
      %v4838 = vadd.f32 %v4389, %v4837
      %v4839 = vpop.f32.mrf.mxu0
      %v4840 = vadd.f32 %v4391, %v4839
      %4841 = vmatmul.bf16.gmra.mxu0 %v3163
      %v4842 = vpop.f32.mrf.mxu0
      %v4843 = vadd.f32 %v4394, %v4842
      %v4844 = vpop.f32.mrf.mxu0
      %v4845 = vadd.f32 %v4396, %v4844
      %4846 = vmatmul.bf16.gmra.mxu0 %v3166
      %v4847 = vpop.f32.mrf.mxu0
      %v4848 = vadd.f32 %v4399, %v4847
      %v4849 = vpop.f32.mrf.mxu0
      %v4850 = vadd.f32 %v4401, %v4849
      %4851 = vmatmul.bf16.gmra.mxu0 %v3169
      %v4852 = vpop.f32.mrf.mxu0
      %v4853 = vadd.f32 %v4404, %v4852
      %v4854 = vpop.f32.mrf.mxu0
      %v4855 = vadd.f32 %v4406, %v4854
      %4856 = vmatmul.bf16.gmra.mxu0 %v3172
      %v4857 = vpop.f32.mrf.mxu0
      %v4858 = vadd.f32 %v4409, %v4857
      %v4859 = vpop.f32.mrf.mxu0
      %v4860 = vadd.f32 %v4411, %v4859
      %4861 = vmatmul.bf16.gmra.mxu0 %v3175
      %v4862 = vpop.f32.mrf.mxu0
      %v4863 = vadd.f32 %v4414, %v4862
      %v4864 = vpop.f32.mrf.mxu0
      %v4865 = vadd.f32 %v4416, %v4864
      %4866 = vmatmul.bf16.gmra.mxu0 %v3178
      %v4867 = vpop.f32.mrf.mxu0
      %v4868 = vadd.f32 %v4419, %v4867
      %v4869 = vpop.f32.mrf.mxu0
      %v4870 = vadd.f32 %v4421, %v4869
      %4871 = vmatmul.bf16.gmra.mxu0 %v3181
      %v4872 = vpop.f32.mrf.mxu0
      %v4873 = vadd.f32 %v4424, %v4872
      %v4874 = vpop.f32.mrf.mxu0
      %v4875 = vadd.f32 %v4426, %v4874
      %4876 = vmatmul.bf16.gmra.mxu0 %v3184
      %v4877 = vpop.f32.mrf.mxu0
      %v4878 = vadd.f32 %v4429, %v4877
      %v4879 = vpop.f32.mrf.mxu0
      %v4880 = vadd.f32 %v4431, %v4879
      %4881 = vmatmul.bf16.gmra.mxu0 %v3187
      %v4882 = vpop.f32.mrf.mxu0
      %v4883 = vadd.f32 %v4434, %v4882
      %v4884 = vpop.f32.mrf.mxu0
      %v4885 = vadd.f32 %v4436, %v4884
      %4886 = vmatmul.bf16.gmra.mxu0 %v3190
      %v4887 = vpop.f32.mrf.mxu0
      %v4888 = vadd.f32 %v4439, %v4887
      %v4889 = vpop.f32.mrf.mxu0
      %v4890 = vadd.f32 %v4441, %v4889
      %4891 = vmatmul.bf16.gmra.mxu0 %v3193
      %v4892 = vpop.f32.mrf.mxu0
      %v4893 = vadd.f32 %v4444, %v4892
      %v4894 = vpop.f32.mrf.mxu0
      %v4895 = vadd.f32 %v4446, %v4894
      %4896 = vmatmul.bf16.gmra.mxu0 %v3196
      %v4897 = vpop.f32.mrf.mxu0
      %v4898 = vadd.f32 %v4449, %v4897
      %v4899 = vpop.f32.mrf.mxu0
      %v4900 = vadd.f32 %v4451, %v4899
      %4901 = vmatmul.bf16.gmra.mxu0 %v3199
      %v4902 = vpop.f32.mrf.mxu0
      %v4903 = vadd.f32 %v4454, %v4902
      %v4904 = vpop.f32.mrf.mxu0
      %v4905 = vadd.f32 %v4456, %v4904
      %4906 = vmatmul.bf16.gmra.mxu0 %v3202
      %v4907 = vpop.f32.mrf.mxu0
      %v4908 = vadd.f32 %v4459, %v4907
      %v4909 = vpop.f32.mrf.mxu0
      %v4910 = vadd.f32 %v4461, %v4909
      %4911 = vmatmul.bf16.gmra.mxu0 %v3205
      %v4912 = vpop.f32.mrf.mxu0
      %v4913 = vadd.f32 %v4464, %v4912
      %v4914 = vpop.f32.mrf.mxu0
      %v4915 = vadd.f32 %v4466, %v4914
      %4916 = vmatmul.bf16.gmra.mxu0 %v3208
      %v4917 = vpop.f32.mrf.mxu0
      %v4918 = vadd.f32 %v4469, %v4917
      %v4919 = vpop.f32.mrf.mxu0
      %v4920 = vadd.f32 %v4471, %v4919
      %4921 = vmatmul.bf16.gmra.mxu0 %v3211
      %v4922 = vpop.f32.mrf.mxu0
      %v4923 = vadd.f32 %v4474, %v4922
      %v4924 = vpop.f32.mrf.mxu0
      %v4925 = vadd.f32 %v4476, %v4924
      %4926 = vmatmul.bf16.gmra.mxu0 %v3214
      %v4927 = vpop.f32.mrf.mxu0
      %v4928 = vadd.f32 %v4479, %v4927
      %v4929 = vpop.f32.mrf.mxu0
      %v4930 = vadd.f32 %v4481, %v4929
      %4931 = vmatmul.bf16.gmra.mxu0 %v3217
      %v4932 = vpop.f32.mrf.mxu0
      %v4933 = vadd.f32 %v4484, %v4932
      %v4934 = vpop.f32.mrf.mxu0
      %v4935 = vadd.f32 %v4486, %v4934
      %4936 = vmatmul.bf16.gmra.mxu0 %v3220
      %v4937 = vpop.f32.mrf.mxu0
      %v4938 = vadd.f32 %v4489, %v4937
      %v4939 = vpop.f32.mrf.mxu0
      %v4940 = vadd.f32 %v4491, %v4939
      %4941 = vmatmul.bf16.gmra.mxu0 %v3223
      %v4942 = vpop.f32.mrf.mxu0
      %v4943 = vadd.f32 %v4494, %v4942
      %v4944 = vpop.f32.mrf.mxu0
      %v4945 = vadd.f32 %v4496, %v4944
      %4946 = vmatmul.bf16.gmra.mxu0 %v3226
      %v4947 = vpop.f32.mrf.mxu0
      %v4948 = vadd.f32 %v4499, %v4947
      %v4949 = vpop.f32.mrf.mxu0
      %v4950 = vadd.f32 %v4501, %v4949
      %4951 = vmatmul.bf16.gmra.mxu0 %v3229
      %v4952 = vpop.f32.mrf.mxu0
      %v4953 = vadd.f32 %v4504, %v4952
      %v4954 = vpop.f32.mrf.mxu0
      %v4955 = vadd.f32 %v4506, %v4954
      %4956 = vmatmul.bf16.gmra.mxu0 %v3232
      %v4957 = vpop.f32.mrf.mxu0
      %v4958 = vadd.f32 %v4509, %v4957
      %v4959 = vpop.f32.mrf.mxu0
      %v4960 = vadd.f32 %v4511, %v4959
      %4961 = vmatmul.bf16.gmra.mxu0 %v3235
      %v4962 = vpop.f32.mrf.mxu0
      %v4963 = vadd.f32 %v4514, %v4962
      %v4964 = vpop.f32.mrf.mxu0
      %v4965 = vadd.f32 %v4516, %v4964
      %4966 = vmatmul.bf16.gmra.mxu0 %v3238
      %v4967 = vpop.f32.mrf.mxu0
      %v4968 = vadd.f32 %v4519, %v4967
      %v4969 = vpop.f32.mrf.mxu0
      %v4970 = vadd.f32 %v4521, %v4969
      %4971 = vmatmul.bf16.gmra.mxu0 %v3241
      %v4972 = vpop.f32.mrf.mxu0
      %v4973 = vadd.f32 %v4524, %v4972
      %v4974 = vpop.f32.mrf.mxu0
      %v4975 = vadd.f32 %v4526, %v4974
      %4976 = vmatmul.bf16.gmra.mxu0 %v3244
      %v4977 = vpop.f32.mrf.mxu0
      %v4978 = vadd.f32 %v4529, %v4977
      %v4979 = vpop.f32.mrf.mxu0
      %v4980 = vadd.f32 %v4531, %v4979
      %4981 = vmatmul.bf16.gmra.mxu0 %v3247
      %v4982 = vpop.f32.mrf.mxu0
      %v4983 = vadd.f32 %v4534, %v4982
      %v4984 = vpop.f32.mrf.mxu0
      %v4985 = vadd.f32 %v4536, %v4984
      %4986 = vmatmul.bf16.gmra.mxu0 %v3250
      %v4987 = vpop.f32.mrf.mxu0
      %v4988 = vadd.f32 %v4539, %v4987
      %v4989 = vpop.f32.mrf.mxu0
      %v4990 = vadd.f32 %v4541, %v4989
      %4991 = vmatmul.bf16.gmra.mxu0 %v3253
      %v4992 = vpop.f32.mrf.mxu0
      %v4993 = vadd.f32 %v4544, %v4992
      %v4994 = vpop.f32.mrf.mxu0
      %v4995 = vadd.f32 %v4546, %v4994
      %4996 = vmatmul.bf16.gmra.mxu0 %v3256
      %v4997 = vpop.f32.mrf.mxu0
      %v4998 = vadd.f32 %v4549, %v4997
      %v4999 = vpop.f32.mrf.mxu0
      %v5000 = vadd.f32 %v4551, %v4999
      %5001 = vmatmul.bf16.gmra.mxu0 %v3259
      %v5002 = vpop.f32.mrf.mxu0
      %v5003 = vadd.f32 %v4554, %v5002
      %v5004 = vpop.f32.mrf.mxu0
      %v5005 = vadd.f32 %v4556, %v5004
      %5006 = vmatmul.bf16.gmra.mxu0 %v3262
      %v5007 = vpop.f32.mrf.mxu0
      %v5008 = vadd.f32 %v4559, %v5007
      %v5009 = vpop.f32.mrf.mxu0
      %v5010 = vadd.f32 %v4561, %v5009
      %5011 = vmatmul.bf16.gmra.mxu0 %v3265
      %v5012 = vpop.f32.mrf.mxu0
      %v5013 = vadd.f32 %v4564, %v5012
      %v5014 = vpop.f32.mrf.mxu0
      %v5015 = vadd.f32 %v4566, %v5014
      %5016 = vmatmul.bf16.gmra.mxu0 %v3268
      %v5017 = vpop.f32.mrf.mxu0
      %v5018 = vadd.f32 %v4569, %v5017
      %v5019 = vpop.f32.mrf.mxu0
      %v5020 = vadd.f32 %v4571, %v5019
      %5021 = vmatmul.bf16.gmra.mxu0 %v3271
      %v5022 = vpop.f32.mrf.mxu0
      %v5023 = vadd.f32 %v4574, %v5022
      %v5024 = vpop.f32.mrf.mxu0
      %v5025 = vadd.f32 %v4576, %v5024
      %5026 = vmatmul.bf16.gmra.mxu0 %v3274
      %v5027 = vpop.f32.mrf.mxu0
      %v5028 = vadd.f32 %v4579, %v5027
      %v5029 = vpop.f32.mrf.mxu0
      %v5030 = vadd.f32 %v4581, %v5029
      %5031 = vmatmul.bf16.gmra.mxu0 %v3277
      %v5032 = vpop.f32.mrf.mxu0
      %v5033 = vadd.f32 %v4584, %v5032
      %v5034 = vpop.f32.mrf.mxu0
      %v5035 = vadd.f32 %v4586, %v5034
      %5036 = vmatmul.bf16.gmra.mxu0 %v3280
      %v5037 = vpop.f32.mrf.mxu0
      %v5038 = vadd.f32 %v4589, %v5037
      %v5039 = vpop.f32.mrf.mxu0
      %v5040 = vadd.f32 %v4591, %v5039
      %5041 = vmatmul.bf16.gmra.mxu0 %v3283
      %v5042 = vpop.f32.mrf.mxu0
      %v5043 = vadd.f32 %v4594, %v5042
      %v5044 = vpop.f32.mrf.mxu0
      %v5045 = vadd.f32 %v4596, %v5044
      %5046 = vmatmul.bf16.gmra.mxu0 %v3286
      %v5047 = vpop.f32.mrf.mxu0
      %v5048 = vadd.f32 %v4599, %v5047
      %v5049 = vpop.f32.mrf.mxu0
      %v5050 = vadd.f32 %v4601, %v5049
      %5051 = vmatmul.bf16.gmra.mxu0 %v3289
      %v5052 = vpop.f32.mrf.mxu0
      %v5053 = vadd.f32 %v4604, %v5052
      %v5054 = vpop.f32.mrf.mxu0
      %v5055 = vadd.f32 %v4606, %v5054
      %5056 = vmatmul.bf16.gmra.mxu0 %v3292
      %v5057 = vpop.f32.mrf.mxu0
      %v5058 = vadd.f32 %v4609, %v5057
      %v5059 = vpop.f32.mrf.mxu0
      %v5060 = vadd.f32 %v4611, %v5059
      %5061 = vmatmul.bf16.gmra.mxu0 %v3295
      %v5062 = vpop.f32.mrf.mxu0
      %v5063 = vadd.f32 %v4614, %v5062
      %v5064 = vpop.f32.mrf.mxu0
      %v5065 = vadd.f32 %v4616, %v5064
      %5066 = vmatmul.bf16.gmra.mxu0 %v3298
      %v5067 = vpop.f32.mrf.mxu0
      %v5068 = vadd.f32 %v4619, %v5067
      %v5069 = vpop.f32.mrf.mxu0
      %v5070 = vadd.f32 %v4621, %v5069
      %5071 = vmatmul.bf16.gmra.mxu0 %v3301
      %v5072 = vpop.f32.mrf.mxu0
      %v5073 = vadd.f32 %v4624, %v5072
      %v5074 = vpop.f32.mrf.mxu0
      %v5075 = vadd.f32 %v4626, %v5074
      %5076 = vmatmul.bf16.gmra.mxu0 %v3304
      %v5077 = vpop.f32.mrf.mxu0
      %v5078 = vadd.f32 %v4629, %v5077
      %v5079 = vpop.f32.mrf.mxu0
      %v5080 = vadd.f32 %v4631, %v5079
      %5081 = vmatmul.bf16.gmra.mxu0 %v3307
      %v5082 = vpop.f32.mrf.mxu0
      %v5083 = vadd.f32 %v4634, %v5082
      %v5084 = vpop.f32.mrf.mxu0
      %v5085 = vadd.f32 %v4636, %v5084
      %5086 = vmatmul.bf16.gmra.mxu0 %v3310
      %v5087 = vpop.f32.mrf.mxu0
      %v5088 = vadd.f32 %v4639, %v5087
      %v5089 = vpop.f32.mrf.mxu0
      %v5090 = vadd.f32 %v4641, %v5089
      %5091 = vmatmul.bf16.gmra.mxu0 %v3313
      %v5092 = vpop.f32.mrf.mxu0
      %v5093 = vadd.f32 %v4644, %v5092
      %v5094 = vpop.f32.mrf.mxu0
      %v5095 = vadd.f32 %v4646, %v5094
      %5096 = vmatmul.bf16.gmra.mxu0 %v3316
      %v5097 = vpop.f32.mrf.mxu0
      %v5098 = vadd.f32 %v4649, %v5097
      %v5099 = vpop.f32.mrf.mxu0
      %v5100 = vadd.f32 %v4651, %v5099
      %5101 = vmatmul.bf16.gmra.mxu0 %v3319
      %v5102 = vpop.f32.mrf.mxu0
      %v5103 = vadd.f32 %v4654, %v5102
      %v5104 = vpop.f32.mrf.mxu0
      %v5105 = vadd.f32 %v4656, %v5104
      %5106 = vmatmul.bf16.gmra.mxu0 %v3322
      %v5107 = vpop.f32.mrf.mxu0
      %v5108 = vadd.f32 %v4659, %v5107
      %v5109 = vpop.f32.mrf.mxu0
      %v5110 = vadd.f32 %v4661, %v5109
      %5111 = vmatmul.bf16.gmra.mxu0 %v3325
      %v5112 = vpop.f32.mrf.mxu0
      %v5113 = vadd.f32 %v4664, %v5112
      %v5114 = vpop.f32.mrf.mxu0
      %v5115 = vadd.f32 %v4666, %v5114
      %5116 = vmatmul.bf16.gmra.mxu0 %v3328
      %v5117 = vpop.f32.mrf.mxu0
      %v5118 = vadd.f32 %v4669, %v5117
      %v5119 = vpop.f32.mrf.mxu0
      %v5120 = vadd.f32 %v4671, %v5119
      %5121 = vmatmul.bf16.gmra.mxu0 %v3331
      %v5122 = vpop.f32.mrf.mxu0
      %v5123 = vadd.f32 %v4674, %v5122
      %v5124 = vpop.f32.mrf.mxu0
      %v5125 = vadd.f32 %v4676, %v5124
      %5126 = vmatmul.bf16.gmra.mxu0 %v3334
      %v5127 = vpop.f32.mrf.mxu0
      %v5128 = vadd.f32 %v4679, %v5127
      %v5129 = vpop.f32.mrf.mxu0
      %v5130 = vadd.f32 %v4681, %v5129
      %5131 = vdwg.mxu0
      %v5132 = vpack.c.bf16 %v4693, %v4693
      %v5133 = vpack.c.bf16 %v4695, %v4695
      %v5134 = vpack.c.bf16 %v4698, %v4698
      %v5135 = vpack.c.bf16 %v4700, %v4700
      %v5136 = vpack.c.bf16 %v4703, %v4703
      %v5137 = vpack.c.bf16 %v4705, %v4705
      %v5138 = vpack.c.bf16 %v4708, %v4708
      %v5139 = vpack.c.bf16 %v4710, %v4710
      %v5140 = vpack.c.bf16 %v4713, %v4713
      %v5141 = vpack.c.bf16 %v4715, %v4715
      %v5142 = vpack.c.bf16 %v4718, %v4718
      %v5143 = vpack.c.bf16 %v4720, %v4720
      %v5144 = vpack.c.bf16 %v4723, %v4723
      %v5145 = vpack.c.bf16 %v4725, %v4725
      %v5146 = vpack.c.bf16 %v4728, %v4728
      %v5147 = vpack.c.bf16 %v4730, %v4730
      %v5148 = vpack.c.bf16 %v4733, %v4733
      %v5149 = vpack.c.bf16 %v4735, %v4735
      %v5150 = vpack.c.bf16 %v4738, %v4738
      %v5151 = vpack.c.bf16 %v4740, %v4740
      %v5152 = vpack.c.bf16 %v4743, %v4743
      %v5153 = vpack.c.bf16 %v4745, %v4745
      %v5154 = vpack.c.bf16 %v4748, %v4748
      %v5155 = vpack.c.bf16 %v4750, %v4750
      %v5156 = vpack.c.bf16 %v4753, %v4753
      %v5157 = vpack.c.bf16 %v4755, %v4755
      %v5158 = vpack.c.bf16 %v4758, %v4758
      %v5159 = vpack.c.bf16 %v4760, %v4760
      %v5160 = vpack.c.bf16 %v4763, %v4763
      %v5161 = vpack.c.bf16 %v4765, %v4765
      %v5162 = vpack.c.bf16 %v4768, %v4768
      %v5163 = vpack.c.bf16 %v4770, %v4770
      %v5164 = vpack.c.bf16 %v4773, %v4773
      %v5165 = vpack.c.bf16 %v4775, %v4775
      %v5166 = vpack.c.bf16 %v4778, %v4778
      %v5167 = vpack.c.bf16 %v4780, %v4780
      %v5168 = vpack.c.bf16 %v4783, %v4783
      %v5169 = vpack.c.bf16 %v4785, %v4785
      %v5170 = vpack.c.bf16 %v4788, %v4788
      %v5171 = vpack.c.bf16 %v4790, %v4790
      %v5172 = vpack.c.bf16 %v4793, %v4793
      %v5173 = vpack.c.bf16 %v4795, %v4795
      %v5174 = vpack.c.bf16 %v4798, %v4798
      %v5175 = vpack.c.bf16 %v4800, %v4800
      %v5176 = vpack.c.bf16 %v4803, %v4803
      %v5177 = vpack.c.bf16 %v4805, %v4805
      %v5178 = vpack.c.bf16 %v4808, %v4808
      %v5179 = vpack.c.bf16 %v4810, %v4810
      %v5180 = vpack.c.bf16 %v4813, %v4813
      %v5181 = vpack.c.bf16 %v4815, %v4815
      %v5182 = vpack.c.bf16 %v4818, %v4818
      %v5183 = vpack.c.bf16 %v4820, %v4820
      %v5184 = vpack.c.bf16 %v4823, %v4823
      %v5185 = vpack.c.bf16 %v4825, %v4825
      %v5186 = vpack.c.bf16 %v4828, %v4828
      %v5187 = vpack.c.bf16 %v4830, %v4830
      %v5188 = vpack.c.bf16 %v4833, %v4833
      %v5189 = vpack.c.bf16 %v4835, %v4835
      %v5190 = vpack.c.bf16 %v4838, %v4838
      %v5191 = vpack.c.bf16 %v4840, %v4840
      %v5192 = vpack.c.bf16 %v4843, %v4843
      %v5193 = vpack.c.bf16 %v4845, %v4845
      %v5194 = vpack.c.bf16 %v4848, %v4848
      %v5195 = vpack.c.bf16 %v4850, %v4850
      %v5196 = vpack.c.bf16 %v4853, %v4853
      %v5197 = vpack.c.bf16 %v4855, %v4855
      %v5198 = vpack.c.bf16 %v4858, %v4858
      %v5199 = vpack.c.bf16 %v4860, %v4860
      %v5200 = vpack.c.bf16 %v4863, %v4863
      %v5201 = vpack.c.bf16 %v4865, %v4865
      %v5202 = vpack.c.bf16 %v4868, %v4868
      %v5203 = vpack.c.bf16 %v4870, %v4870
      %v5204 = vpack.c.bf16 %v4873, %v4873
      %v5205 = vpack.c.bf16 %v4875, %v4875
      %v5206 = vpack.c.bf16 %v4878, %v4878
      %v5207 = vpack.c.bf16 %v4880, %v4880
      %v5208 = vpack.c.bf16 %v4883, %v4883
      %v5209 = vpack.c.bf16 %v4885, %v4885
      %v5210 = vpack.c.bf16 %v4888, %v4888
      %v5211 = vpack.c.bf16 %v4890, %v4890
      %v5212 = vpack.c.bf16 %v4893, %v4893
      %v5213 = vpack.c.bf16 %v4895, %v4895
      %v5214 = vpack.c.bf16 %v4898, %v4898
      %v5215 = vpack.c.bf16 %v4900, %v4900
      %v5216 = vpack.c.bf16 %v4903, %v4903
      %v5217 = vpack.c.bf16 %v4905, %v4905
      %v5218 = vpack.c.bf16 %v4908, %v4908
      %v5219 = vpack.c.bf16 %v4910, %v4910
      %v5220 = vpack.c.bf16 %v4913, %v4913
      %v5221 = vpack.c.bf16 %v4915, %v4915
      %v5222 = vpack.c.bf16 %v4918, %v4918
      %v5223 = vpack.c.bf16 %v4920, %v4920
      %v5224 = vpack.c.bf16 %v4923, %v4923
      %v5225 = vpack.c.bf16 %v4925, %v4925
      %v5226 = vpack.c.bf16 %v4928, %v4928
      %v5227 = vpack.c.bf16 %v4930, %v4930
      %v5228 = vpack.c.bf16 %v4933, %v4933
      %v5229 = vpack.c.bf16 %v4935, %v4935
      %v5230 = vpack.c.bf16 %v4938, %v4938
      %v5231 = vpack.c.bf16 %v4940, %v4940
      %v5232 = vpack.c.bf16 %v4943, %v4943
      %v5233 = vpack.c.bf16 %v4945, %v4945
      %v5234 = vpack.c.bf16 %v4948, %v4948
      %v5235 = vpack.c.bf16 %v4950, %v4950
      %v5236 = vpack.c.bf16 %v4953, %v4953
      %v5237 = vpack.c.bf16 %v4955, %v4955
      %v5238 = vpack.c.bf16 %v4958, %v4958
      %v5239 = vpack.c.bf16 %v4960, %v4960
      %v5240 = vpack.c.bf16 %v4963, %v4963
      %v5241 = vpack.c.bf16 %v4965, %v4965
      %v5242 = vpack.c.bf16 %v4968, %v4968
      %v5243 = vpack.c.bf16 %v4970, %v4970
      %v5244 = vpack.c.bf16 %v4973, %v4973
      %v5245 = vpack.c.bf16 %v4975, %v4975
      %v5246 = vpack.c.bf16 %v4978, %v4978
      %v5247 = vpack.c.bf16 %v4980, %v4980
      %v5248 = vpack.c.bf16 %v4983, %v4983
      %v5249 = vpack.c.bf16 %v4985, %v4985
      %v5250 = vpack.c.bf16 %v4988, %v4988
      %v5251 = vpack.c.bf16 %v4990, %v4990
      %v5252 = vpack.c.bf16 %v4993, %v4993
      %v5253 = vpack.c.bf16 %v4995, %v4995
      %v5254 = vpack.c.bf16 %v4998, %v4998
      %v5255 = vpack.c.bf16 %v5000, %v5000
      %v5256 = vpack.c.bf16 %v5003, %v5003
      %v5257 = vpack.c.bf16 %v5005, %v5005
      %v5258 = vpack.c.bf16 %v5008, %v5008
      %v5259 = vpack.c.bf16 %v5010, %v5010
      %v5260 = vpack.c.bf16 %v5013, %v5013
      %v5261 = vpack.c.bf16 %v5015, %v5015
      %v5262 = vpack.c.bf16 %v5018, %v5018
      %v5263 = vpack.c.bf16 %v5020, %v5020
      %v5264 = vpack.c.bf16 %v5023, %v5023
      %v5265 = vpack.c.bf16 %v5025, %v5025
      %v5266 = vpack.c.bf16 %v5028, %v5028
      %v5267 = vpack.c.bf16 %v5030, %v5030
      %v5268 = vpack.c.bf16 %v5033, %v5033
      %v5269 = vpack.c.bf16 %v5035, %v5035
      %v5270 = vpack.c.bf16 %v5038, %v5038
      %v5271 = vpack.c.bf16 %v5040, %v5040
      %v5272 = vpack.c.bf16 %v5043, %v5043
      %v5273 = vpack.c.bf16 %v5045, %v5045
      %v5274 = vpack.c.bf16 %v5048, %v5048
      %v5275 = vpack.c.bf16 %v5050, %v5050
      %v5276 = vpack.c.bf16 %v5053, %v5053
      %v5277 = vpack.c.bf16 %v5055, %v5055
      %v5278 = vpack.c.bf16 %v5058, %v5058
      %v5279 = vpack.c.bf16 %v5060, %v5060
      %v5280 = vpack.c.bf16 %v5063, %v5063
      %v5281 = vpack.c.bf16 %v5065, %v5065
      %v5282 = vpack.c.bf16 %v5068, %v5068
      %v5283 = vpack.c.bf16 %v5070, %v5070
      %v5284 = vpack.c.bf16 %v5073, %v5073
      %v5285 = vpack.c.bf16 %v5075, %v5075
      %v5286 = vpack.c.bf16 %v5078, %v5078
      %v5287 = vpack.c.bf16 %v5080, %v5080
      %v5288 = vpack.c.bf16 %v5083, %v5083
      %v5289 = vpack.c.bf16 %v5085, %v5085
      %v5290 = vpack.c.bf16 %v5088, %v5088
      %v5291 = vpack.c.bf16 %v5090, %v5090
      %v5292 = vpack.c.bf16 %v5093, %v5093
      %v5293 = vpack.c.bf16 %v5095, %v5095
      %v5294 = vpack.c.bf16 %v5098, %v5098
      %v5295 = vpack.c.bf16 %v5100, %v5100
      %v5296 = vpack.c.bf16 %v5103, %v5103
      %v5297 = vpack.c.bf16 %v5105, %v5105
      %v5298 = vpack.c.bf16 %v5108, %v5108
      %v5299 = vpack.c.bf16 %v5110, %v5110
      %v5300 = vpack.c.bf16 %v5113, %v5113
      %v5301 = vpack.c.bf16 %v5115, %v5115
      %v5302 = vpack.c.bf16 %v5118, %v5118
      %v5303 = vpack.c.bf16 %v5120, %v5120
      %v5304 = vpack.c.bf16 %v5123, %v5123
      %v5305 = vpack.c.bf16 %v5125, %v5125
      %v5306 = vpack.c.bf16 %v5128, %v5128
      %v5307 = vpack.c.bf16 %v5130, %v5130
      %v5319 = vunpack.c.l.b16 %v5132
      %v5320 = vunpack.c.l.b16 %v5133
      %v5321 = vunpack.c.l.b16 %v5134
      %v5322 = vunpack.c.l.b16 %v5135
      %v5323 = vunpack.c.l.b16 %v5136
      %v5324 = vunpack.c.l.b16 %v5137
      %v5325 = vunpack.c.l.b16 %v5138
      %v5326 = vunpack.c.l.b16 %v5139
      %v5327 = vunpack.c.l.b16 %v5140
      %v5328 = vunpack.c.l.b16 %v5141
      %v5329 = vunpack.c.l.b16 %v5142
      %v5330 = vpack.c.b16 %v5320, %v5319
      %v5331 = vpack.c.b16 %v5322, %v5321
      %v5332 = vpack.c.b16 %v5324, %v5323
      %v5333 = vpack.c.b16 %v5326, %v5325
      %v5334 = vpack.c.b16 %v5328, %v5327
      %v5335 = vpack.c.b16 %v5329, %v5329
      %v5347 = vunpack.c.l.b16 %v5143
      %v5348 = vunpack.c.l.b16 %v5144
      %v5349 = vunpack.c.l.b16 %v5145
      %v5350 = vunpack.c.l.b16 %v5146
      %v5351 = vunpack.c.l.b16 %v5147
      %v5352 = vunpack.c.l.b16 %v5148
      %v5353 = vunpack.c.l.b16 %v5149
      %v5354 = vunpack.c.l.b16 %v5150
      %v5355 = vunpack.c.l.b16 %v5151
      %v5356 = vunpack.c.l.b16 %v5152
      %v5357 = vunpack.c.l.b16 %v5153
      %v5358 = vpack.c.b16 %v5348, %v5347
      %v5359 = vpack.c.b16 %v5350, %v5349
      %v5360 = vpack.c.b16 %v5352, %v5351
      %v5361 = vpack.c.b16 %v5354, %v5353
      %v5362 = vpack.c.b16 %v5356, %v5355
      %v5363 = vpack.c.b16 %v5357, %v5357
      %5364 = vrot.lane.b32.xlu0 %v5358, 16
      %v5365 = vpop.permute.xlu0 %5364
      %5366 = vrot.lane.b32.xlu0 %v5359, 16
      %v5367 = vpop.permute.xlu0 %5366
      %5368 = vrot.lane.b32.xlu0 %v5360, 16
      %v5369 = vpop.permute.xlu0 %5368
      %5370 = vrot.lane.b32.xlu0 %v5361, 16
      %v5371 = vpop.permute.xlu0 %5370
      %5372 = vrot.lane.b32.xlu0 %v5362, 16
      %v5373 = vpop.permute.xlu0 %5372
      %5374 = vrot.lane.b32.xlu0 %v5363, 16
      %v5375 = vpop.permute.xlu0 %5374
      %v5387 = vunpack.c.l.b16 %v5154
      %v5388 = vunpack.c.l.b16 %v5155
      %v5389 = vunpack.c.l.b16 %v5156
      %v5390 = vunpack.c.l.b16 %v5157
      %v5391 = vunpack.c.l.b16 %v5158
      %v5392 = vunpack.c.l.b16 %v5159
      %v5393 = vunpack.c.l.b16 %v5160
      %v5394 = vunpack.c.l.b16 %v5161
      %v5395 = vunpack.c.l.b16 %v5162
      %v5396 = vunpack.c.l.b16 %v5163
      %v5397 = vunpack.c.l.b16 %v5164
      %v5398 = vpack.c.b16 %v5388, %v5387
      %v5399 = vpack.c.b16 %v5390, %v5389
      %v5400 = vpack.c.b16 %v5392, %v5391
      %v5401 = vpack.c.b16 %v5394, %v5393
      %v5402 = vpack.c.b16 %v5396, %v5395
      %v5403 = vpack.c.b16 %v5397, %v5397
      %5404 = vrot.lane.b32.xlu0 %v5398, 32
      %v5405 = vpop.permute.xlu0 %5404
      %5406 = vrot.lane.b32.xlu0 %v5399, 32
      %v5407 = vpop.permute.xlu0 %5406
      %5408 = vrot.lane.b32.xlu0 %v5400, 32
      %v5409 = vpop.permute.xlu0 %5408
      %5410 = vrot.lane.b32.xlu0 %v5401, 32
      %v5411 = vpop.permute.xlu0 %5410
      %5412 = vrot.lane.b32.xlu0 %v5402, 32
      %v5413 = vpop.permute.xlu0 %5412
      %5414 = vrot.lane.b32.xlu0 %v5403, 32
      %v5415 = vpop.permute.xlu0 %5414
      %v5427 = vunpack.c.l.b16 %v5165
      %v5428 = vunpack.c.l.b16 %v5166
      %v5429 = vunpack.c.l.b16 %v5167
      %v5430 = vunpack.c.l.b16 %v5168
      %v5431 = vunpack.c.l.b16 %v5169
      %v5432 = vunpack.c.l.b16 %v5170
      %v5433 = vunpack.c.l.b16 %v5171
      %v5434 = vunpack.c.l.b16 %v5172
      %v5435 = vunpack.c.l.b16 %v5173
      %v5436 = vunpack.c.l.b16 %v5174
      %v5437 = vunpack.c.l.b16 %v5175
      %v5438 = vpack.c.b16 %v5428, %v5427
      %v5439 = vpack.c.b16 %v5430, %v5429
      %v5440 = vpack.c.b16 %v5432, %v5431
      %v5441 = vpack.c.b16 %v5434, %v5433
      %v5442 = vpack.c.b16 %v5436, %v5435
      %v5443 = vpack.c.b16 %v5437, %v5437
      %5444 = vrot.lane.b32.xlu0 %v5438, 48
      %v5445 = vpop.permute.xlu0 %5444
      %5446 = vrot.lane.b32.xlu0 %v5439, 48
      %v5447 = vpop.permute.xlu0 %5446
      %5448 = vrot.lane.b32.xlu0 %v5440, 48
      %v5449 = vpop.permute.xlu0 %5448
      %5450 = vrot.lane.b32.xlu0 %v5441, 48
      %v5451 = vpop.permute.xlu0 %5450
      %5452 = vrot.lane.b32.xlu0 %v5442, 48
      %v5453 = vpop.permute.xlu0 %5452
      %5454 = vrot.lane.b32.xlu0 %v5443, 48
      %v5455 = vpop.permute.xlu0 %5454
      %v5467 = vunpack.c.l.b16 %v5176
      %v5468 = vunpack.c.l.b16 %v5177
      %v5469 = vunpack.c.l.b16 %v5178
      %v5470 = vunpack.c.l.b16 %v5179
      %v5471 = vunpack.c.l.b16 %v5180
      %v5472 = vunpack.c.l.b16 %v5181
      %v5473 = vunpack.c.l.b16 %v5182
      %v5474 = vunpack.c.l.b16 %v5183
      %v5475 = vunpack.c.l.b16 %v5184
      %v5476 = vunpack.c.l.b16 %v5185
      %v5477 = vunpack.c.l.b16 %v5186
      %v5478 = vpack.c.b16 %v5468, %v5467
      %v5479 = vpack.c.b16 %v5470, %v5469
      %v5480 = vpack.c.b16 %v5472, %v5471
      %v5481 = vpack.c.b16 %v5474, %v5473
      %v5482 = vpack.c.b16 %v5476, %v5475
      %v5483 = vpack.c.b16 %v5477, %v5477
      %5484 = vrot.lane.b32.xlu0 %v5478, 64
      %v5485 = vpop.permute.xlu0 %5484
      %5486 = vrot.lane.b32.xlu0 %v5479, 64
      %v5487 = vpop.permute.xlu0 %5486
      %5488 = vrot.lane.b32.xlu0 %v5480, 64
      %v5489 = vpop.permute.xlu0 %5488
      %5490 = vrot.lane.b32.xlu0 %v5481, 64
      %v5491 = vpop.permute.xlu0 %5490
      %5492 = vrot.lane.b32.xlu0 %v5482, 64
      %v5493 = vpop.permute.xlu0 %5492
      %5494 = vrot.lane.b32.xlu0 %v5483, 64
      %v5495 = vpop.permute.xlu0 %5494
      %v5507 = vunpack.c.l.b16 %v5187
      %v5508 = vunpack.c.l.b16 %v5188
      %v5509 = vunpack.c.l.b16 %v5189
      %v5510 = vunpack.c.l.b16 %v5190
      %v5511 = vunpack.c.l.b16 %v5191
      %v5512 = vunpack.c.l.b16 %v5192
      %v5513 = vunpack.c.l.b16 %v5193
      %v5514 = vunpack.c.l.b16 %v5194
      %v5515 = vunpack.c.l.b16 %v5195
      %v5516 = vunpack.c.l.b16 %v5196
      %v5517 = vunpack.c.l.b16 %v5197
      %v5518 = vpack.c.b16 %v5508, %v5507
      %v5519 = vpack.c.b16 %v5510, %v5509
      %v5520 = vpack.c.b16 %v5512, %v5511
      %v5521 = vpack.c.b16 %v5514, %v5513
      %v5522 = vpack.c.b16 %v5516, %v5515
      %v5523 = vpack.c.b16 %v5517, %v5517
      %5524 = vrot.lane.b32.xlu0 %v5518, 80
      %v5525 = vpop.permute.xlu0 %5524
      %5526 = vrot.lane.b32.xlu0 %v5519, 80
      %v5527 = vpop.permute.xlu0 %5526
      %5528 = vrot.lane.b32.xlu0 %v5520, 80
      %v5529 = vpop.permute.xlu0 %5528
      %5530 = vrot.lane.b32.xlu0 %v5521, 80
      %v5531 = vpop.permute.xlu0 %5530
      %5532 = vrot.lane.b32.xlu0 %v5522, 80
      %v5533 = vpop.permute.xlu0 %5532
      %5534 = vrot.lane.b32.xlu0 %v5523, 80
      %v5535 = vpop.permute.xlu0 %5534
      %v5547 = vunpack.c.l.b16 %v5198
      %v5548 = vunpack.c.l.b16 %v5199
      %v5549 = vunpack.c.l.b16 %v5200
      %v5550 = vunpack.c.l.b16 %v5201
      %v5551 = vunpack.c.l.b16 %v5202
      %v5552 = vunpack.c.l.b16 %v5203
      %v5553 = vunpack.c.l.b16 %v5204
      %v5554 = vunpack.c.l.b16 %v5205
      %v5555 = vunpack.c.l.b16 %v5206
      %v5556 = vunpack.c.l.b16 %v5207
      %v5557 = vunpack.c.l.b16 %v5208
      %v5558 = vpack.c.b16 %v5548, %v5547
      %v5559 = vpack.c.b16 %v5550, %v5549
      %v5560 = vpack.c.b16 %v5552, %v5551
      %v5561 = vpack.c.b16 %v5554, %v5553
      %v5562 = vpack.c.b16 %v5556, %v5555
      %v5563 = vpack.c.b16 %v5557, %v5557
      %5564 = vrot.lane.b32.xlu0 %v5558, 96
      %v5565 = vpop.permute.xlu0 %5564
      %5566 = vrot.lane.b32.xlu0 %v5559, 96
      %v5567 = vpop.permute.xlu0 %5566
      %5568 = vrot.lane.b32.xlu0 %v5560, 96
      %v5569 = vpop.permute.xlu0 %5568
      %5570 = vrot.lane.b32.xlu0 %v5561, 96
      %v5571 = vpop.permute.xlu0 %5570
      %5572 = vrot.lane.b32.xlu0 %v5562, 96
      %v5573 = vpop.permute.xlu0 %5572
      %5574 = vrot.lane.b32.xlu0 %v5563, 96
      %v5575 = vpop.permute.xlu0 %5574
      %v5587 = vunpack.c.l.b16 %v5209
      %v5588 = vunpack.c.l.b16 %v5210
      %v5589 = vunpack.c.l.b16 %v5211
      %v5590 = vunpack.c.l.b16 %v5212
      %v5591 = vunpack.c.l.b16 %v5213
      %v5592 = vunpack.c.l.b16 %v5214
      %v5593 = vunpack.c.l.b16 %v5215
      %v5594 = vunpack.c.l.b16 %v5216
      %v5595 = vunpack.c.l.b16 %v5217
      %v5596 = vunpack.c.l.b16 %v5218
      %v5597 = vunpack.c.l.b16 %v5219
      %v5598 = vpack.c.b16 %v5588, %v5587
      %v5599 = vpack.c.b16 %v5590, %v5589
      %v5600 = vpack.c.b16 %v5592, %v5591
      %v5601 = vpack.c.b16 %v5594, %v5593
      %v5602 = vpack.c.b16 %v5596, %v5595
      %v5603 = vpack.c.b16 %v5597, %v5597
      %5604 = vrot.lane.b32.xlu0 %v5598, 112
      %v5605 = vpop.permute.xlu0 %5604
      %5606 = vrot.lane.b32.xlu0 %v5599, 112
      %v5607 = vpop.permute.xlu0 %5606
      %5608 = vrot.lane.b32.xlu0 %v5600, 112
      %v5609 = vpop.permute.xlu0 %5608
      %5610 = vrot.lane.b32.xlu0 %v5601, 112
      %v5611 = vpop.permute.xlu0 %5610
      %5612 = vrot.lane.b32.xlu0 %v5602, 112
      %v5613 = vpop.permute.xlu0 %5612
      %5614 = vrot.lane.b32.xlu0 %v5603, 112
      %v5615 = vpop.permute.xlu0 %5614
      %v5627 = vunpack.c.l.b16 %v5220
      %v5628 = vunpack.c.l.b16 %v5221
      %v5629 = vunpack.c.l.b16 %v5222
      %v5630 = vunpack.c.l.b16 %v5223
      %v5631 = vunpack.c.l.b16 %v5224
      %v5632 = vunpack.c.l.b16 %v5225
      %v5633 = vunpack.c.l.b16 %v5226
      %v5634 = vunpack.c.l.b16 %v5227
      %v5635 = vunpack.c.l.b16 %v5228
      %v5636 = vunpack.c.l.b16 %v5229
      %v5637 = vunpack.c.l.b16 %v5230
      %v5638 = vpack.c.b16 %v5628, %v5627
      %v5639 = vpack.c.b16 %v5630, %v5629
      %v5640 = vpack.c.b16 %v5632, %v5631
      %v5641 = vpack.c.b16 %v5634, %v5633
      %v5642 = vpack.c.b16 %v5636, %v5635
      %v5643 = vpack.c.b16 %v5637, %v5637
      %v5655 = vunpack.c.l.b16 %v5231
      %v5656 = vunpack.c.l.b16 %v5232
      %v5657 = vunpack.c.l.b16 %v5233
      %v5658 = vunpack.c.l.b16 %v5234
      %v5659 = vunpack.c.l.b16 %v5235
      %v5660 = vunpack.c.l.b16 %v5236
      %v5661 = vunpack.c.l.b16 %v5237
      %v5662 = vunpack.c.l.b16 %v5238
      %v5663 = vunpack.c.l.b16 %v5239
      %v5664 = vunpack.c.l.b16 %v5240
      %v5665 = vunpack.c.l.b16 %v5241
      %v5666 = vpack.c.b16 %v5656, %v5655
      %v5667 = vpack.c.b16 %v5658, %v5657
      %v5668 = vpack.c.b16 %v5660, %v5659
      %v5669 = vpack.c.b16 %v5662, %v5661
      %v5670 = vpack.c.b16 %v5664, %v5663
      %v5671 = vpack.c.b16 %v5665, %v5665
      %5672 = vrot.lane.b32.xlu0 %v5666, 16
      %v5673 = vpop.permute.xlu0 %5672
      %5674 = vrot.lane.b32.xlu0 %v5667, 16
      %v5675 = vpop.permute.xlu0 %5674
      %5676 = vrot.lane.b32.xlu0 %v5668, 16
      %v5677 = vpop.permute.xlu0 %5676
      %5678 = vrot.lane.b32.xlu0 %v5669, 16
      %v5679 = vpop.permute.xlu0 %5678
      %5680 = vrot.lane.b32.xlu0 %v5670, 16
      %v5681 = vpop.permute.xlu0 %5680
      %5682 = vrot.lane.b32.xlu0 %v5671, 16
      %v5683 = vpop.permute.xlu0 %5682
      %v5695 = vunpack.c.l.b16 %v5242
      %v5696 = vunpack.c.l.b16 %v5243
      %v5697 = vunpack.c.l.b16 %v5244
      %v5698 = vunpack.c.l.b16 %v5245
      %v5699 = vunpack.c.l.b16 %v5246
      %v5700 = vunpack.c.l.b16 %v5247
      %v5701 = vunpack.c.l.b16 %v5248
      %v5702 = vunpack.c.l.b16 %v5249
      %v5703 = vunpack.c.l.b16 %v5250
      %v5704 = vunpack.c.l.b16 %v5251
      %v5705 = vunpack.c.l.b16 %v5252
      %v5706 = vpack.c.b16 %v5696, %v5695
      %v5707 = vpack.c.b16 %v5698, %v5697
      %v5708 = vpack.c.b16 %v5700, %v5699
      %v5709 = vpack.c.b16 %v5702, %v5701
      %v5710 = vpack.c.b16 %v5704, %v5703
      %v5711 = vpack.c.b16 %v5705, %v5705
      %5712 = vrot.lane.b32.xlu0 %v5706, 32
      %v5713 = vpop.permute.xlu0 %5712
      %5714 = vrot.lane.b32.xlu0 %v5707, 32
      %v5715 = vpop.permute.xlu0 %5714
      %5716 = vrot.lane.b32.xlu0 %v5708, 32
      %v5717 = vpop.permute.xlu0 %5716
      %5718 = vrot.lane.b32.xlu0 %v5709, 32
      %v5719 = vpop.permute.xlu0 %5718
      %5720 = vrot.lane.b32.xlu0 %v5710, 32
      %v5721 = vpop.permute.xlu0 %5720
      %5722 = vrot.lane.b32.xlu0 %v5711, 32
      %v5723 = vpop.permute.xlu0 %5722
      %v5735 = vunpack.c.l.b16 %v5253
      %v5736 = vunpack.c.l.b16 %v5254
      %v5737 = vunpack.c.l.b16 %v5255
      %v5738 = vunpack.c.l.b16 %v5256
      %v5739 = vunpack.c.l.b16 %v5257
      %v5740 = vunpack.c.l.b16 %v5258
      %v5741 = vunpack.c.l.b16 %v5259
      %v5742 = vunpack.c.l.b16 %v5260
      %v5743 = vunpack.c.l.b16 %v5261
      %v5744 = vunpack.c.l.b16 %v5262
      %v5745 = vunpack.c.l.b16 %v5263
      %v5746 = vpack.c.b16 %v5736, %v5735
      %v5747 = vpack.c.b16 %v5738, %v5737
      %v5748 = vpack.c.b16 %v5740, %v5739
      %v5749 = vpack.c.b16 %v5742, %v5741
      %v5750 = vpack.c.b16 %v5744, %v5743
      %v5751 = vpack.c.b16 %v5745, %v5745
      %5752 = vrot.lane.b32.xlu0 %v5746, 48
      %v5753 = vpop.permute.xlu0 %5752
      %5754 = vrot.lane.b32.xlu0 %v5747, 48
      %v5755 = vpop.permute.xlu0 %5754
      %5756 = vrot.lane.b32.xlu0 %v5748, 48
      %v5757 = vpop.permute.xlu0 %5756
      %5758 = vrot.lane.b32.xlu0 %v5749, 48
      %v5759 = vpop.permute.xlu0 %5758
      %5760 = vrot.lane.b32.xlu0 %v5750, 48
      %v5761 = vpop.permute.xlu0 %5760
      %5762 = vrot.lane.b32.xlu0 %v5751, 48
      %v5763 = vpop.permute.xlu0 %5762
      %v5775 = vunpack.c.l.b16 %v5264
      %v5776 = vunpack.c.l.b16 %v5265
      %v5777 = vunpack.c.l.b16 %v5266
      %v5778 = vunpack.c.l.b16 %v5267
      %v5779 = vunpack.c.l.b16 %v5268
      %v5780 = vunpack.c.l.b16 %v5269
      %v5781 = vunpack.c.l.b16 %v5270
      %v5782 = vunpack.c.l.b16 %v5271
      %v5783 = vunpack.c.l.b16 %v5272
      %v5784 = vunpack.c.l.b16 %v5273
      %v5785 = vunpack.c.l.b16 %v5274
      %v5786 = vpack.c.b16 %v5776, %v5775
      %v5787 = vpack.c.b16 %v5778, %v5777
      %v5788 = vpack.c.b16 %v5780, %v5779
      %v5789 = vpack.c.b16 %v5782, %v5781
      %v5790 = vpack.c.b16 %v5784, %v5783
      %v5791 = vpack.c.b16 %v5785, %v5785
      %5792 = vrot.lane.b32.xlu0 %v5786, 64
      %v5793 = vpop.permute.xlu0 %5792
      %5794 = vrot.lane.b32.xlu0 %v5787, 64
      %v5795 = vpop.permute.xlu0 %5794
      %5796 = vrot.lane.b32.xlu0 %v5788, 64
      %v5797 = vpop.permute.xlu0 %5796
      %5798 = vrot.lane.b32.xlu0 %v5789, 64
      %v5799 = vpop.permute.xlu0 %5798
      %5800 = vrot.lane.b32.xlu0 %v5790, 64
      %v5801 = vpop.permute.xlu0 %5800
      %5802 = vrot.lane.b32.xlu0 %v5791, 64
      %v5803 = vpop.permute.xlu0 %5802
      %v5815 = vunpack.c.l.b16 %v5275
      %v5816 = vunpack.c.l.b16 %v5276
      %v5817 = vunpack.c.l.b16 %v5277
      %v5818 = vunpack.c.l.b16 %v5278
      %v5819 = vunpack.c.l.b16 %v5279
      %v5820 = vunpack.c.l.b16 %v5280
      %v5821 = vunpack.c.l.b16 %v5281
      %v5822 = vunpack.c.l.b16 %v5282
      %v5823 = vunpack.c.l.b16 %v5283
      %v5824 = vunpack.c.l.b16 %v5284
      %v5825 = vunpack.c.l.b16 %v5285
      %v5826 = vpack.c.b16 %v5816, %v5815
      %v5827 = vpack.c.b16 %v5818, %v5817
      %v5828 = vpack.c.b16 %v5820, %v5819
      %v5829 = vpack.c.b16 %v5822, %v5821
      %v5830 = vpack.c.b16 %v5824, %v5823
      %v5831 = vpack.c.b16 %v5825, %v5825
      %5832 = vrot.lane.b32.xlu0 %v5826, 80
      %v5833 = vpop.permute.xlu0 %5832
      %5834 = vrot.lane.b32.xlu0 %v5827, 80
      %v5835 = vpop.permute.xlu0 %5834
      %5836 = vrot.lane.b32.xlu0 %v5828, 80
      %v5837 = vpop.permute.xlu0 %5836
      %5838 = vrot.lane.b32.xlu0 %v5829, 80
      %v5839 = vpop.permute.xlu0 %5838
      %5840 = vrot.lane.b32.xlu0 %v5830, 80
      %v5841 = vpop.permute.xlu0 %5840
      %5842 = vrot.lane.b32.xlu0 %v5831, 80
      %v5843 = vpop.permute.xlu0 %5842
      %v5855 = vunpack.c.l.b16 %v5286
      %v5856 = vunpack.c.l.b16 %v5287
      %v5857 = vunpack.c.l.b16 %v5288
      %v5858 = vunpack.c.l.b16 %v5289
      %v5859 = vunpack.c.l.b16 %v5290
      %v5860 = vunpack.c.l.b16 %v5291
      %v5861 = vunpack.c.l.b16 %v5292
      %v5862 = vunpack.c.l.b16 %v5293
      %v5863 = vunpack.c.l.b16 %v5294
      %v5864 = vunpack.c.l.b16 %v5295
      %v5865 = vunpack.c.l.b16 %v5296
      %v5866 = vpack.c.b16 %v5856, %v5855
      %v5867 = vpack.c.b16 %v5858, %v5857
      %v5868 = vpack.c.b16 %v5860, %v5859
      %v5869 = vpack.c.b16 %v5862, %v5861
      %v5870 = vpack.c.b16 %v5864, %v5863
      %v5871 = vpack.c.b16 %v5865, %v5865
      %5872 = vrot.lane.b32.xlu0 %v5866, 96
      %v5873 = vpop.permute.xlu0 %5872
      %5874 = vrot.lane.b32.xlu0 %v5867, 96
      %v5875 = vpop.permute.xlu0 %5874
      %5876 = vrot.lane.b32.xlu0 %v5868, 96
      %v5877 = vpop.permute.xlu0 %5876
      %5878 = vrot.lane.b32.xlu0 %v5869, 96
      %v5879 = vpop.permute.xlu0 %5878
      %5880 = vrot.lane.b32.xlu0 %v5870, 96
      %v5881 = vpop.permute.xlu0 %5880
      %5882 = vrot.lane.b32.xlu0 %v5871, 96
      %v5883 = vpop.permute.xlu0 %5882
      %v5895 = vunpack.c.l.b16 %v5297
      %v5896 = vunpack.c.l.b16 %v5298
      %v5897 = vunpack.c.l.b16 %v5299
      %v5898 = vunpack.c.l.b16 %v5300
      %v5899 = vunpack.c.l.b16 %v5301
      %v5900 = vunpack.c.l.b16 %v5302
      %v5901 = vunpack.c.l.b16 %v5303
      %v5902 = vunpack.c.l.b16 %v5304
      %v5903 = vunpack.c.l.b16 %v5305
      %v5904 = vunpack.c.l.b16 %v5306
      %v5905 = vunpack.c.l.b16 %v5307
      %v5906 = vpack.c.b16 %v5896, %v5895
      %v5907 = vpack.c.b16 %v5898, %v5897
      %v5908 = vpack.c.b16 %v5900, %v5899
      %v5909 = vpack.c.b16 %v5902, %v5901
      %v5910 = vpack.c.b16 %v5904, %v5903
      %v5911 = vpack.c.b16 %v5905, %v5905
      %5912 = vrot.lane.b32.xlu0 %v5906, 112
      %v5913 = vpop.permute.xlu0 %5912
      %5914 = vrot.lane.b32.xlu0 %v5907, 112
      %v5915 = vpop.permute.xlu0 %5914
      %5916 = vrot.lane.b32.xlu0 %v5908, 112
      %v5917 = vpop.permute.xlu0 %5916
      %5918 = vrot.lane.b32.xlu0 %v5909, 112
      %v5919 = vpop.permute.xlu0 %5918
      %5920 = vrot.lane.b32.xlu0 %v5910, 112
      %v5921 = vpop.permute.xlu0 %5920
      %5922 = vrot.lane.b32.xlu0 %v5911, 112
      %v5923 = vpop.permute.xlu0 %5922
      %v5926 = vsel %vm3071, %v5330, %v5365
      %v5929 = vsel %vm3071, %v5331, %v5367
      %v5932 = vsel %vm3071, %v5332, %v5369
      %v5935 = vsel %vm3071, %v5333, %v5371
      %v5938 = vsel %vm3071, %v5334, %v5373
      %v5941 = vsel %vm3071, %v5335, %v5375
      %vm5942 = vcmask 261120
      %v5944 = vsel %vm5942, %v5926, %v5405
      %v5946 = vsel %vm5942, %v5929, %v5407
      %v5948 = vsel %vm5942, %v5932, %v5409
      %v5950 = vsel %vm5942, %v5935, %v5411
      %v5952 = vsel %vm5942, %v5938, %v5413
      %v5954 = vsel %vm5942, %v5941, %v5415
      %vm5955 = vcmask 392192
      %v5957 = vsel %vm5955, %v5944, %v5445
      %v5959 = vsel %vm5955, %v5946, %v5447
      %v5961 = vsel %vm5955, %v5948, %v5449
      %v5963 = vsel %vm5955, %v5950, %v5451
      %v5965 = vsel %vm5955, %v5952, %v5453
      %v5967 = vsel %vm5955, %v5954, %v5455
      %v5969 = vsel %vm628, %v5957, %v5485
      %v5971 = vsel %vm628, %v5959, %v5487
      %v5973 = vsel %vm628, %v5961, %v5489
      %v5975 = vsel %vm628, %v5963, %v5491
      %v5977 = vsel %vm628, %v5965, %v5493
      %v5979 = vsel %vm628, %v5967, %v5495
      %vm5980 = vcmask 654336
      %v5982 = vsel %vm5980, %v5969, %v5525
      %v5984 = vsel %vm5980, %v5971, %v5527
      %v5986 = vsel %vm5980, %v5973, %v5529
      %v5988 = vsel %vm5980, %v5975, %v5531
      %v5990 = vsel %vm5980, %v5977, %v5533
      %v5992 = vsel %vm5980, %v5979, %v5535
      %vm5993 = vcmask 785408
      %v5995 = vsel %vm5993, %v5982, %v5565
      %v5997 = vsel %vm5993, %v5984, %v5567
      %v5999 = vsel %vm5993, %v5986, %v5569
      %v6001 = vsel %vm5993, %v5988, %v5571
      %v6003 = vsel %vm5993, %v5990, %v5573
      %v6005 = vsel %vm5993, %v5992, %v5575
      %vm6006 = vcmask 916480
      %v6008 = vsel %vm6006, %v5995, %v5605
      %v6011 = vsel %vm6006, %v5997, %v5607
      %v6014 = vsel %vm6006, %v5999, %v5609
      %v6017 = vsel %vm6006, %v6001, %v5611
      %v6020 = vsel %vm6006, %v6003, %v5613
      %v6023 = vsel %vm6006, %v6005, %v5615
      %v6027 = vsel %vm3071, %v5638, %v5673
      %v6030 = vsel %vm3071, %v5639, %v5675
      %v6033 = vsel %vm3071, %v5640, %v5677
      %v6036 = vsel %vm3071, %v5641, %v5679
      %v6039 = vsel %vm3071, %v5642, %v5681
      %v6042 = vsel %vm3071, %v5643, %v5683
      %v6044 = vsel %vm5942, %v6027, %v5713
      %v6046 = vsel %vm5942, %v6030, %v5715
      %v6048 = vsel %vm5942, %v6033, %v5717
      %v6050 = vsel %vm5942, %v6036, %v5719
      %v6052 = vsel %vm5942, %v6039, %v5721
      %v6054 = vsel %vm5942, %v6042, %v5723
      %v6056 = vsel %vm5955, %v6044, %v5753
      %v6058 = vsel %vm5955, %v6046, %v5755
      %v6060 = vsel %vm5955, %v6048, %v5757
      %v6062 = vsel %vm5955, %v6050, %v5759
      %v6064 = vsel %vm5955, %v6052, %v5761
      %v6066 = vsel %vm5955, %v6054, %v5763
      %v6068 = vsel %vm628, %v6056, %v5793
      %v6070 = vsel %vm628, %v6058, %v5795
      %v6072 = vsel %vm628, %v6060, %v5797
      %v6074 = vsel %vm628, %v6062, %v5799
      %v6076 = vsel %vm628, %v6064, %v5801
      %v6078 = vsel %vm628, %v6066, %v5803
      %v6080 = vsel %vm5980, %v6068, %v5833
      %v6082 = vsel %vm5980, %v6070, %v5835
      %v6084 = vsel %vm5980, %v6072, %v5837
      %v6086 = vsel %vm5980, %v6074, %v5839
      %v6088 = vsel %vm5980, %v6076, %v5841
      %v6090 = vsel %vm5980, %v6078, %v5843
      %v6092 = vsel %vm5993, %v6080, %v5873
      %v6094 = vsel %vm5993, %v6082, %v5875
      %v6096 = vsel %vm5993, %v6084, %v5877
      %v6098 = vsel %vm5993, %v6086, %v5879
      %v6100 = vsel %vm5993, %v6088, %v5881
      %v6102 = vsel %vm5993, %v6090, %v5883
      %v6104 = vsel %vm6006, %v6092, %v5913
      %v6107 = vsel %vm6006, %v6094, %v5915
      %v6110 = vsel %vm6006, %v6096, %v5917
      %v6113 = vsel %vm6006, %v6098, %v5919
      %v6116 = vsel %vm6006, %v6100, %v5921
      %v6119 = vsel %vm6006, %v6102, %v5923
      %v6121 = vld [vmem:[%s4] sm:$0xf]
      %v6122 = vld [vmem:[%s4 + $0x4] sm:$0xf]
      %v6123 = vld [vmem:[%s4 + $0x8] sm:$0xf]
      %v6124 = vld [vmem:[%s4 + $0xc] sm:$0xf]
      %v6125 = vld [vmem:[%s4 + $0x10] sm:$0xf]
      %v6126 = vld [vmem:[%s4 + $0x14] sm:$0xf]
      %v6127 = vld [vmem:[%s4 + $0x18] sm:$0xf]
      %v6128 = vld [vmem:[%s4 + $0x1c] sm:$0xf]
      %v6129 = vld [vmem:[%s4 + $0x20] sm:$0xf]
      %v6130 = vld [vmem:[%s4 + $0x24] sm:$0xf]
      %v6131 = vld [vmem:[%s4 + $0x28] sm:$0xf]
      %v6132 = vld [vmem:[%s4 + $0x2c] sm:$0xf]
      %v6133 = vld [vmem:[%s4 + $0x30] sm:$0xf]
      %v6134 = vld [vmem:[%s4 + $0x34] sm:$0xf]
      %v6135 = vld [vmem:[%s4 + $0x38] sm:$0xf]
      %v6136 = vld [vmem:[%s4 + $0x3c] sm:$0xf]
      %v6137 = vld [vmem:[%s4 + $0x40] sm:$0xf]
      %v6138 = vld [vmem:[%s4 + $0x44] sm:$0xf]
      %v6139 = vld [vmem:[%s4 + $0x48] sm:$0xf]
      %v6140 = vld [vmem:[%s4 + $0x4c] sm:$0xf]
      %v6141 = vld [vmem:[%s4 + $0x50] sm:$0xf]
      %v6142 = vld [vmem:[%s4 + $0x54] sm:$0xf]
      %v6143 = vld [vmem:[%s4 + $0x58] sm:$0xf]
      %v6144 = vld [vmem:[%s4 + $0x5c] sm:$0xf]
      %v6145 = vld [vmem:[%s4 + $0x60] sm:$0xf]
      %v6146 = vld [vmem:[%s4 + $0x64] sm:$0xf]
      %v6147 = vld [vmem:[%s4 + $0x68] sm:$0xf]
      %v6148 = vld [vmem:[%s4 + $0x6c] sm:$0xf]
      %v6149 = vld [vmem:[%s4 + $0x70] sm:$0xf]
      %v6150 = vld [vmem:[%s4 + $0x74] sm:$0xf]
      %v6151 = vld [vmem:[%s4 + $0x78] sm:$0xf]
      %v6152 = vld [vmem:[%s4 + $0x7c] sm:$0xf]
      %v6153 = vld [vmem:[%s5] sm:$0x1]
      %v6155 = vperm.slane %v6153, 0
      %v6189 = vunpack.c.l.b16 %v6121
      %v6190 = vunpack.c.l.b16 %v6122
      %v6191 = vunpack.c.l.b16 %v6123
      %v6192 = vunpack.c.l.b16 %v6124
      %v6193 = vunpack.c.l.b16 %v6125
      %v6194 = vunpack.c.l.b16 %v6126
      %v6195 = vunpack.c.l.b16 %v6127
      %v6196 = vunpack.c.l.b16 %v6128
      %v6197 = vunpack.c.l.b16 %v6129
      %v6198 = vunpack.c.l.b16 %v6130
      %v6199 = vunpack.c.l.b16 %v6131
      %v6200 = vunpack.c.l.b16 %v6132
      %v6201 = vunpack.c.l.b16 %v6133
      %v6202 = vunpack.c.l.b16 %v6134
      %v6203 = vunpack.c.l.b16 %v6135
      %v6204 = vunpack.c.l.b16 %v6136
      %v6205 = vunpack.c.l.b16 %v6137
      %v6206 = vunpack.c.l.b16 %v6138
      %v6207 = vunpack.c.l.b16 %v6139
      %v6208 = vunpack.c.l.b16 %v6140
      %v6209 = vunpack.c.l.b16 %v6141
      %v6210 = vunpack.c.l.b16 %v6142
      %v6211 = vunpack.c.l.b16 %v6143
      %v6212 = vunpack.c.l.b16 %v6144
      %v6213 = vunpack.c.l.b16 %v6145
      %v6214 = vunpack.c.l.b16 %v6146
      %v6215 = vunpack.c.l.b16 %v6147
      %v6216 = vunpack.c.l.b16 %v6148
      %v6217 = vunpack.c.l.b16 %v6149
      %v6218 = vunpack.c.l.b16 %v6150
      %v6219 = vunpack.c.l.b16 %v6151
      %v6220 = vunpack.c.l.b16 %v6152
      %v6221 = vpack.c.b16 %v6190, %v6189
      %v6222 = vpack.c.b16 %v6192, %v6191
      %v6223 = vpack.c.b16 %v6194, %v6193
      %v6224 = vpack.c.b16 %v6196, %v6195
      %v6225 = vpack.c.b16 %v6198, %v6197
      %v6226 = vpack.c.b16 %v6200, %v6199
      %v6227 = vpack.c.b16 %v6202, %v6201
      %v6228 = vpack.c.b16 %v6204, %v6203
      %v6229 = vpack.c.b16 %v6206, %v6205
      %v6230 = vpack.c.b16 %v6208, %v6207
      %v6231 = vpack.c.b16 %v6210, %v6209
      %v6232 = vpack.c.b16 %v6212, %v6211
      %v6233 = vpack.c.b16 %v6214, %v6213
      %v6234 = vpack.c.b16 %v6216, %v6215
      %v6235 = vpack.c.b16 %v6218, %v6217
      %v6236 = vpack.c.b16 %v6220, %v6219
      %6253 = vmatpush.bf16.msra.mxu0 %v6228
      %6254 = vmatpush.bf16.msra.mxu0 %v6227
      %6255 = vmatpush.bf16.msra.mxu0 %v6226
      %6256 = vmatpush.bf16.msra.mxu0 %v6225
      %6257 = vmatpush.bf16.msra.mxu0 %v6224
      %6258 = vmatpush.bf16.msra.mxu0 %v6223
      %6259 = vmatpush.bf16.msra.mxu0 %v6222
      %6260 = vmatpush.bf16.msra.mxu0 %v6221
      %6261 = vmatmul.bf16.gmra.mxu0 %v6008
      %v6262 = vpop.f32.mrf.mxu0
      %v6263 = vadd.f32 %v6155, %v6262
      %v6264 = vpop.f32.mrf.mxu0
      %v6265 = vadd.f32 %v6155, %v6264
      %6266 = vmatmul.bf16.gmra.mxu0 %v6011
      %v6267 = vpop.f32.mrf.mxu0
      %v6268 = vadd.f32 %v6155, %v6267
      %v6269 = vpop.f32.mrf.mxu0
      %v6270 = vadd.f32 %v6155, %v6269
      %6271 = vmatmul.bf16.gmra.mxu0 %v6014
      %v6272 = vpop.f32.mrf.mxu0
      %v6273 = vadd.f32 %v6155, %v6272
      %v6274 = vpop.f32.mrf.mxu0
      %v6275 = vadd.f32 %v6155, %v6274
      %6276 = vmatmul.bf16.gmra.mxu0 %v6017
      %v6277 = vpop.f32.mrf.mxu0
      %v6278 = vadd.f32 %v6155, %v6277
      %v6279 = vpop.f32.mrf.mxu0
      %v6280 = vadd.f32 %v6155, %v6279
      %6281 = vmatmul.bf16.gmra.mxu0 %v6020
      %v6282 = vpop.f32.mrf.mxu0
      %v6283 = vadd.f32 %v6155, %v6282
      %v6284 = vpop.f32.mrf.mxu0
      %v6285 = vadd.f32 %v6155, %v6284
      %6286 = vmatmul.bf16.gmra.mxu0 %v6023
      %v6287 = vpop.f32.mrf.mxu0
      %v6288 = vadd.f32 %v6155, %v6287
      %v6289 = vpop.f32.mrf.mxu0
      %6290 = vdwg.mxu0
      %6291 = vmatpush.bf16.msra.mxu0 %v6236
      %6292 = vmatpush.bf16.msra.mxu0 %v6235
      %6293 = vmatpush.bf16.msra.mxu0 %v6234
      %6294 = vmatpush.bf16.msra.mxu0 %v6233
      %6295 = vmatpush.bf16.msra.mxu0 %v6232
      %6296 = vmatpush.bf16.msra.mxu0 %v6231
      %6297 = vmatpush.bf16.msra.mxu0 %v6230
      %6298 = vmatpush.bf16.msra.mxu0 %v6229
      %6299 = vmatmul.bf16.gmra.mxu0 %v6104
      %v6300 = vpop.f32.mrf.mxu0
      %v6301 = vadd.f32 %v6263, %v6300
      %v6302 = vpop.f32.mrf.mxu0
      %v6303 = vadd.f32 %v6265, %v6302
      %6304 = vmatmul.bf16.gmra.mxu0 %v6107
      %v6305 = vpop.f32.mrf.mxu0
      %v6306 = vadd.f32 %v6268, %v6305
      %v6307 = vpop.f32.mrf.mxu0
      %v6308 = vadd.f32 %v6270, %v6307
      %6309 = vmatmul.bf16.gmra.mxu0 %v6110
      %v6310 = vpop.f32.mrf.mxu0
      %v6311 = vadd.f32 %v6273, %v6310
      %v6312 = vpop.f32.mrf.mxu0
      %v6313 = vadd.f32 %v6275, %v6312
      %6314 = vmatmul.bf16.gmra.mxu0 %v6113
      %v6315 = vpop.f32.mrf.mxu0
      %v6316 = vadd.f32 %v6278, %v6315
      %v6317 = vpop.f32.mrf.mxu0
      %v6318 = vadd.f32 %v6280, %v6317
      %6319 = vmatmul.bf16.gmra.mxu0 %v6116
      %v6320 = vpop.f32.mrf.mxu0
      %v6321 = vadd.f32 %v6283, %v6320
      %v6322 = vpop.f32.mrf.mxu0
      %v6323 = vadd.f32 %v6285, %v6322
      %6324 = vmatmul.bf16.gmra.mxu0 %v6119
      %v6325 = vpop.f32.mrf.mxu0
      %v6326 = vadd.f32 %v6288, %v6325
      %v6327 = vpop.f32.mrf.mxu0
      %6328 = vdwg.mxu0
      %v6329 = vmax.f32 %v6301, 0.0
      %v6330 = vmax.f32 %v6303, 0.0
      %v6331 = vmax.f32 %v6306, 0.0
      %v6332 = vmax.f32 %v6308, 0.0
      %v6333 = vmax.f32 %v6311, 0.0
      %v6334 = vmax.f32 %v6313, 0.0
      %v6335 = vmax.f32 %v6316, 0.0
      %v6336 = vmax.f32 %v6318, 0.0
      %v6337 = vmax.f32 %v6321, 0.0
      %v6338 = vmax.f32 %v6323, 0.0
      %v6339 = vmax.f32 %v6326, 0.0
      %v6340 = vpack.c.bf16 %v6329, %v6329
      %v6341 = vpack.c.bf16 %v6330, %v6330
      %v6342 = vpack.c.bf16 %v6331, %v6331
      %v6343 = vpack.c.bf16 %v6332, %v6332
      %v6344 = vpack.c.bf16 %v6333, %v6333
      %v6345 = vpack.c.bf16 %v6334, %v6334
      %v6346 = vpack.c.bf16 %v6335, %v6335
      %v6347 = vpack.c.bf16 %v6336, %v6336
      %v6348 = vpack.c.bf16 %v6337, %v6337
      %v6349 = vpack.c.bf16 %v6338, %v6338
      %v6350 = vpack.c.bf16 %v6339, %v6339
      %vm6351 = vcmask 257024
      %6352 = vst.msk [vmem:[%s251] sm:$0xf] %vm6351, %v6340
      %6353 = vst.msk [vmem:[%s251 + $0x4] sm:$0xf] %vm6351, %v6341
      %6354 = vst.msk [vmem:[%s251 + $0x8] sm:$0xf] %vm6351, %v6342
      %6355 = vst.msk [vmem:[%s251 + $0xc] sm:$0xf] %vm6351, %v6343
      %6356 = vst.msk [vmem:[%s251 + $0x10] sm:$0xf] %vm6351, %v6344
      %6357 = vst.msk [vmem:[%s251 + $0x14] sm:$0xf] %vm6351, %v6345
      %6358 = vst.msk [vmem:[%s251 + $0x18] sm:$0xf] %vm6351, %v6346
      %6359 = vst.msk [vmem:[%s251 + $0x1c] sm:$0xf] %vm6351, %v6347
      %6360 = vst.msk [vmem:[%s251 + $0x20] sm:$0xf] %vm6351, %v6348
      %6361 = vst.msk [vmem:[%s251 + $0x24] sm:$0xf] %vm6351, %v6349
      %vm6362 = vcmask 253952
      %vm6363 = vsmask.f32 256
      %vm6364 = vmand %vm6362, %vm6363
      %v6365 = vld [vmem:[%s251 + $0x28] sm:$0x1]
      %v6366 = vsel %vm6364, %v6350, %v6365
      %6367 = vst [vmem:[%s251 + $0x28] sm:$0x1] %v6366
      %p6368 = scmp.lt.s32.totalorder %s17, 1
      %s6369 = scalar_select %p6368, %s17, 1
      %s6370 = smul.addr %s6369, 11
      %s6371 = smul.addr %s6370, 4
      %s6372 = scalar_lea.vmem %s6, %s6371
      // Predicated region
      $region45: #{cnn_forward.2} parent=43 // pred_check
        %p6373 = pneg %p166
      $region46: #{cnn_forward.2} parent=43 // pred_check_branch
        %6375 = sbr.rel (%p6373) target = $region48
      $region47: #{cnn_forward.2} parent=43 // pred_region
        _
      $region48: #{cnn_forward.2} parent=43 // pred_fallthru
        _
    $region44: #{cnn_forward.2} parent=5 // pred_fallthru
      _
    %p6376 = scmp.le.s32.totalorder 2, %s12
    // Predicated region
    $region49: #{cnn_forward.2} parent=5 // pred_check
      %p6377 = pneg %p6376
    $region50: #{cnn_forward.2} parent=5 // pred_check_branch
      %6379 = sbr.rel (%p6377) target = $region52
    $region51: #{cnn_forward.2} parent=5 // pred_region
      %s6380 = ssub.s32 %s12, 2
      // Predicated region
      $region53: #{cnn_forward.2} parent=51 // pred_check
        %p6381 = pneg %p172
      $region54: #{cnn_forward.2} parent=51 // pred_check_branch
        %6383 = sbr.rel (%p6381) target = $region56
      $region55: #{cnn_forward.2} parent=51 // pred_region
        %p6384 = scmp.lt.s32.totalorder %s18, 1
        %s6385 = scalar_select %p6384, %s18, 1
        %s6386 = smul.addr %s6385, 11
        %s6387 = smul.addr %s6386, 4
        %s6388 = scalar_lea.vmem %s6, %s6387
      $region56: #{cnn_forward.2} parent=51 // pred_fallthru
        _
    $region52: #{cnn_forward.2} parent=5 // pred_fallthru
      _
  $region6: #{cnn_forward.2} parent=0 // loop_footer
    %s16 = sadd.s32 1, %s12
  $region7: #{cnn_forward.2} parent=0 // loop_footer_branch
    %11 = sbr.rel target = $region3
  $region8: #{cnn_forward.2} parent=0 // loop_exit
    _

</llo_original>
